<compile_context>
chip_gen: v7x
topology: tpu7x:2x2x1
jax: 0.10.0
libtpu: 0.0.40
codegen_flags: <defaults>
</compile_context>

<pallas_src>
import functools

import jax
import jax.numpy as jnp
from jax.experimental import pallas as pl
from jax.experimental.pallas import tpu as pltpu


# ----------------------------------------------------------------------------
# Fused Aggregator kernel: one batch element per grid step.
# ----------------------------------------------------------------------------
def _aggregator_kernel(x_ref, projC_ref, bC_ref, dww_ref, projA_ref, pwB_ref,
                       bias_ref, o_ref, pad_ref, *, H, W, seg_dim, pad):
    Cr = 3 * seg_dim            # channels going through the separable convs
    K = 2 * pad + 1             # merged depthwise kernel size (7)
    Wp = W + 2 * pad
    WCr = W * Cr

    x2 = x_ref[0]                                           # (H, W*C), lane-dense

    # ---- 1x1 proj conv for the conv segments (1..3): pixel-major
    #      block-diagonal matmul (no per-pixel relayout needed).
    y_conv = jnp.dot(x2, projC_ref[...],
                     preferred_element_type=jnp.float32) + bC_ref[...]   # (H, W*Cr)

    # ---- fill the padded scratch: zero ONLY the 3-pixel halo every step
    #      (interior is fully overwritten; do not gate on program_id ->
    #      per-core scratch under megacore), then store the interior.
    zrow = jnp.zeros((pad, Wp * Cr), jnp.float32)
    pad_ref[0:pad, :] = zrow
    pad_ref[pad + H:, :] = zrow
    zcol = jnp.zeros((H, pad * Cr), jnp.float32)
    pad_ref[pad:pad + H, 0:pad * Cr] = zcol
    pad_ref[pad:pad + H, (pad + W) * Cr:] = zcol
    pad_ref[pad:pad + H, pad * Cr:(pad + W) * Cr] = y_conv

    # ---- merged depthwise conv (3x3/5x5/7x7 zero-padded to 7x7): 49 static
    #      taps, each a contiguous lane slice of the padded scratch times a
    #      pre-tiled (1, W*Cr) weight row (dense 3-vreg read per tap; the
    #      whole (49, W*Cr) block is deliberately not held in vregs to keep
    #      register pressure off the accumulator).
    acc = pad_ref[0:H, 0:WCr] * dww_ref[0:1, :]
    for t in range(1, K * K):
        dh, dw = divmod(t, K)
        acc = acc + (pad_ref[dh:dh + H, dw * Cr:dw * Cr + WCr]
                     * dww_ref[t:t + 1, :])

    # ---- fused epilogue: seg-0 path (from x) + three pointwise 1x1 convs
    #      (from acc) + folded BN + ReLU, as two pixel-major block-diagonal
    #      MXU matmuls producing the full (H, W*C) slab -> ONE dense store.
    out = jnp.dot(x2, projA_ref[...], preferred_element_type=jnp.float32)
    out = out + jnp.dot(acc, pwB_ref[...], preferred_element_type=jnp.float32)
    out = jnp.maximum(out + bias_ref[...], 0.0)
    o_ref[0] = out


def aggregator_forward(x, fp, *, dim, seg):
    """x: (B, H, W, dim) f32, fp: folded parameter dict -> (B, H, W, dim)."""
    B, H, W, C = x.shape
    assert C == dim and dim % seg == 0
    seg_dim = dim // seg
    Cr = 3 * seg_dim
    pad = 3                                   # max kernel (7x7) // 2
    Wp = W + 2 * pad
    WC, WCr = W * C, W * Cr

    # Free row-major reshape: channels flattened into the lane axis.
    x2 = x.reshape(B, H, WC)

    kern = functools.partial(_aggregator_kernel, H=H, W=W,
                             seg_dim=seg_dim, pad=pad)

    flops = B * (2 * H * WC * WCr            # proj (conv segments)
                 + 2 * H * WCr * 49          # merged depthwise taps
                 + 2 * H * WC * WC           # seg-0 path matmul
                 + 2 * H * WCr * WC)         # merged pointwise matmul
    bytes_accessed = 4 * (2 * B * H * WC                       # x + out
                          + WC * WCr + 49 * WCr + WC * WC
                          + WCr * WC + WCr + WC)               # params

    out = pl.pallas_call(
        kern,
        out_shape=jax.ShapeDtypeStruct((B, H, WC), jnp.float32),
        grid=(B,),
        in_specs=[
            pl.BlockSpec((1, H, WC), lambda b: (b, 0, 0)),     # x (pixel-major)
            pl.BlockSpec((WC, WCr), lambda b: (0, 0)),         # proj->conv segs (blk-diag)
            pl.BlockSpec((1, WCr), lambda b: (0, 0)),          # proj bias (tiled)
            pl.BlockSpec((49, WCr), lambda b: (0, 0)),         # merged dw taps (tiled)
            pl.BlockSpec((WC, WC), lambda b: (0, 0)),          # seg0 path (blk-diag, BN folded)
            pl.BlockSpec((WCr, WC), lambda b: (0, 0)),         # pointwise (blk-diag, BN folded)
            pl.BlockSpec((1, WC), lambda b: (0, 0)),           # output bias (folded BN shift)
        ],
        out_specs=pl.BlockSpec((1, H, WC), lambda b: (b, 0, 0)),
        scratch_shapes=[pltpu.VMEM((H + 2 * pad, Wp * Cr), jnp.float32)],
        compiler_params=pltpu.CompilerParams(
            dimension_semantics=("parallel",),
            vmem_limit_bytes=32 * 1024 * 1024),
        cost_estimate=pl.CostEstimate(flops=flops, transcendentals=0,
                                      bytes_accessed=bytes_accessed),
    )(x2, fp["projC"], fp["bC"], fp["dw"], fp["projA"], fp["pwB"], fp["bias"])
    return out.reshape(B, H, W, C)


# ----------------------------------------------------------------------------
# Parameters (deterministic synthetic init; shapes follow the module __init__)
# ----------------------------------------------------------------------------
def init_params(key, dim=32, seg=4):
    seg_dim = dim // seg
    ks = jax.random.split(key, 8)

    def rn(k, shape, s=0.1):
        return jax.random.normal(k, shape, jnp.float32) * s

    params = {
        # Aggregator.proj : Conv2d(dim, dim, 1) with bias -> (Cin, Cout) matmul
        "proj_w": rn(ks[0], (dim, dim)),
        "proj_b": rn(ks[1], (dim,)),
    }
    ksizes = {1: 3, 2: 5, 3: 7}
    ki = 2
    for i in (1, 2, 3):
        K = ksizes[i]
        params[f"dw{i}_w"] = rn(ks[ki], (K, K, seg_dim)); ki += 1
        params[f"pw{i}_w"] = rn(ks[ki], (seg_dim, seg_dim)); ki += 1
    return params


def fold_params(params, *, dim, seg, W):
    """Fold eval-mode BN + merge/replicate weights into the pixel-major,
    lane-dense layouts consumed by the fused kernel."""
    seg_dim = dim // seg
    Cr = 3 * seg_dim
    eps = 1e-5
    s = 1.0 / jnp.sqrt(1.0 + eps)      # eval-mode BN scale (default stats)
    # eval-mode BN shift is 0 with default stats (beta=0, mean=0).

    proj_w = params["proj_w"]          # (Cin, Cout)
    proj_b = params["proj_b"]          # (Cout,)
    eyeW = jnp.eye(W, dtype=jnp.float32)

    # proj columns feeding the conv segments, replicated block-diagonally so
    # the matmul runs directly in the (H, W*C) pixel-major layout.
    projC = jnp.kron(eyeW, proj_w[:, seg_dim:])                  # (W*dim, W*Cr)
    bC = jnp.tile(proj_b[seg_dim:], W).reshape(1, W * Cr)

    # Merged depthwise taps: 3x3 / 5x5 zero-padded (centered) into 7x7,
    # flattened to (49, Cr) and tiled W times along lanes -> (49, W*Cr).
    dw7 = jnp.zeros((7, 7, Cr), jnp.float32)
    for idx, i in enumerate((1, 2, 3)):
        K = (3, 5, 7)[idx]
        p0 = (7 - K) // 2
        dw7 = dw7.at[p0:p0 + K, p0:p0 + K,
                     idx * seg_dim:(idx + 1) * seg_dim].set(params[f"dw{i}_w"])
    dw_tiled = jnp.tile(dw7.reshape(49, Cr), (1, W))             # (49, W*Cr)

    # Epilogue matmul A: seg-0 path (proj columns 0..seg_dim with BN0 scale
    # folded), writing only the first seg_dim channels of each pixel.
    A = jnp.zeros((dim, dim), jnp.float32)
    A = A.at[:, :seg_dim].set(proj_w[:, :seg_dim] * s)
    projA = jnp.kron(eyeW, A)                                    # (W*dim, W*dim)

    # Epilogue matmul B: three 8x8 pointwise convs (BN scale folded) writing
    # the remaining 24 channels of each pixel.
    Bm = jnp.zeros((Cr, dim), jnp.float32)
    for idx, i in enumerate((1, 2, 3)):
        sl_in = slice(idx * seg_dim, (idx + 1) * seg_dim)
        sl_out = slice(seg_dim + idx * seg_dim, seg_dim + (idx + 1) * seg_dim)
        Bm = Bm.at[sl_in, sl_out].set(params[f"pw{i}_w"] * s)
    pwB = jnp.kron(eyeW, Bm)                                     # (W*Cr, W*dim)

    # Output bias: proj bias through BN0 for seg 0, BN shift (=0) for 1..3.
    bias_out = jnp.concatenate([proj_b[:seg_dim] * s,
                                jnp.zeros((Cr,), jnp.float32)])
    bias_out = jnp.tile(bias_out, W).reshape(1, W * dim)

    return {"projC": projC, "bC": bC, "dw": dw_tiled,
            "projA": projA, "pwB": pwB, "bias": bias_out}


# ----------------------------------------------------------------------------
# Pure-JAX reference (mirrors the PyTorch forward, eval-mode BN)
# ----------------------------------------------------------------------------
def aggregator_reference(params, x, *, dim, seg):
    seg_dim = dim // seg
    eps = 1e-5
    bn_scale = 1.0 / jnp.sqrt(1.0 + eps)
    hp = jax.lax.Precision.HIGHEST

    y = jnp.einsum("bhwc,cd->bhwd", x, params["proj_w"], precision=hp)
    y = y + params["proj_b"]

    outs = [jax.nn.relu(y[..., :seg_dim] * bn_scale)]
    for i in (1, 2, 3):
        yi = y[..., i * seg_dim:(i + 1) * seg_dim]
        dw = params[f"dw{i}_w"][:, :, None, :]          # (K, K, 1, Cg) HWIO
        di = jax.lax.conv_general_dilated(
            yi, dw, window_strides=(1, 1), padding="SAME",
            dimension_numbers=("NHWC", "HWIO", "NHWC"),
            feature_group_count=seg_dim, precision=hp)
        pi = jnp.einsum("bhwc,cd->bhwd", di, params[f"pw{i}_w"], precision=hp)
        outs.append(jax.nn.relu(pi * bn_scale))
    return jnp.concatenate(outs, axis=-1)


# ----------------------------------------------------------------------------
if __name__ == "__main__":
    dim, seg = 32, 4
    B, H, W = 2, 16, 16

    key = jax.random.PRNGKey(0)
    pkey, xkey = jax.random.split(key)
    params = init_params(pkey, dim=dim, seg=seg)
    folded = fold_params(params, dim=dim, seg=seg, W=W)
    x = jax.random.normal(xkey, (B, H, W, dim), jnp.float32)

    fwd = jax.jit(functools.partial(aggregator_forward, dim=dim, seg=seg))
    out = jax.block_until_ready(fwd(x, folded))

    assert out.shape == (B, H, W, dim), out.shape
    assert bool(jnp.all(jnp.isfinite(out)))

    ref = jax.block_until_ready(aggregator_reference(params, x, dim=dim, seg=seg))
    max_err = float(jnp.max(jnp.abs(out - ref)))
    assert max_err < 1e-2, f"max abs err {max_err}"

    print("KERNEL_OK")
</pallas_src>

<mosaic_0001>
module attributes {stable_mosaic.version = 11 : i64} {
  func.func @_aggregator_kernel(%arg0: i32, %arg1: memref<1x16x512xf32, #tpu.memory_space<vmem>>, %arg2: memref<512x384xf32, #tpu.memory_space<vmem>>, %arg3: memref<1x384xf32, #tpu.memory_space<vmem>>, %arg4: memref<49x384xf32, #tpu.memory_space<vmem>>, %arg5: memref<512x512xf32, #tpu.memory_space<vmem>>, %arg6: memref<384x512xf32, #tpu.memory_space<vmem>>, %arg7: memref<1x512xf32, #tpu.memory_space<vmem>>, %arg8: memref<1x16x512xf32, #tpu.memory_space<vmem>>, %arg9: memref<22x528xf32, #tpu.memory_space<vmem>>) attributes {dimension_semantics = [#tpu.dimension_semantics<parallel>], iteration_bounds = array<i64: 2>, scalar_prefetch = 0 : i64, scratch_operands = 1 : i64, tpu.core_type = #tpu.core_type<tc>, window_params = [{transform_indices = @transform_0, window_bounds = array<i64: 1, 16, 512>}, {pipeline_mode = #tpu.pipeline_mode<synchronous>, transform_indices = @transform_1, window_bounds = array<i64: 512, 384>}, {pipeline_mode = #tpu.pipeline_mode<synchronous>, transform_indices = @transform_2, window_bounds = array<i64: 1, 384>}, {pipeline_mode = #tpu.pipeline_mode<synchronous>, transform_indices = @transform_3, window_bounds = array<i64: 49, 384>}, {pipeline_mode = #tpu.pipeline_mode<synchronous>, transform_indices = @transform_4, window_bounds = array<i64: 512, 512>}, {pipeline_mode = #tpu.pipeline_mode<synchronous>, transform_indices = @transform_5, window_bounds = array<i64: 384, 512>}, {pipeline_mode = #tpu.pipeline_mode<synchronous>, transform_indices = @transform_6, window_bounds = array<i64: 1, 512>}, {transform_indices = @transform_7, window_bounds = array<i64: 1, 16, 512>}]} {
    %c0 = arith.constant 0 : index
    %c0_0 = arith.constant 0 : index
    %c0_1 = arith.constant 0 : index
    %0 = vector.load %arg1[%c0, %c0_0, %c0_1] : memref<1x16x512xf32, #tpu.memory_space<vmem>>, vector<1x16x512xf32>
    %1 = vector.shape_cast %0 : vector<1x16x512xf32> to vector<16x512xf32>
    %c0_2 = arith.constant 0 : index
    %c0_3 = arith.constant 0 : index
    %2 = vector.load %arg2[%c0_2, %c0_3] : memref<512x384xf32, #tpu.memory_space<vmem>>, vector<512x384xf32>
    %cst = arith.constant dense<0.000000e+00> : vector<16x384xf32>
    %3 = tpu.matmul %1, %2, %cst {dimension_numbers = #tpu.dot_dimension_numbers<[1], [0], [0], [1], [0, 0, 1, 1], [], []>} : vector<16x512xf32>, vector<512x384xf32>, vector<16x384xf32> -> vector<16x384xf32>
    %c0_4 = arith.constant 0 : index
    %c0_5 = arith.constant 0 : index
    %4 = vector.load %arg3[%c0_4, %c0_5] : memref<1x384xf32, #tpu.memory_space<vmem>>, vector<1x384xf32>
    %5 = vector.broadcast %4 : vector<1x384xf32> to vector<16x384xf32>
    %6 = arith.addf %3, %5 : vector<16x384xf32>
    %cst_6 = arith.constant 0.000000e+00 : f32
    %7 = vector.broadcast %cst_6 : f32 to vector<3x528xf32>
    %c0_7 = arith.constant 0 : index
    %c0_8 = arith.constant 0 : index
    %8 = vector.load %arg9[%c0_7, %c0_8] : memref<22x528xf32, #tpu.memory_space<vmem>>, vector<3x528xf32>
    tpu.vector_store %arg9[%c0_7, %c0_8], %7 {strides = array<i32>} : memref<22x528xf32, #tpu.memory_space<vmem>>, vector<3x528xf32>,
    %c19 = arith.constant 19 : index
    %c0_9 = arith.constant 0 : index
    %9 = vector.load %arg9[%c19, %c0_9] : memref<22x528xf32, #tpu.memory_space<vmem>>, vector<3x528xf32>
    tpu.vector_store %arg9[%c19, %c0_9], %7 {strides = array<i32>} : memref<22x528xf32, #tpu.memory_space<vmem>>, vector<3x528xf32>,
    %cst_10 = arith.constant 0.000000e+00 : f32
    %10 = vector.broadcast %cst_10 : f32 to vector<16x72xf32>
    %c3 = arith.constant 3 : index
    %c0_11 = arith.constant 0 : index
    %11 = vector.load %arg9[%c3, %c0_11] : memref<22x528xf32, #tpu.memory_space<vmem>>, vector<16x72xf32>
    tpu.vector_store %arg9[%c3, %c0_11], %10 {strides = array<i32>} : memref<22x528xf32, #tpu.memory_space<vmem>>, vector<16x72xf32>,
    %c3_12 = arith.constant 3 : index
    %c456 = arith.constant 456 : index
    %12 = vector.load %arg9[%c3_12, %c456] : memref<22x528xf32, #tpu.memory_space<vmem>>, vector<16x72xf32>
    tpu.vector_store %arg9[%c3_12, %c456], %10 {strides = array<i32>} : memref<22x528xf32, #tpu.memory_space<vmem>>, vector<16x72xf32>,
    %c3_13 = arith.constant 3 : index
    %c72 = arith.constant 72 : index
    %13 = vector.load %arg9[%c3_13, %c72] : memref<22x528xf32, #tpu.memory_space<vmem>>, vector<16x384xf32>
    tpu.vector_store %arg9[%c3_13, %c72], %6 {strides = array<i32>} : memref<22x528xf32, #tpu.memory_space<vmem>>, vector<16x384xf32>,
    %c0_14 = arith.constant 0 : index
    %c0_15 = arith.constant 0 : index
    %14 = vector.load %arg9[%c0_14, %c0_15] : memref<22x528xf32, #tpu.memory_space<vmem>>, vector<16x384xf32>
    %c0_16 = arith.constant 0 : index
    %c0_17 = arith.constant 0 : index
    %15 = vector.load %arg4[%c0_16, %c0_17] : memref<49x384xf32, #tpu.memory_space<vmem>>, vector<1x384xf32>
    %16 = vector.broadcast %15 : vector<1x384xf32> to vector<16x384xf32>
    %17 = arith.mulf %14, %16 : vector<16x384xf32>
    %c0_18 = arith.constant 0 : index
    %c24 = arith.constant 24 : index
    %18 = vector.load %arg9[%c0_18, %c24] : memref<22x528xf32, #tpu.memory_space<vmem>>, vector<16x384xf32>
    %c1 = arith.constant 1 : index
    %c0_19 = arith.constant 0 : index
    %19 = vector.load %arg4[%c1, %c0_19] : memref<49x384xf32, #tpu.memory_space<vmem>>, vector<1x384xf32>
    %20 = vector.broadcast %19 : vector<1x384xf32> to vector<16x384xf32>
    %21 = arith.mulf %18, %20 : vector<16x384xf32>
    %22 = arith.addf %17, %21 : vector<16x384xf32>
    %c0_20 = arith.constant 0 : index
    %c48 = arith.constant 48 : index
    %23 = vector.load %arg9[%c0_20, %c48] : memref<22x528xf32, #tpu.memory_space<vmem>>, vector<16x384xf32>
    %c2 = arith.constant 2 : index
    %c0_21 = arith.constant 0 : index
    %24 = vector.load %arg4[%c2, %c0_21] : memref<49x384xf32, #tpu.memory_space<vmem>>, vector<1x384xf32>
    %25 = vector.broadcast %24 : vector<1x384xf32> to vector<16x384xf32>
    %26 = arith.mulf %23, %25 : vector<16x384xf32>
    %27 = arith.addf %22, %26 : vector<16x384xf32>
    %c0_22 = arith.constant 0 : index
    %c72_23 = arith.constant 72 : index
    %28 = vector.load %arg9[%c0_22, %c72_23] : memref<22x528xf32, #tpu.memory_space<vmem>>, vector<16x384xf32>
    %c3_24 = arith.constant 3 : index
    %c0_25 = arith.constant 0 : index
    %29 = vector.load %arg4[%c3_24, %c0_25] : memref<49x384xf32, #tpu.memory_space<vmem>>, vector<1x384xf32>
    %30 = vector.broadcast %29 : vector<1x384xf32> to vector<16x384xf32>
    %31 = arith.mulf %28, %30 : vector<16x384xf32>
    %32 = arith.addf %27, %31 : vector<16x384xf32>
    %c0_26 = arith.constant 0 : index
    %c96 = arith.constant 96 : index
    %33 = vector.load %arg9[%c0_26, %c96] : memref<22x528xf32, #tpu.memory_space<vmem>>, vector<16x384xf32>
    %c4 = arith.constant 4 : index
    %c0_27 = arith.constant 0 : index
    %34 = vector.load %arg4[%c4, %c0_27] : memref<49x384xf32, #tpu.memory_space<vmem>>, vector<1x384xf32>
    %35 = vector.broadcast %34 : vector<1x384xf32> to vector<16x384xf32>
    %36 = arith.mulf %33, %35 : vector<16x384xf32>
    %37 = arith.addf %32, %36 : vector<16x384xf32>
    %c0_28 = arith.constant 0 : index
    %c120 = arith.constant 120 : index
    %38 = vector.load %arg9[%c0_28, %c120] : memref<22x528xf32, #tpu.memory_space<vmem>>, vector<16x384xf32>
    %c5 = arith.constant 5 : index
    %c0_29 = arith.constant 0 : index
    %39 = vector.load %arg4[%c5, %c0_29] : memref<49x384xf32, #tpu.memory_space<vmem>>, vector<1x384xf32>
    %40 = vector.broadcast %39 : vector<1x384xf32> to vector<16x384xf32>
    %41 = arith.mulf %38, %40 : vector<16x384xf32>
    %42 = arith.addf %37, %41 : vector<16x384xf32>
    %c0_30 = arith.constant 0 : index
    %c144 = arith.constant 144 : index
    %43 = vector.load %arg9[%c0_30, %c144] : memref<22x528xf32, #tpu.memory_space<vmem>>, vector<16x384xf32>
    %c6 = arith.constant 6 : index
    %c0_31 = arith.constant 0 : index
    %44 = vector.load %arg4[%c6, %c0_31] : memref<49x384xf32, #tpu.memory_space<vmem>>, vector<1x384xf32>
    %45 = vector.broadcast %44 : vector<1x384xf32> to vector<16x384xf32>
    %46 = arith.mulf %43, %45 : vector<16x384xf32>
    %47 = arith.addf %42, %46 : vector<16x384xf32>
    %c1_32 = arith.constant 1 : index
    %c0_33 = arith.constant 0 : index
    %48 = vector.load %arg9[%c1_32, %c0_33] : memref<22x528xf32, #tpu.memory_space<vmem>>, vector<16x384xf32>
    %c7 = arith.constant 7 : index
    %c0_34 = arith.constant 0 : index
    %49 = vector.load %arg4[%c7, %c0_34] : memref<49x384xf32, #tpu.memory_space<vmem>>, vector<1x384xf32>
    %50 = vector.broadcast %49 : vector<1x384xf32> to vector<16x384xf32>
    %51 = arith.mulf %48, %50 : vector<16x384xf32>
    %52 = arith.addf %47, %51 : vector<16x384xf32>
    %c1_35 = arith.constant 1 : index
    %c24_36 = arith.constant 24 : index
    %53 = vector.load %arg9[%c1_35, %c24_36] : memref<22x528xf32, #tpu.memory_space<vmem>>, vector<16x384xf32>
    %c8 = arith.constant 8 : index
    %c0_37 = arith.constant 0 : index
    %54 = vector.load %arg4[%c8, %c0_37] : memref<49x384xf32, #tpu.memory_space<vmem>>, vector<1x384xf32>
    %55 = vector.broadcast %54 : vector<1x384xf32> to vector<16x384xf32>
    %56 = arith.mulf %53, %55 : vector<16x384xf32>
    %57 = arith.addf %52, %56 : vector<16x384xf32>
    %c1_38 = arith.constant 1 : index
    %c48_39 = arith.constant 48 : index
    %58 = vector.load %arg9[%c1_38, %c48_39] : memref<22x528xf32, #tpu.memory_space<vmem>>, vector<16x384xf32>
    %c9 = arith.constant 9 : index
    %c0_40 = arith.constant 0 : index
    %59 = vector.load %arg4[%c9, %c0_40] : memref<49x384xf32, #tpu.memory_space<vmem>>, vector<1x384xf32>
    %60 = vector.broadcast %59 : vector<1x384xf32> to vector<16x384xf32>
    %61 = arith.mulf %58, %60 : vector<16x384xf32>
    %62 = arith.addf %57, %61 : vector<16x384xf32>
    %c1_41 = arith.constant 1 : index
    %c72_42 = arith.constant 72 : index
    %63 = vector.load %arg9[%c1_41, %c72_42] : memref<22x528xf32, #tpu.memory_space<vmem>>, vector<16x384xf32>
    %c10 = arith.constant 10 : index
    %c0_43 = arith.constant 0 : index
    %64 = vector.load %arg4[%c10, %c0_43] : memref<49x384xf32, #tpu.memory_space<vmem>>, vector<1x384xf32>
    %65 = vector.broadcast %64 : vector<1x384xf32> to vector<16x384xf32>
    %66 = arith.mulf %63, %65 : vector<16x384xf32>
    %67 = arith.addf %62, %66 : vector<16x384xf32>
    %c1_44 = arith.constant 1 : index
    %c96_45 = arith.constant 96 : index
    %68 = vector.load %arg9[%c1_44, %c96_45] : memref<22x528xf32, #tpu.memory_space<vmem>>, vector<16x384xf32>
    %c11 = arith.constant 11 : index
    %c0_46 = arith.constant 0 : index
    %69 = vector.load %arg4[%c11, %c0_46] : memref<49x384xf32, #tpu.memory_space<vmem>>, vector<1x384xf32>
    %70 = vector.broadcast %69 : vector<1x384xf32> to vector<16x384xf32>
    %71 = arith.mulf %68, %70 : vector<16x384xf32>
    %72 = arith.addf %67, %71 : vector<16x384xf32>
    %c1_47 = arith.constant 1 : index
    %c120_48 = arith.constant 120 : index
    %73 = vector.load %arg9[%c1_47, %c120_48] : memref<22x528xf32, #tpu.memory_space<vmem>>, vector<16x384xf32>
    %c12 = arith.constant 12 : index
    %c0_49 = arith.constant 0 : index
    %74 = vector.load %arg4[%c12, %c0_49] : memref<49x384xf32, #tpu.memory_space<vmem>>, vector<1x384xf32>
    %75 = vector.broadcast %74 : vector<1x384xf32> to vector<16x384xf32>
    %76 = arith.mulf %73, %75 : vector<16x384xf32>
    %77 = arith.addf %72, %76 : vector<16x384xf32>
    %c1_50 = arith.constant 1 : index
    %c144_51 = arith.constant 144 : index
    %78 = vector.load %arg9[%c1_50, %c144_51] : memref<22x528xf32, #tpu.memory_space<vmem>>, vector<16x384xf32>
    %c13 = arith.constant 13 : index
    %c0_52 = arith.constant 0 : index
    %79 = vector.load %arg4[%c13, %c0_52] : memref<49x384xf32, #tpu.memory_space<vmem>>, vector<1x384xf32>
    %80 = vector.broadcast %79 : vector<1x384xf32> to vector<16x384xf32>
    %81 = arith.mulf %78, %80 : vector<16x384xf32>
    %82 = arith.addf %77, %81 : vector<16x384xf32>
    %c2_53 = arith.constant 2 : index
    %c0_54 = arith.constant 0 : index
    %83 = vector.load %arg9[%c2_53, %c0_54] : memref<22x528xf32, #tpu.memory_space<vmem>>, vector<16x384xf32>
    %c14 = arith.constant 14 : index
    %c0_55 = arith.constant 0 : index
    %84 = vector.load %arg4[%c14, %c0_55] : memref<49x384xf32, #tpu.memory_space<vmem>>, vector<1x384xf32>
    %85 = vector.broadcast %84 : vector<1x384xf32> to vector<16x384xf32>
    %86 = arith.mulf %83, %85 : vector<16x384xf32>
    %87 = arith.addf %82, %86 : vector<16x384xf32>
    %c2_56 = arith.constant 2 : index
    %c24_57 = arith.constant 24 : index
    %88 = vector.load %arg9[%c2_56, %c24_57] : memref<22x528xf32, #tpu.memory_space<vmem>>, vector<16x384xf32>
    %c15 = arith.constant 15 : index
    %c0_58 = arith.constant 0 : index
    %89 = vector.load %arg4[%c15, %c0_58] : memref<49x384xf32, #tpu.memory_space<vmem>>, vector<1x384xf32>
    %90 = vector.broadcast %89 : vector<1x384xf32> to vector<16x384xf32>
    %91 = arith.mulf %88, %90 : vector<16x384xf32>
    %92 = arith.addf %87, %91 : vector<16x384xf32>
    %c2_59 = arith.constant 2 : index
    %c48_60 = arith.constant 48 : index
    %93 = vector.load %arg9[%c2_59, %c48_60] : memref<22x528xf32, #tpu.memory_space<vmem>>, vector<16x384xf32>
    %c16 = arith.constant 16 : index
    %c0_61 = arith.constant 0 : index
    %94 = vector.load %arg4[%c16, %c0_61] : memref<49x384xf32, #tpu.memory_space<vmem>>, vector<1x384xf32>
    %95 = vector.broadcast %94 : vector<1x384xf32> to vector<16x384xf32>
    %96 = arith.mulf %93, %95 : vector<16x384xf32>
    %97 = arith.addf %92, %96 : vector<16x384xf32>
    %c2_62 = arith.constant 2 : index
    %c72_63 = arith.constant 72 : index
    %98 = vector.load %arg9[%c2_62, %c72_63] : memref<22x528xf32, #tpu.memory_space<vmem>>, vector<16x384xf32>
    %c17 = arith.constant 17 : index
    %c0_64 = arith.constant 0 : index
    %99 = vector.load %arg4[%c17, %c0_64] : memref<49x384xf32, #tpu.memory_space<vmem>>, vector<1x384xf32>
    %100 = vector.broadcast %99 : vector<1x384xf32> to vector<16x384xf32>
    %101 = arith.mulf %98, %100 : vector<16x384xf32>
    %102 = arith.addf %97, %101 : vector<16x384xf32>
    %c2_65 = arith.constant 2 : index
    %c96_66 = arith.constant 96 : index
    %103 = vector.load %arg9[%c2_65, %c96_66] : memref<22x528xf32, #tpu.memory_space<vmem>>, vector<16x384xf32>
    %c18 = arith.constant 18 : index
    %c0_67 = arith.constant 0 : index
    %104 = vector.load %arg4[%c18, %c0_67] : memref<49x384xf32, #tpu.memory_space<vmem>>, vector<1x384xf32>
    %105 = vector.broadcast %104 : vector<1x384xf32> to vector<16x384xf32>
    %106 = arith.mulf %103, %105 : vector<16x384xf32>
    %107 = arith.addf %102, %106 : vector<16x384xf32>
    %c2_68 = arith.constant 2 : index
    %c120_69 = arith.constant 120 : index
    %108 = vector.load %arg9[%c2_68, %c120_69] : memref<22x528xf32, #tpu.memory_space<vmem>>, vector<16x384xf32>
    %c19_70 = arith.constant 19 : index
    %c0_71 = arith.constant 0 : index
    %109 = vector.load %arg4[%c19_70, %c0_71] : memref<49x384xf32, #tpu.memory_space<vmem>>, vector<1x384xf32>
    %110 = vector.broadcast %109 : vector<1x384xf32> to vector<16x384xf32>
    %111 = arith.mulf %108, %110 : vector<16x384xf32>
    %112 = arith.addf %107, %111 : vector<16x384xf32>
    %c2_72 = arith.constant 2 : index
    %c144_73 = arith.constant 144 : index
    %113 = vector.load %arg9[%c2_72, %c144_73] : memref<22x528xf32, #tpu.memory_space<vmem>>, vector<16x384xf32>
    %c20 = arith.constant 20 : index
    %c0_74 = arith.constant 0 : index
    %114 = vector.load %arg4[%c20, %c0_74] : memref<49x384xf32, #tpu.memory_space<vmem>>, vector<1x384xf32>
    %115 = vector.broadcast %114 : vector<1x384xf32> to vector<16x384xf32>
    %116 = arith.mulf %113, %115 : vector<16x384xf32>
    %117 = arith.addf %112, %116 : vector<16x384xf32>
    %c3_75 = arith.constant 3 : index
    %c0_76 = arith.constant 0 : index
    %118 = vector.load %arg9[%c3_75, %c0_76] : memref<22x528xf32, #tpu.memory_space<vmem>>, vector<16x384xf32>
    %c21 = arith.constant 21 : index
    %c0_77 = arith.constant 0 : index
    %119 = vector.load %arg4[%c21, %c0_77] : memref<49x384xf32, #tpu.memory_space<vmem>>, vector<1x384xf32>
    %120 = vector.broadcast %119 : vector<1x384xf32> to vector<16x384xf32>
    %121 = arith.mulf %118, %120 : vector<16x384xf32>
    %122 = arith.addf %117, %121 : vector<16x384xf32>
    %c3_78 = arith.constant 3 : index
    %c24_79 = arith.constant 24 : index
    %123 = vector.load %arg9[%c3_78, %c24_79] : memref<22x528xf32, #tpu.memory_space<vmem>>, vector<16x384xf32>
    %c22 = arith.constant 22 : index
    %c0_80 = arith.constant 0 : index
    %124 = vector.load %arg4[%c22, %c0_80] : memref<49x384xf32, #tpu.memory_space<vmem>>, vector<1x384xf32>
    %125 = vector.broadcast %124 : vector<1x384xf32> to vector<16x384xf32>
    %126 = arith.mulf %123, %125 : vector<16x384xf32>
    %127 = arith.addf %122, %126 : vector<16x384xf32>
    %c3_81 = arith.constant 3 : index
    %c48_82 = arith.constant 48 : index
    %128 = vector.load %arg9[%c3_81, %c48_82] : memref<22x528xf32, #tpu.memory_space<vmem>>, vector<16x384xf32>
    %c23 = arith.constant 23 : index
    %c0_83 = arith.constant 0 : index
    %129 = vector.load %arg4[%c23, %c0_83] : memref<49x384xf32, #tpu.memory_space<vmem>>, vector<1x384xf32>
    %130 = vector.broadcast %129 : vector<1x384xf32> to vector<16x384xf32>
    %131 = arith.mulf %128, %130 : vector<16x384xf32>
    %132 = arith.addf %127, %131 : vector<16x384xf32>
    %c3_84 = arith.constant 3 : index
    %c72_85 = arith.constant 72 : index
    %133 = vector.load %arg9[%c3_84, %c72_85] : memref<22x528xf32, #tpu.memory_space<vmem>>, vector<16x384xf32>
    %c24_86 = arith.constant 24 : index
    %c0_87 = arith.constant 0 : index
    %134 = vector.load %arg4[%c24_86, %c0_87] : memref<49x384xf32, #tpu.memory_space<vmem>>, vector<1x384xf32>
    %135 = vector.broadcast %134 : vector<1x384xf32> to vector<16x384xf32>
    %136 = arith.mulf %133, %135 : vector<16x384xf32>
    %137 = arith.addf %132, %136 : vector<16x384xf32>
    %c3_88 = arith.constant 3 : index
    %c96_89 = arith.constant 96 : index
    %138 = vector.load %arg9[%c3_88, %c96_89] : memref<22x528xf32, #tpu.memory_space<vmem>>, vector<16x384xf32>
    %c25 = arith.constant 25 : index
    %c0_90 = arith.constant 0 : index
    %139 = vector.load %arg4[%c25, %c0_90] : memref<49x384xf32, #tpu.memory_space<vmem>>, vector<1x384xf32>
    %140 = vector.broadcast %139 : vector<1x384xf32> to vector<16x384xf32>
    %141 = arith.mulf %138, %140 : vector<16x384xf32>
    %142 = arith.addf %137, %141 : vector<16x384xf32>
    %c3_91 = arith.constant 3 : index
    %c120_92 = arith.constant 120 : index
    %143 = vector.load %arg9[%c3_91, %c120_92] : memref<22x528xf32, #tpu.memory_space<vmem>>, vector<16x384xf32>
    %c26 = arith.constant 26 : index
    %c0_93 = arith.constant 0 : index
    %144 = vector.load %arg4[%c26, %c0_93] : memref<49x384xf32, #tpu.memory_space<vmem>>, vector<1x384xf32>
    %145 = vector.broadcast %144 : vector<1x384xf32> to vector<16x384xf32>
    %146 = arith.mulf %143, %145 : vector<16x384xf32>
    %147 = arith.addf %142, %146 : vector<16x384xf32>
    %c3_94 = arith.constant 3 : index
    %c144_95 = arith.constant 144 : index
    %148 = vector.load %arg9[%c3_94, %c144_95] : memref<22x528xf32, #tpu.memory_space<vmem>>, vector<16x384xf32>
    %c27 = arith.constant 27 : index
    %c0_96 = arith.constant 0 : index
    %149 = vector.load %arg4[%c27, %c0_96] : memref<49x384xf32, #tpu.memory_space<vmem>>, vector<1x384xf32>
    %150 = vector.broadcast %149 : vector<1x384xf32> to vector<16x384xf32>
    %151 = arith.mulf %148, %150 : vector<16x384xf32>
    %152 = arith.addf %147, %151 : vector<16x384xf32>
    %c4_97 = arith.constant 4 : index
    %c0_98 = arith.constant 0 : index
    %153 = vector.load %arg9[%c4_97, %c0_98] : memref<22x528xf32, #tpu.memory_space<vmem>>, vector<16x384xf32>
    %c28 = arith.constant 28 : index
    %c0_99 = arith.constant 0 : index
    %154 = vector.load %arg4[%c28, %c0_99] : memref<49x384xf32, #tpu.memory_space<vmem>>, vector<1x384xf32>
    %155 = vector.broadcast %154 : vector<1x384xf32> to vector<16x384xf32>
    %156 = arith.mulf %153, %155 : vector<16x384xf32>
    %157 = arith.addf %152, %156 : vector<16x384xf32>
    %c4_100 = arith.constant 4 : index
    %c24_101 = arith.constant 24 : index
    %158 = vector.load %arg9[%c4_100, %c24_101] : memref<22x528xf32, #tpu.memory_space<vmem>>, vector<16x384xf32>
    %c29 = arith.constant 29 : index
    %c0_102 = arith.constant 0 : index
    %159 = vector.load %arg4[%c29, %c0_102] : memref<49x384xf32, #tpu.memory_space<vmem>>, vector<1x384xf32>
    %160 = vector.broadcast %159 : vector<1x384xf32> to vector<16x384xf32>
    %161 = arith.mulf %158, %160 : vector<16x384xf32>
    %162 = arith.addf %157, %161 : vector<16x384xf32>
    %c4_103 = arith.constant 4 : index
    %c48_104 = arith.constant 48 : index
    %163 = vector.load %arg9[%c4_103, %c48_104] : memref<22x528xf32, #tpu.memory_space<vmem>>, vector<16x384xf32>
    %c30 = arith.constant 30 : index
    %c0_105 = arith.constant 0 : index
    %164 = vector.load %arg4[%c30, %c0_105] : memref<49x384xf32, #tpu.memory_space<vmem>>, vector<1x384xf32>
    %165 = vector.broadcast %164 : vector<1x384xf32> to vector<16x384xf32>
    %166 = arith.mulf %163, %165 : vector<16x384xf32>
    %167 = arith.addf %162, %166 : vector<16x384xf32>
    %c4_106 = arith.constant 4 : index
    %c72_107 = arith.constant 72 : index
    %168 = vector.load %arg9[%c4_106, %c72_107] : memref<22x528xf32, #tpu.memory_space<vmem>>, vector<16x384xf32>
    %c31 = arith.constant 31 : index
    %c0_108 = arith.constant 0 : index
    %169 = vector.load %arg4[%c31, %c0_108] : memref<49x384xf32, #tpu.memory_space<vmem>>, vector<1x384xf32>
    %170 = vector.broadcast %169 : vector<1x384xf32> to vector<16x384xf32>
    %171 = arith.mulf %168, %170 : vector<16x384xf32>
    %172 = arith.addf %167, %171 : vector<16x384xf32>
    %c4_109 = arith.constant 4 : index
    %c96_110 = arith.constant 96 : index
    %173 = vector.load %arg9[%c4_109, %c96_110] : memref<22x528xf32, #tpu.memory_space<vmem>>, vector<16x384xf32>
    %c32 = arith.constant 32 : index
    %c0_111 = arith.constant 0 : index
    %174 = vector.load %arg4[%c32, %c0_111] : memref<49x384xf32, #tpu.memory_space<vmem>>, vector<1x384xf32>
    %175 = vector.broadcast %174 : vector<1x384xf32> to vector<16x384xf32>
    %176 = arith.mulf %173, %175 : vector<16x384xf32>
    %177 = arith.addf %172, %176 : vector<16x384xf32>
    %c4_112 = arith.constant 4 : index
    %c120_113 = arith.constant 120 : index
    %178 = vector.load %arg9[%c4_112, %c120_113] : memref<22x528xf32, #tpu.memory_space<vmem>>, vector<16x384xf32>
    %c33 = arith.constant 33 : index
    %c0_114 = arith.constant 0 : index
    %179 = vector.load %arg4[%c33, %c0_114] : memref<49x384xf32, #tpu.memory_space<vmem>>, vector<1x384xf32>
    %180 = vector.broadcast %179 : vector<1x384xf32> to vector<16x384xf32>
    %181 = arith.mulf %178, %180 : vector<16x384xf32>
    %182 = arith.addf %177, %181 : vector<16x384xf32>
    %c4_115 = arith.constant 4 : index
    %c144_116 = arith.constant 144 : index
    %183 = vector.load %arg9[%c4_115, %c144_116] : memref<22x528xf32, #tpu.memory_space<vmem>>, vector<16x384xf32>
    %c34 = arith.constant 34 : index
    %c0_117 = arith.constant 0 : index
    %184 = vector.load %arg4[%c34, %c0_117] : memref<49x384xf32, #tpu.memory_space<vmem>>, vector<1x384xf32>
    %185 = vector.broadcast %184 : vector<1x384xf32> to vector<16x384xf32>
    %186 = arith.mulf %183, %185 : vector<16x384xf32>
    %187 = arith.addf %182, %186 : vector<16x384xf32>
    %c5_118 = arith.constant 5 : index
    %c0_119 = arith.constant 0 : index
    %188 = vector.load %arg9[%c5_118, %c0_119] : memref<22x528xf32, #tpu.memory_space<vmem>>, vector<16x384xf32>
    %c35 = arith.constant 35 : index
    %c0_120 = arith.constant 0 : index
    %189 = vector.load %arg4[%c35, %c0_120] : memref<49x384xf32, #tpu.memory_space<vmem>>, vector<1x384xf32>
    %190 = vector.broadcast %189 : vector<1x384xf32> to vector<16x384xf32>
    %191 = arith.mulf %188, %190 : vector<16x384xf32>
    %192 = arith.addf %187, %191 : vector<16x384xf32>
    %c5_121 = arith.constant 5 : index
    %c24_122 = arith.constant 24 : index
    %193 = vector.load %arg9[%c5_121, %c24_122] : memref<22x528xf32, #tpu.memory_space<vmem>>, vector<16x384xf32>
    %c36 = arith.constant 36 : index
    %c0_123 = arith.constant 0 : index
    %194 = vector.load %arg4[%c36, %c0_123] : memref<49x384xf32, #tpu.memory_space<vmem>>, vector<1x384xf32>
    %195 = vector.broadcast %194 : vector<1x384xf32> to vector<16x384xf32>
    %196 = arith.mulf %193, %195 : vector<16x384xf32>
    %197 = arith.addf %192, %196 : vector<16x384xf32>
    %c5_124 = arith.constant 5 : index
    %c48_125 = arith.constant 48 : index
    %198 = vector.load %arg9[%c5_124, %c48_125] : memref<22x528xf32, #tpu.memory_space<vmem>>, vector<16x384xf32>
    %c37 = arith.constant 37 : index
    %c0_126 = arith.constant 0 : index
    %199 = vector.load %arg4[%c37, %c0_126] : memref<49x384xf32, #tpu.memory_space<vmem>>, vector<1x384xf32>
    %200 = vector.broadcast %199 : vector<1x384xf32> to vector<16x384xf32>
    %201 = arith.mulf %198, %200 : vector<16x384xf32>
    %202 = arith.addf %197, %201 : vector<16x384xf32>
    %c5_127 = arith.constant 5 : index
    %c72_128 = arith.constant 72 : index
    %203 = vector.load %arg9[%c5_127, %c72_128] : memref<22x528xf32, #tpu.memory_space<vmem>>, vector<16x384xf32>
    %c38 = arith.constant 38 : index
    %c0_129 = arith.constant 0 : index
    %204 = vector.load %arg4[%c38, %c0_129] : memref<49x384xf32, #tpu.memory_space<vmem>>, vector<1x384xf32>
    %205 = vector.broadcast %204 : vector<1x384xf32> to vector<16x384xf32>
    %206 = arith.mulf %203, %205 : vector<16x384xf32>
    %207 = arith.addf %202, %206 : vector<16x384xf32>
    %c5_130 = arith.constant 5 : index
    %c96_131 = arith.constant 96 : index
    %208 = vector.load %arg9[%c5_130, %c96_131] : memref<22x528xf32, #tpu.memory_space<vmem>>, vector<16x384xf32>
    %c39 = arith.constant 39 : index
    %c0_132 = arith.constant 0 : index
    %209 = vector.load %arg4[%c39, %c0_132] : memref<49x384xf32, #tpu.memory_space<vmem>>, vector<1x384xf32>
    %210 = vector.broadcast %209 : vector<1x384xf32> to vector<16x384xf32>
    %211 = arith.mulf %208, %210 : vector<16x384xf32>
    %212 = arith.addf %207, %211 : vector<16x384xf32>
    %c5_133 = arith.constant 5 : index
    %c120_134 = arith.constant 120 : index
    %213 = vector.load %arg9[%c5_133, %c120_134] : memref<22x528xf32, #tpu.memory_space<vmem>>, vector<16x384xf32>
    %c40 = arith.constant 40 : index
    %c0_135 = arith.constant 0 : index
    %214 = vector.load %arg4[%c40, %c0_135] : memref<49x384xf32, #tpu.memory_space<vmem>>, vector<1x384xf32>
    %215 = vector.broadcast %214 : vector<1x384xf32> to vector<16x384xf32>
    %216 = arith.mulf %213, %215 : vector<16x384xf32>
    %217 = arith.addf %212, %216 : vector<16x384xf32>
    %c5_136 = arith.constant 5 : index
    %c144_137 = arith.constant 144 : index
    %218 = vector.load %arg9[%c5_136, %c144_137] : memref<22x528xf32, #tpu.memory_space<vmem>>, vector<16x384xf32>
    %c41 = arith.constant 41 : index
    %c0_138 = arith.constant 0 : index
    %219 = vector.load %arg4[%c41, %c0_138] : memref<49x384xf32, #tpu.memory_space<vmem>>, vector<1x384xf32>
    %220 = vector.broadcast %219 : vector<1x384xf32> to vector<16x384xf32>
    %221 = arith.mulf %218, %220 : vector<16x384xf32>
    %222 = arith.addf %217, %221 : vector<16x384xf32>
    %c6_139 = arith.constant 6 : index
    %c0_140 = arith.constant 0 : index
    %223 = vector.load %arg9[%c6_139, %c0_140] : memref<22x528xf32, #tpu.memory_space<vmem>>, vector<16x384xf32>
    %c42 = arith.constant 42 : index
    %c0_141 = arith.constant 0 : index
    %224 = vector.load %arg4[%c42, %c0_141] : memref<49x384xf32, #tpu.memory_space<vmem>>, vector<1x384xf32>
    %225 = vector.broadcast %224 : vector<1x384xf32> to vector<16x384xf32>
    %226 = arith.mulf %223, %225 : vector<16x384xf32>
    %227 = arith.addf %222, %226 : vector<16x384xf32>
    %c6_142 = arith.constant 6 : index
    %c24_143 = arith.constant 24 : index
    %228 = vector.load %arg9[%c6_142, %c24_143] : memref<22x528xf32, #tpu.memory_space<vmem>>, vector<16x384xf32>
    %c43 = arith.constant 43 : index
    %c0_144 = arith.constant 0 : index
    %229 = vector.load %arg4[%c43, %c0_144] : memref<49x384xf32, #tpu.memory_space<vmem>>, vector<1x384xf32>
    %230 = vector.broadcast %229 : vector<1x384xf32> to vector<16x384xf32>
    %231 = arith.mulf %228, %230 : vector<16x384xf32>
    %232 = arith.addf %227, %231 : vector<16x384xf32>
    %c6_145 = arith.constant 6 : index
    %c48_146 = arith.constant 48 : index
    %233 = vector.load %arg9[%c6_145, %c48_146] : memref<22x528xf32, #tpu.memory_space<vmem>>, vector<16x384xf32>
    %c44 = arith.constant 44 : index
    %c0_147 = arith.constant 0 : index
    %234 = vector.load %arg4[%c44, %c0_147] : memref<49x384xf32, #tpu.memory_space<vmem>>, vector<1x384xf32>
    %235 = vector.broadcast %234 : vector<1x384xf32> to vector<16x384xf32>
    %236 = arith.mulf %233, %235 : vector<16x384xf32>
    %237 = arith.addf %232, %236 : vector<16x384xf32>
    %c6_148 = arith.constant 6 : index
    %c72_149 = arith.constant 72 : index
    %238 = vector.load %arg9[%c6_148, %c72_149] : memref<22x528xf32, #tpu.memory_space<vmem>>, vector<16x384xf32>
    %c45 = arith.constant 45 : index
    %c0_150 = arith.constant 0 : index
    %239 = vector.load %arg4[%c45, %c0_150] : memref<49x384xf32, #tpu.memory_space<vmem>>, vector<1x384xf32>
    %240 = vector.broadcast %239 : vector<1x384xf32> to vector<16x384xf32>
    %241 = arith.mulf %238, %240 : vector<16x384xf32>
    %242 = arith.addf %237, %241 : vector<16x384xf32>
    %c6_151 = arith.constant 6 : index
    %c96_152 = arith.constant 96 : index
    %243 = vector.load %arg9[%c6_151, %c96_152] : memref<22x528xf32, #tpu.memory_space<vmem>>, vector<16x384xf32>
    %c46 = arith.constant 46 : index
    %c0_153 = arith.constant 0 : index
    %244 = vector.load %arg4[%c46, %c0_153] : memref<49x384xf32, #tpu.memory_space<vmem>>, vector<1x384xf32>
    %245 = vector.broadcast %244 : vector<1x384xf32> to vector<16x384xf32>
    %246 = arith.mulf %243, %245 : vector<16x384xf32>
    %247 = arith.addf %242, %246 : vector<16x384xf32>
    %c6_154 = arith.constant 6 : index
    %c120_155 = arith.constant 120 : index
    %248 = vector.load %arg9[%c6_154, %c120_155] : memref<22x528xf32, #tpu.memory_space<vmem>>, vector<16x384xf32>
    %c47 = arith.constant 47 : index
    %c0_156 = arith.constant 0 : index
    %249 = vector.load %arg4[%c47, %c0_156] : memref<49x384xf32, #tpu.memory_space<vmem>>, vector<1x384xf32>
    %250 = vector.broadcast %249 : vector<1x384xf32> to vector<16x384xf32>
    %251 = arith.mulf %248, %250 : vector<16x384xf32>
    %252 = arith.addf %247, %251 : vector<16x384xf32>
    %c6_157 = arith.constant 6 : index
    %c144_158 = arith.constant 144 : index
    %253 = vector.load %arg9[%c6_157, %c144_158] : memref<22x528xf32, #tpu.memory_space<vmem>>, vector<16x384xf32>
    %c48_159 = arith.constant 48 : index
    %c0_160 = arith.constant 0 : index
    %254 = vector.load %arg4[%c48_159, %c0_160] : memref<49x384xf32, #tpu.memory_space<vmem>>, vector<1x384xf32>
    %255 = vector.broadcast %254 : vector<1x384xf32> to vector<16x384xf32>
    %256 = arith.mulf %253, %255 : vector<16x384xf32>
    %257 = arith.addf %252, %256 : vector<16x384xf32>
    %c0_161 = arith.constant 0 : index
    %c0_162 = arith.constant 0 : index
    %258 = vector.load %arg5[%c0_161, %c0_162] : memref<512x512xf32, #tpu.memory_space<vmem>>, vector<512x512xf32>
    %cst_163 = arith.constant dense<0.000000e+00> : vector<16x512xf32>
    %259 = tpu.matmul %1, %258, %cst_163 {dimension_numbers = #tpu.dot_dimension_numbers<[1], [0], [0], [1], [0, 0, 1, 1], [], []>} : vector<16x512xf32>, vector<512x512xf32>, vector<16x512xf32> -> vector<16x512xf32>
    %c0_164 = arith.constant 0 : index
    %c0_165 = arith.constant 0 : index
    %260 = vector.load %arg6[%c0_164, %c0_165] : memref<384x512xf32, #tpu.memory_space<vmem>>, vector<384x512xf32>
    %cst_166 = arith.constant dense<0.000000e+00> : vector<16x512xf32>
    %261 = tpu.matmul %257, %260, %cst_166 {dimension_numbers = #tpu.dot_dimension_numbers<[1], [0], [0], [1], [0, 0, 1, 1], [], []>} : vector<16x384xf32>, vector<384x512xf32>, vector<16x512xf32> -> vector<16x512xf32>
    %262 = arith.addf %259, %261 : vector<16x512xf32>
    %c0_167 = arith.constant 0 : index
    %c0_168 = arith.constant 0 : index
    %263 = vector.load %arg7[%c0_167, %c0_168] : memref<1x512xf32, #tpu.memory_space<vmem>>, vector<1x512xf32>
    %264 = vector.broadcast %263 : vector<1x512xf32> to vector<16x512xf32>
    %265 = arith.addf %262, %264 : vector<16x512xf32>
    %cst_169 = arith.constant 0.000000e+00 : f32
    %266 = vector.broadcast %cst_169 : f32 to vector<16x512xf32>
    %267 = arith.maximumf %265, %266 : vector<16x512xf32>
    %c0_170 = arith.constant 0 : index
    %c0_171 = arith.constant 0 : index
    %c0_172 = arith.constant 0 : index
    %268 = vector.load %arg8[%c0_170, %c0_171, %c0_172] : memref<1x16x512xf32, #tpu.memory_space<vmem>>, vector<1x16x512xf32>
    %269 = vector.shape_cast %268 : vector<1x16x512xf32> to vector<16x512xf32>
    %270 = vector.shape_cast %267 : vector<16x512xf32> to vector<1x16x512xf32>
    tpu.vector_store %arg8[%c0_170, %c0_171, %c0_172], %270 {strides = array<i32>} : memref<1x16x512xf32, #tpu.memory_space<vmem>>, vector<1x16x512xf32>,
    return
  }
  func.func @transform_0(%arg0: i32) -> (i32, i32, i32) {
    %c0_i32 = arith.constant 0 : i32
    %c0_i32_0 = arith.constant 0 : i32
    %c0_i32_1 = arith.constant 0 : i32
    return %arg0, %c0_i32, %c0_i32_0 : i32, i32, i32
  }
  func.func @transform_1(%arg0: i32) -> (i32, i32) {
    %c0_i32 = arith.constant 0 : i32
    %c0_i32_0 = arith.constant 0 : i32
    %c0_i32_1 = arith.constant 0 : i32
    return %c0_i32, %c0_i32_0 : i32, i32
  }
  func.func @transform_2(%arg0: i32) -> (i32, i32) {
    %c0_i32 = arith.constant 0 : i32
    %c0_i32_0 = arith.constant 0 : i32
    %c0_i32_1 = arith.constant 0 : i32
    return %c0_i32, %c0_i32_0 : i32, i32
  }
  func.func @transform_3(%arg0: i32) -> (i32, i32) {
    %c0_i32 = arith.constant 0 : i32
    %c0_i32_0 = arith.constant 0 : i32
    %c0_i32_1 = arith.constant 0 : i32
    return %c0_i32, %c0_i32_0 : i32, i32
  }
  func.func @transform_4(%arg0: i32) -> (i32, i32) {
    %c0_i32 = arith.constant 0 : i32
    %c0_i32_0 = arith.constant 0 : i32
    %c0_i32_1 = arith.constant 0 : i32
    return %c0_i32, %c0_i32_0 : i32, i32
  }
  func.func @transform_5(%arg0: i32) -> (i32, i32) {
    %c0_i32 = arith.constant 0 : i32
    %c0_i32_0 = arith.constant 0 : i32
    %c0_i32_1 = arith.constant 0 : i32
    return %c0_i32, %c0_i32_0 : i32, i32
  }
  func.func @transform_6(%arg0: i32) -> (i32, i32) {
    %c0_i32 = arith.constant 0 : i32
    %c0_i32_0 = arith.constant 0 : i32
    %c0_i32_1 = arith.constant 0 : i32
    return %c0_i32, %c0_i32_0 : i32, i32
  }
  func.func @transform_7(%arg0: i32) -> (i32, i32, i32) {
    %c0_i32 = arith.constant 0 : i32
    %c0_i32_0 = arith.constant 0 : i32
    %c0_i32_1 = arith.constant 0 : i32
    return %arg0, %c0_i32, %c0_i32_0 : i32, i32, i32
  }
}

</mosaic_0001>

<llo_original>
// kernel: aggregator_forward.1
$region0: #{aggregator_forward.1}
  #allocation0 [shape = 'u32[]', space=smem, size = 0x4, offset = 0x4, fixed_abs, tag = 'smem constant byte address 0x4 - core index']
  #allocation1 [shape = 'u32[144,128]{1,0:T(1,128)}', space=vmem, size = 0x12000, scoped, tag = 'internal scratch']
  #allocation2 [shape = 'f32[22,528]{1,0:T(8,128)}', space=vmem, size = 0xf000, scoped, tag = 'scratch operand']
  %s0 = inlined_call_operand.vmem [shape: f32[2,16,512], index: 0, kind: input, shape index: {}]
  %s1 = inlined_call_operand.hbm [shape: f32[512,384], index: 1, kind: input, shape index: {}]
  %s2 = inlined_call_operand.vmem [shape: f32[1,384], index: 2, kind: input, shape index: {}]
  %s3 = inlined_call_operand.vmem [shape: f32[49,384], index: 3, kind: input, shape index: {}]
  %s4 = inlined_call_operand.hbm [shape: f32[512,512], index: 4, kind: input, shape index: {}]
  %s5 = inlined_call_operand.hbm [shape: f32[384,512], index: 5, kind: input, shape index: {}]
  %s6 = inlined_call_operand.vmem [shape: f32[1,512], index: 6, kind: input, shape index: {}]
  %s7 = inlined_call_operand.vmem [shape: f32[2,16,512], index: 7, kind: output, shape index: {}]
  %s8 = sld [smem:[#allocation0]]
  $region73: #{aggregator_forward.1} parent=0
    _
  %s10 = ssub.s32 1, %s8
  %s11 = scalar_select 0, %s10, %s8
  $region1: #{aggregator_forward.1} parent=0
    #allocation3 [shape = 'u8[786432]{0}', space=vmem, size = 0xc0000, scoped, tag = 'input window, operand 1, single buffered']
    #allocation4 [shape = 's32[2]{0}', space=sflag, size = 0x8, scoped, tag = 'scoped memory for aggregator_forward.1']
    #allocation5 [shape = 'u8[1048576]{0}', space=vmem, size = 0x100000, scoped, tag = 'input window, operand 4, single buffered']
    #allocation6 [shape = 's32[1]{0}', space=sflag, size = 0x4, scoped, tag = 'scoped memory for aggregator_forward.1']
    #allocation7 [shape = 'u8[786432]{0}', space=vmem, size = 0xc0000, scoped, tag = 'input window, operand 5, single buffered']
    %12 = vsyncpa [#allocation4], 0
    %13 = vsyncpa [#allocation6], 0
    loop: start=0, step=1, limit=4
    $region2: #{aggregator_forward.1} parent=1 // loop_pre_header
      _
    $region3: #{aggregator_forward.1} parent=1 // loop_header
      %s15 = sphi 0, %s19
      %p16 = scmp.ge.s32.totalorder %s15, 4
      %s25 = sphi 0, %s27
      %s28 = sphi 0, %s25
      %s29 = sphi 0, %s28
      %s45 = sphi 0, %s29
      %s49 = sphi 0, %s49
      %s51 = sphi 0, %s49
      %s52 = sphi 0, %s51
      %s66 = sphi 0, %s52
      %s70 = sphi 0, %s70
      %s72 = sphi 0, %s70
      %s73 = sphi 0, %s72
      %s87 = sphi 0, %s73
      %s91 = sphi 0, %s91
      %s93 = sphi 0, %s91
      %s94 = sphi 0, %s93
      %s108 = sphi 0, %s94
      %s112 = sphi 0, %s112
      %s114 = sphi 0, %s112
      %s115 = sphi 0, %s114
      %s129 = sphi 0, %s115
      %s133 = sphi 0, %s133
      %s135 = sphi 0, %s133
      %s136 = sphi 0, %s135
      %s150 = sphi 0, %s136
      %s154 = sphi 0, %s154
      %s156 = sphi 0, %s154
      %s157 = sphi 0, %s156
      %s171 = sphi 0, %s157
      %s177 = sphi 0, %s179
      %s180 = sphi 0, %s177
      %s181 = sphi 0, %s180
      %s197 = sphi 0, %s181
    $region4: #{aggregator_forward.1} parent=1 // loop_header_branch
      %18 = sbr.rel (%p16) target = $region8
    $region5: #{aggregator_forward.1} parent=1 // loop_body
      %s20 = ssub.s32 %s15, 1
      %s21 = ssub.s32 %s15, 2
      %s22 = sadd.s32 %s15, 1
      %s23 = ssub.s32 %s15, %s22
      %p24 = scmp.eq.s32.totalorder %s23, 0
      %s26 = sadd.s32 %s25, 1
      %s27 = scalar_select %p24, %s25, %s26
      %p30 = pneg %p24
      %p31 = scmp.eq.s32.totalorder %s15, 1
      %p32 = por %p30, %p31
      %p33 = scmp.ne.s32.totalorder %s25, %s28
      %p34 = scmp.eq.s32.totalorder %s15, 0
      %p35 = por %p33, %p34
      %p36 = scmp.ne.s32.totalorder %s25, %s28
      %p37 = scmp.eq.s32.totalorder %s20, 1
      %p38 = por %p36, %p37
      %p39 = scmp.ne.s32.totalorder %s28, %s29
      %p40 = scmp.eq.s32.totalorder %s20, 0
      %p41 = por %p39, %p40
      %p42 = scmp.ne.s32.totalorder %s28, %s29
      %p43 = scmp.eq.s32.totalorder %s21, 1
      %p44 = por %p42, %p43
      %p46 = scmp.ne.s32.totalorder %s29, %s45
      %p47 = scmp.eq.s32.totalorder %s21, 0
      %p48 = por %p46, %p47
      %s50 = sadd.s32 %s49, 1
      %p53 = scmp.eq.s32.totalorder %s15, 1
      %p54 = scmp.ne.s32.totalorder %s49, %s51
      %p55 = scmp.eq.s32.totalorder %s15, 0
      %p56 = por %p54, %p55
      %p57 = scmp.ne.s32.totalorder %s49, %s51
      %p58 = scmp.eq.s32.totalorder %s20, 1
      %p59 = por %p57, %p58
      %p60 = scmp.ne.s32.totalorder %s51, %s52
      %p61 = scmp.eq.s32.totalorder %s20, 0
      %p62 = por %p60, %p61
      %p63 = scmp.ne.s32.totalorder %s51, %s52
      %p64 = scmp.eq.s32.totalorder %s21, 1
      %p65 = por %p63, %p64
      %p67 = scmp.ne.s32.totalorder %s52, %s66
      %p68 = scmp.eq.s32.totalorder %s21, 0
      %p69 = por %p67, %p68
      %s71 = sadd.s32 %s70, 1
      %p74 = scmp.eq.s32.totalorder %s15, 1
      %p75 = scmp.ne.s32.totalorder %s70, %s72
      %p76 = scmp.eq.s32.totalorder %s15, 0
      %p77 = por %p75, %p76
      %p78 = scmp.ne.s32.totalorder %s70, %s72
      %p79 = scmp.eq.s32.totalorder %s20, 1
      %p80 = por %p78, %p79
      %p81 = scmp.ne.s32.totalorder %s72, %s73
      %p82 = scmp.eq.s32.totalorder %s20, 0
      %p83 = por %p81, %p82
      %p84 = scmp.ne.s32.totalorder %s72, %s73
      %p85 = scmp.eq.s32.totalorder %s21, 1
      %p86 = por %p84, %p85
      %p88 = scmp.ne.s32.totalorder %s73, %s87
      %p89 = scmp.eq.s32.totalorder %s21, 0
      %p90 = por %p88, %p89
      %s92 = sadd.s32 %s91, 1
      %p95 = scmp.eq.s32.totalorder %s15, 1
      %p96 = scmp.ne.s32.totalorder %s91, %s93
      %p97 = scmp.eq.s32.totalorder %s15, 0
      %p98 = por %p96, %p97
      %p99 = scmp.ne.s32.totalorder %s91, %s93
      %p100 = scmp.eq.s32.totalorder %s20, 1
      %p101 = por %p99, %p100
      %p102 = scmp.ne.s32.totalorder %s93, %s94
      %p103 = scmp.eq.s32.totalorder %s20, 0
      %p104 = por %p102, %p103
      %p105 = scmp.ne.s32.totalorder %s93, %s94
      %p106 = scmp.eq.s32.totalorder %s21, 1
      %p107 = por %p105, %p106
      %p109 = scmp.ne.s32.totalorder %s94, %s108
      %p110 = scmp.eq.s32.totalorder %s21, 0
      %p111 = por %p109, %p110
      %s113 = sadd.s32 %s112, 1
      %p116 = scmp.eq.s32.totalorder %s15, 1
      %p117 = scmp.ne.s32.totalorder %s112, %s114
      %p118 = scmp.eq.s32.totalorder %s15, 0
      %p119 = por %p117, %p118
      %p120 = scmp.ne.s32.totalorder %s112, %s114
      %p121 = scmp.eq.s32.totalorder %s20, 1
      %p122 = por %p120, %p121
      %p123 = scmp.ne.s32.totalorder %s114, %s115
      %p124 = scmp.eq.s32.totalorder %s20, 0
      %p125 = por %p123, %p124
      %p126 = scmp.ne.s32.totalorder %s114, %s115
      %p127 = scmp.eq.s32.totalorder %s21, 1
      %p128 = por %p126, %p127
      %p130 = scmp.ne.s32.totalorder %s115, %s129
      %p131 = scmp.eq.s32.totalorder %s21, 0
      %p132 = por %p130, %p131
      %s134 = sadd.s32 %s133, 1
      %p137 = scmp.eq.s32.totalorder %s15, 1
      %p138 = scmp.ne.s32.totalorder %s133, %s135
      %p139 = scmp.eq.s32.totalorder %s15, 0
      %p140 = por %p138, %p139
      %p141 = scmp.ne.s32.totalorder %s133, %s135
      %p142 = scmp.eq.s32.totalorder %s20, 1
      %p143 = por %p141, %p142
      %p144 = scmp.ne.s32.totalorder %s135, %s136
      %p145 = scmp.eq.s32.totalorder %s20, 0
      %p146 = por %p144, %p145
      %p147 = scmp.ne.s32.totalorder %s135, %s136
      %p148 = scmp.eq.s32.totalorder %s21, 1
      %p149 = por %p147, %p148
      %p151 = scmp.ne.s32.totalorder %s136, %s150
      %p152 = scmp.eq.s32.totalorder %s21, 0
      %p153 = por %p151, %p152
      %s155 = sadd.s32 %s154, 1
      %p158 = scmp.eq.s32.totalorder %s15, 1
      %p159 = scmp.ne.s32.totalorder %s154, %s156
      %p160 = scmp.eq.s32.totalorder %s15, 0
      %p161 = por %p159, %p160
      %p162 = scmp.ne.s32.totalorder %s154, %s156
      %p163 = scmp.eq.s32.totalorder %s20, 1
      %p164 = por %p162, %p163
      %p165 = scmp.ne.s32.totalorder %s156, %s157
      %p166 = scmp.eq.s32.totalorder %s20, 0
      %p167 = por %p165, %p166
      %p168 = scmp.ne.s32.totalorder %s156, %s157
      %p169 = scmp.eq.s32.totalorder %s21, 1
      %p170 = por %p168, %p169
      %p172 = scmp.ne.s32.totalorder %s157, %s171
      %p173 = scmp.eq.s32.totalorder %s21, 0
      %p174 = por %p172, %p173
      %s175 = ssub.s32 %s15, %s22
      %p176 = scmp.eq.s32.totalorder %s175, 0
      %s178 = sadd.s32 %s177, 1
      %s179 = scalar_select %p176, %s177, %s178
      %p182 = pneg %p176
      %p183 = scmp.eq.s32.totalorder %s15, 1
      %p184 = por %p182, %p183
      %p185 = scmp.ne.s32.totalorder %s177, %s180
      %p186 = scmp.eq.s32.totalorder %s15, 0
      %p187 = por %p185, %p186
      %p188 = scmp.ne.s32.totalorder %s177, %s180
      %p189 = scmp.eq.s32.totalorder %s20, 1
      %p190 = por %p188, %p189
      %p191 = scmp.ne.s32.totalorder %s180, %s181
      %p192 = scmp.eq.s32.totalorder %s20, 0
      %p193 = por %p191, %p192
      %p194 = scmp.ne.s32.totalorder %s180, %s181
      %p195 = scmp.eq.s32.totalorder %s21, 1
      %p196 = por %p194, %p195
      %p198 = scmp.ne.s32.totalorder %s181, %s197
      %p199 = scmp.eq.s32.totalorder %s21, 0
      %p200 = por %p198, %p199
      %p201 = scmp.le.s32.totalorder 1, %s15
      %p202 = scmp.lt.s32.totalorder %s15, 3
      %p203 = pnand %p201, %p202
      %p204 = pneg %p203
      // Predicated region
      $region9: #{aggregator_forward.1} parent=5 // pred_check
        _
      $region10: #{aggregator_forward.1} parent=5 // pred_check_branch
        %206 = sbr.rel (%p203) target = $region12
      $region11: #{aggregator_forward.1} parent=5 // pred_region
        %s207 = ssub.s32 %s15, 1
        // Predicated region
        $region13: #{aggregator_forward.1} parent=11 // pred_check
          %p208 = pneg %p62
        $region14: #{aggregator_forward.1} parent=11 // pred_check_branch
          %210 = sbr.rel (%p208) target = $region16
        $region15: #{aggregator_forward.1} parent=11 // pred_region
          %s212 = ssub.s32 24576, 24576
          %213 = vsyncadd [#allocation4], %s212
          %s214 = sshll.u32 [#allocation3], 4
          %s215 = int_to_ptr.vmem [resolvable:$true] %s214
          %220 = dma.hbm_to_vmem [thread:$0]  %s1, 24576, %s215, [#allocation4], 384, 384, 24
        $region16: #{aggregator_forward.1} parent=11 // pred_fallthru
          _
        // Predicated region
        $region17: #{aggregator_forward.1} parent=11 // pred_check
          %p221 = pneg %p83
        $region18: #{aggregator_forward.1} parent=11 // pred_check_branch
          %223 = sbr.rel (%p221) target = $region20
        $region19: #{aggregator_forward.1} parent=11 // pred_region
          _
        $region20: #{aggregator_forward.1} parent=11 // pred_fallthru
          _
        // Predicated region
        $region21: #{aggregator_forward.1} parent=11 // pred_check
          %p224 = pneg %p104
        $region22: #{aggregator_forward.1} parent=11 // pred_check_branch
          %226 = sbr.rel (%p224) target = $region24
        $region23: #{aggregator_forward.1} parent=11 // pred_region
          _
        $region24: #{aggregator_forward.1} parent=11 // pred_fallthru
          _
        // Predicated region
        $region25: #{aggregator_forward.1} parent=11 // pred_check
          %p227 = pneg %p125
        $region26: #{aggregator_forward.1} parent=11 // pred_check_branch
          %229 = sbr.rel (%p227) target = $region28
        $region27: #{aggregator_forward.1} parent=11 // pred_region
          %s231 = ssub.s32 32768, 32768
          %232 = vsyncadd [#allocation6], %s231
          %s233 = sshll.u32 [#allocation5], 4
          %s234 = int_to_ptr.vmem [resolvable:$true] %s233
          %239 = dma.hbm_to_vmem [thread:$0]  %s4, 32768, %s234, [#allocation6], 512, 512, 32
        $region28: #{aggregator_forward.1} parent=11 // pred_fallthru
          _
        // Predicated region
        $region29: #{aggregator_forward.1} parent=11 // pred_check
          %p240 = pneg %p146
        $region30: #{aggregator_forward.1} parent=11 // pred_check_branch
          %242 = sbr.rel (%p240) target = $region32
        $region31: #{aggregator_forward.1} parent=11 // pred_region
          %s244 = ssub.s32 24576, 24576
          %245 = vsyncadd [#allocation6], %s244
          %s246 = sshll.u32 [#allocation7], 4
          %s247 = int_to_ptr.vmem [resolvable:$true] %s246
          %252 = dma.hbm_to_vmem [thread:$0]  %s5, 24576, %s247, [#allocation6], 512, 512, 32
        $region32: #{aggregator_forward.1} parent=11 // pred_fallthru
          _
        // Predicated region
        $region33: #{aggregator_forward.1} parent=11 // pred_check
          %p253 = pneg %p167
        $region34: #{aggregator_forward.1} parent=11 // pred_check_branch
          %255 = sbr.rel (%p253) target = $region36
        $region35: #{aggregator_forward.1} parent=11 // pred_region
          _
        $region36: #{aggregator_forward.1} parent=11 // pred_fallthru
          _
      $region12: #{aggregator_forward.1} parent=5 // pred_fallthru
        _
      %p256 = scmp.lt.s32.totalorder %s15, 2
      // Predicated region
      $region37: #{aggregator_forward.1} parent=5 // pred_check
        %p257 = pneg %p256
      $region38: #{aggregator_forward.1} parent=5 // pred_check_branch
        %259 = sbr.rel (%p257) target = $region40
      $region39: #{aggregator_forward.1} parent=5 // pred_region
        // Predicated region
        $region41: #{aggregator_forward.1} parent=39 // pred_check
          %p260 = pneg %p35
        $region42: #{aggregator_forward.1} parent=39 // pred_check_branch
          %262 = sbr.rel (%p260) target = $region44
        $region43: #{aggregator_forward.1} parent=39 // pred_region
          %p263 = scmp.lt.s32.totalorder %s15, 1
          %s264 = scalar_select %p263, %s15, 1
          %s265 = smul.addr %s264, 8
          %s266 = smul.addr %s265, 8
          %s267 = scalar_lea.vmem %s0, %s266
        $region44: #{aggregator_forward.1} parent=39 // pred_fallthru
          _
      $region40: #{aggregator_forward.1} parent=5 // pred_fallthru
        _
      %p268 = scmp.le.s32.totalorder 1, %s15
      %p269 = scmp.lt.s32.totalorder %s15, 3
      %p270 = pnand %p268, %p269
      %p271 = pneg %p270
      // Predicated region
      $region45: #{aggregator_forward.1} parent=5 // pred_check
        _
      $region46: #{aggregator_forward.1} parent=5 // pred_check_branch
        %273 = sbr.rel (%p270) target = $region48
      $region47: #{aggregator_forward.1} parent=5 // pred_region
        %s274 = ssub.s32 %s15, 1
        // Predicated region
        $region49: #{aggregator_forward.1} parent=47 // pred_check
          %p275 = pneg %p62
        $region50: #{aggregator_forward.1} parent=47 // pred_check_branch
          %277 = sbr.rel (%p275) target = $region52
        $region51: #{aggregator_forward.1} parent=47 // pred_region
          %278 = dma.done [#allocation4], 24576
        $region52: #{aggregator_forward.1} parent=47 // pred_fallthru
          _
        // Predicated region
        $region53: #{aggregator_forward.1} parent=47 // pred_check
          %p279 = pneg %p125
        $region54: #{aggregator_forward.1} parent=47 // pred_check_branch
          %281 = sbr.rel (%p279) target = $region56
        $region55: #{aggregator_forward.1} parent=47 // pred_region
          %282 = dma.done [#allocation6], 32768
        $region56: #{aggregator_forward.1} parent=47 // pred_fallthru
          _
        // Predicated region
        $region57: #{aggregator_forward.1} parent=47 // pred_check
          %p283 = pneg %p146
        $region58: #{aggregator_forward.1} parent=47 // pred_check_branch
          %285 = sbr.rel (%p283) target = $region60
        $region59: #{aggregator_forward.1} parent=47 // pred_region
          %286 = dma.done [#allocation6], 24576
        $region60: #{aggregator_forward.1} parent=47 // pred_fallthru
          _
        %p287 = scmp.lt.s32.totalorder %s20, 1
        %s288 = scalar_select %p287, %s20, 1
        %s289 = smul.addr %s288, 8
        %s290 = smul.addr %s289, 8
        %s291 = scalar_lea.vmem %s0, %s290
        %p292 = pneg %p41
        %p293 = pneg %p38
        %p294 = pneg %p62
        %p295 = pneg %p59
        %p296 = pneg %p83
        %p297 = pneg %p80
        %p298 = pneg %p104
        %p299 = pneg %p101
        %p300 = pneg %p125
        %p301 = pneg %p122
        %p302 = pneg %p146
        %p303 = pneg %p143
        %p304 = pneg %p167
        %p305 = pneg %p164
        %p306 = pneg %p193
        %p307 = pneg %p190
        %p308 = scmp.lt.s32.totalorder %s20, 1
        %s309 = scalar_select %p308, %s20, 1
        %s310 = smul.addr %s309, 8
        %s311 = smul.addr %s310, 8
        %s312 = scalar_lea.vmem %s7, %s311
        %p313 = scmp.lt.s32.totalorder %s20, 1
        %s314 = scalar_select %p313, %s20, 1
        %s315 = smul.addr %s314, 8
        %s316 = smul.addr %s315, 8
        %s317 = scalar_lea.vmem %s0, %s316
        %p318 = scmp.lt.s32.totalorder %s20, 1
        %s319 = scalar_select %p318, %s20, 1
        %s320 = smul.addr %s319, 8
        %s321 = smul.addr %s320, 8
        %s322 = scalar_lea.vmem %s7, %s321
        %v323 = vld [vmem:[%s317] sm:$0xff]
        %v324 = vld [vmem:[%s317 + $0x8] sm:$0xff]
        %v325 = vld [vmem:[%s317 + $0x10] sm:$0xff]
        %v326 = vld [vmem:[%s317 + $0x18] sm:$0xff]
        %v327 = vld [vmem:[%s317 + $0x20] sm:$0xff]
        %v328 = vld [vmem:[%s317 + $0x28] sm:$0xff]
        %v329 = vld [vmem:[%s317 + $0x30] sm:$0xff]
        %v330 = vld [vmem:[%s317 + $0x38] sm:$0xff]
        %v331 = vld [vmem:[#allocation3] sm:$0xff]
        %v332 = vld [vmem:[#allocation3 + $0x8] sm:$0xff]
        %v333 = vld [vmem:[#allocation3 + $0x10] sm:$0xff]
        %v334 = vld [vmem:[#allocation3 + $0x18] sm:$0xff]
        %v335 = vld [vmem:[#allocation3 + $0x20] sm:$0xff]
        %v336 = vld [vmem:[#allocation3 + $0x28] sm:$0xff]
        %v337 = vld [vmem:[#allocation3 + $0x30] sm:$0xff]
        %v338 = vld [vmem:[#allocation3 + $0x38] sm:$0xff]
        %v339 = vld [vmem:[#allocation3 + $0x40] sm:$0xff]
        %v340 = vld [vmem:[#allocation3 + $0x48] sm:$0xff]
        %v341 = vld [vmem:[#allocation3 + $0x50] sm:$0xff]
        %v342 = vld [vmem:[#allocation3 + $0x58] sm:$0xff]
        %v343 = vld [vmem:[#allocation3 + $0x60] sm:$0xff]
        %v344 = vld [vmem:[#allocation3 + $0x68] sm:$0xff]
        %v345 = vld [vmem:[#allocation3 + $0x70] sm:$0xff]
        %v346 = vld [vmem:[#allocation3 + $0x78] sm:$0xff]
        %v347 = vld [vmem:[#allocation3 + $0x80] sm:$0xff]
        %v348 = vld [vmem:[#allocation3 + $0x88] sm:$0xff]
        %v349 = vld [vmem:[#allocation3 + $0x90] sm:$0xff]
        %v350 = vld [vmem:[#allocation3 + $0x98] sm:$0xff]
        %v351 = vld [vmem:[#allocation3 + $0xa0] sm:$0xff]
        %v352 = vld [vmem:[#allocation3 + $0xa8] sm:$0xff]
        %v353 = vld [vmem:[#allocation3 + $0xb0] sm:$0xff]
        %v354 = vld [vmem:[#allocation3 + $0xb8] sm:$0xff]
        %v355 = vld [vmem:[#allocation3 + $0xc0] sm:$0xff]
        %v356 = vld [vmem:[#allocation3 + $0xc8] sm:$0xff]
        %v357 = vld [vmem:[#allocation3 + $0xd0] sm:$0xff]
        %v358 = vld [vmem:[#allocation3 + $0xd8] sm:$0xff]
        %v359 = vld [vmem:[#allocation3 + $0xe0] sm:$0xff]
        %v360 = vld [vmem:[#allocation3 + $0xe8] sm:$0xff]
        %v361 = vld [vmem:[#allocation3 + $0xf0] sm:$0xff]
        %v362 = vld [vmem:[#allocation3 + $0xf8] sm:$0xff]
        %v363 = vld [vmem:[#allocation3 + $0x100] sm:$0xff]
        %v364 = vld [vmem:[#allocation3 + $0x108] sm:$0xff]
        %v365 = vld [vmem:[#allocation3 + $0x110] sm:$0xff]
        %v366 = vld [vmem:[#allocation3 + $0x118] sm:$0xff]
        %v367 = vld [vmem:[#allocation3 + $0x120] sm:$0xff]
        %v368 = vld [vmem:[#allocation3 + $0x128] sm:$0xff]
        %v369 = vld [vmem:[#allocation3 + $0x130] sm:$0xff]
        %v370 = vld [vmem:[#allocation3 + $0x138] sm:$0xff]
        %v371 = vld [vmem:[#allocation3 + $0x140] sm:$0xff]
        %v372 = vld [vmem:[#allocation3 + $0x148] sm:$0xff]
        %v373 = vld [vmem:[#allocation3 + $0x150] sm:$0xff]
        %v374 = vld [vmem:[#allocation3 + $0x158] sm:$0xff]
        %v375 = vld [vmem:[#allocation3 + $0x160] sm:$0xff]
        %v376 = vld [vmem:[#allocation3 + $0x168] sm:$0xff]
        %v377 = vld [vmem:[#allocation3 + $0x170] sm:$0xff]
        %v378 = vld [vmem:[#allocation3 + $0x178] sm:$0xff]
        %v379 = vld [vmem:[#allocation3 + $0x180] sm:$0xff]
        %v380 = vld [vmem:[#allocation3 + $0x188] sm:$0xff]
        %v381 = vld [vmem:[#allocation3 + $0x190] sm:$0xff]
        %v382 = vld [vmem:[#allocation3 + $0x198] sm:$0xff]
        %v383 = vld [vmem:[#allocation3 + $0x1a0] sm:$0xff]
        %v384 = vld [vmem:[#allocation3 + $0x1a8] sm:$0xff]
        %v385 = vld [vmem:[#allocation3 + $0x1b0] sm:$0xff]
        %v386 = vld [vmem:[#allocation3 + $0x1b8] sm:$0xff]
        %v387 = vld [vmem:[#allocation3 + $0x1c0] sm:$0xff]
        %v388 = vld [vmem:[#allocation3 + $0x1c8] sm:$0xff]
        %v389 = vld [vmem:[#allocation3 + $0x1d0] sm:$0xff]
        %v390 = vld [vmem:[#allocation3 + $0x1d8] sm:$0xff]
        %v391 = vld [vmem:[#allocation3 + $0x1e0] sm:$0xff]
        %v392 = vld [vmem:[#allocation3 + $0x1e8] sm:$0xff]
        %v393 = vld [vmem:[#allocation3 + $0x1f0] sm:$0xff]
        %v394 = vld [vmem:[#allocation3 + $0x1f8] sm:$0xff]
        %v395 = vld [vmem:[#allocation3 + $0x200] sm:$0xff]
        %v396 = vld [vmem:[#allocation3 + $0x208] sm:$0xff]
        %v397 = vld [vmem:[#allocation3 + $0x210] sm:$0xff]
        %v398 = vld [vmem:[#allocation3 + $0x218] sm:$0xff]
        %v399 = vld [vmem:[#allocation3 + $0x220] sm:$0xff]
        %v400 = vld [vmem:[#allocation3 + $0x228] sm:$0xff]
        %v401 = vld [vmem:[#allocation3 + $0x230] sm:$0xff]
        %v402 = vld [vmem:[#allocation3 + $0x238] sm:$0xff]
        %v403 = vld [vmem:[#allocation3 + $0x240] sm:$0xff]
        %v404 = vld [vmem:[#allocation3 + $0x248] sm:$0xff]
        %v405 = vld [vmem:[#allocation3 + $0x250] sm:$0xff]
        %v406 = vld [vmem:[#allocation3 + $0x258] sm:$0xff]
        %v407 = vld [vmem:[#allocation3 + $0x260] sm:$0xff]
        %v408 = vld [vmem:[#allocation3 + $0x268] sm:$0xff]
        %v409 = vld [vmem:[#allocation3 + $0x270] sm:$0xff]
        %v410 = vld [vmem:[#allocation3 + $0x278] sm:$0xff]
        %v411 = vld [vmem:[#allocation3 + $0x280] sm:$0xff]
        %v412 = vld [vmem:[#allocation3 + $0x288] sm:$0xff]
        %v413 = vld [vmem:[#allocation3 + $0x290] sm:$0xff]
        %v414 = vld [vmem:[#allocation3 + $0x298] sm:$0xff]
        %v415 = vld [vmem:[#allocation3 + $0x2a0] sm:$0xff]
        %v416 = vld [vmem:[#allocation3 + $0x2a8] sm:$0xff]
        %v417 = vld [vmem:[#allocation3 + $0x2b0] sm:$0xff]
        %v418 = vld [vmem:[#allocation3 + $0x2b8] sm:$0xff]
        %v419 = vld [vmem:[#allocation3 + $0x2c0] sm:$0xff]
        %v420 = vld [vmem:[#allocation3 + $0x2c8] sm:$0xff]
        %v421 = vld [vmem:[#allocation3 + $0x2d0] sm:$0xff]
        %v422 = vld [vmem:[#allocation3 + $0x2d8] sm:$0xff]
        %v423 = vld [vmem:[#allocation3 + $0x2e0] sm:$0xff]
        %v424 = vld [vmem:[#allocation3 + $0x2e8] sm:$0xff]
        %v425 = vld [vmem:[#allocation3 + $0x2f0] sm:$0xff]
        %v426 = vld [vmem:[#allocation3 + $0x2f8] sm:$0xff]
        %v427 = vld [vmem:[#allocation3 + $0x300] sm:$0xff]
        %v428 = vld [vmem:[#allocation3 + $0x308] sm:$0xff]
        %v429 = vld [vmem:[#allocation3 + $0x310] sm:$0xff]
        %v430 = vld [vmem:[#allocation3 + $0x318] sm:$0xff]
        %v431 = vld [vmem:[#allocation3 + $0x320] sm:$0xff]
        %v432 = vld [vmem:[#allocation3 + $0x328] sm:$0xff]
        %v433 = vld [vmem:[#allocation3 + $0x330] sm:$0xff]
        %v434 = vld [vmem:[#allocation3 + $0x338] sm:$0xff]
        %v435 = vld [vmem:[#allocation3 + $0x340] sm:$0xff]
        %v436 = vld [vmem:[#allocation3 + $0x348] sm:$0xff]
        %v437 = vld [vmem:[#allocation3 + $0x350] sm:$0xff]
        %v438 = vld [vmem:[#allocation3 + $0x358] sm:$0xff]
        %v439 = vld [vmem:[#allocation3 + $0x360] sm:$0xff]
        %v440 = vld [vmem:[#allocation3 + $0x368] sm:$0xff]
        %v441 = vld [vmem:[#allocation3 + $0x370] sm:$0xff]
        %v442 = vld [vmem:[#allocation3 + $0x378] sm:$0xff]
        %v443 = vld [vmem:[#allocation3 + $0x380] sm:$0xff]
        %v444 = vld [vmem:[#allocation3 + $0x388] sm:$0xff]
        %v445 = vld [vmem:[#allocation3 + $0x390] sm:$0xff]
        %v446 = vld [vmem:[#allocation3 + $0x398] sm:$0xff]
        %v447 = vld [vmem:[#allocation3 + $0x3a0] sm:$0xff]
        %v448 = vld [vmem:[#allocation3 + $0x3a8] sm:$0xff]
        %v449 = vld [vmem:[#allocation3 + $0x3b0] sm:$0xff]
        %v450 = vld [vmem:[#allocation3 + $0x3b8] sm:$0xff]
        %v451 = vld [vmem:[#allocation3 + $0x3c0] sm:$0xff]
        %v452 = vld [vmem:[#allocation3 + $0x3c8] sm:$0xff]
        %v453 = vld [vmem:[#allocation3 + $0x3d0] sm:$0xff]
        %v454 = vld [vmem:[#allocation3 + $0x3d8] sm:$0xff]
        %v455 = vld [vmem:[#allocation3 + $0x3e0] sm:$0xff]
        %v456 = vld [vmem:[#allocation3 + $0x3e8] sm:$0xff]
        %v457 = vld [vmem:[#allocation3 + $0x3f0] sm:$0xff]
        %v458 = vld [vmem:[#allocation3 + $0x3f8] sm:$0xff]
        %v459 = vld [vmem:[#allocation3 + $0x400] sm:$0xff]
        %v460 = vld [vmem:[#allocation3 + $0x408] sm:$0xff]
        %v461 = vld [vmem:[#allocation3 + $0x410] sm:$0xff]
        %v462 = vld [vmem:[#allocation3 + $0x418] sm:$0xff]
        %v463 = vld [vmem:[#allocation3 + $0x420] sm:$0xff]
        %v464 = vld [vmem:[#allocation3 + $0x428] sm:$0xff]
        %v465 = vld [vmem:[#allocation3 + $0x430] sm:$0xff]
        %v466 = vld [vmem:[#allocation3 + $0x438] sm:$0xff]
        %v467 = vld [vmem:[#allocation3 + $0x440] sm:$0xff]
        %v468 = vld [vmem:[#allocation3 + $0x448] sm:$0xff]
        %v469 = vld [vmem:[#allocation3 + $0x450] sm:$0xff]
        %v470 = vld [vmem:[#allocation3 + $0x458] sm:$0xff]
        %v471 = vld [vmem:[#allocation3 + $0x460] sm:$0xff]
        %v472 = vld [vmem:[#allocation3 + $0x468] sm:$0xff]
        %v473 = vld [vmem:[#allocation3 + $0x470] sm:$0xff]
        %v474 = vld [vmem:[#allocation3 + $0x478] sm:$0xff]
        %v475 = vld [vmem:[#allocation3 + $0x480] sm:$0xff]
        %v476 = vld [vmem:[#allocation3 + $0x488] sm:$0xff]
        %v477 = vld [vmem:[#allocation3 + $0x490] sm:$0xff]
        %v478 = vld [vmem:[#allocation3 + $0x498] sm:$0xff]
        %v479 = vld [vmem:[#allocation3 + $0x4a0] sm:$0xff]
        %v480 = vld [vmem:[#allocation3 + $0x4a8] sm:$0xff]
        %v481 = vld [vmem:[#allocation3 + $0x4b0] sm:$0xff]
        %v482 = vld [vmem:[#allocation3 + $0x4b8] sm:$0xff]
        %v483 = vld [vmem:[#allocation3 + $0x4c0] sm:$0xff]
        %v484 = vld [vmem:[#allocation3 + $0x4c8] sm:$0xff]
        %v485 = vld [vmem:[#allocation3 + $0x4d0] sm:$0xff]
        %v486 = vld [vmem:[#allocation3 + $0x4d8] sm:$0xff]
        %v487 = vld [vmem:[#allocation3 + $0x4e0] sm:$0xff]
        %v488 = vld [vmem:[#allocation3 + $0x4e8] sm:$0xff]
        %v489 = vld [vmem:[#allocation3 + $0x4f0] sm:$0xff]
        %v490 = vld [vmem:[#allocation3 + $0x4f8] sm:$0xff]
        %v491 = vld [vmem:[#allocation3 + $0x500] sm:$0xff]
        %v492 = vld [vmem:[#allocation3 + $0x508] sm:$0xff]
        %v493 = vld [vmem:[#allocation3 + $0x510] sm:$0xff]
        %v494 = vld [vmem:[#allocation3 + $0x518] sm:$0xff]
        %v495 = vld [vmem:[#allocation3 + $0x520] sm:$0xff]
        %v496 = vld [vmem:[#allocation3 + $0x528] sm:$0xff]
        %v497 = vld [vmem:[#allocation3 + $0x530] sm:$0xff]
        %v498 = vld [vmem:[#allocation3 + $0x538] sm:$0xff]
        %v499 = vld [vmem:[#allocation3 + $0x540] sm:$0xff]
        %v500 = vld [vmem:[#allocation3 + $0x548] sm:$0xff]
        %v501 = vld [vmem:[#allocation3 + $0x550] sm:$0xff]
        %v502 = vld [vmem:[#allocation3 + $0x558] sm:$0xff]
        %v503 = vld [vmem:[#allocation3 + $0x560] sm:$0xff]
        %v504 = vld [vmem:[#allocation3 + $0x568] sm:$0xff]
        %v505 = vld [vmem:[#allocation3 + $0x570] sm:$0xff]
        %v506 = vld [vmem:[#allocation3 + $0x578] sm:$0xff]
        %v507 = vld [vmem:[#allocation3 + $0x580] sm:$0xff]
        %v508 = vld [vmem:[#allocation3 + $0x588] sm:$0xff]
        %v509 = vld [vmem:[#allocation3 + $0x590] sm:$0xff]
        %v510 = vld [vmem:[#allocation3 + $0x598] sm:$0xff]
        %v511 = vld [vmem:[#allocation3 + $0x5a0] sm:$0xff]
        %v512 = vld [vmem:[#allocation3 + $0x5a8] sm:$0xff]
        %v513 = vld [vmem:[#allocation3 + $0x5b0] sm:$0xff]
        %v514 = vld [vmem:[#allocation3 + $0x5b8] sm:$0xff]
        %v515 = vld [vmem:[#allocation3 + $0x5c0] sm:$0xff]
        %v516 = vld [vmem:[#allocation3 + $0x5c8] sm:$0xff]
        %v517 = vld [vmem:[#allocation3 + $0x5d0] sm:$0xff]
        %v518 = vld [vmem:[#allocation3 + $0x5d8] sm:$0xff]
        %v519 = vld [vmem:[#allocation3 + $0x5e0] sm:$0xff]
        %v520 = vld [vmem:[#allocation3 + $0x5e8] sm:$0xff]
        %v521 = vld [vmem:[#allocation3 + $0x5f0] sm:$0xff]
        %v522 = vld [vmem:[#allocation3 + $0x5f8] sm:$0xff]
        %v523 = vld [vmem:[%s2] sm:$0x7]
        %v525 = vlaneseq
        %v526 = vshrl.u32 %v525, 7
        %v527 = vsub.s32 0, %v526
        %v528 = vrot.slane %v523, %v527
        %v529 = vlaneseq
        %v530 = vshrl.u32 %v529, 7
        %v531 = vsub.s32 1, %v530
        %v532 = vrot.slane %v523, %v531
        %v533 = vlaneseq
        %v534 = vshrl.u32 %v533, 7
        %v535 = vsub.s32 2, %v534
        %v536 = vrot.slane %v523, %v535
        %540 = vmatprep.subr.mxu0 %v332
        %541 = vmatpush1.msra.mxu0 %v331
        %542 = vmatprep.subr.mxu0 %v335
        %543 = vmatpush1.msra.mxu0 %v334
        %544 = vmatprep.subr.mxu0 %v338
        %545 = vmatpush1.msra.mxu0 %v337
        %546 = vmatprep.subr.mxu0 %v341
        %547 = vmatpush1.msra.mxu0 %v340
        %548 = vmatprep.subr.mxu0 %v344
        %549 = vmatpush1.msra.mxu0 %v343
        %550 = vmatprep.subr.mxu0 %v347
        %551 = vmatpush1.msra.mxu0 %v346
        %552 = vmatprep.subr.mxu0 %v350
        %553 = vmatpush1.msra.mxu0 %v349
        %554 = vmatprep.subr.mxu0 %v353
        %555 = vmatpush1.msra.mxu0 %v352
        %556 = vmatprep.subr.mxu0 %v356
        %557 = vmatpush1.msra.mxu0 %v355
        %558 = vmatprep.subr.mxu0 %v359
        %559 = vmatpush1.msra.mxu0 %v358
        %560 = vmatprep.subr.mxu0 %v362
        %561 = vmatpush1.msra.mxu0 %v361
        %562 = vmatprep.subr.mxu0 %v365
        %563 = vmatpush1.msra.mxu0 %v364
        %564 = vmatprep.subr.mxu0 %v368
        %565 = vmatpush1.msra.mxu0 %v367
        %566 = vmatprep.subr.mxu0 %v371
        %567 = vmatpush1.msra.mxu0 %v370
        %568 = vmatprep.subr.mxu0 %v374
        %569 = vmatpush1.msra.mxu0 %v373
        %570 = vmatprep.subr.mxu0 %v377
        %571 = vmatpush1.msra.mxu0 %v376
        %572 = vmatprep.subr.mxu0 %v380
        %573 = vmatpush1.msra.mxu0 %v379
        %574 = vmatprep.subr.mxu0 %v383
        %575 = vmatpush1.msra.mxu0 %v382
        %576 = vmatprep.subr.mxu0 %v386
        %577 = vmatpush1.msra.mxu0 %v385
        %578 = vmatprep.subr.mxu0 %v389
        %579 = vmatpush1.msra.mxu0 %v388
        %580 = vmatprep.subr.mxu0 %v392
        %581 = vmatpush1.msra.mxu0 %v391
        %582 = vmatprep.subr.mxu0 %v395
        %583 = vmatpush1.msra.mxu0 %v394
        %584 = vmatprep.subr.mxu0 %v398
        %585 = vmatpush1.msra.mxu0 %v397
        %586 = vmatprep.subr.mxu0 %v401
        %587 = vmatpush1.msra.mxu0 %v400
        %588 = vmatprep.subr.mxu0 %v404
        %589 = vmatpush1.msra.mxu0 %v403
        %590 = vmatprep.subr.mxu0 %v407
        %591 = vmatpush1.msra.mxu0 %v406
        %592 = vmatprep.subr.mxu0 %v410
        %593 = vmatpush1.msra.mxu0 %v409
        %594 = vmatprep.subr.mxu0 %v413
        %595 = vmatpush1.msra.mxu0 %v412
        %596 = vmatprep.subr.mxu0 %v416
        %597 = vmatpush1.msra.mxu0 %v415
        %598 = vmatprep.subr.mxu0 %v419
        %599 = vmatpush1.msra.mxu0 %v418
        %600 = vmatprep.subr.mxu0 %v422
        %601 = vmatpush1.msra.mxu0 %v421
        %602 = vmatprep.subr.mxu0 %v425
        %603 = vmatpush1.msra.mxu0 %v424
        %604 = vmatprep.mubr.f32.mxu0 %v324
        %605 = vmatmul.mubr.f32.gmra.mrb[0].mxu0 %v323
        %v606 = vpop.f32.mrb[0].mxu0
        %v607 = vadd.f32 %v528, %v606
        %v608 = vpop.f32.mrb[0].mxu0
        %v609 = vadd.f32 %v532, %v608
        %610 = vmatprep.mubr.f32.mxu0 %v328
        %611 = vmatmul.mubr.f32.gmra.mrb[0].mxu0 %v327
        %v612 = vpop.f32.mrb[0].mxu0
        %v613 = vadd.f32 %v528, %v612
        %v614 = vpop.f32.mrb[0].mxu0
        %v615 = vadd.f32 %v532, %v614
        %616 = vdwg.mxu0
        %617 = vmatprep.subr.mxu0 %v428
        %618 = vmatpush1.msra.mxu0 %v427
        %619 = vmatprep.subr.mxu0 %v431
        %620 = vmatpush1.msra.mxu0 %v430
        %621 = vmatprep.subr.mxu0 %v434
        %622 = vmatpush1.msra.mxu0 %v433
        %623 = vmatprep.subr.mxu0 %v437
        %624 = vmatpush1.msra.mxu0 %v436
        %625 = vmatprep.subr.mxu0 %v440
        %626 = vmatpush1.msra.mxu0 %v439
        %627 = vmatprep.subr.mxu0 %v443
        %628 = vmatpush1.msra.mxu0 %v442
        %629 = vmatprep.subr.mxu0 %v446
        %630 = vmatpush1.msra.mxu0 %v445
        %631 = vmatprep.subr.mxu0 %v449
        %632 = vmatpush1.msra.mxu0 %v448
        %633 = vmatprep.subr.mxu0 %v452
        %634 = vmatpush1.msra.mxu0 %v451
        %635 = vmatprep.subr.mxu0 %v455
        %636 = vmatpush1.msra.mxu0 %v454
        %637 = vmatprep.subr.mxu0 %v458
        %638 = vmatpush1.msra.mxu0 %v457
        %639 = vmatprep.subr.mxu0 %v461
        %640 = vmatpush1.msra.mxu0 %v460
        %641 = vmatprep.subr.mxu0 %v464
        %642 = vmatpush1.msra.mxu0 %v463
        %643 = vmatprep.subr.mxu0 %v467
        %644 = vmatpush1.msra.mxu0 %v466
        %645 = vmatprep.subr.mxu0 %v470
        %646 = vmatpush1.msra.mxu0 %v469
        %647 = vmatprep.subr.mxu0 %v473
        %648 = vmatpush1.msra.mxu0 %v472
        %649 = vmatprep.subr.mxu0 %v476
        %650 = vmatpush1.msra.mxu0 %v475
        %651 = vmatprep.subr.mxu0 %v479
        %652 = vmatpush1.msra.mxu0 %v478
        %653 = vmatprep.subr.mxu0 %v482
        %654 = vmatpush1.msra.mxu0 %v481
        %655 = vmatprep.subr.mxu0 %v485
        %656 = vmatpush1.msra.mxu0 %v484
        %657 = vmatprep.subr.mxu0 %v488
        %658 = vmatpush1.msra.mxu0 %v487
        %659 = vmatprep.subr.mxu0 %v491
        %660 = vmatpush1.msra.mxu0 %v490
        %661 = vmatprep.subr.mxu0 %v494
        %662 = vmatpush1.msra.mxu0 %v493
        %663 = vmatprep.subr.mxu0 %v497
        %664 = vmatpush1.msra.mxu0 %v496
        %665 = vmatprep.subr.mxu0 %v500
        %666 = vmatpush1.msra.mxu0 %v499
        %667 = vmatprep.subr.mxu0 %v503
        %668 = vmatpush1.msra.mxu0 %v502
        %669 = vmatprep.subr.mxu0 %v506
        %670 = vmatpush1.msra.mxu0 %v505
        %671 = vmatprep.subr.mxu0 %v509
        %672 = vmatpush1.msra.mxu0 %v508
        %673 = vmatprep.subr.mxu0 %v512
        %674 = vmatpush1.msra.mxu0 %v511
        %675 = vmatprep.subr.mxu0 %v515
        %676 = vmatpush1.msra.mxu0 %v514
        %677 = vmatprep.subr.mxu0 %v518
        %678 = vmatpush1.msra.mxu0 %v517
        %679 = vmatprep.subr.mxu0 %v521
        %680 = vmatpush1.msra.mxu0 %v520
        %681 = vmatprep.mubr.f32.mxu0 %v326
        %682 = vmatmul.mubr.f32.gmra.mrb[0].mxu0 %v325
        %v683 = vpop.f32.mrb[0].mxu0
        %v684 = vadd.f32 %v607, %v683
        %v685 = vpop.f32.mrb[0].mxu0
        %v686 = vadd.f32 %v609, %v685
        %687 = vmatprep.mubr.f32.mxu0 %v330
        %688 = vmatmul.mubr.f32.gmra.mrb[0].mxu0 %v329
        %v689 = vpop.f32.mrb[0].mxu0
        %v690 = vadd.f32 %v613, %v689
        %v691 = vpop.f32.mrb[0].mxu0
        %v692 = vadd.f32 %v615, %v691
        %693 = vdwg.mxu0
        %694 = vmatprep.subr.mxu0 0.0
        %695 = vmatpush1.msra.mxu0 %v333
        %696 = vmatprep.subr.mxu0 0.0
        %697 = vmatpush1.msra.mxu0 %v336
        %698 = vmatprep.subr.mxu0 0.0
        %699 = vmatpush1.msra.mxu0 %v339
        %700 = vmatprep.subr.mxu0 0.0
        %701 = vmatpush1.msra.mxu0 %v342
        %702 = vmatprep.subr.mxu0 0.0
        %703 = vmatpush1.msra.mxu0 %v345
        %704 = vmatprep.subr.mxu0 0.0
        %705 = vmatpush1.msra.mxu0 %v348
        %706 = vmatprep.subr.mxu0 0.0
        %707 = vmatpush1.msra.mxu0 %v351
        %708 = vmatprep.subr.mxu0 0.0
        %709 = vmatpush1.msra.mxu0 %v354
        %710 = vmatprep.subr.mxu0 0.0
        %711 = vmatpush1.msra.mxu0 %v357
        %712 = vmatprep.subr.mxu0 0.0
        %713 = vmatpush1.msra.mxu0 %v360
        %714 = vmatprep.subr.mxu0 0.0
        %715 = vmatpush1.msra.mxu0 %v363
        %716 = vmatprep.subr.mxu0 0.0
        %717 = vmatpush1.msra.mxu0 %v366
        %718 = vmatprep.subr.mxu0 0.0
        %719 = vmatpush1.msra.mxu0 %v369
        %720 = vmatprep.subr.mxu0 0.0
        %721 = vmatpush1.msra.mxu0 %v372
        %722 = vmatprep.subr.mxu0 0.0
        %723 = vmatpush1.msra.mxu0 %v375
        %724 = vmatprep.subr.mxu0 0.0
        %725 = vmatpush1.msra.mxu0 %v378
        %726 = vmatprep.subr.mxu0 0.0
        %727 = vmatpush1.msra.mxu0 %v381
        %728 = vmatprep.subr.mxu0 0.0
        %729 = vmatpush1.msra.mxu0 %v384
        %730 = vmatprep.subr.mxu0 0.0
        %731 = vmatpush1.msra.mxu0 %v387
        %732 = vmatprep.subr.mxu0 0.0
        %733 = vmatpush1.msra.mxu0 %v390
        %734 = vmatprep.subr.mxu0 0.0
        %735 = vmatpush1.msra.mxu0 %v393
        %736 = vmatprep.subr.mxu0 0.0
        %737 = vmatpush1.msra.mxu0 %v396
        %738 = vmatprep.subr.mxu0 0.0
        %739 = vmatpush1.msra.mxu0 %v399
        %740 = vmatprep.subr.mxu0 0.0
        %741 = vmatpush1.msra.mxu0 %v402
        %742 = vmatprep.subr.mxu0 0.0
        %743 = vmatpush1.msra.mxu0 %v405
        %744 = vmatprep.subr.mxu0 0.0
        %745 = vmatpush1.msra.mxu0 %v408
        %746 = vmatprep.subr.mxu0 0.0
        %747 = vmatpush1.msra.mxu0 %v411
        %748 = vmatprep.subr.mxu0 0.0
        %749 = vmatpush1.msra.mxu0 %v414
        %750 = vmatprep.subr.mxu0 0.0
        %751 = vmatpush1.msra.mxu0 %v417
        %752 = vmatprep.subr.mxu0 0.0
        %753 = vmatpush1.msra.mxu0 %v420
        %754 = vmatprep.subr.mxu0 0.0
        %755 = vmatpush1.msra.mxu0 %v423
        %756 = vmatprep.subr.mxu0 0.0
        %757 = vmatpush1.msra.mxu0 %v426
        %758 = vmatprep.mubr.f32.mxu0 %v324
        %759 = vmatmul.mubr.f32.gmra.mrb[0].mxu0 %v323
        %v760 = vpop.f32.mrb[0].mxu0
        %v761 = vadd.f32 %v536, %v760
        %v762 = vpop.f32.mrb[0].mxu0
        %763 = vmatprep.mubr.f32.mxu0 %v328
        %764 = vmatmul.mubr.f32.gmra.mrb[0].mxu0 %v327
        %v765 = vpop.f32.mrb[0].mxu0
        %v766 = vadd.f32 %v536, %v765
        %v767 = vpop.f32.mrb[0].mxu0
        %768 = vdwg.mxu0
        %769 = vmatprep.subr.mxu0 0.0
        %770 = vmatpush1.msra.mxu0 %v429
        %771 = vmatprep.subr.mxu0 0.0
        %772 = vmatpush1.msra.mxu0 %v432
        %773 = vmatprep.subr.mxu0 0.0
        %774 = vmatpush1.msra.mxu0 %v435
        %775 = vmatprep.subr.mxu0 0.0
        %776 = vmatpush1.msra.mxu0 %v438
        %777 = vmatprep.subr.mxu0 0.0
        %778 = vmatpush1.msra.mxu0 %v441
        %779 = vmatprep.subr.mxu0 0.0
        %780 = vmatpush1.msra.mxu0 %v444
        %781 = vmatprep.subr.mxu0 0.0
        %782 = vmatpush1.msra.mxu0 %v447
        %783 = vmatprep.subr.mxu0 0.0
        %784 = vmatpush1.msra.mxu0 %v450
        %785 = vmatprep.subr.mxu0 0.0
        %786 = vmatpush1.msra.mxu0 %v453
        %787 = vmatprep.subr.mxu0 0.0
        %788 = vmatpush1.msra.mxu0 %v456
        %789 = vmatprep.subr.mxu0 0.0
        %790 = vmatpush1.msra.mxu0 %v459
        %791 = vmatprep.subr.mxu0 0.0
        %792 = vmatpush1.msra.mxu0 %v462
        %793 = vmatprep.subr.mxu0 0.0
        %794 = vmatpush1.msra.mxu0 %v465
        %795 = vmatprep.subr.mxu0 0.0
        %796 = vmatpush1.msra.mxu0 %v468
        %797 = vmatprep.subr.mxu0 0.0
        %798 = vmatpush1.msra.mxu0 %v471
        %799 = vmatprep.subr.mxu0 0.0
        %800 = vmatpush1.msra.mxu0 %v474
        %801 = vmatprep.subr.mxu0 0.0
        %802 = vmatpush1.msra.mxu0 %v477
        %803 = vmatprep.subr.mxu0 0.0
        %804 = vmatpush1.msra.mxu0 %v480
        %805 = vmatprep.subr.mxu0 0.0
        %806 = vmatpush1.msra.mxu0 %v483
        %807 = vmatprep.subr.mxu0 0.0
        %808 = vmatpush1.msra.mxu0 %v486
        %809 = vmatprep.subr.mxu0 0.0
        %810 = vmatpush1.msra.mxu0 %v489
        %811 = vmatprep.subr.mxu0 0.0
        %812 = vmatpush1.msra.mxu0 %v492
        %813 = vmatprep.subr.mxu0 0.0
        %814 = vmatpush1.msra.mxu0 %v495
        %815 = vmatprep.subr.mxu0 0.0
        %816 = vmatpush1.msra.mxu0 %v498
        %817 = vmatprep.subr.mxu0 0.0
        %818 = vmatpush1.msra.mxu0 %v501
        %819 = vmatprep.subr.mxu0 0.0
        %820 = vmatpush1.msra.mxu0 %v504
        %821 = vmatprep.subr.mxu0 0.0
        %822 = vmatpush1.msra.mxu0 %v507
        %823 = vmatprep.subr.mxu0 0.0
        %824 = vmatpush1.msra.mxu0 %v510
        %825 = vmatprep.subr.mxu0 0.0
        %826 = vmatpush1.msra.mxu0 %v513
        %827 = vmatprep.subr.mxu0 0.0
        %828 = vmatpush1.msra.mxu0 %v516
        %829 = vmatprep.subr.mxu0 0.0
        %830 = vmatpush1.msra.mxu0 %v519
        %831 = vmatprep.subr.mxu0 0.0
        %832 = vmatpush1.msra.mxu0 %v522
        %833 = vmatprep.mubr.f32.mxu0 %v326
        %834 = vmatmul.mubr.f32.gmra.mrb[0].mxu0 %v325
        %v835 = vpop.f32.mrb[0].mxu0
        %v836 = vadd.f32 %v761, %v835
        %v837 = vpop.f32.mrb[0].mxu0
        %838 = vmatprep.mubr.f32.mxu0 %v330
        %839 = vmatmul.mubr.f32.gmra.mrb[0].mxu0 %v329
        %v840 = vpop.f32.mrb[0].mxu0
        %v841 = vadd.f32 %v766, %v840
        %v842 = vpop.f32.mrb[0].mxu0
        %843 = vdwg.mxu0
        %844 = vst [vmem:[#allocation2] sm:$0x7] 0.0
        %845 = vst [vmem:[#allocation2 + $0x8] sm:$0x7] 0.0
        %846 = vst [vmem:[#allocation2 + $0x10] sm:$0x7] 0.0
        %847 = vst [vmem:[#allocation2 + $0x18] sm:$0x7] 0.0
        %vm848 = vcmask 124928
        %849 = vst.msk [vmem:[#allocation2 + $0x20] sm:$0x7] %vm848, 0.0
        %850 = vst [vmem:[#allocation2 + $0x50] sm:$0x38] 0.0
        %851 = vst [vmem:[#allocation2 + $0x58] sm:$0x38] 0.0
        %852 = vst [vmem:[#allocation2 + $0x60] sm:$0x38] 0.0
        %853 = vst [vmem:[#allocation2 + $0x68] sm:$0x38] 0.0
        %vm854 = vcmask 128003
        %855 = vst.msk [vmem:[#allocation2 + $0x70] sm:$0x38] %vm854, 0.0
        %vm856 = vcmask 588803
        %857 = vst.msk [vmem:[#allocation2] sm:$0xf8] %vm856, 0.0
        %vm858 = vcmask 588800
        %859 = vst.msk [vmem:[#allocation2 + $0x28] sm:$0xff] %vm858, 0.0
        %vm860 = vcmask 583680
        %861 = vst.msk [vmem:[#allocation2 + $0x50] sm:$0x7] %vm860, 0.0
        %vm862 = vcmask 1048131
        %863 = vst.msk [vmem:[#allocation2 + $0x18] sm:$0xf8] %vm862, 0.0
        %vm864 = vcmask 130051
        %865 = vst.msk [vmem:[#allocation2 + $0x20] sm:$0xf8] %vm864, 0.0
        %vm866 = vcmask 1048128
        %867 = vst.msk [vmem:[#allocation2 + $0x40] sm:$0xff] %vm866, 0.0
        %vm868 = vcmask 130048
        %869 = vst.msk [vmem:[#allocation2 + $0x48] sm:$0xff] %vm868, 0.0
        %vm870 = vcmask 1043008
        %871 = vst.msk [vmem:[#allocation2 + $0x68] sm:$0x7] %vm870, 0.0
        %872 = vst.msk [vmem:[#allocation2 + $0x70] sm:$0x7] %vm848, 0.0
        %vm879 = vcmask 1042432
        %v880 = vrot.slane %v684, 5
        %v881 = vrot.slane %v686, 5
        %v882 = vrot.slane %v836, 5
        %v883 = vrot.slane %v690, 5
        %v884 = vsel %vm879, %v880, %v883
        %v885 = vrot.slane %v692, 5
        %v886 = vsel %vm879, %v881, %v885
        %v887 = vrot.slane %v841, 5
        %v888 = vsel %vm879, %v882, %v887
        %889 = vrot.lane.b32.xlu0 %v880, 72
        %v890 = vpop.permute.xlu0 %889
        %891 = vrot.lane.b32.xlu0 %v881, 72
        %v892 = vpop.permute.xlu0 %891
        %893 = vrot.lane.b32.xlu0 %v882, 72
        %v894 = vpop.permute.xlu0 %893
        %895 = vrot.lane.b32.xlu0 %v884, 72
        %v896 = vpop.permute.xlu0 %895
        %897 = vrot.lane.b32.xlu0 %v886, 72
        %v898 = vpop.permute.xlu0 %897
        %899 = vrot.lane.b32.xlu0 %v888, 72
        %v900 = vpop.permute.xlu0 %899
        %901 = vrot.lane.b32.xlu0 %v883, 72
        %v902 = vpop.permute.xlu0 %901
        %903 = vrot.lane.b32.xlu0 %v885, 72
        %v904 = vpop.permute.xlu0 %903
        %905 = vrot.lane.b32.xlu0 %v887, 72
        %v906 = vpop.permute.xlu0 %905
        %v907 = vsel %vm858, %v890, %v892
        %v908 = vsel %vm858, %v892, %v894
        %v909 = vsel %vm858, %v896, %v898
        %v910 = vsel %vm858, %v898, %v900
        %v911 = vsel %vm858, %v902, %v904
        %v912 = vsel %vm858, %v904, %v906
        %925 = vst.msk [vmem:[#allocation2] sm:$0xf8] %vm862, %v890
        %926 = vst [vmem:[#allocation2 + $0x8] sm:$0xf8] %v907
        %927 = vst [vmem:[#allocation2 + $0x10] sm:$0xf8] %v908
        %928 = vst.msk [vmem:[#allocation2 + $0x18] sm:$0xf8] %vm856, %v894
        %929 = vst.msk [vmem:[#allocation2 + $0x28] sm:$0xff] %vm866, %v896
        %930 = vst [vmem:[#allocation2 + $0x30] sm:$0xff] %v909
        %931 = vst [vmem:[#allocation2 + $0x38] sm:$0xff] %v910
        %932 = vst.msk [vmem:[#allocation2 + $0x40] sm:$0xff] %vm858, %v900
        %933 = vst.msk [vmem:[#allocation2 + $0x50] sm:$0x7] %vm870, %v902
        %934 = vst [vmem:[#allocation2 + $0x58] sm:$0x7] %v911
        %935 = vst [vmem:[#allocation2 + $0x60] sm:$0x7] %v912
        %936 = vst.msk [vmem:[#allocation2 + $0x68] sm:$0x7] %vm860, %v906
        %v937 = vld [vmem:[#allocation2] sm:$0xff]
        %v938 = vld [vmem:[#allocation2 + $0x8] sm:$0xff]
        %v939 = vld [vmem:[#allocation2 + $0x10] sm:$0xff]
        %v940 = vld [vmem:[#allocation2 + $0x28] sm:$0xff]
        %v941 = vld [vmem:[#allocation2 + $0x30] sm:$0xff]
        %v942 = vld [vmem:[#allocation2 + $0x38] sm:$0xff]
        %v943 = vld [vmem:[%s3] ss:$8 sm:$0x7]
        %v945 = vlaneseq
        %v946 = vshrl.u32 %v945, 7
        %v947 = vsub.s32 0, %v946
        %v948 = vrot.slane %v943, %v947
        %v949 = vlaneseq
        %v950 = vshrl.u32 %v949, 7
        %v951 = vsub.s32 1, %v950
        %v952 = vrot.slane %v943, %v951
        %v953 = vlaneseq
        %v954 = vshrl.u32 %v953, 7
        %v955 = vsub.s32 2, %v954
        %v956 = vrot.slane %v943, %v955
        %v960 = vmul.f32 %v937, %v948
        %v961 = vmul.f32 %v938, %v952
        %v962 = vmul.f32 %v939, %v956
        %v963 = vmul.f32 %v940, %v948
        %v964 = vmul.f32 %v941, %v952
        %v965 = vmul.f32 %v942, %v956
        %v966 = vld [vmem:[#allocation2 + $0x18] sm:$0xff]
        %v967 = vld [vmem:[#allocation2 + $0x40] sm:$0xff]
        %s968 = scalar_lea.vmem %s3, 1
        %v969 = vld [vmem:[%s968] ss:$8 sm:$0x7]
        %v971 = vlaneseq
        %v972 = vshrl.u32 %v971, 7
        %v973 = vsub.s32 0, %v972
        %v974 = vrot.slane %v969, %v973
        %v975 = vlaneseq
        %v976 = vshrl.u32 %v975, 7
        %v977 = vsub.s32 1, %v976
        %v978 = vrot.slane %v969, %v977
        %v979 = vlaneseq
        %v980 = vshrl.u32 %v979, 7
        %v981 = vsub.s32 2, %v980
        %v982 = vrot.slane %v969, %v981
        %983 = vrot.lane.b32.xlu0 %v974, 24
        %v984 = vpop.permute.xlu0 %983
        %985 = vrot.lane.b32.xlu0 %v978, 24
        %v986 = vpop.permute.xlu0 %985
        %987 = vrot.lane.b32.xlu0 %v982, 24
        %v988 = vpop.permute.xlu0 %987
        %vm989 = vcmask 195584
        %v990 = vsel %vm989, %v984, %v986
        %v991 = vsel %vm989, %v986, %v988
        %v996 = vmul.f32 %v937, %v984
        %v997 = vmul.f32 %v938, %v990
        %v998 = vmul.f32 %v939, %v991
        %v999 = vmul.f32 %v966, %v988
        %v1000 = vmul.f32 %v940, %v984
        %v1001 = vmul.f32 %v941, %v990
        %v1002 = vmul.f32 %v942, %v991
        %v1003 = vmul.f32 %v967, %v988
        %1012 = vrot.lane.b32.xlu0 %v996, 104
        %v1013 = vpop.permute.xlu0 %1012
        %1014 = vrot.lane.b32.xlu0 %v997, 104
        %v1015 = vpop.permute.xlu0 %1014
        %1016 = vrot.lane.b32.xlu0 %v998, 104
        %v1017 = vpop.permute.xlu0 %1016
        %1018 = vrot.lane.b32.xlu0 %v999, 104
        %v1019 = vpop.permute.xlu0 %1018
        %1020 = vrot.lane.b32.xlu0 %v1000, 104
        %v1021 = vpop.permute.xlu0 %1020
        %1022 = vrot.lane.b32.xlu0 %v1001, 104
        %v1023 = vpop.permute.xlu0 %1022
        %1024 = vrot.lane.b32.xlu0 %v1002, 104
        %v1025 = vpop.permute.xlu0 %1024
        %1026 = vrot.lane.b32.xlu0 %v1003, 104
        %v1027 = vpop.permute.xlu0 %1026
        %vm1028 = vcmask 850944
        %v1029 = vsel %vm1028, %v1013, %v1015
        %v1030 = vsel %vm1028, %v1015, %v1017
        %v1031 = vsel %vm1028, %v1017, %v1019
        %v1032 = vsel %vm1028, %v1021, %v1023
        %v1033 = vsel %vm1028, %v1023, %v1025
        %v1034 = vsel %vm1028, %v1025, %v1027
        %v1041 = vadd.f32 %v960, %v1029
        %v1042 = vadd.f32 %v961, %v1030
        %v1043 = vadd.f32 %v962, %v1031
        %v1044 = vadd.f32 %v963, %v1032
        %v1045 = vadd.f32 %v964, %v1033
        %v1046 = vadd.f32 %v965, %v1034
        %s1047 = scalar_lea.vmem %s3, 2
        %v1048 = vld [vmem:[%s1047] ss:$8 sm:$0x7]
        %v1050 = vlaneseq
        %v1051 = vshrl.u32 %v1050, 7
        %v1052 = vsub.s32 0, %v1051
        %v1053 = vrot.slane %v1048, %v1052
        %v1054 = vlaneseq
        %v1055 = vshrl.u32 %v1054, 7
        %v1056 = vsub.s32 1, %v1055
        %v1057 = vrot.slane %v1048, %v1056
        %v1058 = vlaneseq
        %v1059 = vshrl.u32 %v1058, 7
        %v1060 = vsub.s32 2, %v1059
        %v1061 = vrot.slane %v1048, %v1060
        %1062 = vrot.lane.b32.xlu0 %v1053, 48
        %v1063 = vpop.permute.xlu0 %1062
        %1064 = vrot.lane.b32.xlu0 %v1057, 48
        %v1065 = vpop.permute.xlu0 %1064
        %1066 = vrot.lane.b32.xlu0 %v1061, 48
        %v1067 = vpop.permute.xlu0 %1066
        %vm1068 = vcmask 392192
        %v1069 = vsel %vm1068, %v1063, %v1065
        %v1070 = vsel %vm1068, %v1065, %v1067
        %v1075 = vmul.f32 %v937, %v1063
        %v1076 = vmul.f32 %v938, %v1069
        %v1077 = vmul.f32 %v939, %v1070
        %v1078 = vmul.f32 %v966, %v1067
        %v1079 = vmul.f32 %v940, %v1063
        %v1080 = vmul.f32 %v941, %v1069
        %v1081 = vmul.f32 %v942, %v1070
        %v1082 = vmul.f32 %v967, %v1067
        %1091 = vrot.lane.b32.xlu0 %v1075, 80
        %v1092 = vpop.permute.xlu0 %1091
        %1093 = vrot.lane.b32.xlu0 %v1076, 80
        %v1094 = vpop.permute.xlu0 %1093
        %1095 = vrot.lane.b32.xlu0 %v1077, 80
        %v1096 = vpop.permute.xlu0 %1095
        %1097 = vrot.lane.b32.xlu0 %v1078, 80
        %v1098 = vpop.permute.xlu0 %1097
        %1099 = vrot.lane.b32.xlu0 %v1079, 80
        %v1100 = vpop.permute.xlu0 %1099
        %1101 = vrot.lane.b32.xlu0 %v1080, 80
        %v1102 = vpop.permute.xlu0 %1101
        %1103 = vrot.lane.b32.xlu0 %v1081, 80
        %v1104 = vpop.permute.xlu0 %1103
        %1105 = vrot.lane.b32.xlu0 %v1082, 80
        %v1106 = vpop.permute.xlu0 %1105
        %vm1107 = vcmask 654336
        %v1108 = vsel %vm1107, %v1092, %v1094
        %v1109 = vsel %vm1107, %v1094, %v1096
        %v1110 = vsel %vm1107, %v1096, %v1098
        %v1111 = vsel %vm1107, %v1100, %v1102
        %v1112 = vsel %vm1107, %v1102, %v1104
        %v1113 = vsel %vm1107, %v1104, %v1106
        %v1120 = vadd.f32 %v1041, %v1108
        %v1121 = vadd.f32 %v1042, %v1109
        %v1122 = vadd.f32 %v1043, %v1110
        %v1123 = vadd.f32 %v1044, %v1111
        %v1124 = vadd.f32 %v1045, %v1112
        %v1125 = vadd.f32 %v1046, %v1113
        %s1126 = scalar_lea.vmem %s3, 3
        %v1127 = vld [vmem:[%s1126] ss:$8 sm:$0x7]
        %v1129 = vlaneseq
        %v1130 = vshrl.u32 %v1129, 7
        %v1131 = vsub.s32 0, %v1130
        %v1132 = vrot.slane %v1127, %v1131
        %v1133 = vlaneseq
        %v1134 = vshrl.u32 %v1133, 7
        %v1135 = vsub.s32 1, %v1134
        %v1136 = vrot.slane %v1127, %v1135
        %v1137 = vlaneseq
        %v1138 = vshrl.u32 %v1137, 7
        %v1139 = vsub.s32 2, %v1138
        %v1140 = vrot.slane %v1127, %v1139
        %1141 = vrot.lane.b32.xlu0 %v1132, 72
        %v1142 = vpop.permute.xlu0 %1141
        %1143 = vrot.lane.b32.xlu0 %v1136, 72
        %v1144 = vpop.permute.xlu0 %1143
        %1145 = vrot.lane.b32.xlu0 %v1140, 72
        %v1146 = vpop.permute.xlu0 %1145
        %v1147 = vsel %vm858, %v1142, %v1144
        %v1148 = vsel %vm858, %v1144, %v1146
        %v1153 = vmul.f32 %v937, %v1142
        %v1154 = vmul.f32 %v938, %v1147
        %v1155 = vmul.f32 %v939, %v1148
        %v1156 = vmul.f32 %v966, %v1146
        %v1157 = vmul.f32 %v940, %v1142
        %v1158 = vmul.f32 %v941, %v1147
        %v1159 = vmul.f32 %v942, %v1148
        %v1160 = vmul.f32 %v967, %v1146
        %1169 = vrot.lane.b32.xlu0 %v1153, 56
        %v1170 = vpop.permute.xlu0 %1169
        %1171 = vrot.lane.b32.xlu0 %v1154, 56
        %v1172 = vpop.permute.xlu0 %1171
        %1173 = vrot.lane.b32.xlu0 %v1155, 56
        %v1174 = vpop.permute.xlu0 %1173
        %1175 = vrot.lane.b32.xlu0 %v1156, 56
        %v1176 = vpop.permute.xlu0 %1175
        %1177 = vrot.lane.b32.xlu0 %v1157, 56
        %v1178 = vpop.permute.xlu0 %1177
        %1179 = vrot.lane.b32.xlu0 %v1158, 56
        %v1180 = vpop.permute.xlu0 %1179
        %1181 = vrot.lane.b32.xlu0 %v1159, 56
        %v1182 = vpop.permute.xlu0 %1181
        %1183 = vrot.lane.b32.xlu0 %v1160, 56
        %v1184 = vpop.permute.xlu0 %1183
        %vm1185 = vcmask 457728
        %v1186 = vsel %vm1185, %v1170, %v1172
        %v1187 = vsel %vm1185, %v1172, %v1174
        %v1188 = vsel %vm1185, %v1174, %v1176
        %v1189 = vsel %vm1185, %v1178, %v1180
        %v1190 = vsel %vm1185, %v1180, %v1182
        %v1191 = vsel %vm1185, %v1182, %v1184
        %v1198 = vadd.f32 %v1120, %v1186
        %v1199 = vadd.f32 %v1121, %v1187
        %v1200 = vadd.f32 %v1122, %v1188
        %v1201 = vadd.f32 %v1123, %v1189
        %v1202 = vadd.f32 %v1124, %v1190
        %v1203 = vadd.f32 %v1125, %v1191
        %s1204 = scalar_lea.vmem %s3, 4
        %v1205 = vld [vmem:[%s1204] ss:$8 sm:$0x7]
        %v1207 = vlaneseq
        %v1208 = vshrl.u32 %v1207, 7
        %v1209 = vsub.s32 0, %v1208
        %v1210 = vrot.slane %v1205, %v1209
        %v1211 = vlaneseq
        %v1212 = vshrl.u32 %v1211, 7
        %v1213 = vsub.s32 1, %v1212
        %v1214 = vrot.slane %v1205, %v1213
        %v1215 = vlaneseq
        %v1216 = vshrl.u32 %v1215, 7
        %v1217 = vsub.s32 2, %v1216
        %v1218 = vrot.slane %v1205, %v1217
        %1219 = vrot.lane.b32.xlu0 %v1210, 96
        %v1220 = vpop.permute.xlu0 %1219
        %1221 = vrot.lane.b32.xlu0 %v1214, 96
        %v1222 = vpop.permute.xlu0 %1221
        %1223 = vrot.lane.b32.xlu0 %v1218, 96
        %v1224 = vpop.permute.xlu0 %1223
        %vm1225 = vcmask 785408
        %v1226 = vsel %vm1225, %v1220, %v1222
        %v1227 = vsel %vm1225, %v1222, %v1224
        %v1232 = vmul.f32 %v937, %v1220
        %v1233 = vmul.f32 %v938, %v1226
        %v1234 = vmul.f32 %v939, %v1227
        %v1235 = vmul.f32 %v966, %v1224
        %v1236 = vmul.f32 %v940, %v1220
        %v1237 = vmul.f32 %v941, %v1226
        %v1238 = vmul.f32 %v942, %v1227
        %v1239 = vmul.f32 %v967, %v1224
        %1248 = vrot.lane.b32.xlu0 %v1232, 32
        %v1249 = vpop.permute.xlu0 %1248
        %1250 = vrot.lane.b32.xlu0 %v1233, 32
        %v1251 = vpop.permute.xlu0 %1250
        %1252 = vrot.lane.b32.xlu0 %v1234, 32
        %v1253 = vpop.permute.xlu0 %1252
        %1254 = vrot.lane.b32.xlu0 %v1235, 32
        %v1255 = vpop.permute.xlu0 %1254
        %1256 = vrot.lane.b32.xlu0 %v1236, 32
        %v1257 = vpop.permute.xlu0 %1256
        %1258 = vrot.lane.b32.xlu0 %v1237, 32
        %v1259 = vpop.permute.xlu0 %1258
        %1260 = vrot.lane.b32.xlu0 %v1238, 32
        %v1261 = vpop.permute.xlu0 %1260
        %1262 = vrot.lane.b32.xlu0 %v1239, 32
        %v1263 = vpop.permute.xlu0 %1262
        %vm1264 = vcmask 261120
        %v1265 = vsel %vm1264, %v1249, %v1251
        %v1266 = vsel %vm1264, %v1251, %v1253
        %v1267 = vsel %vm1264, %v1253, %v1255
        %v1268 = vsel %vm1264, %v1257, %v1259
        %v1269 = vsel %vm1264, %v1259, %v1261
        %v1270 = vsel %vm1264, %v1261, %v1263
        %v1277 = vadd.f32 %v1198, %v1265
        %v1278 = vadd.f32 %v1199, %v1266
        %v1279 = vadd.f32 %v1200, %v1267
        %v1280 = vadd.f32 %v1201, %v1268
        %v1281 = vadd.f32 %v1202, %v1269
        %v1282 = vadd.f32 %v1203, %v1270
        %s1283 = scalar_lea.vmem %s3, 5
        %v1284 = vld [vmem:[%s1283] ss:$8 sm:$0x7]
        %v1286 = vlaneseq
        %v1287 = vshrl.u32 %v1286, 7
        %v1288 = vsub.s32 0, %v1287
        %v1289 = vrot.slane %v1284, %v1288
        %v1290 = vlaneseq
        %v1291 = vshrl.u32 %v1290, 7
        %v1292 = vsub.s32 1, %v1291
        %v1293 = vrot.slane %v1284, %v1292
        %v1294 = vlaneseq
        %v1295 = vshrl.u32 %v1294, 7
        %v1296 = vsub.s32 2, %v1295
        %v1297 = vrot.slane %v1284, %v1296
        %1298 = vrot.lane.b32.xlu0 %v1289, 120
        %v1299 = vpop.permute.xlu0 %1298
        %1300 = vrot.lane.b32.xlu0 %v1293, 120
        %v1301 = vpop.permute.xlu0 %1300
        %1302 = vrot.lane.b32.xlu0 %v1297, 120
        %v1303 = vpop.permute.xlu0 %1302
        %vm1304 = vcmask 982016
        %v1305 = vsel %vm1304, %v1299, %v1301
        %v1306 = vsel %vm1304, %v1301, %v1303
        %v1311 = vmul.f32 %v937, %v1299
        %v1312 = vmul.f32 %v938, %v1305
        %v1313 = vmul.f32 %v939, %v1306
        %v1314 = vmul.f32 %v966, %v1303
        %v1315 = vmul.f32 %v940, %v1299
        %v1316 = vmul.f32 %v941, %v1305
        %v1317 = vmul.f32 %v942, %v1306
        %v1318 = vmul.f32 %v967, %v1303
        %1327 = vrot.lane.b32.xlu0 %v1311, 8
        %v1328 = vpop.permute.xlu0 %1327
        %1329 = vrot.lane.b32.xlu0 %v1312, 8
        %v1330 = vpop.permute.xlu0 %1329
        %1331 = vrot.lane.b32.xlu0 %v1313, 8
        %v1332 = vpop.permute.xlu0 %1331
        %1333 = vrot.lane.b32.xlu0 %v1314, 8
        %v1334 = vpop.permute.xlu0 %1333
        %1335 = vrot.lane.b32.xlu0 %v1315, 8
        %v1336 = vpop.permute.xlu0 %1335
        %1337 = vrot.lane.b32.xlu0 %v1316, 8
        %v1338 = vpop.permute.xlu0 %1337
        %1339 = vrot.lane.b32.xlu0 %v1317, 8
        %v1340 = vpop.permute.xlu0 %1339
        %1341 = vrot.lane.b32.xlu0 %v1318, 8
        %v1342 = vpop.permute.xlu0 %1341
        %vm1343 = vcmask 64512
        %v1344 = vsel %vm1343, %v1328, %v1330
        %v1345 = vsel %vm1343, %v1330, %v1332
        %v1346 = vsel %vm1343, %v1332, %v1334
        %v1347 = vsel %vm1343, %v1336, %v1338
        %v1348 = vsel %vm1343, %v1338, %v1340
        %v1349 = vsel %vm1343, %v1340, %v1342
        %v1356 = vadd.f32 %v1277, %v1344
        %v1357 = vadd.f32 %v1278, %v1345
        %v1358 = vadd.f32 %v1279, %v1346
        %v1359 = vadd.f32 %v1280, %v1347
        %v1360 = vadd.f32 %v1281, %v1348
        %v1361 = vadd.f32 %v1282, %v1349
        %v1362 = vld [vmem:[#allocation2 + $0x20] sm:$0xff]
        %v1363 = vld [vmem:[#allocation2 + $0x48] sm:$0xff]
        %s1364 = scalar_lea.vmem %s3, 6
        %v1365 = vld [vmem:[%s1364] ss:$8 sm:$0x7]
        %v1367 = vlaneseq
        %v1368 = vshrl.u32 %v1367, 7
        %v1369 = vsub.s32 0, %v1368
        %v1370 = vrot.slane %v1365, %v1369
        %v1371 = vlaneseq
        %v1372 = vshrl.u32 %v1371, 7
        %v1373 = vsub.s32 1, %v1372
        %v1374 = vrot.slane %v1365, %v1373
        %v1375 = vlaneseq
        %v1376 = vshrl.u32 %v1375, 7
        %v1377 = vsub.s32 2, %v1376
        %v1378 = vrot.slane %v1365, %v1377
        %1379 = vrot.lane.b32.xlu0 %v1370, 16
        %v1380 = vpop.permute.xlu0 %1379
        %1381 = vrot.lane.b32.xlu0 %v1374, 16
        %v1382 = vpop.permute.xlu0 %1381
        %1383 = vrot.lane.b32.xlu0 %v1378, 16
        %v1384 = vpop.permute.xlu0 %1383
        %v1385 = vsel %vm868, %v1380, %v1382
        %v1386 = vsel %vm868, %v1382, %v1384
        %v1391 = vmul.f32 %v938, %v1380
        %v1392 = vmul.f32 %v939, %v1385
        %v1393 = vmul.f32 %v966, %v1386
        %v1394 = vmul.f32 %v1362, %v1384
        %v1395 = vmul.f32 %v941, %v1380
        %v1396 = vmul.f32 %v942, %v1385
        %v1397 = vmul.f32 %v967, %v1386
        %v1398 = vmul.f32 %v1363, %v1384
        %1407 = vrot.lane.b32.xlu0 %v1391, 112
        %v1408 = vpop.permute.xlu0 %1407
        %1409 = vrot.lane.b32.xlu0 %v1392, 112
        %v1410 = vpop.permute.xlu0 %1409
        %1411 = vrot.lane.b32.xlu0 %v1393, 112
        %v1412 = vpop.permute.xlu0 %1411
        %1413 = vrot.lane.b32.xlu0 %v1394, 112
        %v1414 = vpop.permute.xlu0 %1413
        %1415 = vrot.lane.b32.xlu0 %v1395, 112
        %v1416 = vpop.permute.xlu0 %1415
        %1417 = vrot.lane.b32.xlu0 %v1396, 112
        %v1418 = vpop.permute.xlu0 %1417
        %1419 = vrot.lane.b32.xlu0 %v1397, 112
        %v1420 = vpop.permute.xlu0 %1419
        %1421 = vrot.lane.b32.xlu0 %v1398, 112
        %v1422 = vpop.permute.xlu0 %1421
        %vm1423 = vcmask 916480
        %v1424 = vsel %vm1423, %v1408, %v1410
        %v1425 = vsel %vm1423, %v1410, %v1412
        %v1426 = vsel %vm1423, %v1412, %v1414
        %v1427 = vsel %vm1423, %v1416, %v1418
        %v1428 = vsel %vm1423, %v1418, %v1420
        %v1429 = vsel %vm1423, %v1420, %v1422
        %v1436 = vadd.f32 %v1356, %v1424
        %v1437 = vadd.f32 %v1357, %v1425
        %v1438 = vadd.f32 %v1358, %v1426
        %v1439 = vadd.f32 %v1359, %v1427
        %v1440 = vadd.f32 %v1360, %v1428
        %v1441 = vadd.f32 %v1361, %v1429
        %v1442 = vld [vmem:[#allocation2] sm:$0xfe]
        %v1443 = vld [vmem:[#allocation2 + $0x8] sm:$0xfe]
        %v1444 = vld [vmem:[#allocation2 + $0x10] sm:$0xfe]
        %v1445 = vld [vmem:[#allocation2 + $0x50] sm:$0x1]
        %v1446 = vld [vmem:[#allocation2 + $0x58] sm:$0x1]
        %v1447 = vld [vmem:[#allocation2 + $0x60] sm:$0x1]
        %s1448 = scalar_lea.vmem %s3, 7
        %v1449 = vld [vmem:[%s1448] ss:$8 sm:$0x7]
        %v1451 = vlaneseq
        %v1452 = vshrl.u32 %v1451, 7
        %v1453 = vsub.s32 0, %v1452
        %v1454 = vrot.slane %v1449, %v1453
        %v1455 = vlaneseq
        %v1456 = vshrl.u32 %v1455, 7
        %v1457 = vsub.s32 1, %v1456
        %v1458 = vrot.slane %v1449, %v1457
        %v1459 = vlaneseq
        %v1460 = vshrl.u32 %v1459, 7
        %v1461 = vsub.s32 2, %v1460
        %v1462 = vrot.slane %v1449, %v1461
        %v1466 = vmul.f32 %v1442, %v1454
        %v1467 = vmul.f32 %v1443, %v1458
        %v1468 = vmul.f32 %v1444, %v1462
        %v1469 = vmul.f32 %v940, %v1454
        %v1470 = vmul.f32 %v941, %v1458
        %v1471 = vmul.f32 %v942, %v1462
        %v1472 = vmul.f32 %v1445, %v1454
        %v1473 = vmul.f32 %v1446, %v1458
        %v1474 = vmul.f32 %v1447, %v1462
        %vm1484 = vcmask 1046528
        %v1485 = vrot.slane %v1466, 1
        %v1486 = vrot.slane %v1469, 1
        %v1487 = vsel %vm1484, %v1485, %v1486
        %v1488 = vrot.slane %v1467, 1
        %v1489 = vrot.slane %v1470, 1
        %v1490 = vsel %vm1484, %v1488, %v1489
        %v1491 = vrot.slane %v1468, 1
        %v1492 = vrot.slane %v1471, 1
        %v1493 = vsel %vm1484, %v1491, %v1492
        %v1494 = vrot.slane %v1472, 1
        %v1495 = vsel %vm1484, %v1486, %v1494
        %v1496 = vrot.slane %v1473, 1
        %v1497 = vsel %vm1484, %v1489, %v1496
        %v1498 = vrot.slane %v1474, 1
        %v1499 = vsel %vm1484, %v1492, %v1498
        %v1506 = vadd.f32 %v1436, %v1487
        %v1507 = vadd.f32 %v1437, %v1490
        %v1508 = vadd.f32 %v1438, %v1493
        %v1509 = vadd.f32 %v1439, %v1495
        %v1510 = vadd.f32 %v1440, %v1497
        %v1511 = vadd.f32 %v1441, %v1499
        %v1512 = vld [vmem:[#allocation2 + $0x18] sm:$0xfe]
        %v1513 = vld [vmem:[#allocation2 + $0x68] sm:$0x1]
        %s1514 = scalar_lea.vmem %s3, 24
        %v1515 = vld [vmem:[%s1514] ss:$8 sm:$0x7]
        %v1517 = vlaneseq
        %v1518 = vshrl.u32 %v1517, 7
        %v1519 = vsub.s32 0, %v1518
        %v1520 = vrot.slane %v1515, %v1519
        %v1521 = vlaneseq
        %v1522 = vshrl.u32 %v1521, 7
        %v1523 = vsub.s32 1, %v1522
        %v1524 = vrot.slane %v1515, %v1523
        %v1525 = vlaneseq
        %v1526 = vshrl.u32 %v1525, 7
        %v1527 = vsub.s32 2, %v1526
        %v1528 = vrot.slane %v1515, %v1527
        %1529 = vrot.lane.b32.xlu0 %v1520, 24
        %v1530 = vpop.permute.xlu0 %1529
        %1531 = vrot.lane.b32.xlu0 %v1524, 24
        %v1532 = vpop.permute.xlu0 %1531
        %1533 = vrot.lane.b32.xlu0 %v1528, 24
        %v1534 = vpop.permute.xlu0 %1533
        %v1535 = vsel %vm989, %v1530, %v1532
        %v1536 = vsel %vm989, %v1532, %v1534
        %v1541 = vmul.f32 %v1442, %v1530
        %v1542 = vmul.f32 %v1443, %v1535
        %v1543 = vmul.f32 %v1444, %v1536
        %v1544 = vmul.f32 %v1512, %v1534
        %v1545 = vmul.f32 %v940, %v1530
        %v1546 = vmul.f32 %v941, %v1535
        %v1547 = vmul.f32 %v942, %v1536
        %v1548 = vmul.f32 %v967, %v1534
        %v1549 = vmul.f32 %v1445, %v1530
        %v1550 = vmul.f32 %v1446, %v1535
        %v1551 = vmul.f32 %v1447, %v1536
        %v1552 = vmul.f32 %v1513, %v1534
        %v1565 = vrot.slane %v1541, 1
        %v1566 = vrot.slane %v1545, 1
        %v1567 = vsel %vm1484, %v1565, %v1566
        %v1568 = vrot.slane %v1542, 1
        %v1569 = vrot.slane %v1546, 1
        %v1570 = vsel %vm1484, %v1568, %v1569
        %v1571 = vrot.slane %v1543, 1
        %v1572 = vrot.slane %v1547, 1
        %v1573 = vsel %vm1484, %v1571, %v1572
        %v1574 = vrot.slane %v1544, 1
        %v1575 = vrot.slane %v1548, 1
        %v1576 = vsel %vm1484, %v1574, %v1575
        %v1577 = vrot.slane %v1549, 1
        %v1578 = vsel %vm1484, %v1566, %v1577
        %v1579 = vrot.slane %v1550, 1
        %v1580 = vsel %vm1484, %v1569, %v1579
        %v1581 = vrot.slane %v1551, 1
        %v1582 = vsel %vm1484, %v1572, %v1581
        %v1583 = vrot.slane %v1552, 1
        %v1584 = vsel %vm1484, %v1575, %v1583
        %1585 = vrot.lane.b32.xlu0 %v1567, 104
        %v1586 = vpop.permute.xlu0 %1585
        %1587 = vrot.lane.b32.xlu0 %v1570, 104
        %v1588 = vpop.permute.xlu0 %1587
        %1589 = vrot.lane.b32.xlu0 %v1573, 104
        %v1590 = vpop.permute.xlu0 %1589
        %1591 = vrot.lane.b32.xlu0 %v1576, 104
        %v1592 = vpop.permute.xlu0 %1591
        %1593 = vrot.lane.b32.xlu0 %v1578, 104
        %v1594 = vpop.permute.xlu0 %1593
        %1595 = vrot.lane.b32.xlu0 %v1580, 104
        %v1596 = vpop.permute.xlu0 %1595
        %1597 = vrot.lane.b32.xlu0 %v1582, 104
        %v1598 = vpop.permute.xlu0 %1597
        %1599 = vrot.lane.b32.xlu0 %v1584, 104
        %v1600 = vpop.permute.xlu0 %1599
        %v1601 = vsel %vm1028, %v1586, %v1588
        %v1602 = vsel %vm1028, %v1588, %v1590
        %v1603 = vsel %vm1028, %v1590, %v1592
        %v1604 = vsel %vm1028, %v1594, %v1596
        %v1605 = vsel %vm1028, %v1596, %v1598
        %v1606 = vsel %vm1028, %v1598, %v1600
        %v1613 = vadd.f32 %v1506, %v1601
        %v1614 = vadd.f32 %v1507, %v1602
        %v1615 = vadd.f32 %v1508, %v1603
        %v1616 = vadd.f32 %v1509, %v1604
        %v1617 = vadd.f32 %v1510, %v1605
        %v1618 = vadd.f32 %v1511, %v1606
        %s1619 = scalar_lea.vmem %s3, 25
        %v1620 = vld [vmem:[%s1619] ss:$8 sm:$0x7]
        %v1622 = vlaneseq
        %v1623 = vshrl.u32 %v1622, 7
        %v1624 = vsub.s32 0, %v1623
        %v1625 = vrot.slane %v1620, %v1624
        %v1626 = vlaneseq
        %v1627 = vshrl.u32 %v1626, 7
        %v1628 = vsub.s32 1, %v1627
        %v1629 = vrot.slane %v1620, %v1628
        %v1630 = vlaneseq
        %v1631 = vshrl.u32 %v1630, 7
        %v1632 = vsub.s32 2, %v1631
        %v1633 = vrot.slane %v1620, %v1632
        %1634 = vrot.lane.b32.xlu0 %v1625, 48
        %v1635 = vpop.permute.xlu0 %1634
        %1636 = vrot.lane.b32.xlu0 %v1629, 48
        %v1637 = vpop.permute.xlu0 %1636
        %1638 = vrot.lane.b32.xlu0 %v1633, 48
        %v1639 = vpop.permute.xlu0 %1638
        %v1640 = vsel %vm1068, %v1635, %v1637
        %v1641 = vsel %vm1068, %v1637, %v1639
        %v1646 = vmul.f32 %v1442, %v1635
        %v1647 = vmul.f32 %v1443, %v1640
        %v1648 = vmul.f32 %v1444, %v1641
        %v1649 = vmul.f32 %v1512, %v1639
        %v1650 = vmul.f32 %v940, %v1635
        %v1651 = vmul.f32 %v941, %v1640
        %v1652 = vmul.f32 %v942, %v1641
        %v1653 = vmul.f32 %v967, %v1639
        %v1654 = vmul.f32 %v1445, %v1635
        %v1655 = vmul.f32 %v1446, %v1640
        %v1656 = vmul.f32 %v1447, %v1641
        %v1657 = vmul.f32 %v1513, %v1639
        %v1670 = vrot.slane %v1646, 1
        %v1671 = vrot.slane %v1650, 1
        %v1672 = vsel %vm1484, %v1670, %v1671
        %v1673 = vrot.slane %v1647, 1
        %v1674 = vrot.slane %v1651, 1
        %v1675 = vsel %vm1484, %v1673, %v1674
        %v1676 = vrot.slane %v1648, 1
        %v1677 = vrot.slane %v1652, 1
        %v1678 = vsel %vm1484, %v1676, %v1677
        %v1679 = vrot.slane %v1649, 1
        %v1680 = vrot.slane %v1653, 1
        %v1681 = vsel %vm1484, %v1679, %v1680
        %v1682 = vrot.slane %v1654, 1
        %v1683 = vsel %vm1484, %v1671, %v1682
        %v1684 = vrot.slane %v1655, 1
        %v1685 = vsel %vm1484, %v1674, %v1684
        %v1686 = vrot.slane %v1656, 1
        %v1687 = vsel %vm1484, %v1677, %v1686
        %v1688 = vrot.slane %v1657, 1
        %v1689 = vsel %vm1484, %v1680, %v1688
        %1690 = vrot.lane.b32.xlu0 %v1672, 80
        %v1691 = vpop.permute.xlu0 %1690
        %1692 = vrot.lane.b32.xlu0 %v1675, 80
        %v1693 = vpop.permute.xlu0 %1692
        %1694 = vrot.lane.b32.xlu0 %v1678, 80
        %v1695 = vpop.permute.xlu0 %1694
        %1696 = vrot.lane.b32.xlu0 %v1681, 80
        %v1697 = vpop.permute.xlu0 %1696
        %1698 = vrot.lane.b32.xlu0 %v1683, 80
        %v1699 = vpop.permute.xlu0 %1698
        %1700 = vrot.lane.b32.xlu0 %v1685, 80
        %v1701 = vpop.permute.xlu0 %1700
        %1702 = vrot.lane.b32.xlu0 %v1687, 80
        %v1703 = vpop.permute.xlu0 %1702
        %1704 = vrot.lane.b32.xlu0 %v1689, 80
        %v1705 = vpop.permute.xlu0 %1704
        %v1706 = vsel %vm1107, %v1691, %v1693
        %v1707 = vsel %vm1107, %v1693, %v1695
        %v1708 = vsel %vm1107, %v1695, %v1697
        %v1709 = vsel %vm1107, %v1699, %v1701
        %v1710 = vsel %vm1107, %v1701, %v1703
        %v1711 = vsel %vm1107, %v1703, %v1705
        %v1718 = vadd.f32 %v1613, %v1706
        %v1719 = vadd.f32 %v1614, %v1707
        %v1720 = vadd.f32 %v1615, %v1708
        %v1721 = vadd.f32 %v1616, %v1709
        %v1722 = vadd.f32 %v1617, %v1710
        %v1723 = vadd.f32 %v1618, %v1711
        %s1724 = scalar_lea.vmem %s3, 26
        %v1725 = vld [vmem:[%s1724] ss:$8 sm:$0x7]
        %v1727 = vlaneseq
        %v1728 = vshrl.u32 %v1727, 7
        %v1729 = vsub.s32 0, %v1728
        %v1730 = vrot.slane %v1725, %v1729
        %v1731 = vlaneseq
        %v1732 = vshrl.u32 %v1731, 7
        %v1733 = vsub.s32 1, %v1732
        %v1734 = vrot.slane %v1725, %v1733
        %v1735 = vlaneseq
        %v1736 = vshrl.u32 %v1735, 7
        %v1737 = vsub.s32 2, %v1736
        %v1738 = vrot.slane %v1725, %v1737
        %1739 = vrot.lane.b32.xlu0 %v1730, 72
        %v1740 = vpop.permute.xlu0 %1739
        %1741 = vrot.lane.b32.xlu0 %v1734, 72
        %v1742 = vpop.permute.xlu0 %1741
        %1743 = vrot.lane.b32.xlu0 %v1738, 72
        %v1744 = vpop.permute.xlu0 %1743
        %v1745 = vsel %vm858, %v1740, %v1742
        %v1746 = vsel %vm858, %v1742, %v1744
        %v1751 = vmul.f32 %v1442, %v1740
        %v1752 = vmul.f32 %v1443, %v1745
        %v1753 = vmul.f32 %v1444, %v1746
        %v1754 = vmul.f32 %v1512, %v1744
        %v1755 = vmul.f32 %v940, %v1740
        %v1756 = vmul.f32 %v941, %v1745
        %v1757 = vmul.f32 %v942, %v1746
        %v1758 = vmul.f32 %v967, %v1744
        %v1759 = vmul.f32 %v1445, %v1740
        %v1760 = vmul.f32 %v1446, %v1745
        %v1761 = vmul.f32 %v1447, %v1746
        %v1762 = vmul.f32 %v1513, %v1744
        %v1775 = vrot.slane %v1751, 1
        %v1776 = vrot.slane %v1755, 1
        %v1777 = vsel %vm1484, %v1775, %v1776
        %v1778 = vrot.slane %v1752, 1
        %v1779 = vrot.slane %v1756, 1
        %v1780 = vsel %vm1484, %v1778, %v1779
        %v1781 = vrot.slane %v1753, 1
        %v1782 = vrot.slane %v1757, 1
        %v1783 = vsel %vm1484, %v1781, %v1782
        %v1784 = vrot.slane %v1754, 1
        %v1785 = vrot.slane %v1758, 1
        %v1786 = vsel %vm1484, %v1784, %v1785
        %v1787 = vrot.slane %v1759, 1
        %v1788 = vsel %vm1484, %v1776, %v1787
        %v1789 = vrot.slane %v1760, 1
        %v1790 = vsel %vm1484, %v1779, %v1789
        %v1791 = vrot.slane %v1761, 1
        %v1792 = vsel %vm1484, %v1782, %v1791
        %v1793 = vrot.slane %v1762, 1
        %v1794 = vsel %vm1484, %v1785, %v1793
        %1795 = vrot.lane.b32.xlu0 %v1777, 56
        %v1796 = vpop.permute.xlu0 %1795
        %1797 = vrot.lane.b32.xlu0 %v1780, 56
        %v1798 = vpop.permute.xlu0 %1797
        %1799 = vrot.lane.b32.xlu0 %v1783, 56
        %v1800 = vpop.permute.xlu0 %1799
        %1801 = vrot.lane.b32.xlu0 %v1786, 56
        %v1802 = vpop.permute.xlu0 %1801
        %1803 = vrot.lane.b32.xlu0 %v1788, 56
        %v1804 = vpop.permute.xlu0 %1803
        %1805 = vrot.lane.b32.xlu0 %v1790, 56
        %v1806 = vpop.permute.xlu0 %1805
        %1807 = vrot.lane.b32.xlu0 %v1792, 56
        %v1808 = vpop.permute.xlu0 %1807
        %1809 = vrot.lane.b32.xlu0 %v1794, 56
        %v1810 = vpop.permute.xlu0 %1809
        %v1811 = vsel %vm1185, %v1796, %v1798
        %v1812 = vsel %vm1185, %v1798, %v1800
        %v1813 = vsel %vm1185, %v1800, %v1802
        %v1814 = vsel %vm1185, %v1804, %v1806
        %v1815 = vsel %vm1185, %v1806, %v1808
        %v1816 = vsel %vm1185, %v1808, %v1810
        %v1823 = vadd.f32 %v1718, %v1811
        %v1824 = vadd.f32 %v1719, %v1812
        %v1825 = vadd.f32 %v1720, %v1813
        %v1826 = vadd.f32 %v1721, %v1814
        %v1827 = vadd.f32 %v1722, %v1815
        %v1828 = vadd.f32 %v1723, %v1816
        %s1829 = scalar_lea.vmem %s3, 27
        %v1830 = vld [vmem:[%s1829] ss:$8 sm:$0x7]
        %v1832 = vlaneseq
        %v1833 = vshrl.u32 %v1832, 7
        %v1834 = vsub.s32 0, %v1833
        %v1835 = vrot.slane %v1830, %v1834
        %v1836 = vlaneseq
        %v1837 = vshrl.u32 %v1836, 7
        %v1838 = vsub.s32 1, %v1837
        %v1839 = vrot.slane %v1830, %v1838
        %v1840 = vlaneseq
        %v1841 = vshrl.u32 %v1840, 7
        %v1842 = vsub.s32 2, %v1841
        %v1843 = vrot.slane %v1830, %v1842
        %1844 = vrot.lane.b32.xlu0 %v1835, 96
        %v1845 = vpop.permute.xlu0 %1844
        %1846 = vrot.lane.b32.xlu0 %v1839, 96
        %v1847 = vpop.permute.xlu0 %1846
        %1848 = vrot.lane.b32.xlu0 %v1843, 96
        %v1849 = vpop.permute.xlu0 %1848
        %v1850 = vsel %vm1225, %v1845, %v1847
        %v1851 = vsel %vm1225, %v1847, %v1849
        %v1856 = vmul.f32 %v1442, %v1845
        %v1857 = vmul.f32 %v1443, %v1850
        %v1858 = vmul.f32 %v1444, %v1851
        %v1859 = vmul.f32 %v1512, %v1849
        %v1860 = vmul.f32 %v940, %v1845
        %v1861 = vmul.f32 %v941, %v1850
        %v1862 = vmul.f32 %v942, %v1851
        %v1863 = vmul.f32 %v967, %v1849
        %v1864 = vmul.f32 %v1445, %v1845
        %v1865 = vmul.f32 %v1446, %v1850
        %v1866 = vmul.f32 %v1447, %v1851
        %v1867 = vmul.f32 %v1513, %v1849
        %v1880 = vrot.slane %v1856, 1
        %v1881 = vrot.slane %v1860, 1
        %v1882 = vsel %vm1484, %v1880, %v1881
        %v1883 = vrot.slane %v1857, 1
        %v1884 = vrot.slane %v1861, 1
        %v1885 = vsel %vm1484, %v1883, %v1884
        %v1886 = vrot.slane %v1858, 1
        %v1887 = vrot.slane %v1862, 1
        %v1888 = vsel %vm1484, %v1886, %v1887
        %v1889 = vrot.slane %v1859, 1
        %v1890 = vrot.slane %v1863, 1
        %v1891 = vsel %vm1484, %v1889, %v1890
        %v1892 = vrot.slane %v1864, 1
        %v1893 = vsel %vm1484, %v1881, %v1892
        %v1894 = vrot.slane %v1865, 1
        %v1895 = vsel %vm1484, %v1884, %v1894
        %v1896 = vrot.slane %v1866, 1
        %v1897 = vsel %vm1484, %v1887, %v1896
        %v1898 = vrot.slane %v1867, 1
        %v1899 = vsel %vm1484, %v1890, %v1898
        %1900 = vrot.lane.b32.xlu0 %v1882, 32
        %v1901 = vpop.permute.xlu0 %1900
        %1902 = vrot.lane.b32.xlu0 %v1885, 32
        %v1903 = vpop.permute.xlu0 %1902
        %1904 = vrot.lane.b32.xlu0 %v1888, 32
        %v1905 = vpop.permute.xlu0 %1904
        %1906 = vrot.lane.b32.xlu0 %v1891, 32
        %v1907 = vpop.permute.xlu0 %1906
        %1908 = vrot.lane.b32.xlu0 %v1893, 32
        %v1909 = vpop.permute.xlu0 %1908
        %1910 = vrot.lane.b32.xlu0 %v1895, 32
        %v1911 = vpop.permute.xlu0 %1910
        %1912 = vrot.lane.b32.xlu0 %v1897, 32
        %v1913 = vpop.permute.xlu0 %1912
        %1914 = vrot.lane.b32.xlu0 %v1899, 32
        %v1915 = vpop.permute.xlu0 %1914
        %v1916 = vsel %vm1264, %v1901, %v1903
        %v1917 = vsel %vm1264, %v1903, %v1905
        %v1918 = vsel %vm1264, %v1905, %v1907
        %v1919 = vsel %vm1264, %v1909, %v1911
        %v1920 = vsel %vm1264, %v1911, %v1913
        %v1921 = vsel %vm1264, %v1913, %v1915
        %v1928 = vadd.f32 %v1823, %v1916
        %v1929 = vadd.f32 %v1824, %v1917
        %v1930 = vadd.f32 %v1825, %v1918
        %v1931 = vadd.f32 %v1826, %v1919
        %v1932 = vadd.f32 %v1827, %v1920
        %v1933 = vadd.f32 %v1828, %v1921
        %s1934 = scalar_lea.vmem %s3, 28
        %v1935 = vld [vmem:[%s1934] ss:$8 sm:$0x7]
        %v1937 = vlaneseq
        %v1938 = vshrl.u32 %v1937, 7
        %v1939 = vsub.s32 0, %v1938
        %v1940 = vrot.slane %v1935, %v1939
        %v1941 = vlaneseq
        %v1942 = vshrl.u32 %v1941, 7
        %v1943 = vsub.s32 1, %v1942
        %v1944 = vrot.slane %v1935, %v1943
        %v1945 = vlaneseq
        %v1946 = vshrl.u32 %v1945, 7
        %v1947 = vsub.s32 2, %v1946
        %v1948 = vrot.slane %v1935, %v1947
        %1949 = vrot.lane.b32.xlu0 %v1940, 120
        %v1950 = vpop.permute.xlu0 %1949
        %1951 = vrot.lane.b32.xlu0 %v1944, 120
        %v1952 = vpop.permute.xlu0 %1951
        %1953 = vrot.lane.b32.xlu0 %v1948, 120
        %v1954 = vpop.permute.xlu0 %1953
        %v1955 = vsel %vm1304, %v1950, %v1952
        %v1956 = vsel %vm1304, %v1952, %v1954
        %v1961 = vmul.f32 %v1442, %v1950
        %v1962 = vmul.f32 %v1443, %v1955
        %v1963 = vmul.f32 %v1444, %v1956
        %v1964 = vmul.f32 %v1512, %v1954
        %v1965 = vmul.f32 %v940, %v1950
        %v1966 = vmul.f32 %v941, %v1955
        %v1967 = vmul.f32 %v942, %v1956
        %v1968 = vmul.f32 %v967, %v1954
        %v1969 = vmul.f32 %v1445, %v1950
        %v1970 = vmul.f32 %v1446, %v1955
        %v1971 = vmul.f32 %v1447, %v1956
        %v1972 = vmul.f32 %v1513, %v1954
        %v1985 = vrot.slane %v1961, 1
        %v1986 = vrot.slane %v1965, 1
        %v1987 = vsel %vm1484, %v1985, %v1986
        %v1988 = vrot.slane %v1962, 1
        %v1989 = vrot.slane %v1966, 1
        %v1990 = vsel %vm1484, %v1988, %v1989
        %v1991 = vrot.slane %v1963, 1
        %v1992 = vrot.slane %v1967, 1
        %v1993 = vsel %vm1484, %v1991, %v1992
        %v1994 = vrot.slane %v1964, 1
        %v1995 = vrot.slane %v1968, 1
        %v1996 = vsel %vm1484, %v1994, %v1995
        %v1997 = vrot.slane %v1969, 1
        %v1998 = vsel %vm1484, %v1986, %v1997
        %v1999 = vrot.slane %v1970, 1
        %v2000 = vsel %vm1484, %v1989, %v1999
        %v2001 = vrot.slane %v1971, 1
        %v2002 = vsel %vm1484, %v1992, %v2001
        %v2003 = vrot.slane %v1972, 1
        %v2004 = vsel %vm1484, %v1995, %v2003
        %2005 = vrot.lane.b32.xlu0 %v1987, 8
        %v2006 = vpop.permute.xlu0 %2005
        %2007 = vrot.lane.b32.xlu0 %v1990, 8
        %v2008 = vpop.permute.xlu0 %2007
        %2009 = vrot.lane.b32.xlu0 %v1993, 8
        %v2010 = vpop.permute.xlu0 %2009
        %2011 = vrot.lane.b32.xlu0 %v1996, 8
        %v2012 = vpop.permute.xlu0 %2011
        %2013 = vrot.lane.b32.xlu0 %v1998, 8
        %v2014 = vpop.permute.xlu0 %2013
        %2015 = vrot.lane.b32.xlu0 %v2000, 8
        %v2016 = vpop.permute.xlu0 %2015
        %2017 = vrot.lane.b32.xlu0 %v2002, 8
        %v2018 = vpop.permute.xlu0 %2017
        %2019 = vrot.lane.b32.xlu0 %v2004, 8
        %v2020 = vpop.permute.xlu0 %2019
        %v2021 = vsel %vm1343, %v2006, %v2008
        %v2022 = vsel %vm1343, %v2008, %v2010
        %v2023 = vsel %vm1343, %v2010, %v2012
        %v2024 = vsel %vm1343, %v2014, %v2016
        %v2025 = vsel %vm1343, %v2016, %v2018
        %v2026 = vsel %vm1343, %v2018, %v2020
        %v2033 = vadd.f32 %v1928, %v2021
        %v2034 = vadd.f32 %v1929, %v2022
        %v2035 = vadd.f32 %v1930, %v2023
        %v2036 = vadd.f32 %v1931, %v2024
        %v2037 = vadd.f32 %v1932, %v2025
        %v2038 = vadd.f32 %v1933, %v2026
        %v2039 = vld [vmem:[#allocation2 + $0x20] sm:$0xfe]
        %v2040 = vld [vmem:[#allocation2 + $0x70] sm:$0x1]
        %s2041 = scalar_lea.vmem %s3, 29
        %v2042 = vld [vmem:[%s2041] ss:$8 sm:$0x7]
        %v2044 = vlaneseq
        %v2045 = vshrl.u32 %v2044, 7
        %v2046 = vsub.s32 0, %v2045
        %v2047 = vrot.slane %v2042, %v2046
        %v2048 = vlaneseq
        %v2049 = vshrl.u32 %v2048, 7
        %v2050 = vsub.s32 1, %v2049
        %v2051 = vrot.slane %v2042, %v2050
        %v2052 = vlaneseq
        %v2053 = vshrl.u32 %v2052, 7
        %v2054 = vsub.s32 2, %v2053
        %v2055 = vrot.slane %v2042, %v2054
        %2056 = vrot.lane.b32.xlu0 %v2047, 16
        %v2057 = vpop.permute.xlu0 %2056
        %2058 = vrot.lane.b32.xlu0 %v2051, 16
        %v2059 = vpop.permute.xlu0 %2058
        %2060 = vrot.lane.b32.xlu0 %v2055, 16
        %v2061 = vpop.permute.xlu0 %2060
        %v2062 = vsel %vm868, %v2057, %v2059
        %v2063 = vsel %vm868, %v2059, %v2061
        %v2068 = vmul.f32 %v1443, %v2057
        %v2069 = vmul.f32 %v1444, %v2062
        %v2070 = vmul.f32 %v1512, %v2063
        %v2071 = vmul.f32 %v2039, %v2061
        %v2072 = vmul.f32 %v941, %v2057
        %v2073 = vmul.f32 %v942, %v2062
        %v2074 = vmul.f32 %v967, %v2063
        %v2075 = vmul.f32 %v1363, %v2061
        %v2076 = vmul.f32 %v1446, %v2057
        %v2077 = vmul.f32 %v1447, %v2062
        %v2078 = vmul.f32 %v1513, %v2063
        %v2079 = vmul.f32 %v2040, %v2061
        %v2092 = vrot.slane %v2068, 1
        %v2093 = vrot.slane %v2072, 1
        %v2094 = vsel %vm1484, %v2092, %v2093
        %v2095 = vrot.slane %v2069, 1
        %v2096 = vrot.slane %v2073, 1
        %v2097 = vsel %vm1484, %v2095, %v2096
        %v2098 = vrot.slane %v2070, 1
        %v2099 = vrot.slane %v2074, 1
        %v2100 = vsel %vm1484, %v2098, %v2099
        %v2101 = vrot.slane %v2071, 1
        %v2102 = vrot.slane %v2075, 1
        %v2103 = vsel %vm1484, %v2101, %v2102
        %v2104 = vrot.slane %v2076, 1
        %v2105 = vsel %vm1484, %v2093, %v2104
        %v2106 = vrot.slane %v2077, 1
        %v2107 = vsel %vm1484, %v2096, %v2106
        %v2108 = vrot.slane %v2078, 1
        %v2109 = vsel %vm1484, %v2099, %v2108
        %v2110 = vrot.slane %v2079, 1
        %v2111 = vsel %vm1484, %v2102, %v2110
        %2112 = vrot.lane.b32.xlu0 %v2094, 112
        %v2113 = vpop.permute.xlu0 %2112
        %2114 = vrot.lane.b32.xlu0 %v2097, 112
        %v2115 = vpop.permute.xlu0 %2114
        %2116 = vrot.lane.b32.xlu0 %v2100, 112
        %v2117 = vpop.permute.xlu0 %2116
        %2118 = vrot.lane.b32.xlu0 %v2103, 112
        %v2119 = vpop.permute.xlu0 %2118
        %2120 = vrot.lane.b32.xlu0 %v2105, 112
        %v2121 = vpop.permute.xlu0 %2120
        %2122 = vrot.lane.b32.xlu0 %v2107, 112
        %v2123 = vpop.permute.xlu0 %2122
        %2124 = vrot.lane.b32.xlu0 %v2109, 112
        %v2125 = vpop.permute.xlu0 %2124
        %2126 = vrot.lane.b32.xlu0 %v2111, 112
        %v2127 = vpop.permute.xlu0 %2126
        %v2128 = vsel %vm1423, %v2113, %v2115
        %v2129 = vsel %vm1423, %v2115, %v2117
        %v2130 = vsel %vm1423, %v2117, %v2119
        %v2131 = vsel %vm1423, %v2121, %v2123
        %v2132 = vsel %vm1423, %v2123, %v2125
        %v2133 = vsel %vm1423, %v2125, %v2127
        %v2140 = vadd.f32 %v2033, %v2128
        %v2141 = vadd.f32 %v2034, %v2129
        %v2142 = vadd.f32 %v2035, %v2130
        %v2143 = vadd.f32 %v2036, %v2131
        %v2144 = vadd.f32 %v2037, %v2132
        %v2145 = vadd.f32 %v2038, %v2133
        %v2146 = vld [vmem:[#allocation2] sm:$0xfc]
        %v2147 = vld [vmem:[#allocation2 + $0x8] sm:$0xfc]
        %v2148 = vld [vmem:[#allocation2 + $0x10] sm:$0xfc]
        %v2149 = vld [vmem:[#allocation2 + $0x50] sm:$0x3]
        %v2150 = vld [vmem:[#allocation2 + $0x58] sm:$0x3]
        %v2151 = vld [vmem:[#allocation2 + $0x60] sm:$0x3]
        %s2152 = scalar_lea.vmem %s3, 30
        %v2153 = vld [vmem:[%s2152] ss:$8 sm:$0x7]
        %v2155 = vlaneseq
        %v2156 = vshrl.u32 %v2155, 7
        %v2157 = vsub.s32 0, %v2156
        %v2158 = vrot.slane %v2153, %v2157
        %v2159 = vlaneseq
        %v2160 = vshrl.u32 %v2159, 7
        %v2161 = vsub.s32 1, %v2160
        %v2162 = vrot.slane %v2153, %v2161
        %v2163 = vlaneseq
        %v2164 = vshrl.u32 %v2163, 7
        %v2165 = vsub.s32 2, %v2164
        %v2166 = vrot.slane %v2153, %v2165
        %v2170 = vmul.f32 %v2146, %v2158
        %v2171 = vmul.f32 %v2147, %v2162
        %v2172 = vmul.f32 %v2148, %v2166
        %v2173 = vmul.f32 %v940, %v2158
        %v2174 = vmul.f32 %v941, %v2162
        %v2175 = vmul.f32 %v942, %v2166
        %v2176 = vmul.f32 %v2149, %v2158
        %v2177 = vmul.f32 %v2150, %v2162
        %v2178 = vmul.f32 %v2151, %v2166
        %vm2188 = vcmask 1045504
        %v2189 = vrot.slane %v2170, 2
        %v2190 = vrot.slane %v2173, 2
        %v2191 = vsel %vm2188, %v2189, %v2190
        %v2192 = vrot.slane %v2171, 2
        %v2193 = vrot.slane %v2174, 2
        %v2194 = vsel %vm2188, %v2192, %v2193
        %v2195 = vrot.slane %v2172, 2
        %v2196 = vrot.slane %v2175, 2
        %v2197 = vsel %vm2188, %v2195, %v2196
        %v2198 = vrot.slane %v2176, 2
        %v2199 = vsel %vm2188, %v2190, %v2198
        %v2200 = vrot.slane %v2177, 2
        %v2201 = vsel %vm2188, %v2193, %v2200
        %v2202 = vrot.slane %v2178, 2
        %v2203 = vsel %vm2188, %v2196, %v2202
        %v2210 = vadd.f32 %v2140, %v2191
        %v2211 = vadd.f32 %v2141, %v2194
        %v2212 = vadd.f32 %v2142, %v2197
        %v2213 = vadd.f32 %v2143, %v2199
        %v2214 = vadd.f32 %v2144, %v2201
        %v2215 = vadd.f32 %v2145, %v2203
        %v2216 = vld [vmem:[#allocation2 + $0x18] sm:$0xfc]
        %v2217 = vld [vmem:[#allocation2 + $0x68] sm:$0x3]
        %s2218 = scalar_lea.vmem %s3, 31
        %v2219 = vld [vmem:[%s2218] ss:$8 sm:$0x7]
        %v2221 = vlaneseq
        %v2222 = vshrl.u32 %v2221, 7
        %v2223 = vsub.s32 0, %v2222
        %v2224 = vrot.slane %v2219, %v2223
        %v2225 = vlaneseq
        %v2226 = vshrl.u32 %v2225, 7
        %v2227 = vsub.s32 1, %v2226
        %v2228 = vrot.slane %v2219, %v2227
        %v2229 = vlaneseq
        %v2230 = vshrl.u32 %v2229, 7
        %v2231 = vsub.s32 2, %v2230
        %v2232 = vrot.slane %v2219, %v2231
        %2233 = vrot.lane.b32.xlu0 %v2224, 24
        %v2234 = vpop.permute.xlu0 %2233
        %2235 = vrot.lane.b32.xlu0 %v2228, 24
        %v2236 = vpop.permute.xlu0 %2235
        %2237 = vrot.lane.b32.xlu0 %v2232, 24
        %v2238 = vpop.permute.xlu0 %2237
        %v2239 = vsel %vm989, %v2234, %v2236
        %v2240 = vsel %vm989, %v2236, %v2238
        %v2245 = vmul.f32 %v2146, %v2234
        %v2246 = vmul.f32 %v2147, %v2239
        %v2247 = vmul.f32 %v2148, %v2240
        %v2248 = vmul.f32 %v2216, %v2238
        %v2249 = vmul.f32 %v940, %v2234
        %v2250 = vmul.f32 %v941, %v2239
        %v2251 = vmul.f32 %v942, %v2240
        %v2252 = vmul.f32 %v967, %v2238
        %v2253 = vmul.f32 %v2149, %v2234
        %v2254 = vmul.f32 %v2150, %v2239
        %v2255 = vmul.f32 %v2151, %v2240
        %v2256 = vmul.f32 %v2217, %v2238
        %v2269 = vrot.slane %v2245, 2
        %v2270 = vrot.slane %v2249, 2
        %v2271 = vsel %vm2188, %v2269, %v2270
        %v2272 = vrot.slane %v2246, 2
        %v2273 = vrot.slane %v2250, 2
        %v2274 = vsel %vm2188, %v2272, %v2273
        %v2275 = vrot.slane %v2247, 2
        %v2276 = vrot.slane %v2251, 2
        %v2277 = vsel %vm2188, %v2275, %v2276
        %v2278 = vrot.slane %v2248, 2
        %v2279 = vrot.slane %v2252, 2
        %v2280 = vsel %vm2188, %v2278, %v2279
        %v2281 = vrot.slane %v2253, 2
        %v2282 = vsel %vm2188, %v2270, %v2281
        %v2283 = vrot.slane %v2254, 2
        %v2284 = vsel %vm2188, %v2273, %v2283
        %v2285 = vrot.slane %v2255, 2
        %v2286 = vsel %vm2188, %v2276, %v2285
        %v2287 = vrot.slane %v2256, 2
        %v2288 = vsel %vm2188, %v2279, %v2287
        %2289 = vrot.lane.b32.xlu0 %v2271, 104
        %v2290 = vpop.permute.xlu0 %2289
        %2291 = vrot.lane.b32.xlu0 %v2274, 104
        %v2292 = vpop.permute.xlu0 %2291
        %2293 = vrot.lane.b32.xlu0 %v2277, 104
        %v2294 = vpop.permute.xlu0 %2293
        %2295 = vrot.lane.b32.xlu0 %v2280, 104
        %v2296 = vpop.permute.xlu0 %2295
        %2297 = vrot.lane.b32.xlu0 %v2282, 104
        %v2298 = vpop.permute.xlu0 %2297
        %2299 = vrot.lane.b32.xlu0 %v2284, 104
        %v2300 = vpop.permute.xlu0 %2299
        %2301 = vrot.lane.b32.xlu0 %v2286, 104
        %v2302 = vpop.permute.xlu0 %2301
        %2303 = vrot.lane.b32.xlu0 %v2288, 104
        %v2304 = vpop.permute.xlu0 %2303
        %v2305 = vsel %vm1028, %v2290, %v2292
        %v2306 = vsel %vm1028, %v2292, %v2294
        %v2307 = vsel %vm1028, %v2294, %v2296
        %v2308 = vsel %vm1028, %v2298, %v2300
        %v2309 = vsel %vm1028, %v2300, %v2302
        %v2310 = vsel %vm1028, %v2302, %v2304
        %v2317 = vadd.f32 %v2210, %v2305
        %v2318 = vadd.f32 %v2211, %v2306
        %v2319 = vadd.f32 %v2212, %v2307
        %v2320 = vadd.f32 %v2213, %v2308
        %v2321 = vadd.f32 %v2214, %v2309
        %v2322 = vadd.f32 %v2215, %v2310
        %s2323 = scalar_lea.vmem %s3, 48
        %v2324 = vld [vmem:[%s2323] ss:$8 sm:$0x7]
        %v2326 = vlaneseq
        %v2327 = vshrl.u32 %v2326, 7
        %v2328 = vsub.s32 0, %v2327
        %v2329 = vrot.slane %v2324, %v2328
        %v2330 = vlaneseq
        %v2331 = vshrl.u32 %v2330, 7
        %v2332 = vsub.s32 1, %v2331
        %v2333 = vrot.slane %v2324, %v2332
        %v2334 = vlaneseq
        %v2335 = vshrl.u32 %v2334, 7
        %v2336 = vsub.s32 2, %v2335
        %v2337 = vrot.slane %v2324, %v2336
        %2338 = vrot.lane.b32.xlu0 %v2329, 48
        %v2339 = vpop.permute.xlu0 %2338
        %2340 = vrot.lane.b32.xlu0 %v2333, 48
        %v2341 = vpop.permute.xlu0 %2340
        %2342 = vrot.lane.b32.xlu0 %v2337, 48
        %v2343 = vpop.permute.xlu0 %2342
        %v2344 = vsel %vm1068, %v2339, %v2341
        %v2345 = vsel %vm1068, %v2341, %v2343
        %v2350 = vmul.f32 %v2146, %v2339
        %v2351 = vmul.f32 %v2147, %v2344
        %v2352 = vmul.f32 %v2148, %v2345
        %v2353 = vmul.f32 %v2216, %v2343
        %v2354 = vmul.f32 %v940, %v2339
        %v2355 = vmul.f32 %v941, %v2344
        %v2356 = vmul.f32 %v942, %v2345
        %v2357 = vmul.f32 %v967, %v2343
        %v2358 = vmul.f32 %v2149, %v2339
        %v2359 = vmul.f32 %v2150, %v2344
        %v2360 = vmul.f32 %v2151, %v2345
        %v2361 = vmul.f32 %v2217, %v2343
        %v2374 = vrot.slane %v2350, 2
        %v2375 = vrot.slane %v2354, 2
        %v2376 = vsel %vm2188, %v2374, %v2375
        %v2377 = vrot.slane %v2351, 2
        %v2378 = vrot.slane %v2355, 2
        %v2379 = vsel %vm2188, %v2377, %v2378
        %v2380 = vrot.slane %v2352, 2
        %v2381 = vrot.slane %v2356, 2
        %v2382 = vsel %vm2188, %v2380, %v2381
        %v2383 = vrot.slane %v2353, 2
        %v2384 = vrot.slane %v2357, 2
        %v2385 = vsel %vm2188, %v2383, %v2384
        %v2386 = vrot.slane %v2358, 2
        %v2387 = vsel %vm2188, %v2375, %v2386
        %v2388 = vrot.slane %v2359, 2
        %v2389 = vsel %vm2188, %v2378, %v2388
        %v2390 = vrot.slane %v2360, 2
        %v2391 = vsel %vm2188, %v2381, %v2390
        %v2392 = vrot.slane %v2361, 2
        %v2393 = vsel %vm2188, %v2384, %v2392
        %2394 = vrot.lane.b32.xlu0 %v2376, 80
        %v2395 = vpop.permute.xlu0 %2394
        %2396 = vrot.lane.b32.xlu0 %v2379, 80
        %v2397 = vpop.permute.xlu0 %2396
        %2398 = vrot.lane.b32.xlu0 %v2382, 80
        %v2399 = vpop.permute.xlu0 %2398
        %2400 = vrot.lane.b32.xlu0 %v2385, 80
        %v2401 = vpop.permute.xlu0 %2400
        %2402 = vrot.lane.b32.xlu0 %v2387, 80
        %v2403 = vpop.permute.xlu0 %2402
        %2404 = vrot.lane.b32.xlu0 %v2389, 80
        %v2405 = vpop.permute.xlu0 %2404
        %2406 = vrot.lane.b32.xlu0 %v2391, 80
        %v2407 = vpop.permute.xlu0 %2406
        %2408 = vrot.lane.b32.xlu0 %v2393, 80
        %v2409 = vpop.permute.xlu0 %2408
        %v2410 = vsel %vm1107, %v2395, %v2397
        %v2411 = vsel %vm1107, %v2397, %v2399
        %v2412 = vsel %vm1107, %v2399, %v2401
        %v2413 = vsel %vm1107, %v2403, %v2405
        %v2414 = vsel %vm1107, %v2405, %v2407
        %v2415 = vsel %vm1107, %v2407, %v2409
        %v2422 = vadd.f32 %v2317, %v2410
        %v2423 = vadd.f32 %v2318, %v2411
        %v2424 = vadd.f32 %v2319, %v2412
        %v2425 = vadd.f32 %v2320, %v2413
        %v2426 = vadd.f32 %v2321, %v2414
        %v2427 = vadd.f32 %v2322, %v2415
        %s2428 = scalar_lea.vmem %s3, 49
        %v2429 = vld [vmem:[%s2428] ss:$8 sm:$0x7]
        %v2431 = vlaneseq
        %v2432 = vshrl.u32 %v2431, 7
        %v2433 = vsub.s32 0, %v2432
        %v2434 = vrot.slane %v2429, %v2433
        %v2435 = vlaneseq
        %v2436 = vshrl.u32 %v2435, 7
        %v2437 = vsub.s32 1, %v2436
        %v2438 = vrot.slane %v2429, %v2437
        %v2439 = vlaneseq
        %v2440 = vshrl.u32 %v2439, 7
        %v2441 = vsub.s32 2, %v2440
        %v2442 = vrot.slane %v2429, %v2441
        %2443 = vrot.lane.b32.xlu0 %v2434, 72
        %v2444 = vpop.permute.xlu0 %2443
        %2445 = vrot.lane.b32.xlu0 %v2438, 72
        %v2446 = vpop.permute.xlu0 %2445
        %2447 = vrot.lane.b32.xlu0 %v2442, 72
        %v2448 = vpop.permute.xlu0 %2447
        %v2449 = vsel %vm858, %v2444, %v2446
        %v2450 = vsel %vm858, %v2446, %v2448
        %v2455 = vmul.f32 %v2146, %v2444
        %v2456 = vmul.f32 %v2147, %v2449
        %v2457 = vmul.f32 %v2148, %v2450
        %v2458 = vmul.f32 %v2216, %v2448
        %v2459 = vmul.f32 %v940, %v2444
        %v2460 = vmul.f32 %v941, %v2449
        %v2461 = vmul.f32 %v942, %v2450
        %v2462 = vmul.f32 %v967, %v2448
        %v2463 = vmul.f32 %v2149, %v2444
        %v2464 = vmul.f32 %v2150, %v2449
        %v2465 = vmul.f32 %v2151, %v2450
        %v2466 = vmul.f32 %v2217, %v2448
        %v2479 = vrot.slane %v2455, 2
        %v2480 = vrot.slane %v2459, 2
        %v2481 = vsel %vm2188, %v2479, %v2480
        %v2482 = vrot.slane %v2456, 2
        %v2483 = vrot.slane %v2460, 2
        %v2484 = vsel %vm2188, %v2482, %v2483
        %v2485 = vrot.slane %v2457, 2
        %v2486 = vrot.slane %v2461, 2
        %v2487 = vsel %vm2188, %v2485, %v2486
        %v2488 = vrot.slane %v2458, 2
        %v2489 = vrot.slane %v2462, 2
        %v2490 = vsel %vm2188, %v2488, %v2489
        %v2491 = vrot.slane %v2463, 2
        %v2492 = vsel %vm2188, %v2480, %v2491
        %v2493 = vrot.slane %v2464, 2
        %v2494 = vsel %vm2188, %v2483, %v2493
        %v2495 = vrot.slane %v2465, 2
        %v2496 = vsel %vm2188, %v2486, %v2495
        %v2497 = vrot.slane %v2466, 2
        %v2498 = vsel %vm2188, %v2489, %v2497
        %2499 = vrot.lane.b32.xlu0 %v2481, 56
        %v2500 = vpop.permute.xlu0 %2499
        %2501 = vrot.lane.b32.xlu0 %v2484, 56
        %v2502 = vpop.permute.xlu0 %2501
        %2503 = vrot.lane.b32.xlu0 %v2487, 56
        %v2504 = vpop.permute.xlu0 %2503
        %2505 = vrot.lane.b32.xlu0 %v2490, 56
        %v2506 = vpop.permute.xlu0 %2505
        %2507 = vrot.lane.b32.xlu0 %v2492, 56
        %v2508 = vpop.permute.xlu0 %2507
        %2509 = vrot.lane.b32.xlu0 %v2494, 56
        %v2510 = vpop.permute.xlu0 %2509
        %2511 = vrot.lane.b32.xlu0 %v2496, 56
        %v2512 = vpop.permute.xlu0 %2511
        %2513 = vrot.lane.b32.xlu0 %v2498, 56
        %v2514 = vpop.permute.xlu0 %2513
        %v2515 = vsel %vm1185, %v2500, %v2502
        %v2516 = vsel %vm1185, %v2502, %v2504
        %v2517 = vsel %vm1185, %v2504, %v2506
        %v2518 = vsel %vm1185, %v2508, %v2510
        %v2519 = vsel %vm1185, %v2510, %v2512
        %v2520 = vsel %vm1185, %v2512, %v2514
        %v2527 = vadd.f32 %v2422, %v2515
        %v2528 = vadd.f32 %v2423, %v2516
        %v2529 = vadd.f32 %v2424, %v2517
        %v2530 = vadd.f32 %v2425, %v2518
        %v2531 = vadd.f32 %v2426, %v2519
        %v2532 = vadd.f32 %v2427, %v2520
        %s2533 = scalar_lea.vmem %s3, 50
        %v2534 = vld [vmem:[%s2533] ss:$8 sm:$0x7]
        %v2536 = vlaneseq
        %v2537 = vshrl.u32 %v2536, 7
        %v2538 = vsub.s32 0, %v2537
        %v2539 = vrot.slane %v2534, %v2538
        %v2540 = vlaneseq
        %v2541 = vshrl.u32 %v2540, 7
        %v2542 = vsub.s32 1, %v2541
        %v2543 = vrot.slane %v2534, %v2542
        %v2544 = vlaneseq
        %v2545 = vshrl.u32 %v2544, 7
        %v2546 = vsub.s32 2, %v2545
        %v2547 = vrot.slane %v2534, %v2546
        %2548 = vrot.lane.b32.xlu0 %v2539, 96
        %v2549 = vpop.permute.xlu0 %2548
        %2550 = vrot.lane.b32.xlu0 %v2543, 96
        %v2551 = vpop.permute.xlu0 %2550
        %2552 = vrot.lane.b32.xlu0 %v2547, 96
        %v2553 = vpop.permute.xlu0 %2552
        %v2554 = vsel %vm1225, %v2549, %v2551
        %v2555 = vsel %vm1225, %v2551, %v2553
        %v2560 = vmul.f32 %v2146, %v2549
        %v2561 = vmul.f32 %v2147, %v2554
        %v2562 = vmul.f32 %v2148, %v2555
        %v2563 = vmul.f32 %v2216, %v2553
        %v2564 = vmul.f32 %v940, %v2549
        %v2565 = vmul.f32 %v941, %v2554
        %v2566 = vmul.f32 %v942, %v2555
        %v2567 = vmul.f32 %v967, %v2553
        %v2568 = vmul.f32 %v2149, %v2549
        %v2569 = vmul.f32 %v2150, %v2554
        %v2570 = vmul.f32 %v2151, %v2555
        %v2571 = vmul.f32 %v2217, %v2553
        %v2584 = vrot.slane %v2560, 2
        %v2585 = vrot.slane %v2564, 2
        %v2586 = vsel %vm2188, %v2584, %v2585
        %v2587 = vrot.slane %v2561, 2
        %v2588 = vrot.slane %v2565, 2
        %v2589 = vsel %vm2188, %v2587, %v2588
        %v2590 = vrot.slane %v2562, 2
        %v2591 = vrot.slane %v2566, 2
        %v2592 = vsel %vm2188, %v2590, %v2591
        %v2593 = vrot.slane %v2563, 2
        %v2594 = vrot.slane %v2567, 2
        %v2595 = vsel %vm2188, %v2593, %v2594
        %v2596 = vrot.slane %v2568, 2
        %v2597 = vsel %vm2188, %v2585, %v2596
        %v2598 = vrot.slane %v2569, 2
        %v2599 = vsel %vm2188, %v2588, %v2598
        %v2600 = vrot.slane %v2570, 2
        %v2601 = vsel %vm2188, %v2591, %v2600
        %v2602 = vrot.slane %v2571, 2
        %v2603 = vsel %vm2188, %v2594, %v2602
        %2604 = vrot.lane.b32.xlu0 %v2586, 32
        %v2605 = vpop.permute.xlu0 %2604
        %2606 = vrot.lane.b32.xlu0 %v2589, 32
        %v2607 = vpop.permute.xlu0 %2606
        %2608 = vrot.lane.b32.xlu0 %v2592, 32
        %v2609 = vpop.permute.xlu0 %2608
        %2610 = vrot.lane.b32.xlu0 %v2595, 32
        %v2611 = vpop.permute.xlu0 %2610
        %2612 = vrot.lane.b32.xlu0 %v2597, 32
        %v2613 = vpop.permute.xlu0 %2612
        %2614 = vrot.lane.b32.xlu0 %v2599, 32
        %v2615 = vpop.permute.xlu0 %2614
        %2616 = vrot.lane.b32.xlu0 %v2601, 32
        %v2617 = vpop.permute.xlu0 %2616
        %2618 = vrot.lane.b32.xlu0 %v2603, 32
        %v2619 = vpop.permute.xlu0 %2618
        %v2620 = vsel %vm1264, %v2605, %v2607
        %v2621 = vsel %vm1264, %v2607, %v2609
        %v2622 = vsel %vm1264, %v2609, %v2611
        %v2623 = vsel %vm1264, %v2613, %v2615
        %v2624 = vsel %vm1264, %v2615, %v2617
        %v2625 = vsel %vm1264, %v2617, %v2619
        %v2632 = vadd.f32 %v2527, %v2620
        %v2633 = vadd.f32 %v2528, %v2621
        %v2634 = vadd.f32 %v2529, %v2622
        %v2635 = vadd.f32 %v2530, %v2623
        %v2636 = vadd.f32 %v2531, %v2624
        %v2637 = vadd.f32 %v2532, %v2625
        %s2638 = scalar_lea.vmem %s3, 51
        %v2639 = vld [vmem:[%s2638] ss:$8 sm:$0x7]
        %v2641 = vlaneseq
        %v2642 = vshrl.u32 %v2641, 7
        %v2643 = vsub.s32 0, %v2642
        %v2644 = vrot.slane %v2639, %v2643
        %v2645 = vlaneseq
        %v2646 = vshrl.u32 %v2645, 7
        %v2647 = vsub.s32 1, %v2646
        %v2648 = vrot.slane %v2639, %v2647
        %v2649 = vlaneseq
        %v2650 = vshrl.u32 %v2649, 7
        %v2651 = vsub.s32 2, %v2650
        %v2652 = vrot.slane %v2639, %v2651
        %2653 = vrot.lane.b32.xlu0 %v2644, 120
        %v2654 = vpop.permute.xlu0 %2653
        %2655 = vrot.lane.b32.xlu0 %v2648, 120
        %v2656 = vpop.permute.xlu0 %2655
        %2657 = vrot.lane.b32.xlu0 %v2652, 120
        %v2658 = vpop.permute.xlu0 %2657
        %v2659 = vsel %vm1304, %v2654, %v2656
        %v2660 = vsel %vm1304, %v2656, %v2658
        %v2665 = vmul.f32 %v2146, %v2654
        %v2666 = vmul.f32 %v2147, %v2659
        %v2667 = vmul.f32 %v2148, %v2660
        %v2668 = vmul.f32 %v2216, %v2658
        %v2669 = vmul.f32 %v940, %v2654
        %v2670 = vmul.f32 %v941, %v2659
        %v2671 = vmul.f32 %v942, %v2660
        %v2672 = vmul.f32 %v967, %v2658
        %v2673 = vmul.f32 %v2149, %v2654
        %v2674 = vmul.f32 %v2150, %v2659
        %v2675 = vmul.f32 %v2151, %v2660
        %v2676 = vmul.f32 %v2217, %v2658
        %v2689 = vrot.slane %v2665, 2
        %v2690 = vrot.slane %v2669, 2
        %v2691 = vsel %vm2188, %v2689, %v2690
        %v2692 = vrot.slane %v2666, 2
        %v2693 = vrot.slane %v2670, 2
        %v2694 = vsel %vm2188, %v2692, %v2693
        %v2695 = vrot.slane %v2667, 2
        %v2696 = vrot.slane %v2671, 2
        %v2697 = vsel %vm2188, %v2695, %v2696
        %v2698 = vrot.slane %v2668, 2
        %v2699 = vrot.slane %v2672, 2
        %v2700 = vsel %vm2188, %v2698, %v2699
        %v2701 = vrot.slane %v2673, 2
        %v2702 = vsel %vm2188, %v2690, %v2701
        %v2703 = vrot.slane %v2674, 2
        %v2704 = vsel %vm2188, %v2693, %v2703
        %v2705 = vrot.slane %v2675, 2
        %v2706 = vsel %vm2188, %v2696, %v2705
        %v2707 = vrot.slane %v2676, 2
        %v2708 = vsel %vm2188, %v2699, %v2707
        %2709 = vrot.lane.b32.xlu0 %v2691, 8
        %v2710 = vpop.permute.xlu0 %2709
        %2711 = vrot.lane.b32.xlu0 %v2694, 8
        %v2712 = vpop.permute.xlu0 %2711
        %2713 = vrot.lane.b32.xlu0 %v2697, 8
        %v2714 = vpop.permute.xlu0 %2713
        %2715 = vrot.lane.b32.xlu0 %v2700, 8
        %v2716 = vpop.permute.xlu0 %2715
        %2717 = vrot.lane.b32.xlu0 %v2702, 8
        %v2718 = vpop.permute.xlu0 %2717
        %2719 = vrot.lane.b32.xlu0 %v2704, 8
        %v2720 = vpop.permute.xlu0 %2719
        %2721 = vrot.lane.b32.xlu0 %v2706, 8
        %v2722 = vpop.permute.xlu0 %2721
        %2723 = vrot.lane.b32.xlu0 %v2708, 8
        %v2724 = vpop.permute.xlu0 %2723
        %v2725 = vsel %vm1343, %v2710, %v2712
        %v2726 = vsel %vm1343, %v2712, %v2714
        %v2727 = vsel %vm1343, %v2714, %v2716
        %v2728 = vsel %vm1343, %v2718, %v2720
        %v2729 = vsel %vm1343, %v2720, %v2722
        %v2730 = vsel %vm1343, %v2722, %v2724
        %v2737 = vadd.f32 %v2632, %v2725
        %v2738 = vadd.f32 %v2633, %v2726
        %v2739 = vadd.f32 %v2634, %v2727
        %v2740 = vadd.f32 %v2635, %v2728
        %v2741 = vadd.f32 %v2636, %v2729
        %v2742 = vadd.f32 %v2637, %v2730
        %v2743 = vld [vmem:[#allocation2 + $0x20] sm:$0xfc]
        %v2744 = vld [vmem:[#allocation2 + $0x70] sm:$0x3]
        %s2745 = scalar_lea.vmem %s3, 52
        %v2746 = vld [vmem:[%s2745] ss:$8 sm:$0x7]
        %v2748 = vlaneseq
        %v2749 = vshrl.u32 %v2748, 7
        %v2750 = vsub.s32 0, %v2749
        %v2751 = vrot.slane %v2746, %v2750
        %v2752 = vlaneseq
        %v2753 = vshrl.u32 %v2752, 7
        %v2754 = vsub.s32 1, %v2753
        %v2755 = vrot.slane %v2746, %v2754
        %v2756 = vlaneseq
        %v2757 = vshrl.u32 %v2756, 7
        %v2758 = vsub.s32 2, %v2757
        %v2759 = vrot.slane %v2746, %v2758
        %2760 = vrot.lane.b32.xlu0 %v2751, 16
        %v2761 = vpop.permute.xlu0 %2760
        %2762 = vrot.lane.b32.xlu0 %v2755, 16
        %v2763 = vpop.permute.xlu0 %2762
        %2764 = vrot.lane.b32.xlu0 %v2759, 16
        %v2765 = vpop.permute.xlu0 %2764
        %v2766 = vsel %vm868, %v2761, %v2763
        %v2767 = vsel %vm868, %v2763, %v2765
        %v2772 = vmul.f32 %v2147, %v2761
        %v2773 = vmul.f32 %v2148, %v2766
        %v2774 = vmul.f32 %v2216, %v2767
        %v2775 = vmul.f32 %v2743, %v2765
        %v2776 = vmul.f32 %v941, %v2761
        %v2777 = vmul.f32 %v942, %v2766
        %v2778 = vmul.f32 %v967, %v2767
        %v2779 = vmul.f32 %v1363, %v2765
        %v2780 = vmul.f32 %v2150, %v2761
        %v2781 = vmul.f32 %v2151, %v2766
        %v2782 = vmul.f32 %v2217, %v2767
        %v2783 = vmul.f32 %v2744, %v2765
        %v2796 = vrot.slane %v2772, 2
        %v2797 = vrot.slane %v2776, 2
        %v2798 = vsel %vm2188, %v2796, %v2797
        %v2799 = vrot.slane %v2773, 2
        %v2800 = vrot.slane %v2777, 2
        %v2801 = vsel %vm2188, %v2799, %v2800
        %v2802 = vrot.slane %v2774, 2
        %v2803 = vrot.slane %v2778, 2
        %v2804 = vsel %vm2188, %v2802, %v2803
        %v2805 = vrot.slane %v2775, 2
        %v2806 = vrot.slane %v2779, 2
        %v2807 = vsel %vm2188, %v2805, %v2806
        %v2808 = vrot.slane %v2780, 2
        %v2809 = vsel %vm2188, %v2797, %v2808
        %v2810 = vrot.slane %v2781, 2
        %v2811 = vsel %vm2188, %v2800, %v2810
        %v2812 = vrot.slane %v2782, 2
        %v2813 = vsel %vm2188, %v2803, %v2812
        %v2814 = vrot.slane %v2783, 2
        %v2815 = vsel %vm2188, %v2806, %v2814
        %2816 = vrot.lane.b32.xlu0 %v2798, 112
        %v2817 = vpop.permute.xlu0 %2816
        %2818 = vrot.lane.b32.xlu0 %v2801, 112
        %v2819 = vpop.permute.xlu0 %2818
        %2820 = vrot.lane.b32.xlu0 %v2804, 112
        %v2821 = vpop.permute.xlu0 %2820
        %2822 = vrot.lane.b32.xlu0 %v2807, 112
        %v2823 = vpop.permute.xlu0 %2822
        %2824 = vrot.lane.b32.xlu0 %v2809, 112
        %v2825 = vpop.permute.xlu0 %2824
        %2826 = vrot.lane.b32.xlu0 %v2811, 112
        %v2827 = vpop.permute.xlu0 %2826
        %2828 = vrot.lane.b32.xlu0 %v2813, 112
        %v2829 = vpop.permute.xlu0 %2828
        %2830 = vrot.lane.b32.xlu0 %v2815, 112
        %v2831 = vpop.permute.xlu0 %2830
        %v2832 = vsel %vm1423, %v2817, %v2819
        %v2833 = vsel %vm1423, %v2819, %v2821
        %v2834 = vsel %vm1423, %v2821, %v2823
        %v2835 = vsel %vm1423, %v2825, %v2827
        %v2836 = vsel %vm1423, %v2827, %v2829
        %v2837 = vsel %vm1423, %v2829, %v2831
        %v2844 = vadd.f32 %v2737, %v2832
        %v2845 = vadd.f32 %v2738, %v2833
        %v2846 = vadd.f32 %v2739, %v2834
        %v2847 = vadd.f32 %v2740, %v2835
        %v2848 = vadd.f32 %v2741, %v2836
        %v2849 = vadd.f32 %v2742, %v2837
        %v2850 = vld [vmem:[#allocation2] sm:$0xf8]
        %v2851 = vld [vmem:[#allocation2 + $0x8] sm:$0xf8]
        %v2852 = vld [vmem:[#allocation2 + $0x10] sm:$0xf8]
        %v2853 = vld [vmem:[#allocation2 + $0x50] sm:$0x7]
        %v2854 = vld [vmem:[#allocation2 + $0x58] sm:$0x7]
        %v2855 = vld [vmem:[#allocation2 + $0x60] sm:$0x7]
        %s2856 = scalar_lea.vmem %s3, 53
        %v2857 = vld [vmem:[%s2856] ss:$8 sm:$0x7]
        %v2859 = vlaneseq
        %v2860 = vshrl.u32 %v2859, 7
        %v2861 = vsub.s32 0, %v2860
        %v2862 = vrot.slane %v2857, %v2861
        %v2863 = vlaneseq
        %v2864 = vshrl.u32 %v2863, 7
        %v2865 = vsub.s32 1, %v2864
        %v2866 = vrot.slane %v2857, %v2865
        %v2867 = vlaneseq
        %v2868 = vshrl.u32 %v2867, 7
        %v2869 = vsub.s32 2, %v2868
        %v2870 = vrot.slane %v2857, %v2869
        %v2874 = vmul.f32 %v2850, %v2862
        %v2875 = vmul.f32 %v2851, %v2866
        %v2876 = vmul.f32 %v2852, %v2870
        %v2877 = vmul.f32 %v940, %v2862
        %v2878 = vmul.f32 %v941, %v2866
        %v2879 = vmul.f32 %v942, %v2870
        %v2880 = vmul.f32 %v2853, %v2862
        %v2881 = vmul.f32 %v2854, %v2866
        %v2882 = vmul.f32 %v2855, %v2870
        %vm2892 = vcmask 1044480
        %v2893 = vrot.slane %v2874, 3
        %v2894 = vrot.slane %v2877, 3
        %v2895 = vsel %vm2892, %v2893, %v2894
        %v2896 = vrot.slane %v2875, 3
        %v2897 = vrot.slane %v2878, 3
        %v2898 = vsel %vm2892, %v2896, %v2897
        %v2899 = vrot.slane %v2876, 3
        %v2900 = vrot.slane %v2879, 3
        %v2901 = vsel %vm2892, %v2899, %v2900
        %v2902 = vrot.slane %v2880, 3
        %v2903 = vsel %vm2892, %v2894, %v2902
        %v2904 = vrot.slane %v2881, 3
        %v2905 = vsel %vm2892, %v2897, %v2904
        %v2906 = vrot.slane %v2882, 3
        %v2907 = vsel %vm2892, %v2900, %v2906
        %v2914 = vadd.f32 %v2844, %v2895
        %v2915 = vadd.f32 %v2845, %v2898
        %v2916 = vadd.f32 %v2846, %v2901
        %v2917 = vadd.f32 %v2847, %v2903
        %v2918 = vadd.f32 %v2848, %v2905
        %v2919 = vadd.f32 %v2849, %v2907
        %v2920 = vld [vmem:[#allocation2 + $0x18] sm:$0xf8]
        %v2921 = vld [vmem:[#allocation2 + $0x68] sm:$0x7]
        %s2922 = scalar_lea.vmem %s3, 54
        %v2923 = vld [vmem:[%s2922] ss:$8 sm:$0x7]
        %v2925 = vlaneseq
        %v2926 = vshrl.u32 %v2925, 7
        %v2927 = vsub.s32 0, %v2926
        %v2928 = vrot.slane %v2923, %v2927
        %v2929 = vlaneseq
        %v2930 = vshrl.u32 %v2929, 7
        %v2931 = vsub.s32 1, %v2930
        %v2932 = vrot.slane %v2923, %v2931
        %v2933 = vlaneseq
        %v2934 = vshrl.u32 %v2933, 7
        %v2935 = vsub.s32 2, %v2934
        %v2936 = vrot.slane %v2923, %v2935
        %2937 = vrot.lane.b32.xlu0 %v2928, 24
        %v2938 = vpop.permute.xlu0 %2937
        %2939 = vrot.lane.b32.xlu0 %v2932, 24
        %v2940 = vpop.permute.xlu0 %2939
        %2941 = vrot.lane.b32.xlu0 %v2936, 24
        %v2942 = vpop.permute.xlu0 %2941
        %v2943 = vsel %vm989, %v2938, %v2940
        %v2944 = vsel %vm989, %v2940, %v2942
        %v2949 = vmul.f32 %v2850, %v2938
        %v2950 = vmul.f32 %v2851, %v2943
        %v2951 = vmul.f32 %v2852, %v2944
        %v2952 = vmul.f32 %v2920, %v2942
        %v2953 = vmul.f32 %v940, %v2938
        %v2954 = vmul.f32 %v941, %v2943
        %v2955 = vmul.f32 %v942, %v2944
        %v2956 = vmul.f32 %v967, %v2942
        %v2957 = vmul.f32 %v2853, %v2938
        %v2958 = vmul.f32 %v2854, %v2943
        %v2959 = vmul.f32 %v2855, %v2944
        %v2960 = vmul.f32 %v2921, %v2942
        %v2973 = vrot.slane %v2949, 3
        %v2974 = vrot.slane %v2953, 3
        %v2975 = vsel %vm2892, %v2973, %v2974
        %v2976 = vrot.slane %v2950, 3
        %v2977 = vrot.slane %v2954, 3
        %v2978 = vsel %vm2892, %v2976, %v2977
        %v2979 = vrot.slane %v2951, 3
        %v2980 = vrot.slane %v2955, 3
        %v2981 = vsel %vm2892, %v2979, %v2980
        %v2982 = vrot.slane %v2952, 3
        %v2983 = vrot.slane %v2956, 3
        %v2984 = vsel %vm2892, %v2982, %v2983
        %v2985 = vrot.slane %v2957, 3
        %v2986 = vsel %vm2892, %v2974, %v2985
        %v2987 = vrot.slane %v2958, 3
        %v2988 = vsel %vm2892, %v2977, %v2987
        %v2989 = vrot.slane %v2959, 3
        %v2990 = vsel %vm2892, %v2980, %v2989
        %v2991 = vrot.slane %v2960, 3
        %v2992 = vsel %vm2892, %v2983, %v2991
        %2993 = vrot.lane.b32.xlu0 %v2975, 104
        %v2994 = vpop.permute.xlu0 %2993
        %2995 = vrot.lane.b32.xlu0 %v2978, 104
        %v2996 = vpop.permute.xlu0 %2995
        %2997 = vrot.lane.b32.xlu0 %v2981, 104
        %v2998 = vpop.permute.xlu0 %2997
        %2999 = vrot.lane.b32.xlu0 %v2984, 104
        %v3000 = vpop.permute.xlu0 %2999
        %3001 = vrot.lane.b32.xlu0 %v2986, 104
        %v3002 = vpop.permute.xlu0 %3001
        %3003 = vrot.lane.b32.xlu0 %v2988, 104
        %v3004 = vpop.permute.xlu0 %3003
        %3005 = vrot.lane.b32.xlu0 %v2990, 104
        %v3006 = vpop.permute.xlu0 %3005
        %3007 = vrot.lane.b32.xlu0 %v2992, 104
        %v3008 = vpop.permute.xlu0 %3007
        %v3009 = vsel %vm1028, %v2994, %v2996
        %v3010 = vsel %vm1028, %v2996, %v2998
        %v3011 = vsel %vm1028, %v2998, %v3000
        %v3012 = vsel %vm1028, %v3002, %v3004
        %v3013 = vsel %vm1028, %v3004, %v3006
        %v3014 = vsel %vm1028, %v3006, %v3008
        %v3021 = vadd.f32 %v2914, %v3009
        %v3022 = vadd.f32 %v2915, %v3010
        %v3023 = vadd.f32 %v2916, %v3011
        %v3024 = vadd.f32 %v2917, %v3012
        %v3025 = vadd.f32 %v2918, %v3013
        %v3026 = vadd.f32 %v2919, %v3014
        %s3027 = scalar_lea.vmem %s3, 55
        %v3028 = vld [vmem:[%s3027] ss:$8 sm:$0x7]
        %v3030 = vlaneseq
        %v3031 = vshrl.u32 %v3030, 7
        %v3032 = vsub.s32 0, %v3031
        %v3033 = vrot.slane %v3028, %v3032
        %v3034 = vlaneseq
        %v3035 = vshrl.u32 %v3034, 7
        %v3036 = vsub.s32 1, %v3035
        %v3037 = vrot.slane %v3028, %v3036
        %v3038 = vlaneseq
        %v3039 = vshrl.u32 %v3038, 7
        %v3040 = vsub.s32 2, %v3039
        %v3041 = vrot.slane %v3028, %v3040
        %3042 = vrot.lane.b32.xlu0 %v3033, 48
        %v3043 = vpop.permute.xlu0 %3042
        %3044 = vrot.lane.b32.xlu0 %v3037, 48
        %v3045 = vpop.permute.xlu0 %3044
        %3046 = vrot.lane.b32.xlu0 %v3041, 48
        %v3047 = vpop.permute.xlu0 %3046
        %v3048 = vsel %vm1068, %v3043, %v3045
        %v3049 = vsel %vm1068, %v3045, %v3047
        %v3054 = vmul.f32 %v2850, %v3043
        %v3055 = vmul.f32 %v2851, %v3048
        %v3056 = vmul.f32 %v2852, %v3049
        %v3057 = vmul.f32 %v2920, %v3047
        %v3058 = vmul.f32 %v940, %v3043
        %v3059 = vmul.f32 %v941, %v3048
        %v3060 = vmul.f32 %v942, %v3049
        %v3061 = vmul.f32 %v967, %v3047
        %v3062 = vmul.f32 %v2853, %v3043
        %v3063 = vmul.f32 %v2854, %v3048
        %v3064 = vmul.f32 %v2855, %v3049
        %v3065 = vmul.f32 %v2921, %v3047
        %v3078 = vrot.slane %v3054, 3
        %v3079 = vrot.slane %v3058, 3
        %v3080 = vsel %vm2892, %v3078, %v3079
        %v3081 = vrot.slane %v3055, 3
        %v3082 = vrot.slane %v3059, 3
        %v3083 = vsel %vm2892, %v3081, %v3082
        %v3084 = vrot.slane %v3056, 3
        %v3085 = vrot.slane %v3060, 3
        %v3086 = vsel %vm2892, %v3084, %v3085
        %v3087 = vrot.slane %v3057, 3
        %v3088 = vrot.slane %v3061, 3
        %v3089 = vsel %vm2892, %v3087, %v3088
        %v3090 = vrot.slane %v3062, 3
        %v3091 = vsel %vm2892, %v3079, %v3090
        %v3092 = vrot.slane %v3063, 3
        %v3093 = vsel %vm2892, %v3082, %v3092
        %v3094 = vrot.slane %v3064, 3
        %v3095 = vsel %vm2892, %v3085, %v3094
        %v3096 = vrot.slane %v3065, 3
        %v3097 = vsel %vm2892, %v3088, %v3096
        %3098 = vrot.lane.b32.xlu0 %v3080, 80
        %v3099 = vpop.permute.xlu0 %3098
        %3100 = vrot.lane.b32.xlu0 %v3083, 80
        %v3101 = vpop.permute.xlu0 %3100
        %3102 = vrot.lane.b32.xlu0 %v3086, 80
        %v3103 = vpop.permute.xlu0 %3102
        %3104 = vrot.lane.b32.xlu0 %v3089, 80
        %v3105 = vpop.permute.xlu0 %3104
        %3106 = vrot.lane.b32.xlu0 %v3091, 80
        %v3107 = vpop.permute.xlu0 %3106
        %3108 = vrot.lane.b32.xlu0 %v3093, 80
        %v3109 = vpop.permute.xlu0 %3108
        %3110 = vrot.lane.b32.xlu0 %v3095, 80
        %v3111 = vpop.permute.xlu0 %3110
        %3112 = vrot.lane.b32.xlu0 %v3097, 80
        %v3113 = vpop.permute.xlu0 %3112
        %v3114 = vsel %vm1107, %v3099, %v3101
        %v3115 = vsel %vm1107, %v3101, %v3103
        %v3116 = vsel %vm1107, %v3103, %v3105
        %v3117 = vsel %vm1107, %v3107, %v3109
        %v3118 = vsel %vm1107, %v3109, %v3111
        %v3119 = vsel %vm1107, %v3111, %v3113
        %v3126 = vadd.f32 %v3021, %v3114
        %v3127 = vadd.f32 %v3022, %v3115
        %v3128 = vadd.f32 %v3023, %v3116
        %v3129 = vadd.f32 %v3024, %v3117
        %v3130 = vadd.f32 %v3025, %v3118
        %v3131 = vadd.f32 %v3026, %v3119
        %s3132 = scalar_lea.vmem %s3, 72
        %v3133 = vld [vmem:[%s3132] ss:$8 sm:$0x7]
        %v3135 = vlaneseq
        %v3136 = vshrl.u32 %v3135, 7
        %v3137 = vsub.s32 0, %v3136
        %v3138 = vrot.slane %v3133, %v3137
        %v3139 = vlaneseq
        %v3140 = vshrl.u32 %v3139, 7
        %v3141 = vsub.s32 1, %v3140
        %v3142 = vrot.slane %v3133, %v3141
        %v3143 = vlaneseq
        %v3144 = vshrl.u32 %v3143, 7
        %v3145 = vsub.s32 2, %v3144
        %v3146 = vrot.slane %v3133, %v3145
        %3147 = vrot.lane.b32.xlu0 %v3138, 72
        %v3148 = vpop.permute.xlu0 %3147
        %3149 = vrot.lane.b32.xlu0 %v3142, 72
        %v3150 = vpop.permute.xlu0 %3149
        %3151 = vrot.lane.b32.xlu0 %v3146, 72
        %v3152 = vpop.permute.xlu0 %3151
        %v3153 = vsel %vm858, %v3148, %v3150
        %v3154 = vsel %vm858, %v3150, %v3152
        %v3159 = vmul.f32 %v2850, %v3148
        %v3160 = vmul.f32 %v2851, %v3153
        %v3161 = vmul.f32 %v2852, %v3154
        %v3162 = vmul.f32 %v2920, %v3152
        %v3163 = vmul.f32 %v940, %v3148
        %v3164 = vmul.f32 %v941, %v3153
        %v3165 = vmul.f32 %v942, %v3154
        %v3166 = vmul.f32 %v967, %v3152
        %v3167 = vmul.f32 %v2853, %v3148
        %v3168 = vmul.f32 %v2854, %v3153
        %v3169 = vmul.f32 %v2855, %v3154
        %v3170 = vmul.f32 %v2921, %v3152
        %v3183 = vrot.slane %v3159, 3
        %v3184 = vrot.slane %v3163, 3
        %v3185 = vsel %vm2892, %v3183, %v3184
        %v3186 = vrot.slane %v3160, 3
        %v3187 = vrot.slane %v3164, 3
        %v3188 = vsel %vm2892, %v3186, %v3187
        %v3189 = vrot.slane %v3161, 3
        %v3190 = vrot.slane %v3165, 3
        %v3191 = vsel %vm2892, %v3189, %v3190
        %v3192 = vrot.slane %v3162, 3
        %v3193 = vrot.slane %v3166, 3
        %v3194 = vsel %vm2892, %v3192, %v3193
        %v3195 = vrot.slane %v3167, 3
        %v3196 = vsel %vm2892, %v3184, %v3195
        %v3197 = vrot.slane %v3168, 3
        %v3198 = vsel %vm2892, %v3187, %v3197
        %v3199 = vrot.slane %v3169, 3
        %v3200 = vsel %vm2892, %v3190, %v3199
        %v3201 = vrot.slane %v3170, 3
        %v3202 = vsel %vm2892, %v3193, %v3201
        %3203 = vrot.lane.b32.xlu0 %v3185, 56
        %v3204 = vpop.permute.xlu0 %3203
        %3205 = vrot.lane.b32.xlu0 %v3188, 56
        %v3206 = vpop.permute.xlu0 %3205
        %3207 = vrot.lane.b32.xlu0 %v3191, 56
        %v3208 = vpop.permute.xlu0 %3207
        %3209 = vrot.lane.b32.xlu0 %v3194, 56
        %v3210 = vpop.permute.xlu0 %3209
        %3211 = vrot.lane.b32.xlu0 %v3196, 56
        %v3212 = vpop.permute.xlu0 %3211
        %3213 = vrot.lane.b32.xlu0 %v3198, 56
        %v3214 = vpop.permute.xlu0 %3213
        %3215 = vrot.lane.b32.xlu0 %v3200, 56
        %v3216 = vpop.permute.xlu0 %3215
        %3217 = vrot.lane.b32.xlu0 %v3202, 56
        %v3218 = vpop.permute.xlu0 %3217
        %v3219 = vsel %vm1185, %v3204, %v3206
        %v3220 = vsel %vm1185, %v3206, %v3208
        %v3221 = vsel %vm1185, %v3208, %v3210
        %v3222 = vsel %vm1185, %v3212, %v3214
        %v3223 = vsel %vm1185, %v3214, %v3216
        %v3224 = vsel %vm1185, %v3216, %v3218
        %v3231 = vadd.f32 %v3126, %v3219
        %v3232 = vadd.f32 %v3127, %v3220
        %v3233 = vadd.f32 %v3128, %v3221
        %v3234 = vadd.f32 %v3129, %v3222
        %v3235 = vadd.f32 %v3130, %v3223
        %v3236 = vadd.f32 %v3131, %v3224
        %s3237 = scalar_lea.vmem %s3, 73
        %v3238 = vld [vmem:[%s3237] ss:$8 sm:$0x7]
        %v3240 = vlaneseq
        %v3241 = vshrl.u32 %v3240, 7
        %v3242 = vsub.s32 0, %v3241
        %v3243 = vrot.slane %v3238, %v3242
        %v3244 = vlaneseq
        %v3245 = vshrl.u32 %v3244, 7
        %v3246 = vsub.s32 1, %v3245
        %v3247 = vrot.slane %v3238, %v3246
        %v3248 = vlaneseq
        %v3249 = vshrl.u32 %v3248, 7
        %v3250 = vsub.s32 2, %v3249
        %v3251 = vrot.slane %v3238, %v3250
        %3252 = vrot.lane.b32.xlu0 %v3243, 96
        %v3253 = vpop.permute.xlu0 %3252
        %3254 = vrot.lane.b32.xlu0 %v3247, 96
        %v3255 = vpop.permute.xlu0 %3254
        %3256 = vrot.lane.b32.xlu0 %v3251, 96
        %v3257 = vpop.permute.xlu0 %3256
        %v3258 = vsel %vm1225, %v3253, %v3255
        %v3259 = vsel %vm1225, %v3255, %v3257
        %v3264 = vmul.f32 %v2850, %v3253
        %v3265 = vmul.f32 %v2851, %v3258
        %v3266 = vmul.f32 %v2852, %v3259
        %v3267 = vmul.f32 %v2920, %v3257
        %v3268 = vmul.f32 %v940, %v3253
        %v3269 = vmul.f32 %v941, %v3258
        %v3270 = vmul.f32 %v942, %v3259
        %v3271 = vmul.f32 %v967, %v3257
        %v3272 = vmul.f32 %v2853, %v3253
        %v3273 = vmul.f32 %v2854, %v3258
        %v3274 = vmul.f32 %v2855, %v3259
        %v3275 = vmul.f32 %v2921, %v3257
        %v3288 = vrot.slane %v3264, 3
        %v3289 = vrot.slane %v3268, 3
        %v3290 = vsel %vm2892, %v3288, %v3289
        %v3291 = vrot.slane %v3265, 3
        %v3292 = vrot.slane %v3269, 3
        %v3293 = vsel %vm2892, %v3291, %v3292
        %v3294 = vrot.slane %v3266, 3
        %v3295 = vrot.slane %v3270, 3
        %v3296 = vsel %vm2892, %v3294, %v3295
        %v3297 = vrot.slane %v3267, 3
        %v3298 = vrot.slane %v3271, 3
        %v3299 = vsel %vm2892, %v3297, %v3298
        %v3300 = vrot.slane %v3272, 3
        %v3301 = vsel %vm2892, %v3289, %v3300
        %v3302 = vrot.slane %v3273, 3
        %v3303 = vsel %vm2892, %v3292, %v3302
        %v3304 = vrot.slane %v3274, 3
        %v3305 = vsel %vm2892, %v3295, %v3304
        %v3306 = vrot.slane %v3275, 3
        %v3307 = vsel %vm2892, %v3298, %v3306
        %3308 = vrot.lane.b32.xlu0 %v3290, 32
        %v3309 = vpop.permute.xlu0 %3308
        %3310 = vrot.lane.b32.xlu0 %v3293, 32
        %v3311 = vpop.permute.xlu0 %3310
        %3312 = vrot.lane.b32.xlu0 %v3296, 32
        %v3313 = vpop.permute.xlu0 %3312
        %3314 = vrot.lane.b32.xlu0 %v3299, 32
        %v3315 = vpop.permute.xlu0 %3314
        %3316 = vrot.lane.b32.xlu0 %v3301, 32
        %v3317 = vpop.permute.xlu0 %3316
        %3318 = vrot.lane.b32.xlu0 %v3303, 32
        %v3319 = vpop.permute.xlu0 %3318
        %3320 = vrot.lane.b32.xlu0 %v3305, 32
        %v3321 = vpop.permute.xlu0 %3320
        %3322 = vrot.lane.b32.xlu0 %v3307, 32
        %v3323 = vpop.permute.xlu0 %3322
        %v3324 = vsel %vm1264, %v3309, %v3311
        %v3325 = vsel %vm1264, %v3311, %v3313
        %v3326 = vsel %vm1264, %v3313, %v3315
        %v3327 = vsel %vm1264, %v3317, %v3319
        %v3328 = vsel %vm1264, %v3319, %v3321
        %v3329 = vsel %vm1264, %v3321, %v3323
        %v3336 = vadd.f32 %v3231, %v3324
        %v3337 = vadd.f32 %v3232, %v3325
        %v3338 = vadd.f32 %v3233, %v3326
        %v3339 = vadd.f32 %v3234, %v3327
        %v3340 = vadd.f32 %v3235, %v3328
        %v3341 = vadd.f32 %v3236, %v3329
        %s3342 = scalar_lea.vmem %s3, 74
        %v3343 = vld [vmem:[%s3342] ss:$8 sm:$0x7]
        %v3345 = vlaneseq
        %v3346 = vshrl.u32 %v3345, 7
        %v3347 = vsub.s32 0, %v3346
        %v3348 = vrot.slane %v3343, %v3347
        %v3349 = vlaneseq
        %v3350 = vshrl.u32 %v3349, 7
        %v3351 = vsub.s32 1, %v3350
        %v3352 = vrot.slane %v3343, %v3351
        %v3353 = vlaneseq
        %v3354 = vshrl.u32 %v3353, 7
        %v3355 = vsub.s32 2, %v3354
        %v3356 = vrot.slane %v3343, %v3355
        %3357 = vrot.lane.b32.xlu0 %v3348, 120
        %v3358 = vpop.permute.xlu0 %3357
        %3359 = vrot.lane.b32.xlu0 %v3352, 120
        %v3360 = vpop.permute.xlu0 %3359
        %3361 = vrot.lane.b32.xlu0 %v3356, 120
        %v3362 = vpop.permute.xlu0 %3361
        %v3363 = vsel %vm1304, %v3358, %v3360
        %v3364 = vsel %vm1304, %v3360, %v3362
        %v3369 = vmul.f32 %v2850, %v3358
        %v3370 = vmul.f32 %v2851, %v3363
        %v3371 = vmul.f32 %v2852, %v3364
        %v3372 = vmul.f32 %v2920, %v3362
        %v3373 = vmul.f32 %v940, %v3358
        %v3374 = vmul.f32 %v941, %v3363
        %v3375 = vmul.f32 %v942, %v3364
        %v3376 = vmul.f32 %v967, %v3362
        %v3377 = vmul.f32 %v2853, %v3358
        %v3378 = vmul.f32 %v2854, %v3363
        %v3379 = vmul.f32 %v2855, %v3364
        %v3380 = vmul.f32 %v2921, %v3362
        %v3393 = vrot.slane %v3369, 3
        %v3394 = vrot.slane %v3373, 3
        %v3395 = vsel %vm2892, %v3393, %v3394
        %v3396 = vrot.slane %v3370, 3
        %v3397 = vrot.slane %v3374, 3
        %v3398 = vsel %vm2892, %v3396, %v3397
        %v3399 = vrot.slane %v3371, 3
        %v3400 = vrot.slane %v3375, 3
        %v3401 = vsel %vm2892, %v3399, %v3400
        %v3402 = vrot.slane %v3372, 3
        %v3403 = vrot.slane %v3376, 3
        %v3404 = vsel %vm2892, %v3402, %v3403
        %v3405 = vrot.slane %v3377, 3
        %v3406 = vsel %vm2892, %v3394, %v3405
        %v3407 = vrot.slane %v3378, 3
        %v3408 = vsel %vm2892, %v3397, %v3407
        %v3409 = vrot.slane %v3379, 3
        %v3410 = vsel %vm2892, %v3400, %v3409
        %v3411 = vrot.slane %v3380, 3
        %v3412 = vsel %vm2892, %v3403, %v3411
        %3413 = vrot.lane.b32.xlu0 %v3395, 8
        %v3414 = vpop.permute.xlu0 %3413
        %3415 = vrot.lane.b32.xlu0 %v3398, 8
        %v3416 = vpop.permute.xlu0 %3415
        %3417 = vrot.lane.b32.xlu0 %v3401, 8
        %v3418 = vpop.permute.xlu0 %3417
        %3419 = vrot.lane.b32.xlu0 %v3404, 8
        %v3420 = vpop.permute.xlu0 %3419
        %3421 = vrot.lane.b32.xlu0 %v3406, 8
        %v3422 = vpop.permute.xlu0 %3421
        %3423 = vrot.lane.b32.xlu0 %v3408, 8
        %v3424 = vpop.permute.xlu0 %3423
        %3425 = vrot.lane.b32.xlu0 %v3410, 8
        %v3426 = vpop.permute.xlu0 %3425
        %3427 = vrot.lane.b32.xlu0 %v3412, 8
        %v3428 = vpop.permute.xlu0 %3427
        %v3429 = vsel %vm1343, %v3414, %v3416
        %v3430 = vsel %vm1343, %v3416, %v3418
        %v3431 = vsel %vm1343, %v3418, %v3420
        %v3432 = vsel %vm1343, %v3422, %v3424
        %v3433 = vsel %vm1343, %v3424, %v3426
        %v3434 = vsel %vm1343, %v3426, %v3428
        %v3441 = vadd.f32 %v3336, %v3429
        %v3442 = vadd.f32 %v3337, %v3430
        %v3443 = vadd.f32 %v3338, %v3431
        %v3444 = vadd.f32 %v3339, %v3432
        %v3445 = vadd.f32 %v3340, %v3433
        %v3446 = vadd.f32 %v3341, %v3434
        %v3447 = vld [vmem:[#allocation2 + $0x20] sm:$0xf8]
        %v3448 = vld [vmem:[#allocation2 + $0x70] sm:$0x7]
        %s3449 = scalar_lea.vmem %s3, 75
        %v3450 = vld [vmem:[%s3449] ss:$8 sm:$0x7]
        %v3452 = vlaneseq
        %v3453 = vshrl.u32 %v3452, 7
        %v3454 = vsub.s32 0, %v3453
        %v3455 = vrot.slane %v3450, %v3454
        %v3456 = vlaneseq
        %v3457 = vshrl.u32 %v3456, 7
        %v3458 = vsub.s32 1, %v3457
        %v3459 = vrot.slane %v3450, %v3458
        %v3460 = vlaneseq
        %v3461 = vshrl.u32 %v3460, 7
        %v3462 = vsub.s32 2, %v3461
        %v3463 = vrot.slane %v3450, %v3462
        %3464 = vrot.lane.b32.xlu0 %v3455, 16
        %v3465 = vpop.permute.xlu0 %3464
        %3466 = vrot.lane.b32.xlu0 %v3459, 16
        %v3467 = vpop.permute.xlu0 %3466
        %3468 = vrot.lane.b32.xlu0 %v3463, 16
        %v3469 = vpop.permute.xlu0 %3468
        %v3470 = vsel %vm868, %v3465, %v3467
        %v3471 = vsel %vm868, %v3467, %v3469
        %v3476 = vmul.f32 %v2851, %v3465
        %v3477 = vmul.f32 %v2852, %v3470
        %v3478 = vmul.f32 %v2920, %v3471
        %v3479 = vmul.f32 %v3447, %v3469
        %v3480 = vmul.f32 %v941, %v3465
        %v3481 = vmul.f32 %v942, %v3470
        %v3482 = vmul.f32 %v967, %v3471
        %v3483 = vmul.f32 %v1363, %v3469
        %v3484 = vmul.f32 %v2854, %v3465
        %v3485 = vmul.f32 %v2855, %v3470
        %v3486 = vmul.f32 %v2921, %v3471
        %v3487 = vmul.f32 %v3448, %v3469
        %v3500 = vrot.slane %v3476, 3
        %v3501 = vrot.slane %v3480, 3
        %v3502 = vsel %vm2892, %v3500, %v3501
        %v3503 = vrot.slane %v3477, 3
        %v3504 = vrot.slane %v3481, 3
        %v3505 = vsel %vm2892, %v3503, %v3504
        %v3506 = vrot.slane %v3478, 3
        %v3507 = vrot.slane %v3482, 3
        %v3508 = vsel %vm2892, %v3506, %v3507
        %v3509 = vrot.slane %v3479, 3
        %v3510 = vrot.slane %v3483, 3
        %v3511 = vsel %vm2892, %v3509, %v3510
        %v3512 = vrot.slane %v3484, 3
        %v3513 = vsel %vm2892, %v3501, %v3512
        %v3514 = vrot.slane %v3485, 3
        %v3515 = vsel %vm2892, %v3504, %v3514
        %v3516 = vrot.slane %v3486, 3
        %v3517 = vsel %vm2892, %v3507, %v3516
        %v3518 = vrot.slane %v3487, 3
        %v3519 = vsel %vm2892, %v3510, %v3518
        %3520 = vrot.lane.b32.xlu0 %v3502, 112
        %v3521 = vpop.permute.xlu0 %3520
        %3522 = vrot.lane.b32.xlu0 %v3505, 112
        %v3523 = vpop.permute.xlu0 %3522
        %3524 = vrot.lane.b32.xlu0 %v3508, 112
        %v3525 = vpop.permute.xlu0 %3524
        %3526 = vrot.lane.b32.xlu0 %v3511, 112
        %v3527 = vpop.permute.xlu0 %3526
        %3528 = vrot.lane.b32.xlu0 %v3513, 112
        %v3529 = vpop.permute.xlu0 %3528
        %3530 = vrot.lane.b32.xlu0 %v3515, 112
        %v3531 = vpop.permute.xlu0 %3530
        %3532 = vrot.lane.b32.xlu0 %v3517, 112
        %v3533 = vpop.permute.xlu0 %3532
        %3534 = vrot.lane.b32.xlu0 %v3519, 112
        %v3535 = vpop.permute.xlu0 %3534
        %v3536 = vsel %vm1423, %v3521, %v3523
        %v3537 = vsel %vm1423, %v3523, %v3525
        %v3538 = vsel %vm1423, %v3525, %v3527
        %v3539 = vsel %vm1423, %v3529, %v3531
        %v3540 = vsel %vm1423, %v3531, %v3533
        %v3541 = vsel %vm1423, %v3533, %v3535
        %v3548 = vadd.f32 %v3441, %v3536
        %v3549 = vadd.f32 %v3442, %v3537
        %v3550 = vadd.f32 %v3443, %v3538
        %v3551 = vadd.f32 %v3444, %v3539
        %v3552 = vadd.f32 %v3445, %v3540
        %v3553 = vadd.f32 %v3446, %v3541
        %v3554 = vld [vmem:[#allocation2] sm:$0xf0]
        %v3555 = vld [vmem:[#allocation2 + $0x8] sm:$0xf0]
        %v3556 = vld [vmem:[#allocation2 + $0x10] sm:$0xf0]
        %v3557 = vld [vmem:[#allocation2 + $0x50] sm:$0xf]
        %v3558 = vld [vmem:[#allocation2 + $0x58] sm:$0xf]
        %v3559 = vld [vmem:[#allocation2 + $0x60] sm:$0xf]
        %s3560 = scalar_lea.vmem %s3, 76
        %v3561 = vld [vmem:[%s3560] ss:$8 sm:$0x7]
        %v3563 = vlaneseq
        %v3564 = vshrl.u32 %v3563, 7
        %v3565 = vsub.s32 0, %v3564
        %v3566 = vrot.slane %v3561, %v3565
        %v3567 = vlaneseq
        %v3568 = vshrl.u32 %v3567, 7
        %v3569 = vsub.s32 1, %v3568
        %v3570 = vrot.slane %v3561, %v3569
        %v3571 = vlaneseq
        %v3572 = vshrl.u32 %v3571, 7
        %v3573 = vsub.s32 2, %v3572
        %v3574 = vrot.slane %v3561, %v3573
        %v3578 = vmul.f32 %v3554, %v3566
        %v3579 = vmul.f32 %v3555, %v3570
        %v3580 = vmul.f32 %v3556, %v3574
        %v3581 = vmul.f32 %v940, %v3566
        %v3582 = vmul.f32 %v941, %v3570
        %v3583 = vmul.f32 %v942, %v3574
        %v3584 = vmul.f32 %v3557, %v3566
        %v3585 = vmul.f32 %v3558, %v3570
        %v3586 = vmul.f32 %v3559, %v3574
        %vm3596 = vcmask 1043456
        %v3597 = vrot.slane %v3578, 4
        %v3598 = vrot.slane %v3581, 4
        %v3599 = vsel %vm3596, %v3597, %v3598
        %v3600 = vrot.slane %v3579, 4
        %v3601 = vrot.slane %v3582, 4
        %v3602 = vsel %vm3596, %v3600, %v3601
        %v3603 = vrot.slane %v3580, 4
        %v3604 = vrot.slane %v3583, 4
        %v3605 = vsel %vm3596, %v3603, %v3604
        %v3606 = vrot.slane %v3584, 4
        %v3607 = vsel %vm3596, %v3598, %v3606
        %v3608 = vrot.slane %v3585, 4
        %v3609 = vsel %vm3596, %v3601, %v3608
        %v3610 = vrot.slane %v3586, 4
        %v3611 = vsel %vm3596, %v3604, %v3610
        %v3618 = vadd.f32 %v3548, %v3599
        %v3619 = vadd.f32 %v3549, %v3602
        %v3620 = vadd.f32 %v3550, %v3605
        %v3621 = vadd.f32 %v3551, %v3607
        %v3622 = vadd.f32 %v3552, %v3609
        %v3623 = vadd.f32 %v3553, %v3611
        %v3624 = vld [vmem:[#allocation2 + $0x18] sm:$0xf0]
        %v3625 = vld [vmem:[#allocation2 + $0x68] sm:$0xf]
        %s3626 = scalar_lea.vmem %s3, 77
        %v3627 = vld [vmem:[%s3626] ss:$8 sm:$0x7]
        %v3629 = vlaneseq
        %v3630 = vshrl.u32 %v3629, 7
        %v3631 = vsub.s32 0, %v3630
        %v3632 = vrot.slane %v3627, %v3631
        %v3633 = vlaneseq
        %v3634 = vshrl.u32 %v3633, 7
        %v3635 = vsub.s32 1, %v3634
        %v3636 = vrot.slane %v3627, %v3635
        %v3637 = vlaneseq
        %v3638 = vshrl.u32 %v3637, 7
        %v3639 = vsub.s32 2, %v3638
        %v3640 = vrot.slane %v3627, %v3639
        %3641 = vrot.lane.b32.xlu0 %v3632, 24
        %v3642 = vpop.permute.xlu0 %3641
        %3643 = vrot.lane.b32.xlu0 %v3636, 24
        %v3644 = vpop.permute.xlu0 %3643
        %3645 = vrot.lane.b32.xlu0 %v3640, 24
        %v3646 = vpop.permute.xlu0 %3645
        %v3647 = vsel %vm989, %v3642, %v3644
        %v3648 = vsel %vm989, %v3644, %v3646
        %v3653 = vmul.f32 %v3554, %v3642
        %v3654 = vmul.f32 %v3555, %v3647
        %v3655 = vmul.f32 %v3556, %v3648
        %v3656 = vmul.f32 %v3624, %v3646
        %v3657 = vmul.f32 %v940, %v3642
        %v3658 = vmul.f32 %v941, %v3647
        %v3659 = vmul.f32 %v942, %v3648
        %v3660 = vmul.f32 %v967, %v3646
        %v3661 = vmul.f32 %v3557, %v3642
        %v3662 = vmul.f32 %v3558, %v3647
        %v3663 = vmul.f32 %v3559, %v3648
        %v3664 = vmul.f32 %v3625, %v3646
        %v3677 = vrot.slane %v3653, 4
        %v3678 = vrot.slane %v3657, 4
        %v3679 = vsel %vm3596, %v3677, %v3678
        %v3680 = vrot.slane %v3654, 4
        %v3681 = vrot.slane %v3658, 4
        %v3682 = vsel %vm3596, %v3680, %v3681
        %v3683 = vrot.slane %v3655, 4
        %v3684 = vrot.slane %v3659, 4
        %v3685 = vsel %vm3596, %v3683, %v3684
        %v3686 = vrot.slane %v3656, 4
        %v3687 = vrot.slane %v3660, 4
        %v3688 = vsel %vm3596, %v3686, %v3687
        %v3689 = vrot.slane %v3661, 4
        %v3690 = vsel %vm3596, %v3678, %v3689
        %v3691 = vrot.slane %v3662, 4
        %v3692 = vsel %vm3596, %v3681, %v3691
        %v3693 = vrot.slane %v3663, 4
        %v3694 = vsel %vm3596, %v3684, %v3693
        %v3695 = vrot.slane %v3664, 4
        %v3696 = vsel %vm3596, %v3687, %v3695
        %3697 = vrot.lane.b32.xlu0 %v3679, 104
        %v3698 = vpop.permute.xlu0 %3697
        %3699 = vrot.lane.b32.xlu0 %v3682, 104
        %v3700 = vpop.permute.xlu0 %3699
        %3701 = vrot.lane.b32.xlu0 %v3685, 104
        %v3702 = vpop.permute.xlu0 %3701
        %3703 = vrot.lane.b32.xlu0 %v3688, 104
        %v3704 = vpop.permute.xlu0 %3703
        %3705 = vrot.lane.b32.xlu0 %v3690, 104
        %v3706 = vpop.permute.xlu0 %3705
        %3707 = vrot.lane.b32.xlu0 %v3692, 104
        %v3708 = vpop.permute.xlu0 %3707
        %3709 = vrot.lane.b32.xlu0 %v3694, 104
        %v3710 = vpop.permute.xlu0 %3709
        %3711 = vrot.lane.b32.xlu0 %v3696, 104
        %v3712 = vpop.permute.xlu0 %3711
        %v3713 = vsel %vm1028, %v3698, %v3700
        %v3714 = vsel %vm1028, %v3700, %v3702
        %v3715 = vsel %vm1028, %v3702, %v3704
        %v3716 = vsel %vm1028, %v3706, %v3708
        %v3717 = vsel %vm1028, %v3708, %v3710
        %v3718 = vsel %vm1028, %v3710, %v3712
        %v3725 = vadd.f32 %v3618, %v3713
        %v3726 = vadd.f32 %v3619, %v3714
        %v3727 = vadd.f32 %v3620, %v3715
        %v3728 = vadd.f32 %v3621, %v3716
        %v3729 = vadd.f32 %v3622, %v3717
        %v3730 = vadd.f32 %v3623, %v3718
        %s3731 = scalar_lea.vmem %s3, 78
        %v3732 = vld [vmem:[%s3731] ss:$8 sm:$0x7]
        %v3734 = vlaneseq
        %v3735 = vshrl.u32 %v3734, 7
        %v3736 = vsub.s32 0, %v3735
        %v3737 = vrot.slane %v3732, %v3736
        %v3738 = vlaneseq
        %v3739 = vshrl.u32 %v3738, 7
        %v3740 = vsub.s32 1, %v3739
        %v3741 = vrot.slane %v3732, %v3740
        %v3742 = vlaneseq
        %v3743 = vshrl.u32 %v3742, 7
        %v3744 = vsub.s32 2, %v3743
        %v3745 = vrot.slane %v3732, %v3744
        %3746 = vrot.lane.b32.xlu0 %v3737, 48
        %v3747 = vpop.permute.xlu0 %3746
        %3748 = vrot.lane.b32.xlu0 %v3741, 48
        %v3749 = vpop.permute.xlu0 %3748
        %3750 = vrot.lane.b32.xlu0 %v3745, 48
        %v3751 = vpop.permute.xlu0 %3750
        %v3752 = vsel %vm1068, %v3747, %v3749
        %v3753 = vsel %vm1068, %v3749, %v3751
        %v3758 = vmul.f32 %v3554, %v3747
        %v3759 = vmul.f32 %v3555, %v3752
        %v3760 = vmul.f32 %v3556, %v3753
        %v3761 = vmul.f32 %v3624, %v3751
        %v3762 = vmul.f32 %v940, %v3747
        %v3763 = vmul.f32 %v941, %v3752
        %v3764 = vmul.f32 %v942, %v3753
        %v3765 = vmul.f32 %v967, %v3751
        %v3766 = vmul.f32 %v3557, %v3747
        %v3767 = vmul.f32 %v3558, %v3752
        %v3768 = vmul.f32 %v3559, %v3753
        %v3769 = vmul.f32 %v3625, %v3751
        %v3782 = vrot.slane %v3758, 4
        %v3783 = vrot.slane %v3762, 4
        %v3784 = vsel %vm3596, %v3782, %v3783
        %v3785 = vrot.slane %v3759, 4
        %v3786 = vrot.slane %v3763, 4
        %v3787 = vsel %vm3596, %v3785, %v3786
        %v3788 = vrot.slane %v3760, 4
        %v3789 = vrot.slane %v3764, 4
        %v3790 = vsel %vm3596, %v3788, %v3789
        %v3791 = vrot.slane %v3761, 4
        %v3792 = vrot.slane %v3765, 4
        %v3793 = vsel %vm3596, %v3791, %v3792
        %v3794 = vrot.slane %v3766, 4
        %v3795 = vsel %vm3596, %v3783, %v3794
        %v3796 = vrot.slane %v3767, 4
        %v3797 = vsel %vm3596, %v3786, %v3796
        %v3798 = vrot.slane %v3768, 4
        %v3799 = vsel %vm3596, %v3789, %v3798
        %v3800 = vrot.slane %v3769, 4
        %v3801 = vsel %vm3596, %v3792, %v3800
        %3802 = vrot.lane.b32.xlu0 %v3784, 80
        %v3803 = vpop.permute.xlu0 %3802
        %3804 = vrot.lane.b32.xlu0 %v3787, 80
        %v3805 = vpop.permute.xlu0 %3804
        %3806 = vrot.lane.b32.xlu0 %v3790, 80
        %v3807 = vpop.permute.xlu0 %3806
        %3808 = vrot.lane.b32.xlu0 %v3793, 80
        %v3809 = vpop.permute.xlu0 %3808
        %3810 = vrot.lane.b32.xlu0 %v3795, 80
        %v3811 = vpop.permute.xlu0 %3810
        %3812 = vrot.lane.b32.xlu0 %v3797, 80
        %v3813 = vpop.permute.xlu0 %3812
        %3814 = vrot.lane.b32.xlu0 %v3799, 80
        %v3815 = vpop.permute.xlu0 %3814
        %3816 = vrot.lane.b32.xlu0 %v3801, 80
        %v3817 = vpop.permute.xlu0 %3816
        %v3818 = vsel %vm1107, %v3803, %v3805
        %v3819 = vsel %vm1107, %v3805, %v3807
        %v3820 = vsel %vm1107, %v3807, %v3809
        %v3821 = vsel %vm1107, %v3811, %v3813
        %v3822 = vsel %vm1107, %v3813, %v3815
        %v3823 = vsel %vm1107, %v3815, %v3817
        %v3830 = vadd.f32 %v3725, %v3818
        %v3831 = vadd.f32 %v3726, %v3819
        %v3832 = vadd.f32 %v3727, %v3820
        %v3833 = vadd.f32 %v3728, %v3821
        %v3834 = vadd.f32 %v3729, %v3822
        %v3835 = vadd.f32 %v3730, %v3823
        %s3836 = scalar_lea.vmem %s3, 79
        %v3837 = vld [vmem:[%s3836] ss:$8 sm:$0x7]
        %v3839 = vlaneseq
        %v3840 = vshrl.u32 %v3839, 7
        %v3841 = vsub.s32 0, %v3840
        %v3842 = vrot.slane %v3837, %v3841
        %v3843 = vlaneseq
        %v3844 = vshrl.u32 %v3843, 7
        %v3845 = vsub.s32 1, %v3844
        %v3846 = vrot.slane %v3837, %v3845
        %v3847 = vlaneseq
        %v3848 = vshrl.u32 %v3847, 7
        %v3849 = vsub.s32 2, %v3848
        %v3850 = vrot.slane %v3837, %v3849
        %3851 = vrot.lane.b32.xlu0 %v3842, 72
        %v3852 = vpop.permute.xlu0 %3851
        %3853 = vrot.lane.b32.xlu0 %v3846, 72
        %v3854 = vpop.permute.xlu0 %3853
        %3855 = vrot.lane.b32.xlu0 %v3850, 72
        %v3856 = vpop.permute.xlu0 %3855
        %v3857 = vsel %vm858, %v3852, %v3854
        %v3858 = vsel %vm858, %v3854, %v3856
        %v3863 = vmul.f32 %v3554, %v3852
        %v3864 = vmul.f32 %v3555, %v3857
        %v3865 = vmul.f32 %v3556, %v3858
        %v3866 = vmul.f32 %v3624, %v3856
        %v3867 = vmul.f32 %v940, %v3852
        %v3868 = vmul.f32 %v941, %v3857
        %v3869 = vmul.f32 %v942, %v3858
        %v3870 = vmul.f32 %v967, %v3856
        %v3871 = vmul.f32 %v3557, %v3852
        %v3872 = vmul.f32 %v3558, %v3857
        %v3873 = vmul.f32 %v3559, %v3858
        %v3874 = vmul.f32 %v3625, %v3856
        %v3887 = vrot.slane %v3863, 4
        %v3888 = vrot.slane %v3867, 4
        %v3889 = vsel %vm3596, %v3887, %v3888
        %v3890 = vrot.slane %v3864, 4
        %v3891 = vrot.slane %v3868, 4
        %v3892 = vsel %vm3596, %v3890, %v3891
        %v3893 = vrot.slane %v3865, 4
        %v3894 = vrot.slane %v3869, 4
        %v3895 = vsel %vm3596, %v3893, %v3894
        %v3896 = vrot.slane %v3866, 4
        %v3897 = vrot.slane %v3870, 4
        %v3898 = vsel %vm3596, %v3896, %v3897
        %v3899 = vrot.slane %v3871, 4
        %v3900 = vsel %vm3596, %v3888, %v3899
        %v3901 = vrot.slane %v3872, 4
        %v3902 = vsel %vm3596, %v3891, %v3901
        %v3903 = vrot.slane %v3873, 4
        %v3904 = vsel %vm3596, %v3894, %v3903
        %v3905 = vrot.slane %v3874, 4
        %v3906 = vsel %vm3596, %v3897, %v3905
        %3907 = vrot.lane.b32.xlu0 %v3889, 56
        %v3908 = vpop.permute.xlu0 %3907
        %3909 = vrot.lane.b32.xlu0 %v3892, 56
        %v3910 = vpop.permute.xlu0 %3909
        %3911 = vrot.lane.b32.xlu0 %v3895, 56
        %v3912 = vpop.permute.xlu0 %3911
        %3913 = vrot.lane.b32.xlu0 %v3898, 56
        %v3914 = vpop.permute.xlu0 %3913
        %3915 = vrot.lane.b32.xlu0 %v3900, 56
        %v3916 = vpop.permute.xlu0 %3915
        %3917 = vrot.lane.b32.xlu0 %v3902, 56
        %v3918 = vpop.permute.xlu0 %3917
        %3919 = vrot.lane.b32.xlu0 %v3904, 56
        %v3920 = vpop.permute.xlu0 %3919
        %3921 = vrot.lane.b32.xlu0 %v3906, 56
        %v3922 = vpop.permute.xlu0 %3921
        %v3923 = vsel %vm1185, %v3908, %v3910
        %v3924 = vsel %vm1185, %v3910, %v3912
        %v3925 = vsel %vm1185, %v3912, %v3914
        %v3926 = vsel %vm1185, %v3916, %v3918
        %v3927 = vsel %vm1185, %v3918, %v3920
        %v3928 = vsel %vm1185, %v3920, %v3922
        %v3935 = vadd.f32 %v3830, %v3923
        %v3936 = vadd.f32 %v3831, %v3924
        %v3937 = vadd.f32 %v3832, %v3925
        %v3938 = vadd.f32 %v3833, %v3926
        %v3939 = vadd.f32 %v3834, %v3927
        %v3940 = vadd.f32 %v3835, %v3928
        %s3941 = scalar_lea.vmem %s3, 96
        %v3942 = vld [vmem:[%s3941] ss:$8 sm:$0x7]
        %v3944 = vlaneseq
        %v3945 = vshrl.u32 %v3944, 7
        %v3946 = vsub.s32 0, %v3945
        %v3947 = vrot.slane %v3942, %v3946
        %v3948 = vlaneseq
        %v3949 = vshrl.u32 %v3948, 7
        %v3950 = vsub.s32 1, %v3949
        %v3951 = vrot.slane %v3942, %v3950
        %v3952 = vlaneseq
        %v3953 = vshrl.u32 %v3952, 7
        %v3954 = vsub.s32 2, %v3953
        %v3955 = vrot.slane %v3942, %v3954
        %3956 = vrot.lane.b32.xlu0 %v3947, 96
        %v3957 = vpop.permute.xlu0 %3956
        %3958 = vrot.lane.b32.xlu0 %v3951, 96
        %v3959 = vpop.permute.xlu0 %3958
        %3960 = vrot.lane.b32.xlu0 %v3955, 96
        %v3961 = vpop.permute.xlu0 %3960
        %v3962 = vsel %vm1225, %v3957, %v3959
        %v3963 = vsel %vm1225, %v3959, %v3961
        %v3968 = vmul.f32 %v3554, %v3957
        %v3969 = vmul.f32 %v3555, %v3962
        %v3970 = vmul.f32 %v3556, %v3963
        %v3971 = vmul.f32 %v3624, %v3961
        %v3972 = vmul.f32 %v940, %v3957
        %v3973 = vmul.f32 %v941, %v3962
        %v3974 = vmul.f32 %v942, %v3963
        %v3975 = vmul.f32 %v967, %v3961
        %v3976 = vmul.f32 %v3557, %v3957
        %v3977 = vmul.f32 %v3558, %v3962
        %v3978 = vmul.f32 %v3559, %v3963
        %v3979 = vmul.f32 %v3625, %v3961
        %v3992 = vrot.slane %v3968, 4
        %v3993 = vrot.slane %v3972, 4
        %v3994 = vsel %vm3596, %v3992, %v3993
        %v3995 = vrot.slane %v3969, 4
        %v3996 = vrot.slane %v3973, 4
        %v3997 = vsel %vm3596, %v3995, %v3996
        %v3998 = vrot.slane %v3970, 4
        %v3999 = vrot.slane %v3974, 4
        %v4000 = vsel %vm3596, %v3998, %v3999
        %v4001 = vrot.slane %v3971, 4
        %v4002 = vrot.slane %v3975, 4
        %v4003 = vsel %vm3596, %v4001, %v4002
        %v4004 = vrot.slane %v3976, 4
        %v4005 = vsel %vm3596, %v3993, %v4004
        %v4006 = vrot.slane %v3977, 4
        %v4007 = vsel %vm3596, %v3996, %v4006
        %v4008 = vrot.slane %v3978, 4
        %v4009 = vsel %vm3596, %v3999, %v4008
        %v4010 = vrot.slane %v3979, 4
        %v4011 = vsel %vm3596, %v4002, %v4010
        %4012 = vrot.lane.b32.xlu0 %v3994, 32
        %v4013 = vpop.permute.xlu0 %4012
        %4014 = vrot.lane.b32.xlu0 %v3997, 32
        %v4015 = vpop.permute.xlu0 %4014
        %4016 = vrot.lane.b32.xlu0 %v4000, 32
        %v4017 = vpop.permute.xlu0 %4016
        %4018 = vrot.lane.b32.xlu0 %v4003, 32
        %v4019 = vpop.permute.xlu0 %4018
        %4020 = vrot.lane.b32.xlu0 %v4005, 32
        %v4021 = vpop.permute.xlu0 %4020
        %4022 = vrot.lane.b32.xlu0 %v4007, 32
        %v4023 = vpop.permute.xlu0 %4022
        %4024 = vrot.lane.b32.xlu0 %v4009, 32
        %v4025 = vpop.permute.xlu0 %4024
        %4026 = vrot.lane.b32.xlu0 %v4011, 32
        %v4027 = vpop.permute.xlu0 %4026
        %v4028 = vsel %vm1264, %v4013, %v4015
        %v4029 = vsel %vm1264, %v4015, %v4017
        %v4030 = vsel %vm1264, %v4017, %v4019
        %v4031 = vsel %vm1264, %v4021, %v4023
        %v4032 = vsel %vm1264, %v4023, %v4025
        %v4033 = vsel %vm1264, %v4025, %v4027
        %v4040 = vadd.f32 %v3935, %v4028
        %v4041 = vadd.f32 %v3936, %v4029
        %v4042 = vadd.f32 %v3937, %v4030
        %v4043 = vadd.f32 %v3938, %v4031
        %v4044 = vadd.f32 %v3939, %v4032
        %v4045 = vadd.f32 %v3940, %v4033
        %s4046 = scalar_lea.vmem %s3, 97
        %v4047 = vld [vmem:[%s4046] ss:$8 sm:$0x7]
        %v4049 = vlaneseq
        %v4050 = vshrl.u32 %v4049, 7
        %v4051 = vsub.s32 0, %v4050
        %v4052 = vrot.slane %v4047, %v4051
        %v4053 = vlaneseq
        %v4054 = vshrl.u32 %v4053, 7
        %v4055 = vsub.s32 1, %v4054
        %v4056 = vrot.slane %v4047, %v4055
        %v4057 = vlaneseq
        %v4058 = vshrl.u32 %v4057, 7
        %v4059 = vsub.s32 2, %v4058
        %v4060 = vrot.slane %v4047, %v4059
        %4061 = vrot.lane.b32.xlu0 %v4052, 120
        %v4062 = vpop.permute.xlu0 %4061
        %4063 = vrot.lane.b32.xlu0 %v4056, 120
        %v4064 = vpop.permute.xlu0 %4063
        %4065 = vrot.lane.b32.xlu0 %v4060, 120
        %v4066 = vpop.permute.xlu0 %4065
        %v4067 = vsel %vm1304, %v4062, %v4064
        %v4068 = vsel %vm1304, %v4064, %v4066
        %v4073 = vmul.f32 %v3554, %v4062
        %v4074 = vmul.f32 %v3555, %v4067
        %v4075 = vmul.f32 %v3556, %v4068
        %v4076 = vmul.f32 %v3624, %v4066
        %v4077 = vmul.f32 %v940, %v4062
        %v4078 = vmul.f32 %v941, %v4067
        %v4079 = vmul.f32 %v942, %v4068
        %v4080 = vmul.f32 %v967, %v4066
        %v4081 = vmul.f32 %v3557, %v4062
        %v4082 = vmul.f32 %v3558, %v4067
        %v4083 = vmul.f32 %v3559, %v4068
        %v4084 = vmul.f32 %v3625, %v4066
        %v4097 = vrot.slane %v4073, 4
        %v4098 = vrot.slane %v4077, 4
        %v4099 = vsel %vm3596, %v4097, %v4098
        %v4100 = vrot.slane %v4074, 4
        %v4101 = vrot.slane %v4078, 4
        %v4102 = vsel %vm3596, %v4100, %v4101
        %v4103 = vrot.slane %v4075, 4
        %v4104 = vrot.slane %v4079, 4
        %v4105 = vsel %vm3596, %v4103, %v4104
        %v4106 = vrot.slane %v4076, 4
        %v4107 = vrot.slane %v4080, 4
        %v4108 = vsel %vm3596, %v4106, %v4107
        %v4109 = vrot.slane %v4081, 4
        %v4110 = vsel %vm3596, %v4098, %v4109
        %v4111 = vrot.slane %v4082, 4
        %v4112 = vsel %vm3596, %v4101, %v4111
        %v4113 = vrot.slane %v4083, 4
        %v4114 = vsel %vm3596, %v4104, %v4113
        %v4115 = vrot.slane %v4084, 4
        %v4116 = vsel %vm3596, %v4107, %v4115
        %4117 = vrot.lane.b32.xlu0 %v4099, 8
        %v4118 = vpop.permute.xlu0 %4117
        %4119 = vrot.lane.b32.xlu0 %v4102, 8
        %v4120 = vpop.permute.xlu0 %4119
        %4121 = vrot.lane.b32.xlu0 %v4105, 8
        %v4122 = vpop.permute.xlu0 %4121
        %4123 = vrot.lane.b32.xlu0 %v4108, 8
        %v4124 = vpop.permute.xlu0 %4123
        %4125 = vrot.lane.b32.xlu0 %v4110, 8
        %v4126 = vpop.permute.xlu0 %4125
        %4127 = vrot.lane.b32.xlu0 %v4112, 8
        %v4128 = vpop.permute.xlu0 %4127
        %4129 = vrot.lane.b32.xlu0 %v4114, 8
        %v4130 = vpop.permute.xlu0 %4129
        %4131 = vrot.lane.b32.xlu0 %v4116, 8
        %v4132 = vpop.permute.xlu0 %4131
        %v4133 = vsel %vm1343, %v4118, %v4120
        %v4134 = vsel %vm1343, %v4120, %v4122
        %v4135 = vsel %vm1343, %v4122, %v4124
        %v4136 = vsel %vm1343, %v4126, %v4128
        %v4137 = vsel %vm1343, %v4128, %v4130
        %v4138 = vsel %vm1343, %v4130, %v4132
        %v4145 = vadd.f32 %v4040, %v4133
        %v4146 = vadd.f32 %v4041, %v4134
        %v4147 = vadd.f32 %v4042, %v4135
        %v4148 = vadd.f32 %v4043, %v4136
        %v4149 = vadd.f32 %v4044, %v4137
        %v4150 = vadd.f32 %v4045, %v4138
        %v4151 = vld [vmem:[#allocation2 + $0x20] sm:$0xf0]
        %v4152 = vld [vmem:[#allocation2 + $0x70] sm:$0xf]
        %s4153 = scalar_lea.vmem %s3, 98
        %v4154 = vld [vmem:[%s4153] ss:$8 sm:$0x7]
        %v4156 = vlaneseq
        %v4157 = vshrl.u32 %v4156, 7
        %v4158 = vsub.s32 0, %v4157
        %v4159 = vrot.slane %v4154, %v4158
        %v4160 = vlaneseq
        %v4161 = vshrl.u32 %v4160, 7
        %v4162 = vsub.s32 1, %v4161
        %v4163 = vrot.slane %v4154, %v4162
        %v4164 = vlaneseq
        %v4165 = vshrl.u32 %v4164, 7
        %v4166 = vsub.s32 2, %v4165
        %v4167 = vrot.slane %v4154, %v4166
        %4168 = vrot.lane.b32.xlu0 %v4159, 16
        %v4169 = vpop.permute.xlu0 %4168
        %4170 = vrot.lane.b32.xlu0 %v4163, 16
        %v4171 = vpop.permute.xlu0 %4170
        %4172 = vrot.lane.b32.xlu0 %v4167, 16
        %v4173 = vpop.permute.xlu0 %4172
        %v4174 = vsel %vm868, %v4169, %v4171
        %v4175 = vsel %vm868, %v4171, %v4173
        %v4180 = vmul.f32 %v3555, %v4169
        %v4181 = vmul.f32 %v3556, %v4174
        %v4182 = vmul.f32 %v3624, %v4175
        %v4183 = vmul.f32 %v4151, %v4173
        %v4184 = vmul.f32 %v941, %v4169
        %v4185 = vmul.f32 %v942, %v4174
        %v4186 = vmul.f32 %v967, %v4175
        %v4187 = vmul.f32 %v1363, %v4173
        %v4188 = vmul.f32 %v3558, %v4169
        %v4189 = vmul.f32 %v3559, %v4174
        %v4190 = vmul.f32 %v3625, %v4175
        %v4191 = vmul.f32 %v4152, %v4173
        %v4204 = vrot.slane %v4180, 4
        %v4205 = vrot.slane %v4184, 4
        %v4206 = vsel %vm3596, %v4204, %v4205
        %v4207 = vrot.slane %v4181, 4
        %v4208 = vrot.slane %v4185, 4
        %v4209 = vsel %vm3596, %v4207, %v4208
        %v4210 = vrot.slane %v4182, 4
        %v4211 = vrot.slane %v4186, 4
        %v4212 = vsel %vm3596, %v4210, %v4211
        %v4213 = vrot.slane %v4183, 4
        %v4214 = vrot.slane %v4187, 4
        %v4215 = vsel %vm3596, %v4213, %v4214
        %v4216 = vrot.slane %v4188, 4
        %v4217 = vsel %vm3596, %v4205, %v4216
        %v4218 = vrot.slane %v4189, 4
        %v4219 = vsel %vm3596, %v4208, %v4218
        %v4220 = vrot.slane %v4190, 4
        %v4221 = vsel %vm3596, %v4211, %v4220
        %v4222 = vrot.slane %v4191, 4
        %v4223 = vsel %vm3596, %v4214, %v4222
        %4224 = vrot.lane.b32.xlu0 %v4206, 112
        %v4225 = vpop.permute.xlu0 %4224
        %4226 = vrot.lane.b32.xlu0 %v4209, 112
        %v4227 = vpop.permute.xlu0 %4226
        %4228 = vrot.lane.b32.xlu0 %v4212, 112
        %v4229 = vpop.permute.xlu0 %4228
        %4230 = vrot.lane.b32.xlu0 %v4215, 112
        %v4231 = vpop.permute.xlu0 %4230
        %4232 = vrot.lane.b32.xlu0 %v4217, 112
        %v4233 = vpop.permute.xlu0 %4232
        %4234 = vrot.lane.b32.xlu0 %v4219, 112
        %v4235 = vpop.permute.xlu0 %4234
        %4236 = vrot.lane.b32.xlu0 %v4221, 112
        %v4237 = vpop.permute.xlu0 %4236
        %4238 = vrot.lane.b32.xlu0 %v4223, 112
        %v4239 = vpop.permute.xlu0 %4238
        %v4240 = vsel %vm1423, %v4225, %v4227
        %v4241 = vsel %vm1423, %v4227, %v4229
        %v4242 = vsel %vm1423, %v4229, %v4231
        %v4243 = vsel %vm1423, %v4233, %v4235
        %v4244 = vsel %vm1423, %v4235, %v4237
        %v4245 = vsel %vm1423, %v4237, %v4239
        %v4252 = vadd.f32 %v4145, %v4240
        %v4253 = vadd.f32 %v4146, %v4241
        %v4254 = vadd.f32 %v4147, %v4242
        %v4255 = vadd.f32 %v4148, %v4243
        %v4256 = vadd.f32 %v4149, %v4244
        %v4257 = vadd.f32 %v4150, %v4245
        %v4258 = vld [vmem:[#allocation2] sm:$0xe0]
        %v4259 = vld [vmem:[#allocation2 + $0x8] sm:$0xe0]
        %v4260 = vld [vmem:[#allocation2 + $0x10] sm:$0xe0]
        %v4261 = vld [vmem:[#allocation2 + $0x50] sm:$0x1f]
        %v4262 = vld [vmem:[#allocation2 + $0x58] sm:$0x1f]
        %v4263 = vld [vmem:[#allocation2 + $0x60] sm:$0x1f]
        %s4264 = scalar_lea.vmem %s3, 99
        %v4265 = vld [vmem:[%s4264] ss:$8 sm:$0x7]
        %v4267 = vlaneseq
        %v4268 = vshrl.u32 %v4267, 7
        %v4269 = vsub.s32 0, %v4268
        %v4270 = vrot.slane %v4265, %v4269
        %v4271 = vlaneseq
        %v4272 = vshrl.u32 %v4271, 7
        %v4273 = vsub.s32 1, %v4272
        %v4274 = vrot.slane %v4265, %v4273
        %v4275 = vlaneseq
        %v4276 = vshrl.u32 %v4275, 7
        %v4277 = vsub.s32 2, %v4276
        %v4278 = vrot.slane %v4265, %v4277
        %v4282 = vmul.f32 %v4258, %v4270
        %v4283 = vmul.f32 %v4259, %v4274
        %v4284 = vmul.f32 %v4260, %v4278
        %v4285 = vmul.f32 %v940, %v4270
        %v4286 = vmul.f32 %v941, %v4274
        %v4287 = vmul.f32 %v942, %v4278
        %v4288 = vmul.f32 %v4261, %v4270
        %v4289 = vmul.f32 %v4262, %v4274
        %v4290 = vmul.f32 %v4263, %v4278
        %v4300 = vrot.slane %v4282, 5
        %v4301 = vrot.slane %v4285, 5
        %v4302 = vsel %vm879, %v4300, %v4301
        %v4303 = vrot.slane %v4283, 5
        %v4304 = vrot.slane %v4286, 5
        %v4305 = vsel %vm879, %v4303, %v4304
        %v4306 = vrot.slane %v4284, 5
        %v4307 = vrot.slane %v4287, 5
        %v4308 = vsel %vm879, %v4306, %v4307
        %v4309 = vrot.slane %v4288, 5
        %v4310 = vsel %vm879, %v4301, %v4309
        %v4311 = vrot.slane %v4289, 5
        %v4312 = vsel %vm879, %v4304, %v4311
        %v4313 = vrot.slane %v4290, 5
        %v4314 = vsel %vm879, %v4307, %v4313
        %v4321 = vadd.f32 %v4252, %v4302
        %v4322 = vadd.f32 %v4253, %v4305
        %v4323 = vadd.f32 %v4254, %v4308
        %v4324 = vadd.f32 %v4255, %v4310
        %v4325 = vadd.f32 %v4256, %v4312
        %v4326 = vadd.f32 %v4257, %v4314
        %v4327 = vld [vmem:[#allocation2 + $0x18] sm:$0xe0]
        %v4328 = vld [vmem:[#allocation2 + $0x68] sm:$0x1f]
        %s4329 = scalar_lea.vmem %s3, 100
        %v4330 = vld [vmem:[%s4329] ss:$8 sm:$0x7]
        %v4332 = vlaneseq
        %v4333 = vshrl.u32 %v4332, 7
        %v4334 = vsub.s32 0, %v4333
        %v4335 = vrot.slane %v4330, %v4334
        %v4336 = vlaneseq
        %v4337 = vshrl.u32 %v4336, 7
        %v4338 = vsub.s32 1, %v4337
        %v4339 = vrot.slane %v4330, %v4338
        %v4340 = vlaneseq
        %v4341 = vshrl.u32 %v4340, 7
        %v4342 = vsub.s32 2, %v4341
        %v4343 = vrot.slane %v4330, %v4342
        %4344 = vrot.lane.b32.xlu0 %v4335, 24
        %v4345 = vpop.permute.xlu0 %4344
        %4346 = vrot.lane.b32.xlu0 %v4339, 24
        %v4347 = vpop.permute.xlu0 %4346
        %4348 = vrot.lane.b32.xlu0 %v4343, 24
        %v4349 = vpop.permute.xlu0 %4348
        %v4350 = vsel %vm989, %v4345, %v4347
        %v4351 = vsel %vm989, %v4347, %v4349
        %v4356 = vmul.f32 %v4258, %v4345
        %v4357 = vmul.f32 %v4259, %v4350
        %v4358 = vmul.f32 %v4260, %v4351
        %v4359 = vmul.f32 %v4327, %v4349
        %v4360 = vmul.f32 %v940, %v4345
        %v4361 = vmul.f32 %v941, %v4350
        %v4362 = vmul.f32 %v942, %v4351
        %v4363 = vmul.f32 %v967, %v4349
        %v4364 = vmul.f32 %v4261, %v4345
        %v4365 = vmul.f32 %v4262, %v4350
        %v4366 = vmul.f32 %v4263, %v4351
        %v4367 = vmul.f32 %v4328, %v4349
        %v4380 = vrot.slane %v4356, 5
        %v4381 = vrot.slane %v4360, 5
        %v4382 = vsel %vm879, %v4380, %v4381
        %v4383 = vrot.slane %v4357, 5
        %v4384 = vrot.slane %v4361, 5
        %v4385 = vsel %vm879, %v4383, %v4384
        %v4386 = vrot.slane %v4358, 5
        %v4387 = vrot.slane %v4362, 5
        %v4388 = vsel %vm879, %v4386, %v4387
        %v4389 = vrot.slane %v4359, 5
        %v4390 = vrot.slane %v4363, 5
        %v4391 = vsel %vm879, %v4389, %v4390
        %v4392 = vrot.slane %v4364, 5
        %v4393 = vsel %vm879, %v4381, %v4392
        %v4394 = vrot.slane %v4365, 5
        %v4395 = vsel %vm879, %v4384, %v4394
        %v4396 = vrot.slane %v4366, 5
        %v4397 = vsel %vm879, %v4387, %v4396
        %v4398 = vrot.slane %v4367, 5
        %v4399 = vsel %vm879, %v4390, %v4398
        %4400 = vrot.lane.b32.xlu0 %v4382, 104
        %v4401 = vpop.permute.xlu0 %4400
        %4402 = vrot.lane.b32.xlu0 %v4385, 104
        %v4403 = vpop.permute.xlu0 %4402
        %4404 = vrot.lane.b32.xlu0 %v4388, 104
        %v4405 = vpop.permute.xlu0 %4404
        %4406 = vrot.lane.b32.xlu0 %v4391, 104
        %v4407 = vpop.permute.xlu0 %4406
        %4408 = vrot.lane.b32.xlu0 %v4393, 104
        %v4409 = vpop.permute.xlu0 %4408
        %4410 = vrot.lane.b32.xlu0 %v4395, 104
        %v4411 = vpop.permute.xlu0 %4410
        %4412 = vrot.lane.b32.xlu0 %v4397, 104
        %v4413 = vpop.permute.xlu0 %4412
        %4414 = vrot.lane.b32.xlu0 %v4399, 104
        %v4415 = vpop.permute.xlu0 %4414
        %v4416 = vsel %vm1028, %v4401, %v4403
        %v4417 = vsel %vm1028, %v4403, %v4405
        %v4418 = vsel %vm1028, %v4405, %v4407
        %v4419 = vsel %vm1028, %v4409, %v4411
        %v4420 = vsel %vm1028, %v4411, %v4413
        %v4421 = vsel %vm1028, %v4413, %v4415
        %v4428 = vadd.f32 %v4321, %v4416
        %v4429 = vadd.f32 %v4322, %v4417
        %v4430 = vadd.f32 %v4323, %v4418
        %v4431 = vadd.f32 %v4324, %v4419
        %v4432 = vadd.f32 %v4325, %v4420
        %v4433 = vadd.f32 %v4326, %v4421
        %s4434 = scalar_lea.vmem %s3, 101
        %v4435 = vld [vmem:[%s4434] ss:$8 sm:$0x7]
        %v4437 = vlaneseq
        %v4438 = vshrl.u32 %v4437, 7
        %v4439 = vsub.s32 0, %v4438
        %v4440 = vrot.slane %v4435, %v4439
        %v4441 = vlaneseq
        %v4442 = vshrl.u32 %v4441, 7
        %v4443 = vsub.s32 1, %v4442
        %v4444 = vrot.slane %v4435, %v4443
        %v4445 = vlaneseq
        %v4446 = vshrl.u32 %v4445, 7
        %v4447 = vsub.s32 2, %v4446
        %v4448 = vrot.slane %v4435, %v4447
        %4449 = vrot.lane.b32.xlu0 %v4440, 48
        %v4450 = vpop.permute.xlu0 %4449
        %4451 = vrot.lane.b32.xlu0 %v4444, 48
        %v4452 = vpop.permute.xlu0 %4451
        %4453 = vrot.lane.b32.xlu0 %v4448, 48
        %v4454 = vpop.permute.xlu0 %4453
        %v4455 = vsel %vm1068, %v4450, %v4452
        %v4456 = vsel %vm1068, %v4452, %v4454
        %v4461 = vmul.f32 %v4258, %v4450
        %v4462 = vmul.f32 %v4259, %v4455
        %v4463 = vmul.f32 %v4260, %v4456
        %v4464 = vmul.f32 %v4327, %v4454
        %v4465 = vmul.f32 %v940, %v4450
        %v4466 = vmul.f32 %v941, %v4455
        %v4467 = vmul.f32 %v942, %v4456
        %v4468 = vmul.f32 %v967, %v4454
        %v4469 = vmul.f32 %v4261, %v4450
        %v4470 = vmul.f32 %v4262, %v4455
        %v4471 = vmul.f32 %v4263, %v4456
        %v4472 = vmul.f32 %v4328, %v4454
        %v4485 = vrot.slane %v4461, 5
        %v4486 = vrot.slane %v4465, 5
        %v4487 = vsel %vm879, %v4485, %v4486
        %v4488 = vrot.slane %v4462, 5
        %v4489 = vrot.slane %v4466, 5
        %v4490 = vsel %vm879, %v4488, %v4489
        %v4491 = vrot.slane %v4463, 5
        %v4492 = vrot.slane %v4467, 5
        %v4493 = vsel %vm879, %v4491, %v4492
        %v4494 = vrot.slane %v4464, 5
        %v4495 = vrot.slane %v4468, 5
        %v4496 = vsel %vm879, %v4494, %v4495
        %v4497 = vrot.slane %v4469, 5
        %v4498 = vsel %vm879, %v4486, %v4497
        %v4499 = vrot.slane %v4470, 5
        %v4500 = vsel %vm879, %v4489, %v4499
        %v4501 = vrot.slane %v4471, 5
        %v4502 = vsel %vm879, %v4492, %v4501
        %v4503 = vrot.slane %v4472, 5
        %v4504 = vsel %vm879, %v4495, %v4503
        %4505 = vrot.lane.b32.xlu0 %v4487, 80
        %v4506 = vpop.permute.xlu0 %4505
        %4507 = vrot.lane.b32.xlu0 %v4490, 80
        %v4508 = vpop.permute.xlu0 %4507
        %4509 = vrot.lane.b32.xlu0 %v4493, 80
        %v4510 = vpop.permute.xlu0 %4509
        %4511 = vrot.lane.b32.xlu0 %v4496, 80
        %v4512 = vpop.permute.xlu0 %4511
        %4513 = vrot.lane.b32.xlu0 %v4498, 80
        %v4514 = vpop.permute.xlu0 %4513
        %4515 = vrot.lane.b32.xlu0 %v4500, 80
        %v4516 = vpop.permute.xlu0 %4515
        %4517 = vrot.lane.b32.xlu0 %v4502, 80
        %v4518 = vpop.permute.xlu0 %4517
        %4519 = vrot.lane.b32.xlu0 %v4504, 80
        %v4520 = vpop.permute.xlu0 %4519
        %v4521 = vsel %vm1107, %v4506, %v4508
        %v4522 = vsel %vm1107, %v4508, %v4510
        %v4523 = vsel %vm1107, %v4510, %v4512
        %v4524 = vsel %vm1107, %v4514, %v4516
        %v4525 = vsel %vm1107, %v4516, %v4518
        %v4526 = vsel %vm1107, %v4518, %v4520
        %v4533 = vadd.f32 %v4428, %v4521
        %v4534 = vadd.f32 %v4429, %v4522
        %v4535 = vadd.f32 %v4430, %v4523
        %v4536 = vadd.f32 %v4431, %v4524
        %v4537 = vadd.f32 %v4432, %v4525
        %v4538 = vadd.f32 %v4433, %v4526
        %s4539 = scalar_lea.vmem %s3, 102
        %v4540 = vld [vmem:[%s4539] ss:$8 sm:$0x7]
        %v4542 = vlaneseq
        %v4543 = vshrl.u32 %v4542, 7
        %v4544 = vsub.s32 0, %v4543
        %v4545 = vrot.slane %v4540, %v4544
        %v4546 = vlaneseq
        %v4547 = vshrl.u32 %v4546, 7
        %v4548 = vsub.s32 1, %v4547
        %v4549 = vrot.slane %v4540, %v4548
        %v4550 = vlaneseq
        %v4551 = vshrl.u32 %v4550, 7
        %v4552 = vsub.s32 2, %v4551
        %v4553 = vrot.slane %v4540, %v4552
        %4554 = vrot.lane.b32.xlu0 %v4545, 72
        %v4555 = vpop.permute.xlu0 %4554
        %4556 = vrot.lane.b32.xlu0 %v4549, 72
        %v4557 = vpop.permute.xlu0 %4556
        %4558 = vrot.lane.b32.xlu0 %v4553, 72
        %v4559 = vpop.permute.xlu0 %4558
        %v4560 = vsel %vm858, %v4555, %v4557
        %v4561 = vsel %vm858, %v4557, %v4559
        %v4566 = vmul.f32 %v4258, %v4555
        %v4567 = vmul.f32 %v4259, %v4560
        %v4568 = vmul.f32 %v4260, %v4561
        %v4569 = vmul.f32 %v4327, %v4559
        %v4570 = vmul.f32 %v940, %v4555
        %v4571 = vmul.f32 %v941, %v4560
        %v4572 = vmul.f32 %v942, %v4561
        %v4573 = vmul.f32 %v967, %v4559
        %v4574 = vmul.f32 %v4261, %v4555
        %v4575 = vmul.f32 %v4262, %v4560
        %v4576 = vmul.f32 %v4263, %v4561
        %v4577 = vmul.f32 %v4328, %v4559
        %v4590 = vrot.slane %v4566, 5
        %v4591 = vrot.slane %v4570, 5
        %v4592 = vsel %vm879, %v4590, %v4591
        %v4593 = vrot.slane %v4567, 5
        %v4594 = vrot.slane %v4571, 5
        %v4595 = vsel %vm879, %v4593, %v4594
        %v4596 = vrot.slane %v4568, 5
        %v4597 = vrot.slane %v4572, 5
        %v4598 = vsel %vm879, %v4596, %v4597
        %v4599 = vrot.slane %v4569, 5
        %v4600 = vrot.slane %v4573, 5
        %v4601 = vsel %vm879, %v4599, %v4600
        %v4602 = vrot.slane %v4574, 5
        %v4603 = vsel %vm879, %v4591, %v4602
        %v4604 = vrot.slane %v4575, 5
        %v4605 = vsel %vm879, %v4594, %v4604
        %v4606 = vrot.slane %v4576, 5
        %v4607 = vsel %vm879, %v4597, %v4606
        %v4608 = vrot.slane %v4577, 5
        %v4609 = vsel %vm879, %v4600, %v4608
        %4610 = vrot.lane.b32.xlu0 %v4592, 56
        %v4611 = vpop.permute.xlu0 %4610
        %4612 = vrot.lane.b32.xlu0 %v4595, 56
        %v4613 = vpop.permute.xlu0 %4612
        %4614 = vrot.lane.b32.xlu0 %v4598, 56
        %v4615 = vpop.permute.xlu0 %4614
        %4616 = vrot.lane.b32.xlu0 %v4601, 56
        %v4617 = vpop.permute.xlu0 %4616
        %4618 = vrot.lane.b32.xlu0 %v4603, 56
        %v4619 = vpop.permute.xlu0 %4618
        %4620 = vrot.lane.b32.xlu0 %v4605, 56
        %v4621 = vpop.permute.xlu0 %4620
        %4622 = vrot.lane.b32.xlu0 %v4607, 56
        %v4623 = vpop.permute.xlu0 %4622
        %4624 = vrot.lane.b32.xlu0 %v4609, 56
        %v4625 = vpop.permute.xlu0 %4624
        %v4626 = vsel %vm1185, %v4611, %v4613
        %v4627 = vsel %vm1185, %v4613, %v4615
        %v4628 = vsel %vm1185, %v4615, %v4617
        %v4629 = vsel %vm1185, %v4619, %v4621
        %v4630 = vsel %vm1185, %v4621, %v4623
        %v4631 = vsel %vm1185, %v4623, %v4625
        %v4638 = vadd.f32 %v4533, %v4626
        %v4639 = vadd.f32 %v4534, %v4627
        %v4640 = vadd.f32 %v4535, %v4628
        %v4641 = vadd.f32 %v4536, %v4629
        %v4642 = vadd.f32 %v4537, %v4630
        %v4643 = vadd.f32 %v4538, %v4631
        %s4644 = scalar_lea.vmem %s3, 103
        %v4645 = vld [vmem:[%s4644] ss:$8 sm:$0x7]
        %v4647 = vlaneseq
        %v4648 = vshrl.u32 %v4647, 7
        %v4649 = vsub.s32 0, %v4648
        %v4650 = vrot.slane %v4645, %v4649
        %v4651 = vlaneseq
        %v4652 = vshrl.u32 %v4651, 7
        %v4653 = vsub.s32 1, %v4652
        %v4654 = vrot.slane %v4645, %v4653
        %v4655 = vlaneseq
        %v4656 = vshrl.u32 %v4655, 7
        %v4657 = vsub.s32 2, %v4656
        %v4658 = vrot.slane %v4645, %v4657
        %4659 = vrot.lane.b32.xlu0 %v4650, 96
        %v4660 = vpop.permute.xlu0 %4659
        %4661 = vrot.lane.b32.xlu0 %v4654, 96
        %v4662 = vpop.permute.xlu0 %4661
        %4663 = vrot.lane.b32.xlu0 %v4658, 96
        %v4664 = vpop.permute.xlu0 %4663
        %v4665 = vsel %vm1225, %v4660, %v4662
        %v4666 = vsel %vm1225, %v4662, %v4664
        %v4671 = vmul.f32 %v4258, %v4660
        %v4672 = vmul.f32 %v4259, %v4665
        %v4673 = vmul.f32 %v4260, %v4666
        %v4674 = vmul.f32 %v4327, %v4664
        %v4675 = vmul.f32 %v940, %v4660
        %v4676 = vmul.f32 %v941, %v4665
        %v4677 = vmul.f32 %v942, %v4666
        %v4678 = vmul.f32 %v967, %v4664
        %v4679 = vmul.f32 %v4261, %v4660
        %v4680 = vmul.f32 %v4262, %v4665
        %v4681 = vmul.f32 %v4263, %v4666
        %v4682 = vmul.f32 %v4328, %v4664
        %v4695 = vrot.slane %v4671, 5
        %v4696 = vrot.slane %v4675, 5
        %v4697 = vsel %vm879, %v4695, %v4696
        %v4698 = vrot.slane %v4672, 5
        %v4699 = vrot.slane %v4676, 5
        %v4700 = vsel %vm879, %v4698, %v4699
        %v4701 = vrot.slane %v4673, 5
        %v4702 = vrot.slane %v4677, 5
        %v4703 = vsel %vm879, %v4701, %v4702
        %v4704 = vrot.slane %v4674, 5
        %v4705 = vrot.slane %v4678, 5
        %v4706 = vsel %vm879, %v4704, %v4705
        %v4707 = vrot.slane %v4679, 5
        %v4708 = vsel %vm879, %v4696, %v4707
        %v4709 = vrot.slane %v4680, 5
        %v4710 = vsel %vm879, %v4699, %v4709
        %v4711 = vrot.slane %v4681, 5
        %v4712 = vsel %vm879, %v4702, %v4711
        %v4713 = vrot.slane %v4682, 5
        %v4714 = vsel %vm879, %v4705, %v4713
        %4715 = vrot.lane.b32.xlu0 %v4697, 32
        %v4716 = vpop.permute.xlu0 %4715
        %4717 = vrot.lane.b32.xlu0 %v4700, 32
        %v4718 = vpop.permute.xlu0 %4717
        %4719 = vrot.lane.b32.xlu0 %v4703, 32
        %v4720 = vpop.permute.xlu0 %4719
        %4721 = vrot.lane.b32.xlu0 %v4706, 32
        %v4722 = vpop.permute.xlu0 %4721
        %4723 = vrot.lane.b32.xlu0 %v4708, 32
        %v4724 = vpop.permute.xlu0 %4723
        %4725 = vrot.lane.b32.xlu0 %v4710, 32
        %v4726 = vpop.permute.xlu0 %4725
        %4727 = vrot.lane.b32.xlu0 %v4712, 32
        %v4728 = vpop.permute.xlu0 %4727
        %4729 = vrot.lane.b32.xlu0 %v4714, 32
        %v4730 = vpop.permute.xlu0 %4729
        %v4731 = vsel %vm1264, %v4716, %v4718
        %v4732 = vsel %vm1264, %v4718, %v4720
        %v4733 = vsel %vm1264, %v4720, %v4722
        %v4734 = vsel %vm1264, %v4724, %v4726
        %v4735 = vsel %vm1264, %v4726, %v4728
        %v4736 = vsel %vm1264, %v4728, %v4730
        %v4743 = vadd.f32 %v4638, %v4731
        %v4744 = vadd.f32 %v4639, %v4732
        %v4745 = vadd.f32 %v4640, %v4733
        %v4746 = vadd.f32 %v4641, %v4734
        %v4747 = vadd.f32 %v4642, %v4735
        %v4748 = vadd.f32 %v4643, %v4736
        %s4749 = scalar_lea.vmem %s3, 120
        %v4750 = vld [vmem:[%s4749] ss:$8 sm:$0x7]
        %v4752 = vlaneseq
        %v4753 = vshrl.u32 %v4752, 7
        %v4754 = vsub.s32 0, %v4753
        %v4755 = vrot.slane %v4750, %v4754
        %v4756 = vlaneseq
        %v4757 = vshrl.u32 %v4756, 7
        %v4758 = vsub.s32 1, %v4757
        %v4759 = vrot.slane %v4750, %v4758
        %v4760 = vlaneseq
        %v4761 = vshrl.u32 %v4760, 7
        %v4762 = vsub.s32 2, %v4761
        %v4763 = vrot.slane %v4750, %v4762
        %4764 = vrot.lane.b32.xlu0 %v4755, 120
        %v4765 = vpop.permute.xlu0 %4764
        %4766 = vrot.lane.b32.xlu0 %v4759, 120
        %v4767 = vpop.permute.xlu0 %4766
        %4768 = vrot.lane.b32.xlu0 %v4763, 120
        %v4769 = vpop.permute.xlu0 %4768
        %v4770 = vsel %vm1304, %v4765, %v4767
        %v4771 = vsel %vm1304, %v4767, %v4769
        %v4776 = vmul.f32 %v4258, %v4765
        %v4777 = vmul.f32 %v4259, %v4770
        %v4778 = vmul.f32 %v4260, %v4771
        %v4779 = vmul.f32 %v4327, %v4769
        %v4780 = vmul.f32 %v940, %v4765
        %v4781 = vmul.f32 %v941, %v4770
        %v4782 = vmul.f32 %v942, %v4771
        %v4783 = vmul.f32 %v967, %v4769
        %v4784 = vmul.f32 %v4261, %v4765
        %v4785 = vmul.f32 %v4262, %v4770
        %v4786 = vmul.f32 %v4263, %v4771
        %v4787 = vmul.f32 %v4328, %v4769
        %v4800 = vrot.slane %v4776, 5
        %v4801 = vrot.slane %v4780, 5
        %v4802 = vsel %vm879, %v4800, %v4801
        %v4803 = vrot.slane %v4777, 5
        %v4804 = vrot.slane %v4781, 5
        %v4805 = vsel %vm879, %v4803, %v4804
        %v4806 = vrot.slane %v4778, 5
        %v4807 = vrot.slane %v4782, 5
        %v4808 = vsel %vm879, %v4806, %v4807
        %v4809 = vrot.slane %v4779, 5
        %v4810 = vrot.slane %v4783, 5
        %v4811 = vsel %vm879, %v4809, %v4810
        %v4812 = vrot.slane %v4784, 5
        %v4813 = vsel %vm879, %v4801, %v4812
        %v4814 = vrot.slane %v4785, 5
        %v4815 = vsel %vm879, %v4804, %v4814
        %v4816 = vrot.slane %v4786, 5
        %v4817 = vsel %vm879, %v4807, %v4816
        %v4818 = vrot.slane %v4787, 5
        %v4819 = vsel %vm879, %v4810, %v4818
        %4820 = vrot.lane.b32.xlu0 %v4802, 8
        %v4821 = vpop.permute.xlu0 %4820
        %4822 = vrot.lane.b32.xlu0 %v4805, 8
        %v4823 = vpop.permute.xlu0 %4822
        %4824 = vrot.lane.b32.xlu0 %v4808, 8
        %v4825 = vpop.permute.xlu0 %4824
        %4826 = vrot.lane.b32.xlu0 %v4811, 8
        %v4827 = vpop.permute.xlu0 %4826
        %4828 = vrot.lane.b32.xlu0 %v4813, 8
        %v4829 = vpop.permute.xlu0 %4828
        %4830 = vrot.lane.b32.xlu0 %v4815, 8
        %v4831 = vpop.permute.xlu0 %4830
        %4832 = vrot.lane.b32.xlu0 %v4817, 8
        %v4833 = vpop.permute.xlu0 %4832
        %4834 = vrot.lane.b32.xlu0 %v4819, 8
        %v4835 = vpop.permute.xlu0 %4834
        %v4836 = vsel %vm1343, %v4821, %v4823
        %v4837 = vsel %vm1343, %v4823, %v4825
        %v4838 = vsel %vm1343, %v4825, %v4827
        %v4839 = vsel %vm1343, %v4829, %v4831
        %v4840 = vsel %vm1343, %v4831, %v4833
        %v4841 = vsel %vm1343, %v4833, %v4835
        %v4848 = vadd.f32 %v4743, %v4836
        %v4849 = vadd.f32 %v4744, %v4837
        %v4850 = vadd.f32 %v4745, %v4838
        %v4851 = vadd.f32 %v4746, %v4839
        %v4852 = vadd.f32 %v4747, %v4840
        %v4853 = vadd.f32 %v4748, %v4841
        %v4854 = vld [vmem:[#allocation2 + $0x20] sm:$0xe0]
        %v4855 = vld [vmem:[#allocation2 + $0x70] sm:$0x1f]
        %s4856 = scalar_lea.vmem %s3, 121
        %v4857 = vld [vmem:[%s4856] ss:$8 sm:$0x7]
        %v4859 = vlaneseq
        %v4860 = vshrl.u32 %v4859, 7
        %v4861 = vsub.s32 0, %v4860
        %v4862 = vrot.slane %v4857, %v4861
        %v4863 = vlaneseq
        %v4864 = vshrl.u32 %v4863, 7
        %v4865 = vsub.s32 1, %v4864
        %v4866 = vrot.slane %v4857, %v4865
        %v4867 = vlaneseq
        %v4868 = vshrl.u32 %v4867, 7
        %v4869 = vsub.s32 2, %v4868
        %v4870 = vrot.slane %v4857, %v4869
        %4871 = vrot.lane.b32.xlu0 %v4862, 16
        %v4872 = vpop.permute.xlu0 %4871
        %4873 = vrot.lane.b32.xlu0 %v4866, 16
        %v4874 = vpop.permute.xlu0 %4873
        %4875 = vrot.lane.b32.xlu0 %v4870, 16
        %v4876 = vpop.permute.xlu0 %4875
        %v4877 = vsel %vm868, %v4872, %v4874
        %v4878 = vsel %vm868, %v4874, %v4876
        %v4883 = vmul.f32 %v4259, %v4872
        %v4884 = vmul.f32 %v4260, %v4877
        %v4885 = vmul.f32 %v4327, %v4878
        %v4886 = vmul.f32 %v4854, %v4876
        %v4887 = vmul.f32 %v941, %v4872
        %v4888 = vmul.f32 %v942, %v4877
        %v4889 = vmul.f32 %v967, %v4878
        %v4890 = vmul.f32 %v1363, %v4876
        %v4891 = vmul.f32 %v4262, %v4872
        %v4892 = vmul.f32 %v4263, %v4877
        %v4893 = vmul.f32 %v4328, %v4878
        %v4894 = vmul.f32 %v4855, %v4876
        %v4907 = vrot.slane %v4883, 5
        %v4908 = vrot.slane %v4887, 5
        %v4909 = vsel %vm879, %v4907, %v4908
        %v4910 = vrot.slane %v4884, 5
        %v4911 = vrot.slane %v4888, 5
        %v4912 = vsel %vm879, %v4910, %v4911
        %v4913 = vrot.slane %v4885, 5
        %v4914 = vrot.slane %v4889, 5
        %v4915 = vsel %vm879, %v4913, %v4914
        %v4916 = vrot.slane %v4886, 5
        %v4917 = vrot.slane %v4890, 5
        %v4918 = vsel %vm879, %v4916, %v4917
        %v4919 = vrot.slane %v4891, 5
        %v4920 = vsel %vm879, %v4908, %v4919
        %v4921 = vrot.slane %v4892, 5
        %v4922 = vsel %vm879, %v4911, %v4921
        %v4923 = vrot.slane %v4893, 5
        %v4924 = vsel %vm879, %v4914, %v4923
        %v4925 = vrot.slane %v4894, 5
        %v4926 = vsel %vm879, %v4917, %v4925
        %4927 = vrot.lane.b32.xlu0 %v4909, 112
        %v4928 = vpop.permute.xlu0 %4927
        %4929 = vrot.lane.b32.xlu0 %v4912, 112
        %v4930 = vpop.permute.xlu0 %4929
        %4931 = vrot.lane.b32.xlu0 %v4915, 112
        %v4932 = vpop.permute.xlu0 %4931
        %4933 = vrot.lane.b32.xlu0 %v4918, 112
        %v4934 = vpop.permute.xlu0 %4933
        %4935 = vrot.lane.b32.xlu0 %v4920, 112
        %v4936 = vpop.permute.xlu0 %4935
        %4937 = vrot.lane.b32.xlu0 %v4922, 112
        %v4938 = vpop.permute.xlu0 %4937
        %4939 = vrot.lane.b32.xlu0 %v4924, 112
        %v4940 = vpop.permute.xlu0 %4939
        %4941 = vrot.lane.b32.xlu0 %v4926, 112
        %v4942 = vpop.permute.xlu0 %4941
        %v4943 = vsel %vm1423, %v4928, %v4930
        %v4944 = vsel %vm1423, %v4930, %v4932
        %v4945 = vsel %vm1423, %v4932, %v4934
        %v4946 = vsel %vm1423, %v4936, %v4938
        %v4947 = vsel %vm1423, %v4938, %v4940
        %v4948 = vsel %vm1423, %v4940, %v4942
        %v4955 = vadd.f32 %v4848, %v4943
        %v4956 = vadd.f32 %v4849, %v4944
        %v4957 = vadd.f32 %v4850, %v4945
        %v4958 = vadd.f32 %v4851, %v4946
        %v4959 = vadd.f32 %v4852, %v4947
        %v4960 = vadd.f32 %v4853, %v4948
        %v4961 = vld [vmem:[#allocation2] sm:$0xc0]
        %v4962 = vld [vmem:[#allocation2 + $0x8] sm:$0xc0]
        %v4963 = vld [vmem:[#allocation2 + $0x10] sm:$0xc0]
        %v4964 = vld [vmem:[#allocation2 + $0x50] sm:$0x3f]
        %v4965 = vld [vmem:[#allocation2 + $0x58] sm:$0x3f]
        %v4966 = vld [vmem:[#allocation2 + $0x60] sm:$0x3f]
        %s4967 = scalar_lea.vmem %s3, 122
        %v4968 = vld [vmem:[%s4967] ss:$8 sm:$0x7]
        %v4970 = vlaneseq
        %v4971 = vshrl.u32 %v4970, 7
        %v4972 = vsub.s32 0, %v4971
        %v4973 = vrot.slane %v4968, %v4972
        %v4974 = vlaneseq
        %v4975 = vshrl.u32 %v4974, 7
        %v4976 = vsub.s32 1, %v4975
        %v4977 = vrot.slane %v4968, %v4976
        %v4978 = vlaneseq
        %v4979 = vshrl.u32 %v4978, 7
        %v4980 = vsub.s32 2, %v4979
        %v4981 = vrot.slane %v4968, %v4980
        %v4985 = vmul.f32 %v4961, %v4973
        %v4986 = vmul.f32 %v4962, %v4977
        %v4987 = vmul.f32 %v4963, %v4981
        %v4988 = vmul.f32 %v940, %v4973
        %v4989 = vmul.f32 %v941, %v4977
        %v4990 = vmul.f32 %v942, %v4981
        %v4991 = vmul.f32 %v4964, %v4973
        %v4992 = vmul.f32 %v4965, %v4977
        %v4993 = vmul.f32 %v4966, %v4981
        %vm5003 = vcmask 1041408
        %v5004 = vrot.slane %v4985, 6
        %v5005 = vrot.slane %v4988, 6
        %v5006 = vsel %vm5003, %v5004, %v5005
        %v5007 = vrot.slane %v4986, 6
        %v5008 = vrot.slane %v4989, 6
        %v5009 = vsel %vm5003, %v5007, %v5008
        %v5010 = vrot.slane %v4987, 6
        %v5011 = vrot.slane %v4990, 6
        %v5012 = vsel %vm5003, %v5010, %v5011
        %v5013 = vrot.slane %v4991, 6
        %v5014 = vsel %vm5003, %v5005, %v5013
        %v5015 = vrot.slane %v4992, 6
        %v5016 = vsel %vm5003, %v5008, %v5015
        %v5017 = vrot.slane %v4993, 6
        %v5018 = vsel %vm5003, %v5011, %v5017
        %v5025 = vadd.f32 %v4955, %v5006
        %v5026 = vadd.f32 %v4956, %v5009
        %v5027 = vadd.f32 %v4957, %v5012
        %v5028 = vadd.f32 %v4958, %v5014
        %v5029 = vadd.f32 %v4959, %v5016
        %v5030 = vadd.f32 %v4960, %v5018
        %v5031 = vld [vmem:[#allocation2 + $0x18] sm:$0xc0]
        %v5032 = vld [vmem:[#allocation2 + $0x68] sm:$0x3f]
        %s5033 = scalar_lea.vmem %s3, 123
        %v5034 = vld [vmem:[%s5033] ss:$8 sm:$0x7]
        %v5036 = vlaneseq
        %v5037 = vshrl.u32 %v5036, 7
        %v5038 = vsub.s32 0, %v5037
        %v5039 = vrot.slane %v5034, %v5038
        %v5040 = vlaneseq
        %v5041 = vshrl.u32 %v5040, 7
        %v5042 = vsub.s32 1, %v5041
        %v5043 = vrot.slane %v5034, %v5042
        %v5044 = vlaneseq
        %v5045 = vshrl.u32 %v5044, 7
        %v5046 = vsub.s32 2, %v5045
        %v5047 = vrot.slane %v5034, %v5046
        %5048 = vrot.lane.b32.xlu0 %v5039, 24
        %v5049 = vpop.permute.xlu0 %5048
        %5050 = vrot.lane.b32.xlu0 %v5043, 24
        %v5051 = vpop.permute.xlu0 %5050
        %5052 = vrot.lane.b32.xlu0 %v5047, 24
        %v5053 = vpop.permute.xlu0 %5052
        %v5054 = vsel %vm989, %v5049, %v5051
        %v5055 = vsel %vm989, %v5051, %v5053
        %v5060 = vmul.f32 %v4961, %v5049
        %v5061 = vmul.f32 %v4962, %v5054
        %v5062 = vmul.f32 %v4963, %v5055
        %v5063 = vmul.f32 %v5031, %v5053
        %v5064 = vmul.f32 %v940, %v5049
        %v5065 = vmul.f32 %v941, %v5054
        %v5066 = vmul.f32 %v942, %v5055
        %v5067 = vmul.f32 %v967, %v5053
        %v5068 = vmul.f32 %v4964, %v5049
        %v5069 = vmul.f32 %v4965, %v5054
        %v5070 = vmul.f32 %v4966, %v5055
        %v5071 = vmul.f32 %v5032, %v5053
        %v5084 = vrot.slane %v5060, 6
        %v5085 = vrot.slane %v5064, 6
        %v5086 = vsel %vm5003, %v5084, %v5085
        %v5087 = vrot.slane %v5061, 6
        %v5088 = vrot.slane %v5065, 6
        %v5089 = vsel %vm5003, %v5087, %v5088
        %v5090 = vrot.slane %v5062, 6
        %v5091 = vrot.slane %v5066, 6
        %v5092 = vsel %vm5003, %v5090, %v5091
        %v5093 = vrot.slane %v5063, 6
        %v5094 = vrot.slane %v5067, 6
        %v5095 = vsel %vm5003, %v5093, %v5094
        %v5096 = vrot.slane %v5068, 6
        %v5097 = vsel %vm5003, %v5085, %v5096
        %v5098 = vrot.slane %v5069, 6
        %v5099 = vsel %vm5003, %v5088, %v5098
        %v5100 = vrot.slane %v5070, 6
        %v5101 = vsel %vm5003, %v5091, %v5100
        %v5102 = vrot.slane %v5071, 6
        %v5103 = vsel %vm5003, %v5094, %v5102
        %5104 = vrot.lane.b32.xlu0 %v5086, 104
        %v5105 = vpop.permute.xlu0 %5104
        %5106 = vrot.lane.b32.xlu0 %v5089, 104
        %v5107 = vpop.permute.xlu0 %5106
        %5108 = vrot.lane.b32.xlu0 %v5092, 104
        %v5109 = vpop.permute.xlu0 %5108
        %5110 = vrot.lane.b32.xlu0 %v5095, 104
        %v5111 = vpop.permute.xlu0 %5110
        %5112 = vrot.lane.b32.xlu0 %v5097, 104
        %v5113 = vpop.permute.xlu0 %5112
        %5114 = vrot.lane.b32.xlu0 %v5099, 104
        %v5115 = vpop.permute.xlu0 %5114
        %5116 = vrot.lane.b32.xlu0 %v5101, 104
        %v5117 = vpop.permute.xlu0 %5116
        %5118 = vrot.lane.b32.xlu0 %v5103, 104
        %v5119 = vpop.permute.xlu0 %5118
        %v5120 = vsel %vm1028, %v5105, %v5107
        %v5121 = vsel %vm1028, %v5107, %v5109
        %v5122 = vsel %vm1028, %v5109, %v5111
        %v5123 = vsel %vm1028, %v5113, %v5115
        %v5124 = vsel %vm1028, %v5115, %v5117
        %v5125 = vsel %vm1028, %v5117, %v5119
        %v5132 = vadd.f32 %v5025, %v5120
        %v5133 = vadd.f32 %v5026, %v5121
        %v5134 = vadd.f32 %v5027, %v5122
        %v5135 = vadd.f32 %v5028, %v5123
        %v5136 = vadd.f32 %v5029, %v5124
        %v5137 = vadd.f32 %v5030, %v5125
        %s5138 = scalar_lea.vmem %s3, 124
        %v5139 = vld [vmem:[%s5138] ss:$8 sm:$0x7]
        %v5141 = vlaneseq
        %v5142 = vshrl.u32 %v5141, 7
        %v5143 = vsub.s32 0, %v5142
        %v5144 = vrot.slane %v5139, %v5143
        %v5145 = vlaneseq
        %v5146 = vshrl.u32 %v5145, 7
        %v5147 = vsub.s32 1, %v5146
        %v5148 = vrot.slane %v5139, %v5147
        %v5149 = vlaneseq
        %v5150 = vshrl.u32 %v5149, 7
        %v5151 = vsub.s32 2, %v5150
        %v5152 = vrot.slane %v5139, %v5151
        %5153 = vrot.lane.b32.xlu0 %v5144, 48
        %v5154 = vpop.permute.xlu0 %5153
        %5155 = vrot.lane.b32.xlu0 %v5148, 48
        %v5156 = vpop.permute.xlu0 %5155
        %5157 = vrot.lane.b32.xlu0 %v5152, 48
        %v5158 = vpop.permute.xlu0 %5157
        %v5159 = vsel %vm1068, %v5154, %v5156
        %v5160 = vsel %vm1068, %v5156, %v5158
        %v5165 = vmul.f32 %v4961, %v5154
        %v5166 = vmul.f32 %v4962, %v5159
        %v5167 = vmul.f32 %v4963, %v5160
        %v5168 = vmul.f32 %v5031, %v5158
        %v5169 = vmul.f32 %v940, %v5154
        %v5170 = vmul.f32 %v941, %v5159
        %v5171 = vmul.f32 %v942, %v5160
        %v5172 = vmul.f32 %v967, %v5158
        %v5173 = vmul.f32 %v4964, %v5154
        %v5174 = vmul.f32 %v4965, %v5159
        %v5175 = vmul.f32 %v4966, %v5160
        %v5176 = vmul.f32 %v5032, %v5158
        %v5189 = vrot.slane %v5165, 6
        %v5190 = vrot.slane %v5169, 6
        %v5191 = vsel %vm5003, %v5189, %v5190
        %v5192 = vrot.slane %v5166, 6
        %v5193 = vrot.slane %v5170, 6
        %v5194 = vsel %vm5003, %v5192, %v5193
        %v5195 = vrot.slane %v5167, 6
        %v5196 = vrot.slane %v5171, 6
        %v5197 = vsel %vm5003, %v5195, %v5196
        %v5198 = vrot.slane %v5168, 6
        %v5199 = vrot.slane %v5172, 6
        %v5200 = vsel %vm5003, %v5198, %v5199
        %v5201 = vrot.slane %v5173, 6
        %v5202 = vsel %vm5003, %v5190, %v5201
        %v5203 = vrot.slane %v5174, 6
        %v5204 = vsel %vm5003, %v5193, %v5203
        %v5205 = vrot.slane %v5175, 6
        %v5206 = vsel %vm5003, %v5196, %v5205
        %v5207 = vrot.slane %v5176, 6
        %v5208 = vsel %vm5003, %v5199, %v5207
        %5209 = vrot.lane.b32.xlu0 %v5191, 80
        %v5210 = vpop.permute.xlu0 %5209
        %5211 = vrot.lane.b32.xlu0 %v5194, 80
        %v5212 = vpop.permute.xlu0 %5211
        %5213 = vrot.lane.b32.xlu0 %v5197, 80
        %v5214 = vpop.permute.xlu0 %5213
        %5215 = vrot.lane.b32.xlu0 %v5200, 80
        %v5216 = vpop.permute.xlu0 %5215
        %5217 = vrot.lane.b32.xlu0 %v5202, 80
        %v5218 = vpop.permute.xlu0 %5217
        %5219 = vrot.lane.b32.xlu0 %v5204, 80
        %v5220 = vpop.permute.xlu0 %5219
        %5221 = vrot.lane.b32.xlu0 %v5206, 80
        %v5222 = vpop.permute.xlu0 %5221
        %5223 = vrot.lane.b32.xlu0 %v5208, 80
        %v5224 = vpop.permute.xlu0 %5223
        %v5225 = vsel %vm1107, %v5210, %v5212
        %v5226 = vsel %vm1107, %v5212, %v5214
        %v5227 = vsel %vm1107, %v5214, %v5216
        %v5228 = vsel %vm1107, %v5218, %v5220
        %v5229 = vsel %vm1107, %v5220, %v5222
        %v5230 = vsel %vm1107, %v5222, %v5224
        %v5237 = vadd.f32 %v5132, %v5225
        %v5238 = vadd.f32 %v5133, %v5226
        %v5239 = vadd.f32 %v5134, %v5227
        %v5240 = vadd.f32 %v5135, %v5228
        %v5241 = vadd.f32 %v5136, %v5229
        %v5242 = vadd.f32 %v5137, %v5230
        %s5243 = scalar_lea.vmem %s3, 125
        %v5244 = vld [vmem:[%s5243] ss:$8 sm:$0x7]
        %v5246 = vlaneseq
        %v5247 = vshrl.u32 %v5246, 7
        %v5248 = vsub.s32 0, %v5247
        %v5249 = vrot.slane %v5244, %v5248
        %v5250 = vlaneseq
        %v5251 = vshrl.u32 %v5250, 7
        %v5252 = vsub.s32 1, %v5251
        %v5253 = vrot.slane %v5244, %v5252
        %v5254 = vlaneseq
        %v5255 = vshrl.u32 %v5254, 7
        %v5256 = vsub.s32 2, %v5255
        %v5257 = vrot.slane %v5244, %v5256
        %5258 = vrot.lane.b32.xlu0 %v5249, 72
        %v5259 = vpop.permute.xlu0 %5258
        %5260 = vrot.lane.b32.xlu0 %v5253, 72
        %v5261 = vpop.permute.xlu0 %5260
        %5262 = vrot.lane.b32.xlu0 %v5257, 72
        %v5263 = vpop.permute.xlu0 %5262
        %v5264 = vsel %vm858, %v5259, %v5261
        %v5265 = vsel %vm858, %v5261, %v5263
        %v5270 = vmul.f32 %v4961, %v5259
        %v5271 = vmul.f32 %v4962, %v5264
        %v5272 = vmul.f32 %v4963, %v5265
        %v5273 = vmul.f32 %v5031, %v5263
        %v5274 = vmul.f32 %v940, %v5259
        %v5275 = vmul.f32 %v941, %v5264
        %v5276 = vmul.f32 %v942, %v5265
        %v5277 = vmul.f32 %v967, %v5263
        %v5278 = vmul.f32 %v4964, %v5259
        %v5279 = vmul.f32 %v4965, %v5264
        %v5280 = vmul.f32 %v4966, %v5265
        %v5281 = vmul.f32 %v5032, %v5263
        %v5294 = vrot.slane %v5270, 6
        %v5295 = vrot.slane %v5274, 6
        %v5296 = vsel %vm5003, %v5294, %v5295
        %v5297 = vrot.slane %v5271, 6
        %v5298 = vrot.slane %v5275, 6
        %v5299 = vsel %vm5003, %v5297, %v5298
        %v5300 = vrot.slane %v5272, 6
        %v5301 = vrot.slane %v5276, 6
        %v5302 = vsel %vm5003, %v5300, %v5301
        %v5303 = vrot.slane %v5273, 6
        %v5304 = vrot.slane %v5277, 6
        %v5305 = vsel %vm5003, %v5303, %v5304
        %v5306 = vrot.slane %v5278, 6
        %v5307 = vsel %vm5003, %v5295, %v5306
        %v5308 = vrot.slane %v5279, 6
        %v5309 = vsel %vm5003, %v5298, %v5308
        %v5310 = vrot.slane %v5280, 6
        %v5311 = vsel %vm5003, %v5301, %v5310
        %v5312 = vrot.slane %v5281, 6
        %v5313 = vsel %vm5003, %v5304, %v5312
        %5314 = vrot.lane.b32.xlu0 %v5296, 56
        %v5315 = vpop.permute.xlu0 %5314
        %5316 = vrot.lane.b32.xlu0 %v5299, 56
        %v5317 = vpop.permute.xlu0 %5316
        %5318 = vrot.lane.b32.xlu0 %v5302, 56
        %v5319 = vpop.permute.xlu0 %5318
        %5320 = vrot.lane.b32.xlu0 %v5305, 56
        %v5321 = vpop.permute.xlu0 %5320
        %5322 = vrot.lane.b32.xlu0 %v5307, 56
        %v5323 = vpop.permute.xlu0 %5322
        %5324 = vrot.lane.b32.xlu0 %v5309, 56
        %v5325 = vpop.permute.xlu0 %5324
        %5326 = vrot.lane.b32.xlu0 %v5311, 56
        %v5327 = vpop.permute.xlu0 %5326
        %5328 = vrot.lane.b32.xlu0 %v5313, 56
        %v5329 = vpop.permute.xlu0 %5328
        %v5330 = vsel %vm1185, %v5315, %v5317
        %v5331 = vsel %vm1185, %v5317, %v5319
        %v5332 = vsel %vm1185, %v5319, %v5321
        %v5333 = vsel %vm1185, %v5323, %v5325
        %v5334 = vsel %vm1185, %v5325, %v5327
        %v5335 = vsel %vm1185, %v5327, %v5329
        %v5342 = vadd.f32 %v5237, %v5330
        %v5343 = vadd.f32 %v5238, %v5331
        %v5344 = vadd.f32 %v5239, %v5332
        %v5345 = vadd.f32 %v5240, %v5333
        %v5346 = vadd.f32 %v5241, %v5334
        %v5347 = vadd.f32 %v5242, %v5335
        %s5348 = scalar_lea.vmem %s3, 126
        %v5349 = vld [vmem:[%s5348] ss:$8 sm:$0x7]
        %v5351 = vlaneseq
        %v5352 = vshrl.u32 %v5351, 7
        %v5353 = vsub.s32 0, %v5352
        %v5354 = vrot.slane %v5349, %v5353
        %v5355 = vlaneseq
        %v5356 = vshrl.u32 %v5355, 7
        %v5357 = vsub.s32 1, %v5356
        %v5358 = vrot.slane %v5349, %v5357
        %v5359 = vlaneseq
        %v5360 = vshrl.u32 %v5359, 7
        %v5361 = vsub.s32 2, %v5360
        %v5362 = vrot.slane %v5349, %v5361
        %5363 = vrot.lane.b32.xlu0 %v5354, 96
        %v5364 = vpop.permute.xlu0 %5363
        %5365 = vrot.lane.b32.xlu0 %v5358, 96
        %v5366 = vpop.permute.xlu0 %5365
        %5367 = vrot.lane.b32.xlu0 %v5362, 96
        %v5368 = vpop.permute.xlu0 %5367
        %v5369 = vsel %vm1225, %v5364, %v5366
        %v5370 = vsel %vm1225, %v5366, %v5368
        %v5375 = vmul.f32 %v4961, %v5364
        %v5376 = vmul.f32 %v4962, %v5369
        %v5377 = vmul.f32 %v4963, %v5370
        %v5378 = vmul.f32 %v5031, %v5368
        %v5379 = vmul.f32 %v940, %v5364
        %v5380 = vmul.f32 %v941, %v5369
        %v5381 = vmul.f32 %v942, %v5370
        %v5382 = vmul.f32 %v967, %v5368
        %v5383 = vmul.f32 %v4964, %v5364
        %v5384 = vmul.f32 %v4965, %v5369
        %v5385 = vmul.f32 %v4966, %v5370
        %v5386 = vmul.f32 %v5032, %v5368
        %v5399 = vrot.slane %v5375, 6
        %v5400 = vrot.slane %v5379, 6
        %v5401 = vsel %vm5003, %v5399, %v5400
        %v5402 = vrot.slane %v5376, 6
        %v5403 = vrot.slane %v5380, 6
        %v5404 = vsel %vm5003, %v5402, %v5403
        %v5405 = vrot.slane %v5377, 6
        %v5406 = vrot.slane %v5381, 6
        %v5407 = vsel %vm5003, %v5405, %v5406
        %v5408 = vrot.slane %v5378, 6
        %v5409 = vrot.slane %v5382, 6
        %v5410 = vsel %vm5003, %v5408, %v5409
        %v5411 = vrot.slane %v5383, 6
        %v5412 = vsel %vm5003, %v5400, %v5411
        %v5413 = vrot.slane %v5384, 6
        %v5414 = vsel %vm5003, %v5403, %v5413
        %v5415 = vrot.slane %v5385, 6
        %v5416 = vsel %vm5003, %v5406, %v5415
        %v5417 = vrot.slane %v5386, 6
        %v5418 = vsel %vm5003, %v5409, %v5417
        %5419 = vrot.lane.b32.xlu0 %v5401, 32
        %v5420 = vpop.permute.xlu0 %5419
        %5421 = vrot.lane.b32.xlu0 %v5404, 32
        %v5422 = vpop.permute.xlu0 %5421
        %5423 = vrot.lane.b32.xlu0 %v5407, 32
        %v5424 = vpop.permute.xlu0 %5423
        %5425 = vrot.lane.b32.xlu0 %v5410, 32
        %v5426 = vpop.permute.xlu0 %5425
        %5427 = vrot.lane.b32.xlu0 %v5412, 32
        %v5428 = vpop.permute.xlu0 %5427
        %5429 = vrot.lane.b32.xlu0 %v5414, 32
        %v5430 = vpop.permute.xlu0 %5429
        %5431 = vrot.lane.b32.xlu0 %v5416, 32
        %v5432 = vpop.permute.xlu0 %5431
        %5433 = vrot.lane.b32.xlu0 %v5418, 32
        %v5434 = vpop.permute.xlu0 %5433
        %v5435 = vsel %vm1264, %v5420, %v5422
        %v5436 = vsel %vm1264, %v5422, %v5424
        %v5437 = vsel %vm1264, %v5424, %v5426
        %v5438 = vsel %vm1264, %v5428, %v5430
        %v5439 = vsel %vm1264, %v5430, %v5432
        %v5440 = vsel %vm1264, %v5432, %v5434
        %v5447 = vadd.f32 %v5342, %v5435
        %v5448 = vadd.f32 %v5343, %v5436
        %v5449 = vadd.f32 %v5344, %v5437
        %v5450 = vadd.f32 %v5345, %v5438
        %v5451 = vadd.f32 %v5346, %v5439
        %v5452 = vadd.f32 %v5347, %v5440
        %s5453 = scalar_lea.vmem %s3, 127
        %v5454 = vld [vmem:[%s5453] ss:$8 sm:$0x7]
        %v5456 = vlaneseq
        %v5457 = vshrl.u32 %v5456, 7
        %v5458 = vsub.s32 0, %v5457
        %v5459 = vrot.slane %v5454, %v5458
        %v5460 = vlaneseq
        %v5461 = vshrl.u32 %v5460, 7
        %v5462 = vsub.s32 1, %v5461
        %v5463 = vrot.slane %v5454, %v5462
        %v5464 = vlaneseq
        %v5465 = vshrl.u32 %v5464, 7
        %v5466 = vsub.s32 2, %v5465
        %v5467 = vrot.slane %v5454, %v5466
        %5468 = vrot.lane.b32.xlu0 %v5459, 120
        %v5469 = vpop.permute.xlu0 %5468
        %5470 = vrot.lane.b32.xlu0 %v5463, 120
        %v5471 = vpop.permute.xlu0 %5470
        %5472 = vrot.lane.b32.xlu0 %v5467, 120
        %v5473 = vpop.permute.xlu0 %5472
        %v5474 = vsel %vm1304, %v5469, %v5471
        %v5475 = vsel %vm1304, %v5471, %v5473
        %v5480 = vmul.f32 %v4961, %v5469
        %v5481 = vmul.f32 %v4962, %v5474
        %v5482 = vmul.f32 %v4963, %v5475
        %v5483 = vmul.f32 %v5031, %v5473
        %v5484 = vmul.f32 %v940, %v5469
        %v5485 = vmul.f32 %v941, %v5474
        %v5486 = vmul.f32 %v942, %v5475
        %v5487 = vmul.f32 %v967, %v5473
        %v5488 = vmul.f32 %v4964, %v5469
        %v5489 = vmul.f32 %v4965, %v5474
        %v5490 = vmul.f32 %v4966, %v5475
        %v5491 = vmul.f32 %v5032, %v5473
        %v5504 = vrot.slane %v5480, 6
        %v5505 = vrot.slane %v5484, 6
        %v5506 = vsel %vm5003, %v5504, %v5505
        %v5507 = vrot.slane %v5481, 6
        %v5508 = vrot.slane %v5485, 6
        %v5509 = vsel %vm5003, %v5507, %v5508
        %v5510 = vrot.slane %v5482, 6
        %v5511 = vrot.slane %v5486, 6
        %v5512 = vsel %vm5003, %v5510, %v5511
        %v5513 = vrot.slane %v5483, 6
        %v5514 = vrot.slane %v5487, 6
        %v5515 = vsel %vm5003, %v5513, %v5514
        %v5516 = vrot.slane %v5488, 6
        %v5517 = vsel %vm5003, %v5505, %v5516
        %v5518 = vrot.slane %v5489, 6
        %v5519 = vsel %vm5003, %v5508, %v5518
        %v5520 = vrot.slane %v5490, 6
        %v5521 = vsel %vm5003, %v5511, %v5520
        %v5522 = vrot.slane %v5491, 6
        %v5523 = vsel %vm5003, %v5514, %v5522
        %5524 = vrot.lane.b32.xlu0 %v5506, 8
        %v5525 = vpop.permute.xlu0 %5524
        %5526 = vrot.lane.b32.xlu0 %v5509, 8
        %v5527 = vpop.permute.xlu0 %5526
        %5528 = vrot.lane.b32.xlu0 %v5512, 8
        %v5529 = vpop.permute.xlu0 %5528
        %5530 = vrot.lane.b32.xlu0 %v5515, 8
        %v5531 = vpop.permute.xlu0 %5530
        %5532 = vrot.lane.b32.xlu0 %v5517, 8
        %v5533 = vpop.permute.xlu0 %5532
        %5534 = vrot.lane.b32.xlu0 %v5519, 8
        %v5535 = vpop.permute.xlu0 %5534
        %5536 = vrot.lane.b32.xlu0 %v5521, 8
        %v5537 = vpop.permute.xlu0 %5536
        %5538 = vrot.lane.b32.xlu0 %v5523, 8
        %v5539 = vpop.permute.xlu0 %5538
        %v5540 = vsel %vm1343, %v5525, %v5527
        %v5541 = vsel %vm1343, %v5527, %v5529
        %v5542 = vsel %vm1343, %v5529, %v5531
        %v5543 = vsel %vm1343, %v5533, %v5535
        %v5544 = vsel %vm1343, %v5535, %v5537
        %v5545 = vsel %vm1343, %v5537, %v5539
        %v5552 = vadd.f32 %v5447, %v5540
        %v5553 = vadd.f32 %v5448, %v5541
        %v5554 = vadd.f32 %v5449, %v5542
        %v5555 = vadd.f32 %v5450, %v5543
        %v5556 = vadd.f32 %v5451, %v5544
        %v5557 = vadd.f32 %v5452, %v5545
        %v5558 = vld [vmem:[#allocation2 + $0x20] sm:$0xc0]
        %v5559 = vld [vmem:[#allocation2 + $0x70] sm:$0x3f]
        %s5560 = scalar_lea.vmem %s3, 144
        %v5561 = vld [vmem:[%s5560] ss:$8 sm:$0x7]
        %v5563 = vlaneseq
        %v5564 = vshrl.u32 %v5563, 7
        %v5565 = vsub.s32 0, %v5564
        %v5566 = vrot.slane %v5561, %v5565
        %v5567 = vlaneseq
        %v5568 = vshrl.u32 %v5567, 7
        %v5569 = vsub.s32 1, %v5568
        %v5570 = vrot.slane %v5561, %v5569
        %v5571 = vlaneseq
        %v5572 = vshrl.u32 %v5571, 7
        %v5573 = vsub.s32 2, %v5572
        %v5574 = vrot.slane %v5561, %v5573
        %5575 = vrot.lane.b32.xlu0 %v5566, 16
        %v5576 = vpop.permute.xlu0 %5575
        %5577 = vrot.lane.b32.xlu0 %v5570, 16
        %v5578 = vpop.permute.xlu0 %5577
        %5579 = vrot.lane.b32.xlu0 %v5574, 16
        %v5580 = vpop.permute.xlu0 %5579
        %v5581 = vsel %vm868, %v5576, %v5578
        %v5582 = vsel %vm868, %v5578, %v5580
        %v5587 = vmul.f32 %v4962, %v5576
        %v5588 = vmul.f32 %v4963, %v5581
        %v5589 = vmul.f32 %v5031, %v5582
        %v5590 = vmul.f32 %v5558, %v5580
        %v5591 = vmul.f32 %v941, %v5576
        %v5592 = vmul.f32 %v942, %v5581
        %v5593 = vmul.f32 %v967, %v5582
        %v5594 = vmul.f32 %v1363, %v5580
        %v5595 = vmul.f32 %v4965, %v5576
        %v5596 = vmul.f32 %v4966, %v5581
        %v5597 = vmul.f32 %v5032, %v5582
        %v5598 = vmul.f32 %v5559, %v5580
        %v5611 = vrot.slane %v5587, 6
        %v5612 = vrot.slane %v5591, 6
        %v5613 = vsel %vm5003, %v5611, %v5612
        %v5614 = vrot.slane %v5588, 6
        %v5615 = vrot.slane %v5592, 6
        %v5616 = vsel %vm5003, %v5614, %v5615
        %v5617 = vrot.slane %v5589, 6
        %v5618 = vrot.slane %v5593, 6
        %v5619 = vsel %vm5003, %v5617, %v5618
        %v5620 = vrot.slane %v5590, 6
        %v5621 = vrot.slane %v5594, 6
        %v5622 = vsel %vm5003, %v5620, %v5621
        %v5623 = vrot.slane %v5595, 6
        %v5624 = vsel %vm5003, %v5612, %v5623
        %v5625 = vrot.slane %v5596, 6
        %v5626 = vsel %vm5003, %v5615, %v5625
        %v5627 = vrot.slane %v5597, 6
        %v5628 = vsel %vm5003, %v5618, %v5627
        %v5629 = vrot.slane %v5598, 6
        %v5630 = vsel %vm5003, %v5621, %v5629
        %5631 = vrot.lane.b32.xlu0 %v5613, 112
        %v5632 = vpop.permute.xlu0 %5631
        %5633 = vrot.lane.b32.xlu0 %v5616, 112
        %v5634 = vpop.permute.xlu0 %5633
        %5635 = vrot.lane.b32.xlu0 %v5619, 112
        %v5636 = vpop.permute.xlu0 %5635
        %5637 = vrot.lane.b32.xlu0 %v5622, 112
        %v5638 = vpop.permute.xlu0 %5637
        %5639 = vrot.lane.b32.xlu0 %v5624, 112
        %v5640 = vpop.permute.xlu0 %5639
        %5641 = vrot.lane.b32.xlu0 %v5626, 112
        %v5642 = vpop.permute.xlu0 %5641
        %5643 = vrot.lane.b32.xlu0 %v5628, 112
        %v5644 = vpop.permute.xlu0 %5643
        %5645 = vrot.lane.b32.xlu0 %v5630, 112
        %v5646 = vpop.permute.xlu0 %5645
        %v5647 = vsel %vm1423, %v5632, %v5634
        %v5648 = vsel %vm1423, %v5634, %v5636
        %v5649 = vsel %vm1423, %v5636, %v5638
        %v5650 = vsel %vm1423, %v5640, %v5642
        %v5651 = vsel %vm1423, %v5642, %v5644
        %v5652 = vsel %vm1423, %v5644, %v5646
        %v5659 = vadd.f32 %v5552, %v5647
        %v5660 = vadd.f32 %v5553, %v5648
        %v5661 = vadd.f32 %v5554, %v5649
        %v5662 = vadd.f32 %v5555, %v5650
        %v5663 = vadd.f32 %v5556, %v5651
        %v5664 = vadd.f32 %v5557, %v5652
        %v5665 = vld [vmem:[#allocation5] sm:$0xff]
        %v5666 = vld [vmem:[#allocation5 + $0x8] sm:$0xff]
        %v5667 = vld [vmem:[#allocation5 + $0x10] sm:$0xff]
        %v5668 = vld [vmem:[#allocation5 + $0x18] sm:$0xff]
        %v5669 = vld [vmem:[#allocation5 + $0x20] sm:$0xff]
        %v5670 = vld [vmem:[#allocation5 + $0x28] sm:$0xff]
        %v5671 = vld [vmem:[#allocation5 + $0x30] sm:$0xff]
        %v5672 = vld [vmem:[#allocation5 + $0x38] sm:$0xff]
        %v5673 = vld [vmem:[#allocation5 + $0x40] sm:$0xff]
        %v5674 = vld [vmem:[#allocation5 + $0x48] sm:$0xff]
        %v5675 = vld [vmem:[#allocation5 + $0x50] sm:$0xff]
        %v5676 = vld [vmem:[#allocation5 + $0x58] sm:$0xff]
        %v5677 = vld [vmem:[#allocation5 + $0x60] sm:$0xff]
        %v5678 = vld [vmem:[#allocation5 + $0x68] sm:$0xff]
        %v5679 = vld [vmem:[#allocation5 + $0x70] sm:$0xff]
        %v5680 = vld [vmem:[#allocation5 + $0x78] sm:$0xff]
        %v5681 = vld [vmem:[#allocation5 + $0x80] sm:$0xff]
        %v5682 = vld [vmem:[#allocation5 + $0x88] sm:$0xff]
        %v5683 = vld [vmem:[#allocation5 + $0x90] sm:$0xff]
        %v5684 = vld [vmem:[#allocation5 + $0x98] sm:$0xff]
        %v5685 = vld [vmem:[#allocation5 + $0xa0] sm:$0xff]
        %v5686 = vld [vmem:[#allocation5 + $0xa8] sm:$0xff]
        %v5687 = vld [vmem:[#allocation5 + $0xb0] sm:$0xff]
        %v5688 = vld [vmem:[#allocation5 + $0xb8] sm:$0xff]
        %v5689 = vld [vmem:[#allocation5 + $0xc0] sm:$0xff]
        %v5690 = vld [vmem:[#allocation5 + $0xc8] sm:$0xff]
        %v5691 = vld [vmem:[#allocation5 + $0xd0] sm:$0xff]
        %v5692 = vld [vmem:[#allocation5 + $0xd8] sm:$0xff]
        %v5693 = vld [vmem:[#allocation5 + $0xe0] sm:$0xff]
        %v5694 = vld [vmem:[#allocation5 + $0xe8] sm:$0xff]
        %v5695 = vld [vmem:[#allocation5 + $0xf0] sm:$0xff]
        %v5696 = vld [vmem:[#allocation5 + $0xf8] sm:$0xff]
        %v5697 = vld [vmem:[#allocation5 + $0x100] sm:$0xff]
        %v5698 = vld [vmem:[#allocation5 + $0x108] sm:$0xff]
        %v5699 = vld [vmem:[#allocation5 + $0x110] sm:$0xff]
        %v5700 = vld [vmem:[#allocation5 + $0x118] sm:$0xff]
        %v5701 = vld [vmem:[#allocation5 + $0x120] sm:$0xff]
        %v5702 = vld [vmem:[#allocation5 + $0x128] sm:$0xff]
        %v5703 = vld [vmem:[#allocation5 + $0x130] sm:$0xff]
        %v5704 = vld [vmem:[#allocation5 + $0x138] sm:$0xff]
        %v5705 = vld [vmem:[#allocation5 + $0x140] sm:$0xff]
        %v5706 = vld [vmem:[#allocation5 + $0x148] sm:$0xff]
        %v5707 = vld [vmem:[#allocation5 + $0x150] sm:$0xff]
        %v5708 = vld [vmem:[#allocation5 + $0x158] sm:$0xff]
        %v5709 = vld [vmem:[#allocation5 + $0x160] sm:$0xff]
        %v5710 = vld [vmem:[#allocation5 + $0x168] sm:$0xff]
        %v5711 = vld [vmem:[#allocation5 + $0x170] sm:$0xff]
        %v5712 = vld [vmem:[#allocation5 + $0x178] sm:$0xff]
        %v5713 = vld [vmem:[#allocation5 + $0x180] sm:$0xff]
        %v5714 = vld [vmem:[#allocation5 + $0x188] sm:$0xff]
        %v5715 = vld [vmem:[#allocation5 + $0x190] sm:$0xff]
        %v5716 = vld [vmem:[#allocation5 + $0x198] sm:$0xff]
        %v5717 = vld [vmem:[#allocation5 + $0x1a0] sm:$0xff]
        %v5718 = vld [vmem:[#allocation5 + $0x1a8] sm:$0xff]
        %v5719 = vld [vmem:[#allocation5 + $0x1b0] sm:$0xff]
        %v5720 = vld [vmem:[#allocation5 + $0x1b8] sm:$0xff]
        %v5721 = vld [vmem:[#allocation5 + $0x1c0] sm:$0xff]
        %v5722 = vld [vmem:[#allocation5 + $0x1c8] sm:$0xff]
        %v5723 = vld [vmem:[#allocation5 + $0x1d0] sm:$0xff]
        %v5724 = vld [vmem:[#allocation5 + $0x1d8] sm:$0xff]
        %v5725 = vld [vmem:[#allocation5 + $0x1e0] sm:$0xff]
        %v5726 = vld [vmem:[#allocation5 + $0x1e8] sm:$0xff]
        %v5727 = vld [vmem:[#allocation5 + $0x1f0] sm:$0xff]
        %v5728 = vld [vmem:[#allocation5 + $0x1f8] sm:$0xff]
        %v5729 = vld [vmem:[#allocation5 + $0x200] sm:$0xff]
        %v5730 = vld [vmem:[#allocation5 + $0x208] sm:$0xff]
        %v5731 = vld [vmem:[#allocation5 + $0x210] sm:$0xff]
        %v5732 = vld [vmem:[#allocation5 + $0x218] sm:$0xff]
        %v5733 = vld [vmem:[#allocation5 + $0x220] sm:$0xff]
        %v5734 = vld [vmem:[#allocation5 + $0x228] sm:$0xff]
        %v5735 = vld [vmem:[#allocation5 + $0x230] sm:$0xff]
        %v5736 = vld [vmem:[#allocation5 + $0x238] sm:$0xff]
        %v5737 = vld [vmem:[#allocation5 + $0x240] sm:$0xff]
        %v5738 = vld [vmem:[#allocation5 + $0x248] sm:$0xff]
        %v5739 = vld [vmem:[#allocation5 + $0x250] sm:$0xff]
        %v5740 = vld [vmem:[#allocation5 + $0x258] sm:$0xff]
        %v5741 = vld [vmem:[#allocation5 + $0x260] sm:$0xff]
        %v5742 = vld [vmem:[#allocation5 + $0x268] sm:$0xff]
        %v5743 = vld [vmem:[#allocation5 + $0x270] sm:$0xff]
        %v5744 = vld [vmem:[#allocation5 + $0x278] sm:$0xff]
        %v5745 = vld [vmem:[#allocation5 + $0x280] sm:$0xff]
        %v5746 = vld [vmem:[#allocation5 + $0x288] sm:$0xff]
        %v5747 = vld [vmem:[#allocation5 + $0x290] sm:$0xff]
        %v5748 = vld [vmem:[#allocation5 + $0x298] sm:$0xff]
        %v5749 = vld [vmem:[#allocation5 + $0x2a0] sm:$0xff]
        %v5750 = vld [vmem:[#allocation5 + $0x2a8] sm:$0xff]
        %v5751 = vld [vmem:[#allocation5 + $0x2b0] sm:$0xff]
        %v5752 = vld [vmem:[#allocation5 + $0x2b8] sm:$0xff]
        %v5753 = vld [vmem:[#allocation5 + $0x2c0] sm:$0xff]
        %v5754 = vld [vmem:[#allocation5 + $0x2c8] sm:$0xff]
        %v5755 = vld [vmem:[#allocation5 + $0x2d0] sm:$0xff]
        %v5756 = vld [vmem:[#allocation5 + $0x2d8] sm:$0xff]
        %v5757 = vld [vmem:[#allocation5 + $0x2e0] sm:$0xff]
        %v5758 = vld [vmem:[#allocation5 + $0x2e8] sm:$0xff]
        %v5759 = vld [vmem:[#allocation5 + $0x2f0] sm:$0xff]
        %v5760 = vld [vmem:[#allocation5 + $0x2f8] sm:$0xff]
        %v5761 = vld [vmem:[#allocation5 + $0x300] sm:$0xff]
        %v5762 = vld [vmem:[#allocation5 + $0x308] sm:$0xff]
        %v5763 = vld [vmem:[#allocation5 + $0x310] sm:$0xff]
        %v5764 = vld [vmem:[#allocation5 + $0x318] sm:$0xff]
        %v5765 = vld [vmem:[#allocation5 + $0x320] sm:$0xff]
        %v5766 = vld [vmem:[#allocation5 + $0x328] sm:$0xff]
        %v5767 = vld [vmem:[#allocation5 + $0x330] sm:$0xff]
        %v5768 = vld [vmem:[#allocation5 + $0x338] sm:$0xff]
        %v5769 = vld [vmem:[#allocation5 + $0x340] sm:$0xff]
        %v5770 = vld [vmem:[#allocation5 + $0x348] sm:$0xff]
        %v5771 = vld [vmem:[#allocation5 + $0x350] sm:$0xff]
        %v5772 = vld [vmem:[#allocation5 + $0x358] sm:$0xff]
        %v5773 = vld [vmem:[#allocation5 + $0x360] sm:$0xff]
        %v5774 = vld [vmem:[#allocation5 + $0x368] sm:$0xff]
        %v5775 = vld [vmem:[#allocation5 + $0x370] sm:$0xff]
        %v5776 = vld [vmem:[#allocation5 + $0x378] sm:$0xff]
        %v5777 = vld [vmem:[#allocation5 + $0x380] sm:$0xff]
        %v5778 = vld [vmem:[#allocation5 + $0x388] sm:$0xff]
        %v5779 = vld [vmem:[#allocation5 + $0x390] sm:$0xff]
        %v5780 = vld [vmem:[#allocation5 + $0x398] sm:$0xff]
        %v5781 = vld [vmem:[#allocation5 + $0x3a0] sm:$0xff]
        %v5782 = vld [vmem:[#allocation5 + $0x3a8] sm:$0xff]
        %v5783 = vld [vmem:[#allocation5 + $0x3b0] sm:$0xff]
        %v5784 = vld [vmem:[#allocation5 + $0x3b8] sm:$0xff]
        %v5785 = vld [vmem:[#allocation5 + $0x3c0] sm:$0xff]
        %v5786 = vld [vmem:[#allocation5 + $0x3c8] sm:$0xff]
        %v5787 = vld [vmem:[#allocation5 + $0x3d0] sm:$0xff]
        %v5788 = vld [vmem:[#allocation5 + $0x3d8] sm:$0xff]
        %v5789 = vld [vmem:[#allocation5 + $0x3e0] sm:$0xff]
        %v5790 = vld [vmem:[#allocation5 + $0x3e8] sm:$0xff]
        %v5791 = vld [vmem:[#allocation5 + $0x3f0] sm:$0xff]
        %v5792 = vld [vmem:[#allocation5 + $0x3f8] sm:$0xff]
        %v5793 = vld [vmem:[#allocation5 + $0x400] sm:$0xff]
        %v5794 = vld [vmem:[#allocation5 + $0x408] sm:$0xff]
        %v5795 = vld [vmem:[#allocation5 + $0x410] sm:$0xff]
        %v5796 = vld [vmem:[#allocation5 + $0x418] sm:$0xff]
        %v5797 = vld [vmem:[#allocation5 + $0x420] sm:$0xff]
        %v5798 = vld [vmem:[#allocation5 + $0x428] sm:$0xff]
        %v5799 = vld [vmem:[#allocation5 + $0x430] sm:$0xff]
        %v5800 = vld [vmem:[#allocation5 + $0x438] sm:$0xff]
        %v5801 = vld [vmem:[#allocation5 + $0x440] sm:$0xff]
        %v5802 = vld [vmem:[#allocation5 + $0x448] sm:$0xff]
        %v5803 = vld [vmem:[#allocation5 + $0x450] sm:$0xff]
        %v5804 = vld [vmem:[#allocation5 + $0x458] sm:$0xff]
        %v5805 = vld [vmem:[#allocation5 + $0x460] sm:$0xff]
        %v5806 = vld [vmem:[#allocation5 + $0x468] sm:$0xff]
        %v5807 = vld [vmem:[#allocation5 + $0x470] sm:$0xff]
        %v5808 = vld [vmem:[#allocation5 + $0x478] sm:$0xff]
        %v5809 = vld [vmem:[#allocation5 + $0x480] sm:$0xff]
        %v5810 = vld [vmem:[#allocation5 + $0x488] sm:$0xff]
        %v5811 = vld [vmem:[#allocation5 + $0x490] sm:$0xff]
        %v5812 = vld [vmem:[#allocation5 + $0x498] sm:$0xff]
        %v5813 = vld [vmem:[#allocation5 + $0x4a0] sm:$0xff]
        %v5814 = vld [vmem:[#allocation5 + $0x4a8] sm:$0xff]
        %v5815 = vld [vmem:[#allocation5 + $0x4b0] sm:$0xff]
        %v5816 = vld [vmem:[#allocation5 + $0x4b8] sm:$0xff]
        %v5817 = vld [vmem:[#allocation5 + $0x4c0] sm:$0xff]
        %v5818 = vld [vmem:[#allocation5 + $0x4c8] sm:$0xff]
        %v5819 = vld [vmem:[#allocation5 + $0x4d0] sm:$0xff]
        %v5820 = vld [vmem:[#allocation5 + $0x4d8] sm:$0xff]
        %v5821 = vld [vmem:[#allocation5 + $0x4e0] sm:$0xff]
        %v5822 = vld [vmem:[#allocation5 + $0x4e8] sm:$0xff]
        %v5823 = vld [vmem:[#allocation5 + $0x4f0] sm:$0xff]
        %v5824 = vld [vmem:[#allocation5 + $0x4f8] sm:$0xff]
        %v5825 = vld [vmem:[#allocation5 + $0x500] sm:$0xff]
        %v5826 = vld [vmem:[#allocation5 + $0x508] sm:$0xff]
        %v5827 = vld [vmem:[#allocation5 + $0x510] sm:$0xff]
        %v5828 = vld [vmem:[#allocation5 + $0x518] sm:$0xff]
        %v5829 = vld [vmem:[#allocation5 + $0x520] sm:$0xff]
        %v5830 = vld [vmem:[#allocation5 + $0x528] sm:$0xff]
        %v5831 = vld [vmem:[#allocation5 + $0x530] sm:$0xff]
        %v5832 = vld [vmem:[#allocation5 + $0x538] sm:$0xff]
        %v5833 = vld [vmem:[#allocation5 + $0x540] sm:$0xff]
        %v5834 = vld [vmem:[#allocation5 + $0x548] sm:$0xff]
        %v5835 = vld [vmem:[#allocation5 + $0x550] sm:$0xff]
        %v5836 = vld [vmem:[#allocation5 + $0x558] sm:$0xff]
        %v5837 = vld [vmem:[#allocation5 + $0x560] sm:$0xff]
        %v5838 = vld [vmem:[#allocation5 + $0x568] sm:$0xff]
        %v5839 = vld [vmem:[#allocation5 + $0x570] sm:$0xff]
        %v5840 = vld [vmem:[#allocation5 + $0x578] sm:$0xff]
        %v5841 = vld [vmem:[#allocation5 + $0x580] sm:$0xff]
        %v5842 = vld [vmem:[#allocation5 + $0x588] sm:$0xff]
        %v5843 = vld [vmem:[#allocation5 + $0x590] sm:$0xff]
        %v5844 = vld [vmem:[#allocation5 + $0x598] sm:$0xff]
        %v5845 = vld [vmem:[#allocation5 + $0x5a0] sm:$0xff]
        %v5846 = vld [vmem:[#allocation5 + $0x5a8] sm:$0xff]
        %v5847 = vld [vmem:[#allocation5 + $0x5b0] sm:$0xff]
        %v5848 = vld [vmem:[#allocation5 + $0x5b8] sm:$0xff]
        %v5849 = vld [vmem:[#allocation5 + $0x5c0] sm:$0xff]
        %v5850 = vld [vmem:[#allocation5 + $0x5c8] sm:$0xff]
        %v5851 = vld [vmem:[#allocation5 + $0x5d0] sm:$0xff]
        %v5852 = vld [vmem:[#allocation5 + $0x5d8] sm:$0xff]
        %v5853 = vld [vmem:[#allocation5 + $0x5e0] sm:$0xff]
        %v5854 = vld [vmem:[#allocation5 + $0x5e8] sm:$0xff]
        %v5855 = vld [vmem:[#allocation5 + $0x5f0] sm:$0xff]
        %v5856 = vld [vmem:[#allocation5 + $0x5f8] sm:$0xff]
        %v5857 = vld [vmem:[#allocation5 + $0x600] sm:$0xff]
        %v5858 = vld [vmem:[#allocation5 + $0x608] sm:$0xff]
        %v5859 = vld [vmem:[#allocation5 + $0x610] sm:$0xff]
        %v5860 = vld [vmem:[#allocation5 + $0x618] sm:$0xff]
        %v5861 = vld [vmem:[#allocation5 + $0x620] sm:$0xff]
        %v5862 = vld [vmem:[#allocation5 + $0x628] sm:$0xff]
        %v5863 = vld [vmem:[#allocation5 + $0x630] sm:$0xff]
        %v5864 = vld [vmem:[#allocation5 + $0x638] sm:$0xff]
        %v5865 = vld [vmem:[#allocation5 + $0x640] sm:$0xff]
        %v5866 = vld [vmem:[#allocation5 + $0x648] sm:$0xff]
        %v5867 = vld [vmem:[#allocation5 + $0x650] sm:$0xff]
        %v5868 = vld [vmem:[#allocation5 + $0x658] sm:$0xff]
        %v5869 = vld [vmem:[#allocation5 + $0x660] sm:$0xff]
        %v5870 = vld [vmem:[#allocation5 + $0x668] sm:$0xff]
        %v5871 = vld [vmem:[#allocation5 + $0x670] sm:$0xff]
        %v5872 = vld [vmem:[#allocation5 + $0x678] sm:$0xff]
        %v5873 = vld [vmem:[#allocation5 + $0x680] sm:$0xff]
        %v5874 = vld [vmem:[#allocation5 + $0x688] sm:$0xff]
        %v5875 = vld [vmem:[#allocation5 + $0x690] sm:$0xff]
        %v5876 = vld [vmem:[#allocation5 + $0x698] sm:$0xff]
        %v5877 = vld [vmem:[#allocation5 + $0x6a0] sm:$0xff]
        %v5878 = vld [vmem:[#allocation5 + $0x6a8] sm:$0xff]
        %v5879 = vld [vmem:[#allocation5 + $0x6b0] sm:$0xff]
        %v5880 = vld [vmem:[#allocation5 + $0x6b8] sm:$0xff]
        %v5881 = vld [vmem:[#allocation5 + $0x6c0] sm:$0xff]
        %v5882 = vld [vmem:[#allocation5 + $0x6c8] sm:$0xff]
        %v5883 = vld [vmem:[#allocation5 + $0x6d0] sm:$0xff]
        %v5884 = vld [vmem:[#allocation5 + $0x6d8] sm:$0xff]
        %v5885 = vld [vmem:[#allocation5 + $0x6e0] sm:$0xff]
        %v5886 = vld [vmem:[#allocation5 + $0x6e8] sm:$0xff]
        %v5887 = vld [vmem:[#allocation5 + $0x6f0] sm:$0xff]
        %v5888 = vld [vmem:[#allocation5 + $0x6f8] sm:$0xff]
        %v5889 = vld [vmem:[#allocation5 + $0x700] sm:$0xff]
        %v5890 = vld [vmem:[#allocation5 + $0x708] sm:$0xff]
        %v5891 = vld [vmem:[#allocation5 + $0x710] sm:$0xff]
        %v5892 = vld [vmem:[#allocation5 + $0x718] sm:$0xff]
        %v5893 = vld [vmem:[#allocation5 + $0x720] sm:$0xff]
        %v5894 = vld [vmem:[#allocation5 + $0x728] sm:$0xff]
        %v5895 = vld [vmem:[#allocation5 + $0x730] sm:$0xff]
        %v5896 = vld [vmem:[#allocation5 + $0x738] sm:$0xff]
        %v5897 = vld [vmem:[#allocation5 + $0x740] sm:$0xff]
        %v5898 = vld [vmem:[#allocation5 + $0x748] sm:$0xff]
        %v5899 = vld [vmem:[#allocation5 + $0x750] sm:$0xff]
        %v5900 = vld [vmem:[#allocation5 + $0x758] sm:$0xff]
        %v5901 = vld [vmem:[#allocation5 + $0x760] sm:$0xff]
        %v5902 = vld [vmem:[#allocation5 + $0x768] sm:$0xff]
        %v5903 = vld [vmem:[#allocation5 + $0x770] sm:$0xff]
        %v5904 = vld [vmem:[#allocation5 + $0x778] sm:$0xff]
        %v5905 = vld [vmem:[#allocation5 + $0x780] sm:$0xff]
        %v5906 = vld [vmem:[#allocation5 + $0x788] sm:$0xff]
        %v5907 = vld [vmem:[#allocation5 + $0x790] sm:$0xff]
        %v5908 = vld [vmem:[#allocation5 + $0x798] sm:$0xff]
        %v5909 = vld [vmem:[#allocation5 + $0x7a0] sm:$0xff]
        %v5910 = vld [vmem:[#allocation5 + $0x7a8] sm:$0xff]
        %v5911 = vld [vmem:[#allocation5 + $0x7b0] sm:$0xff]
        %v5912 = vld [vmem:[#allocation5 + $0x7b8] sm:$0xff]
        %v5913 = vld [vmem:[#allocation5 + $0x7c0] sm:$0xff]
        %v5914 = vld [vmem:[#allocation5 + $0x7c8] sm:$0xff]
        %v5915 = vld [vmem:[#allocation5 + $0x7d0] sm:$0xff]
        %v5916 = vld [vmem:[#allocation5 + $0x7d8] sm:$0xff]
        %v5917 = vld [vmem:[#allocation5 + $0x7e0] sm:$0xff]
        %v5918 = vld [vmem:[#allocation5 + $0x7e8] sm:$0xff]
        %v5919 = vld [vmem:[#allocation5 + $0x7f0] sm:$0xff]
        %v5920 = vld [vmem:[#allocation5 + $0x7f8] sm:$0xff]
        %v5921 = vld [vmem:[#allocation7] sm:$0xff]
        %v5922 = vld [vmem:[#allocation7 + $0x8] sm:$0xff]
        %v5923 = vld [vmem:[#allocation7 + $0x10] sm:$0xff]
        %v5924 = vld [vmem:[#allocation7 + $0x18] sm:$0xff]
        %v5925 = vld [vmem:[#allocation7 + $0x20] sm:$0xff]
        %v5926 = vld [vmem:[#allocation7 + $0x28] sm:$0xff]
        %v5927 = vld [vmem:[#allocation7 + $0x30] sm:$0xff]
        %v5928 = vld [vmem:[#allocation7 + $0x38] sm:$0xff]
        %v5929 = vld [vmem:[#allocation7 + $0x40] sm:$0xff]
        %v5930 = vld [vmem:[#allocation7 + $0x48] sm:$0xff]
        %v5931 = vld [vmem:[#allocation7 + $0x50] sm:$0xff]
        %v5932 = vld [vmem:[#allocation7 + $0x58] sm:$0xff]
        %v5933 = vld [vmem:[#allocation7 + $0x60] sm:$0xff]
        %v5934 = vld [vmem:[#allocation7 + $0x68] sm:$0xff]
        %v5935 = vld [vmem:[#allocation7 + $0x70] sm:$0xff]
        %v5936 = vld [vmem:[#allocation7 + $0x78] sm:$0xff]
        %v5937 = vld [vmem:[#allocation7 + $0x80] sm:$0xff]
        %v5938 = vld [vmem:[#allocation7 + $0x88] sm:$0xff]
        %v5939 = vld [vmem:[#allocation7 + $0x90] sm:$0xff]
        %v5940 = vld [vmem:[#allocation7 + $0x98] sm:$0xff]
        %v5941 = vld [vmem:[#allocation7 + $0xa0] sm:$0xff]
        %v5942 = vld [vmem:[#allocation7 + $0xa8] sm:$0xff]
        %v5943 = vld [vmem:[#allocation7 + $0xb0] sm:$0xff]
        %v5944 = vld [vmem:[#allocation7 + $0xb8] sm:$0xff]
        %v5945 = vld [vmem:[#allocation7 + $0xc0] sm:$0xff]
        %v5946 = vld [vmem:[#allocation7 + $0xc8] sm:$0xff]
        %v5947 = vld [vmem:[#allocation7 + $0xd0] sm:$0xff]
        %v5948 = vld [vmem:[#allocation7 + $0xd8] sm:$0xff]
        %v5949 = vld [vmem:[#allocation7 + $0xe0] sm:$0xff]
        %v5950 = vld [vmem:[#allocation7 + $0xe8] sm:$0xff]
        %v5951 = vld [vmem:[#allocation7 + $0xf0] sm:$0xff]
        %v5952 = vld [vmem:[#allocation7 + $0xf8] sm:$0xff]
        %v5953 = vld [vmem:[#allocation7 + $0x100] sm:$0xff]
        %v5954 = vld [vmem:[#allocation7 + $0x108] sm:$0xff]
        %v5955 = vld [vmem:[#allocation7 + $0x110] sm:$0xff]
        %v5956 = vld [vmem:[#allocation7 + $0x118] sm:$0xff]
        %v5957 = vld [vmem:[#allocation7 + $0x120] sm:$0xff]
        %v5958 = vld [vmem:[#allocation7 + $0x128] sm:$0xff]
        %v5959 = vld [vmem:[#allocation7 + $0x130] sm:$0xff]
        %v5960 = vld [vmem:[#allocation7 + $0x138] sm:$0xff]
        %v5961 = vld [vmem:[#allocation7 + $0x140] sm:$0xff]
        %v5962 = vld [vmem:[#allocation7 + $0x148] sm:$0xff]
        %v5963 = vld [vmem:[#allocation7 + $0x150] sm:$0xff]
        %v5964 = vld [vmem:[#allocation7 + $0x158] sm:$0xff]
        %v5965 = vld [vmem:[#allocation7 + $0x160] sm:$0xff]
        %v5966 = vld [vmem:[#allocation7 + $0x168] sm:$0xff]
        %v5967 = vld [vmem:[#allocation7 + $0x170] sm:$0xff]
        %v5968 = vld [vmem:[#allocation7 + $0x178] sm:$0xff]
        %v5969 = vld [vmem:[#allocation7 + $0x180] sm:$0xff]
        %v5970 = vld [vmem:[#allocation7 + $0x188] sm:$0xff]
        %v5971 = vld [vmem:[#allocation7 + $0x190] sm:$0xff]
        %v5972 = vld [vmem:[#allocation7 + $0x198] sm:$0xff]
        %v5973 = vld [vmem:[#allocation7 + $0x1a0] sm:$0xff]
        %v5974 = vld [vmem:[#allocation7 + $0x1a8] sm:$0xff]
        %v5975 = vld [vmem:[#allocation7 + $0x1b0] sm:$0xff]
        %v5976 = vld [vmem:[#allocation7 + $0x1b8] sm:$0xff]
        %v5977 = vld [vmem:[#allocation7 + $0x1c0] sm:$0xff]
        %v5978 = vld [vmem:[#allocation7 + $0x1c8] sm:$0xff]
        %v5979 = vld [vmem:[#allocation7 + $0x1d0] sm:$0xff]
        %v5980 = vld [vmem:[#allocation7 + $0x1d8] sm:$0xff]
        %v5981 = vld [vmem:[#allocation7 + $0x1e0] sm:$0xff]
        %v5982 = vld [vmem:[#allocation7 + $0x1e8] sm:$0xff]
        %v5983 = vld [vmem:[#allocation7 + $0x1f0] sm:$0xff]
        %v5984 = vld [vmem:[#allocation7 + $0x1f8] sm:$0xff]
        %v5985 = vld [vmem:[#allocation7 + $0x200] sm:$0xff]
        %v5986 = vld [vmem:[#allocation7 + $0x208] sm:$0xff]
        %v5987 = vld [vmem:[#allocation7 + $0x210] sm:$0xff]
        %v5988 = vld [vmem:[#allocation7 + $0x218] sm:$0xff]
        %v5989 = vld [vmem:[#allocation7 + $0x220] sm:$0xff]
        %v5990 = vld [vmem:[#allocation7 + $0x228] sm:$0xff]
        %v5991 = vld [vmem:[#allocation7 + $0x230] sm:$0xff]
        %v5992 = vld [vmem:[#allocation7 + $0x238] sm:$0xff]
        %v5993 = vld [vmem:[#allocation7 + $0x240] sm:$0xff]
        %v5994 = vld [vmem:[#allocation7 + $0x248] sm:$0xff]
        %v5995 = vld [vmem:[#allocation7 + $0x250] sm:$0xff]
        %v5996 = vld [vmem:[#allocation7 + $0x258] sm:$0xff]
        %v5997 = vld [vmem:[#allocation7 + $0x260] sm:$0xff]
        %v5998 = vld [vmem:[#allocation7 + $0x268] sm:$0xff]
        %v5999 = vld [vmem:[#allocation7 + $0x270] sm:$0xff]
        %v6000 = vld [vmem:[#allocation7 + $0x278] sm:$0xff]
        %v6001 = vld [vmem:[#allocation7 + $0x280] sm:$0xff]
        %v6002 = vld [vmem:[#allocation7 + $0x288] sm:$0xff]
        %v6003 = vld [vmem:[#allocation7 + $0x290] sm:$0xff]
        %v6004 = vld [vmem:[#allocation7 + $0x298] sm:$0xff]
        %v6005 = vld [vmem:[#allocation7 + $0x2a0] sm:$0xff]
        %v6006 = vld [vmem:[#allocation7 + $0x2a8] sm:$0xff]
        %v6007 = vld [vmem:[#allocation7 + $0x2b0] sm:$0xff]
        %v6008 = vld [vmem:[#allocation7 + $0x2b8] sm:$0xff]
        %v6009 = vld [vmem:[#allocation7 + $0x2c0] sm:$0xff]
        %v6010 = vld [vmem:[#allocation7 + $0x2c8] sm:$0xff]
        %v6011 = vld [vmem:[#allocation7 + $0x2d0] sm:$0xff]
        %v6012 = vld [vmem:[#allocation7 + $0x2d8] sm:$0xff]
        %v6013 = vld [vmem:[#allocation7 + $0x2e0] sm:$0xff]
        %v6014 = vld [vmem:[#allocation7 + $0x2e8] sm:$0xff]
        %v6015 = vld [vmem:[#allocation7 + $0x2f0] sm:$0xff]
        %v6016 = vld [vmem:[#allocation7 + $0x2f8] sm:$0xff]
        %v6017 = vld [vmem:[#allocation7 + $0x300] sm:$0xff]
        %v6018 = vld [vmem:[#allocation7 + $0x308] sm:$0xff]
        %v6019 = vld [vmem:[#allocation7 + $0x310] sm:$0xff]
        %v6020 = vld [vmem:[#allocation7 + $0x318] sm:$0xff]
        %v6021 = vld [vmem:[#allocation7 + $0x320] sm:$0xff]
        %v6022 = vld [vmem:[#allocation7 + $0x328] sm:$0xff]
        %v6023 = vld [vmem:[#allocation7 + $0x330] sm:$0xff]
        %v6024 = vld [vmem:[#allocation7 + $0x338] sm:$0xff]
        %v6025 = vld [vmem:[#allocation7 + $0x340] sm:$0xff]
        %v6026 = vld [vmem:[#allocation7 + $0x348] sm:$0xff]
        %v6027 = vld [vmem:[#allocation7 + $0x350] sm:$0xff]
        %v6028 = vld [vmem:[#allocation7 + $0x358] sm:$0xff]
        %v6029 = vld [vmem:[#allocation7 + $0x360] sm:$0xff]
        %v6030 = vld [vmem:[#allocation7 + $0x368] sm:$0xff]
        %v6031 = vld [vmem:[#allocation7 + $0x370] sm:$0xff]
        %v6032 = vld [vmem:[#allocation7 + $0x378] sm:$0xff]
        %v6033 = vld [vmem:[#allocation7 + $0x380] sm:$0xff]
        %v6034 = vld [vmem:[#allocation7 + $0x388] sm:$0xff]
        %v6035 = vld [vmem:[#allocation7 + $0x390] sm:$0xff]
        %v6036 = vld [vmem:[#allocation7 + $0x398] sm:$0xff]
        %v6037 = vld [vmem:[#allocation7 + $0x3a0] sm:$0xff]
        %v6038 = vld [vmem:[#allocation7 + $0x3a8] sm:$0xff]
        %v6039 = vld [vmem:[#allocation7 + $0x3b0] sm:$0xff]
        %v6040 = vld [vmem:[#allocation7 + $0x3b8] sm:$0xff]
        %v6041 = vld [vmem:[#allocation7 + $0x3c0] sm:$0xff]
        %v6042 = vld [vmem:[#allocation7 + $0x3c8] sm:$0xff]
        %v6043 = vld [vmem:[#allocation7 + $0x3d0] sm:$0xff]
        %v6044 = vld [vmem:[#allocation7 + $0x3d8] sm:$0xff]
        %v6045 = vld [vmem:[#allocation7 + $0x3e0] sm:$0xff]
        %v6046 = vld [vmem:[#allocation7 + $0x3e8] sm:$0xff]
        %v6047 = vld [vmem:[#allocation7 + $0x3f0] sm:$0xff]
        %v6048 = vld [vmem:[#allocation7 + $0x3f8] sm:$0xff]
        %v6049 = vld [vmem:[#allocation7 + $0x400] sm:$0xff]
        %v6050 = vld [vmem:[#allocation7 + $0x408] sm:$0xff]
        %v6051 = vld [vmem:[#allocation7 + $0x410] sm:$0xff]
        %v6052 = vld [vmem:[#allocation7 + $0x418] sm:$0xff]
        %v6053 = vld [vmem:[#allocation7 + $0x420] sm:$0xff]
        %v6054 = vld [vmem:[#allocation7 + $0x428] sm:$0xff]
        %v6055 = vld [vmem:[#allocation7 + $0x430] sm:$0xff]
        %v6056 = vld [vmem:[#allocation7 + $0x438] sm:$0xff]
        %v6057 = vld [vmem:[#allocation7 + $0x440] sm:$0xff]
        %v6058 = vld [vmem:[#allocation7 + $0x448] sm:$0xff]
        %v6059 = vld [vmem:[#allocation7 + $0x450] sm:$0xff]
        %v6060 = vld [vmem:[#allocation7 + $0x458] sm:$0xff]
        %v6061 = vld [vmem:[#allocation7 + $0x460] sm:$0xff]
        %v6062 = vld [vmem:[#allocation7 + $0x468] sm:$0xff]
        %v6063 = vld [vmem:[#allocation7 + $0x470] sm:$0xff]
        %v6064 = vld [vmem:[#allocation7 + $0x478] sm:$0xff]
        %v6065 = vld [vmem:[#allocation7 + $0x480] sm:$0xff]
        %v6066 = vld [vmem:[#allocation7 + $0x488] sm:$0xff]
        %v6067 = vld [vmem:[#allocation7 + $0x490] sm:$0xff]
        %v6068 = vld [vmem:[#allocation7 + $0x498] sm:$0xff]
        %v6069 = vld [vmem:[#allocation7 + $0x4a0] sm:$0xff]
        %v6070 = vld [vmem:[#allocation7 + $0x4a8] sm:$0xff]
        %v6071 = vld [vmem:[#allocation7 + $0x4b0] sm:$0xff]
        %v6072 = vld [vmem:[#allocation7 + $0x4b8] sm:$0xff]
        %v6073 = vld [vmem:[#allocation7 + $0x4c0] sm:$0xff]
        %v6074 = vld [vmem:[#allocation7 + $0x4c8] sm:$0xff]
        %v6075 = vld [vmem:[#allocation7 + $0x4d0] sm:$0xff]
        %v6076 = vld [vmem:[#allocation7 + $0x4d8] sm:$0xff]
        %v6077 = vld [vmem:[#allocation7 + $0x4e0] sm:$0xff]
        %v6078 = vld [vmem:[#allocation7 + $0x4e8] sm:$0xff]
        %v6079 = vld [vmem:[#allocation7 + $0x4f0] sm:$0xff]
        %v6080 = vld [vmem:[#allocation7 + $0x4f8] sm:$0xff]
        %v6081 = vld [vmem:[#allocation7 + $0x500] sm:$0xff]
        %v6082 = vld [vmem:[#allocation7 + $0x508] sm:$0xff]
        %v6083 = vld [vmem:[#allocation7 + $0x510] sm:$0xff]
        %v6084 = vld [vmem:[#allocation7 + $0x518] sm:$0xff]
        %v6085 = vld [vmem:[#allocation7 + $0x520] sm:$0xff]
        %v6086 = vld [vmem:[#allocation7 + $0x528] sm:$0xff]
        %v6087 = vld [vmem:[#allocation7 + $0x530] sm:$0xff]
        %v6088 = vld [vmem:[#allocation7 + $0x538] sm:$0xff]
        %v6089 = vld [vmem:[#allocation7 + $0x540] sm:$0xff]
        %v6090 = vld [vmem:[#allocation7 + $0x548] sm:$0xff]
        %v6091 = vld [vmem:[#allocation7 + $0x550] sm:$0xff]
        %v6092 = vld [vmem:[#allocation7 + $0x558] sm:$0xff]
        %v6093 = vld [vmem:[#allocation7 + $0x560] sm:$0xff]
        %v6094 = vld [vmem:[#allocation7 + $0x568] sm:$0xff]
        %v6095 = vld [vmem:[#allocation7 + $0x570] sm:$0xff]
        %v6096 = vld [vmem:[#allocation7 + $0x578] sm:$0xff]
        %v6097 = vld [vmem:[#allocation7 + $0x580] sm:$0xff]
        %v6098 = vld [vmem:[#allocation7 + $0x588] sm:$0xff]
        %v6099 = vld [vmem:[#allocation7 + $0x590] sm:$0xff]
        %v6100 = vld [vmem:[#allocation7 + $0x598] sm:$0xff]
        %v6101 = vld [vmem:[#allocation7 + $0x5a0] sm:$0xff]
        %v6102 = vld [vmem:[#allocation7 + $0x5a8] sm:$0xff]
        %v6103 = vld [vmem:[#allocation7 + $0x5b0] sm:$0xff]
        %v6104 = vld [vmem:[#allocation7 + $0x5b8] sm:$0xff]
        %v6105 = vld [vmem:[#allocation7 + $0x5c0] sm:$0xff]
        %v6106 = vld [vmem:[#allocation7 + $0x5c8] sm:$0xff]
        %v6107 = vld [vmem:[#allocation7 + $0x5d0] sm:$0xff]
        %v6108 = vld [vmem:[#allocation7 + $0x5d8] sm:$0xff]
        %v6109 = vld [vmem:[#allocation7 + $0x5e0] sm:$0xff]
        %v6110 = vld [vmem:[#allocation7 + $0x5e8] sm:$0xff]
        %v6111 = vld [vmem:[#allocation7 + $0x5f0] sm:$0xff]
        %v6112 = vld [vmem:[#allocation7 + $0x5f8] sm:$0xff]
        %6113 = vmatprep.subr.mxu0 %v5922
        %6114 = vmatpush1.msra.mxu0 %v5921
        %6115 = vmatprep.subr.mxu0 %v5926
        %6116 = vmatpush1.msra.mxu0 %v5925
        %6117 = vmatprep.subr.mxu0 %v5930
        %6118 = vmatpush1.msra.mxu0 %v5929
        %6119 = vmatprep.subr.mxu0 %v5934
        %6120 = vmatpush1.msra.mxu0 %v5933
        %6121 = vmatprep.subr.mxu0 %v5938
        %6122 = vmatpush1.msra.mxu0 %v5937
        %6123 = vmatprep.subr.mxu0 %v5942
        %6124 = vmatpush1.msra.mxu0 %v5941
        %6125 = vmatprep.subr.mxu0 %v5946
        %6126 = vmatpush1.msra.mxu0 %v5945
        %6127 = vmatprep.subr.mxu0 %v5950
        %6128 = vmatpush1.msra.mxu0 %v5949
        %6129 = vmatprep.subr.mxu0 %v5954
        %6130 = vmatpush1.msra.mxu0 %v5953
        %6131 = vmatprep.subr.mxu0 %v5958
        %6132 = vmatpush1.msra.mxu0 %v5957
        %6133 = vmatprep.subr.mxu0 %v5962
        %6134 = vmatpush1.msra.mxu0 %v5961
        %6135 = vmatprep.subr.mxu0 %v5966
        %6136 = vmatpush1.msra.mxu0 %v5965
        %6137 = vmatprep.subr.mxu0 %v5970
        %6138 = vmatpush1.msra.mxu0 %v5969
        %6139 = vmatprep.subr.mxu0 %v5974
        %6140 = vmatpush1.msra.mxu0 %v5973
        %6141 = vmatprep.subr.mxu0 %v5978
        %6142 = vmatpush1.msra.mxu0 %v5977
        %6143 = vmatprep.subr.mxu0 %v5982
        %6144 = vmatpush1.msra.mxu0 %v5981
        %6145 = vmatprep.subr.mxu0 %v5986
        %6146 = vmatpush1.msra.mxu0 %v5985
        %6147 = vmatprep.subr.mxu0 %v5990
        %6148 = vmatpush1.msra.mxu0 %v5989
        %6149 = vmatprep.subr.mxu0 %v5994
        %6150 = vmatpush1.msra.mxu0 %v5993
        %6151 = vmatprep.subr.mxu0 %v5998
        %6152 = vmatpush1.msra.mxu0 %v5997
        %6153 = vmatprep.subr.mxu0 %v6002
        %6154 = vmatpush1.msra.mxu0 %v6001
        %6155 = vmatprep.subr.mxu0 %v6006
        %6156 = vmatpush1.msra.mxu0 %v6005
        %6157 = vmatprep.subr.mxu0 %v6010
        %6158 = vmatpush1.msra.mxu0 %v6009
        %6159 = vmatprep.subr.mxu0 %v6014
        %6160 = vmatpush1.msra.mxu0 %v6013
        %6161 = vmatprep.subr.mxu0 %v6018
        %6162 = vmatpush1.msra.mxu0 %v6017
        %6163 = vmatprep.subr.mxu0 %v6022
        %6164 = vmatpush1.msra.mxu0 %v6021
        %6165 = vmatprep.subr.mxu0 %v6026
        %6166 = vmatpush1.msra.mxu0 %v6025
        %6167 = vmatprep.subr.mxu0 %v6030
        %6168 = vmatpush1.msra.mxu0 %v6029
        %6169 = vmatprep.subr.mxu0 %v6034
        %6170 = vmatpush1.msra.mxu0 %v6033
        %6171 = vmatprep.subr.mxu0 %v6038
        %6172 = vmatpush1.msra.mxu0 %v6037
        %6173 = vmatprep.subr.mxu0 %v6042
        %6174 = vmatpush1.msra.mxu0 %v6041
        %6175 = vmatprep.subr.mxu0 %v6046
        %6176 = vmatpush1.msra.mxu0 %v6045
        %6177 = vmatprep.mubr.f32.mxu0 %v5660
        %6178 = vmatmul.mubr.f32.gmra.mrb[0].mxu0 %v5659
        %v6179 = vpop.f32.mrb[0].mxu0
        %v6180 = vadd.f32 0.0, %v6179
        %v6181 = vpop.f32.mrb[0].mxu0
        %v6182 = vadd.f32 0.0, %v6181
        %6183 = vmatprep.mubr.f32.mxu0 %v5663
        %6184 = vmatmul.mubr.f32.gmra.mrb[0].mxu0 %v5662
        %v6185 = vpop.f32.mrb[0].mxu0
        %v6186 = vadd.f32 0.0, %v6185
        %v6187 = vpop.f32.mrb[0].mxu0
        %v6188 = vadd.f32 0.0, %v6187
        %6189 = vdwg.mxu0
        %6190 = vmatprep.subr.mxu0 %v6050
        %6191 = vmatpush1.msra.mxu0 %v6049
        %6192 = vmatprep.subr.mxu0 %v6054
        %6193 = vmatpush1.msra.mxu0 %v6053
        %6194 = vmatprep.subr.mxu0 %v6058
        %6195 = vmatpush1.msra.mxu0 %v6057
        %6196 = vmatprep.subr.mxu0 %v6062
        %6197 = vmatpush1.msra.mxu0 %v6061
        %6198 = vmatprep.subr.mxu0 %v6066
        %6199 = vmatpush1.msra.mxu0 %v6065
        %6200 = vmatprep.subr.mxu0 %v6070
        %6201 = vmatpush1.msra.mxu0 %v6069
        %6202 = vmatprep.subr.mxu0 %v6074
        %6203 = vmatpush1.msra.mxu0 %v6073
        %6204 = vmatprep.subr.mxu0 %v6078
        %6205 = vmatpush1.msra.mxu0 %v6077
        %6206 = vmatprep.subr.mxu0 %v6082
        %6207 = vmatpush1.msra.mxu0 %v6081
        %6208 = vmatprep.subr.mxu0 %v6086
        %6209 = vmatpush1.msra.mxu0 %v6085
        %6210 = vmatprep.subr.mxu0 %v6090
        %6211 = vmatpush1.msra.mxu0 %v6089
        %6212 = vmatprep.subr.mxu0 %v6094
        %6213 = vmatpush1.msra.mxu0 %v6093
        %6214 = vmatprep.subr.mxu0 %v6098
        %6215 = vmatpush1.msra.mxu0 %v6097
        %6216 = vmatprep.subr.mxu0 %v6102
        %6217 = vmatpush1.msra.mxu0 %v6101
        %6218 = vmatprep.subr.mxu0 %v6106
        %6219 = vmatpush1.msra.mxu0 %v6105
        %6220 = vmatprep.subr.mxu0 %v6110
        %6221 = vmatpush1.msra.mxu0 %v6109
        %6222 = vmatprep.subr.mxu0 0.0
        %6223 = vmatpush1.msra.mxu0 0.0
        %6224 = vmatprep.subr.mxu0 0.0
        %6225 = vmatpush1.msra.mxu0 0.0
        %6226 = vmatprep.subr.mxu0 0.0
        %6227 = vmatpush1.msra.mxu0 0.0
        %6228 = vmatprep.subr.mxu0 0.0
        %6229 = vmatpush1.msra.mxu0 0.0
        %6230 = vmatprep.subr.mxu0 0.0
        %6231 = vmatpush1.msra.mxu0 0.0
        %6232 = vmatprep.subr.mxu0 0.0
        %6233 = vmatpush1.msra.mxu0 0.0
        %6234 = vmatprep.subr.mxu0 0.0
        %6235 = vmatpush1.msra.mxu0 0.0
        %6236 = vmatprep.subr.mxu0 0.0
        %6237 = vmatpush1.msra.mxu0 0.0
        %6238 = vmatprep.subr.mxu0 0.0
        %6239 = vmatpush1.msra.mxu0 0.0
        %6240 = vmatprep.subr.mxu0 0.0
        %6241 = vmatpush1.msra.mxu0 0.0
        %6242 = vmatprep.subr.mxu0 0.0
        %6243 = vmatpush1.msra.mxu0 0.0
        %6244 = vmatprep.subr.mxu0 0.0
        %6245 = vmatpush1.msra.mxu0 0.0
        %6246 = vmatprep.subr.mxu0 0.0
        %6247 = vmatpush1.msra.mxu0 0.0
        %6248 = vmatprep.subr.mxu0 0.0
        %6249 = vmatpush1.msra.mxu0 0.0
        %6250 = vmatprep.subr.mxu0 0.0
        %6251 = vmatpush1.msra.mxu0 0.0
        %6252 = vmatprep.subr.mxu0 0.0
        %6253 = vmatpush1.msra.mxu0 0.0
        %6254 = vmatprep.mubr.f32.mxu0 0.0
        %6255 = vmatmul.mubr.f32.gmra.mrb[0].mxu0 %v5661
        %v6256 = vpop.f32.mrb[0].mxu0
        %v6257 = vadd.f32 %v6180, %v6256
        %v6258 = vpop.f32.mrb[0].mxu0
        %v6259 = vadd.f32 %v6182, %v6258
        %6260 = vmatprep.mubr.f32.mxu0 0.0
        %6261 = vmatmul.mubr.f32.gmra.mrb[0].mxu0 %v5664
        %v6262 = vpop.f32.mrb[0].mxu0
        %v6263 = vadd.f32 %v6186, %v6262
        %v6264 = vpop.f32.mrb[0].mxu0
        %v6265 = vadd.f32 %v6188, %v6264
        %6266 = vdwg.mxu0
        %6267 = vmatprep.subr.mxu0 %v5924
        %6268 = vmatpush1.msra.mxu0 %v5923
        %6269 = vmatprep.subr.mxu0 %v5928
        %6270 = vmatpush1.msra.mxu0 %v5927
        %6271 = vmatprep.subr.mxu0 %v5932
        %6272 = vmatpush1.msra.mxu0 %v5931
        %6273 = vmatprep.subr.mxu0 %v5936
        %6274 = vmatpush1.msra.mxu0 %v5935
        %6275 = vmatprep.subr.mxu0 %v5940
        %6276 = vmatpush1.msra.mxu0 %v5939
        %6277 = vmatprep.subr.mxu0 %v5944
        %6278 = vmatpush1.msra.mxu0 %v5943
        %6279 = vmatprep.subr.mxu0 %v5948
        %6280 = vmatpush1.msra.mxu0 %v5947
        %6281 = vmatprep.subr.mxu0 %v5952
        %6282 = vmatpush1.msra.mxu0 %v5951
        %6283 = vmatprep.subr.mxu0 %v5956
        %6284 = vmatpush1.msra.mxu0 %v5955
        %6285 = vmatprep.subr.mxu0 %v5960
        %6286 = vmatpush1.msra.mxu0 %v5959
        %6287 = vmatprep.subr.mxu0 %v5964
        %6288 = vmatpush1.msra.mxu0 %v5963
        %6289 = vmatprep.subr.mxu0 %v5968
        %6290 = vmatpush1.msra.mxu0 %v5967
        %6291 = vmatprep.subr.mxu0 %v5972
        %6292 = vmatpush1.msra.mxu0 %v5971
        %6293 = vmatprep.subr.mxu0 %v5976
        %6294 = vmatpush1.msra.mxu0 %v5975
        %6295 = vmatprep.subr.mxu0 %v5980
        %6296 = vmatpush1.msra.mxu0 %v5979
        %6297 = vmatprep.subr.mxu0 %v5984
        %6298 = vmatpush1.msra.mxu0 %v5983
        %6299 = vmatprep.subr.mxu0 %v5988
        %6300 = vmatpush1.msra.mxu0 %v5987
        %6301 = vmatprep.subr.mxu0 %v5992
        %6302 = vmatpush1.msra.mxu0 %v5991
        %6303 = vmatprep.subr.mxu0 %v5996
        %6304 = vmatpush1.msra.mxu0 %v5995
        %6305 = vmatprep.subr.mxu0 %v6000
        %6306 = vmatpush1.msra.mxu0 %v5999
        %6307 = vmatprep.subr.mxu0 %v6004
        %6308 = vmatpush1.msra.mxu0 %v6003
        %6309 = vmatprep.subr.mxu0 %v6008
        %6310 = vmatpush1.msra.mxu0 %v6007
        %6311 = vmatprep.subr.mxu0 %v6012
        %6312 = vmatpush1.msra.mxu0 %v6011
        %6313 = vmatprep.subr.mxu0 %v6016
        %6314 = vmatpush1.msra.mxu0 %v6015
        %6315 = vmatprep.subr.mxu0 %v6020
        %6316 = vmatpush1.msra.mxu0 %v6019
        %6317 = vmatprep.subr.mxu0 %v6024
        %6318 = vmatpush1.msra.mxu0 %v6023
        %6319 = vmatprep.subr.mxu0 %v6028
        %6320 = vmatpush1.msra.mxu0 %v6027
        %6321 = vmatprep.subr.mxu0 %v6032
        %6322 = vmatpush1.msra.mxu0 %v6031
        %6323 = vmatprep.subr.mxu0 %v6036
        %6324 = vmatpush1.msra.mxu0 %v6035
        %6325 = vmatprep.subr.mxu0 %v6040
        %6326 = vmatpush1.msra.mxu0 %v6039
        %6327 = vmatprep.subr.mxu0 %v6044
        %6328 = vmatpush1.msra.mxu0 %v6043
        %6329 = vmatprep.subr.mxu0 %v6048
        %6330 = vmatpush1.msra.mxu0 %v6047
        %6331 = vmatprep.mubr.f32.mxu0 %v5660
        %6332 = vmatmul.mubr.f32.gmra.mrb[0].mxu0 %v5659
        %v6333 = vpop.f32.mrb[0].mxu0
        %v6334 = vadd.f32 0.0, %v6333
        %v6335 = vpop.f32.mrb[0].mxu0
        %v6336 = vadd.f32 0.0, %v6335
        %6337 = vmatprep.mubr.f32.mxu0 %v5663
        %6338 = vmatmul.mubr.f32.gmra.mrb[0].mxu0 %v5662
        %v6339 = vpop.f32.mrb[0].mxu0
        %v6340 = vadd.f32 0.0, %v6339
        %v6341 = vpop.f32.mrb[0].mxu0
        %v6342 = vadd.f32 0.0, %v6341
        %6343 = vdwg.mxu0
        %6344 = vmatprep.subr.mxu0 %v6052
        %6345 = vmatpush1.msra.mxu0 %v6051
        %6346 = vmatprep.subr.mxu0 %v6056
        %6347 = vmatpush1.msra.mxu0 %v6055
        %6348 = vmatprep.subr.mxu0 %v6060
        %6349 = vmatpush1.msra.mxu0 %v6059
        %6350 = vmatprep.subr.mxu0 %v6064
        %6351 = vmatpush1.msra.mxu0 %v6063
        %6352 = vmatprep.subr.mxu0 %v6068
        %6353 = vmatpush1.msra.mxu0 %v6067
        %6354 = vmatprep.subr.mxu0 %v6072
        %6355 = vmatpush1.msra.mxu0 %v6071
        %6356 = vmatprep.subr.mxu0 %v6076
        %6357 = vmatpush1.msra.mxu0 %v6075
        %6358 = vmatprep.subr.mxu0 %v6080
        %6359 = vmatpush1.msra.mxu0 %v6079
        %6360 = vmatprep.subr.mxu0 %v6084
        %6361 = vmatpush1.msra.mxu0 %v6083
        %6362 = vmatprep.subr.mxu0 %v6088
        %6363 = vmatpush1.msra.mxu0 %v6087
        %6364 = vmatprep.subr.mxu0 %v6092
        %6365 = vmatpush1.msra.mxu0 %v6091
        %6366 = vmatprep.subr.mxu0 %v6096
        %6367 = vmatpush1.msra.mxu0 %v6095
        %6368 = vmatprep.subr.mxu0 %v6100
        %6369 = vmatpush1.msra.mxu0 %v6099
        %6370 = vmatprep.subr.mxu0 %v6104
        %6371 = vmatpush1.msra.mxu0 %v6103
        %6372 = vmatprep.subr.mxu0 %v6108
        %6373 = vmatpush1.msra.mxu0 %v6107
        %6374 = vmatprep.subr.mxu0 %v6112
        %6375 = vmatpush1.msra.mxu0 %v6111
        %6376 = vmatprep.subr.mxu0 0.0
        %6377 = vmatpush1.msra.mxu0 0.0
        %6378 = vmatprep.subr.mxu0 0.0
        %6379 = vmatpush1.msra.mxu0 0.0
        %6380 = vmatprep.subr.mxu0 0.0
        %6381 = vmatpush1.msra.mxu0 0.0
        %6382 = vmatprep.subr.mxu0 0.0
        %6383 = vmatpush1.msra.mxu0 0.0
        %6384 = vmatprep.subr.mxu0 0.0
        %6385 = vmatpush1.msra.mxu0 0.0
        %6386 = vmatprep.subr.mxu0 0.0
        %6387 = vmatpush1.msra.mxu0 0.0
        %6388 = vmatprep.subr.mxu0 0.0
        %6389 = vmatpush1.msra.mxu0 0.0
        %6390 = vmatprep.subr.mxu0 0.0
        %6391 = vmatpush1.msra.mxu0 0.0
        %6392 = vmatprep.subr.mxu0 0.0
        %6393 = vmatpush1.msra.mxu0 0.0
        %6394 = vmatprep.subr.mxu0 0.0
        %6395 = vmatpush1.msra.mxu0 0.0
        %6396 = vmatprep.subr.mxu0 0.0
        %6397 = vmatpush1.msra.mxu0 0.0
        %6398 = vmatprep.subr.mxu0 0.0
        %6399 = vmatpush1.msra.mxu0 0.0
        %6400 = vmatprep.subr.mxu0 0.0
        %6401 = vmatpush1.msra.mxu0 0.0
        %6402 = vmatprep.subr.mxu0 0.0
        %6403 = vmatpush1.msra.mxu0 0.0
        %6404 = vmatprep.subr.mxu0 0.0
        %6405 = vmatpush1.msra.mxu0 0.0
        %6406 = vmatprep.subr.mxu0 0.0
        %6407 = vmatpush1.msra.mxu0 0.0
        %6408 = vmatprep.mubr.f32.mxu0 0.0
        %6409 = vmatmul.mubr.f32.gmra.mrb[0].mxu0 %v5661
        %v6410 = vpop.f32.mrb[0].mxu0
        %v6411 = vadd.f32 %v6334, %v6410
        %v6412 = vpop.f32.mrb[0].mxu0
        %v6413 = vadd.f32 %v6336, %v6412
        %6414 = vmatprep.mubr.f32.mxu0 0.0
        %6415 = vmatmul.mubr.f32.gmra.mrb[0].mxu0 %v5664
        %v6416 = vpop.f32.mrb[0].mxu0
        %v6417 = vadd.f32 %v6340, %v6416
        %v6418 = vpop.f32.mrb[0].mxu0
        %v6419 = vadd.f32 %v6342, %v6418
        %6420 = vdwg.mxu0
        %6421 = vmatprep.subr.mxu0 %v5666
        %6422 = vmatpush1.msra.mxu0 %v5665
        %6423 = vmatprep.subr.mxu0 %v5670
        %6424 = vmatpush1.msra.mxu0 %v5669
        %6425 = vmatprep.subr.mxu0 %v5674
        %6426 = vmatpush1.msra.mxu0 %v5673
        %6427 = vmatprep.subr.mxu0 %v5678
        %6428 = vmatpush1.msra.mxu0 %v5677
        %6429 = vmatprep.subr.mxu0 %v5682
        %6430 = vmatpush1.msra.mxu0 %v5681
        %6431 = vmatprep.subr.mxu0 %v5686
        %6432 = vmatpush1.msra.mxu0 %v5685
        %6433 = vmatprep.subr.mxu0 %v5690
        %6434 = vmatpush1.msra.mxu0 %v5689
        %6435 = vmatprep.subr.mxu0 %v5694
        %6436 = vmatpush1.msra.mxu0 %v5693
        %6437 = vmatprep.subr.mxu0 %v5698
        %6438 = vmatpush1.msra.mxu0 %v5697
        %6439 = vmatprep.subr.mxu0 %v5702
        %6440 = vmatpush1.msra.mxu0 %v5701
        %6441 = vmatprep.subr.mxu0 %v5706
        %6442 = vmatpush1.msra.mxu0 %v5705
        %6443 = vmatprep.subr.mxu0 %v5710
        %6444 = vmatpush1.msra.mxu0 %v5709
        %6445 = vmatprep.subr.mxu0 %v5714
        %6446 = vmatpush1.msra.mxu0 %v5713
        %6447 = vmatprep.subr.mxu0 %v5718
        %6448 = vmatpush1.msra.mxu0 %v5717
        %6449 = vmatprep.subr.mxu0 %v5722
        %6450 = vmatpush1.msra.mxu0 %v5721
        %6451 = vmatprep.subr.mxu0 %v5726
        %6452 = vmatpush1.msra.mxu0 %v5725
        %6453 = vmatprep.subr.mxu0 %v5730
        %6454 = vmatpush1.msra.mxu0 %v5729
        %6455 = vmatprep.subr.mxu0 %v5734
        %6456 = vmatpush1.msra.mxu0 %v5733
        %6457 = vmatprep.subr.mxu0 %v5738
        %6458 = vmatpush1.msra.mxu0 %v5737
        %6459 = vmatprep.subr.mxu0 %v5742
        %6460 = vmatpush1.msra.mxu0 %v5741
        %6461 = vmatprep.subr.mxu0 %v5746
        %6462 = vmatpush1.msra.mxu0 %v5745
        %6463 = vmatprep.subr.mxu0 %v5750
        %6464 = vmatpush1.msra.mxu0 %v5749
        %6465 = vmatprep.subr.mxu0 %v5754
        %6466 = vmatpush1.msra.mxu0 %v5753
        %6467 = vmatprep.subr.mxu0 %v5758
        %6468 = vmatpush1.msra.mxu0 %v5757
        %6469 = vmatprep.subr.mxu0 %v5762
        %6470 = vmatpush1.msra.mxu0 %v5761
        %6471 = vmatprep.subr.mxu0 %v5766
        %6472 = vmatpush1.msra.mxu0 %v5765
        %6473 = vmatprep.subr.mxu0 %v5770
        %6474 = vmatpush1.msra.mxu0 %v5769
        %6475 = vmatprep.subr.mxu0 %v5774
        %6476 = vmatpush1.msra.mxu0 %v5773
        %6477 = vmatprep.subr.mxu0 %v5778
        %6478 = vmatpush1.msra.mxu0 %v5777
        %6479 = vmatprep.subr.mxu0 %v5782
        %6480 = vmatpush1.msra.mxu0 %v5781
        %6481 = vmatprep.subr.mxu0 %v5786
        %6482 = vmatpush1.msra.mxu0 %v5785
        %6483 = vmatprep.subr.mxu0 %v5790
        %6484 = vmatpush1.msra.mxu0 %v5789
        %6485 = vmatprep.mubr.f32.mxu0 %v324
        %6486 = vmatmul.mubr.f32.gmra.mrb[0].mxu0 %v323
        %v6487 = vpop.f32.mrb[0].mxu0
        %v6488 = vadd.f32 %v6257, %v6487
        %v6489 = vpop.f32.mrb[0].mxu0
        %v6490 = vadd.f32 %v6259, %v6489
        %6491 = vmatprep.mubr.f32.mxu0 %v328
        %6492 = vmatmul.mubr.f32.gmra.mrb[0].mxu0 %v327
        %v6493 = vpop.f32.mrb[0].mxu0
        %v6494 = vadd.f32 %v6263, %v6493
        %v6495 = vpop.f32.mrb[0].mxu0
        %v6496 = vadd.f32 %v6265, %v6495
        %6497 = vdwg.mxu0
        %6498 = vmatprep.subr.mxu0 %v5794
        %6499 = vmatpush1.msra.mxu0 %v5793
        %6500 = vmatprep.subr.mxu0 %v5798
        %6501 = vmatpush1.msra.mxu0 %v5797
        %6502 = vmatprep.subr.mxu0 %v5802
        %6503 = vmatpush1.msra.mxu0 %v5801
        %6504 = vmatprep.subr.mxu0 %v5806
        %6505 = vmatpush1.msra.mxu0 %v5805
        %6506 = vmatprep.subr.mxu0 %v5810
        %6507 = vmatpush1.msra.mxu0 %v5809
        %6508 = vmatprep.subr.mxu0 %v5814
        %6509 = vmatpush1.msra.mxu0 %v5813
        %6510 = vmatprep.subr.mxu0 %v5818
        %6511 = vmatpush1.msra.mxu0 %v5817
        %6512 = vmatprep.subr.mxu0 %v5822
        %6513 = vmatpush1.msra.mxu0 %v5821
        %6514 = vmatprep.subr.mxu0 %v5826
        %6515 = vmatpush1.msra.mxu0 %v5825
        %6516 = vmatprep.subr.mxu0 %v5830
        %6517 = vmatpush1.msra.mxu0 %v5829
        %6518 = vmatprep.subr.mxu0 %v5834
        %6519 = vmatpush1.msra.mxu0 %v5833
        %6520 = vmatprep.subr.mxu0 %v5838
        %6521 = vmatpush1.msra.mxu0 %v5837
        %6522 = vmatprep.subr.mxu0 %v5842
        %6523 = vmatpush1.msra.mxu0 %v5841
        %6524 = vmatprep.subr.mxu0 %v5846
        %6525 = vmatpush1.msra.mxu0 %v5845
        %6526 = vmatprep.subr.mxu0 %v5850
        %6527 = vmatpush1.msra.mxu0 %v5849
        %6528 = vmatprep.subr.mxu0 %v5854
        %6529 = vmatpush1.msra.mxu0 %v5853
        %6530 = vmatprep.subr.mxu0 %v5858
        %6531 = vmatpush1.msra.mxu0 %v5857
        %6532 = vmatprep.subr.mxu0 %v5862
        %6533 = vmatpush1.msra.mxu0 %v5861
        %6534 = vmatprep.subr.mxu0 %v5866
        %6535 = vmatpush1.msra.mxu0 %v5865
        %6536 = vmatprep.subr.mxu0 %v5870
        %6537 = vmatpush1.msra.mxu0 %v5869
        %6538 = vmatprep.subr.mxu0 %v5874
        %6539 = vmatpush1.msra.mxu0 %v5873
        %6540 = vmatprep.subr.mxu0 %v5878
        %6541 = vmatpush1.msra.mxu0 %v5877
        %6542 = vmatprep.subr.mxu0 %v5882
        %6543 = vmatpush1.msra.mxu0 %v5881
        %6544 = vmatprep.subr.mxu0 %v5886
        %6545 = vmatpush1.msra.mxu0 %v5885
        %6546 = vmatprep.subr.mxu0 %v5890
        %6547 = vmatpush1.msra.mxu0 %v5889
        %6548 = vmatprep.subr.mxu0 %v5894
        %6549 = vmatpush1.msra.mxu0 %v5893
        %6550 = vmatprep.subr.mxu0 %v5898
        %6551 = vmatpush1.msra.mxu0 %v5897
        %6552 = vmatprep.subr.mxu0 %v5902
        %6553 = vmatpush1.msra.mxu0 %v5901
        %6554 = vmatprep.subr.mxu0 %v5906
        %6555 = vmatpush1.msra.mxu0 %v5905
        %6556 = vmatprep.subr.mxu0 %v5910
        %6557 = vmatpush1.msra.mxu0 %v5909
        %6558 = vmatprep.subr.mxu0 %v5914
        %6559 = vmatpush1.msra.mxu0 %v5913
        %6560 = vmatprep.subr.mxu0 %v5918
        %6561 = vmatpush1.msra.mxu0 %v5917
        %6562 = vmatprep.mubr.f32.mxu0 %v326
        %6563 = vmatmul.mubr.f32.gmra.mrb[0].mxu0 %v325
        %v6564 = vpop.f32.mrb[0].mxu0
        %v6565 = vadd.f32 %v6488, %v6564
        %v6566 = vpop.f32.mrb[0].mxu0
        %v6567 = vadd.f32 %v6490, %v6566
        %6568 = vmatprep.mubr.f32.mxu0 %v330
        %6569 = vmatmul.mubr.f32.gmra.mrb[0].mxu0 %v329
        %v6570 = vpop.f32.mrb[0].mxu0
        %v6571 = vadd.f32 %v6494, %v6570
        %v6572 = vpop.f32.mrb[0].mxu0
        %v6573 = vadd.f32 %v6496, %v6572
        %6574 = vdwg.mxu0
        %6575 = vmatprep.subr.mxu0 %v5668
        %6576 = vmatpush1.msra.mxu0 %v5667
        %6577 = vmatprep.subr.mxu0 %v5672
        %6578 = vmatpush1.msra.mxu0 %v5671
        %6579 = vmatprep.subr.mxu0 %v5676
        %6580 = vmatpush1.msra.mxu0 %v5675
        %6581 = vmatprep.subr.mxu0 %v5680
        %6582 = vmatpush1.msra.mxu0 %v5679
        %6583 = vmatprep.subr.mxu0 %v5684
        %6584 = vmatpush1.msra.mxu0 %v5683
        %6585 = vmatprep.subr.mxu0 %v5688
        %6586 = vmatpush1.msra.mxu0 %v5687
        %6587 = vmatprep.subr.mxu0 %v5692
        %6588 = vmatpush1.msra.mxu0 %v5691
        %6589 = vmatprep.subr.mxu0 %v5696
        %6590 = vmatpush1.msra.mxu0 %v5695
        %6591 = vmatprep.subr.mxu0 %v5700
        %6592 = vmatpush1.msra.mxu0 %v5699
        %6593 = vmatprep.subr.mxu0 %v5704
        %6594 = vmatpush1.msra.mxu0 %v5703
        %6595 = vmatprep.subr.mxu0 %v5708
        %6596 = vmatpush1.msra.mxu0 %v5707
        %6597 = vmatprep.subr.mxu0 %v5712
        %6598 = vmatpush1.msra.mxu0 %v5711
        %6599 = vmatprep.subr.mxu0 %v5716
        %6600 = vmatpush1.msra.mxu0 %v5715
        %6601 = vmatprep.subr.mxu0 %v5720
        %6602 = vmatpush1.msra.mxu0 %v5719
        %6603 = vmatprep.subr.mxu0 %v5724
        %6604 = vmatpush1.msra.mxu0 %v5723
        %6605 = vmatprep.subr.mxu0 %v5728
        %6606 = vmatpush1.msra.mxu0 %v5727
        %6607 = vmatprep.subr.mxu0 %v5732
        %6608 = vmatpush1.msra.mxu0 %v5731
        %6609 = vmatprep.subr.mxu0 %v5736
        %6610 = vmatpush1.msra.mxu0 %v5735
        %6611 = vmatprep.subr.mxu0 %v5740
        %6612 = vmatpush1.msra.mxu0 %v5739
        %6613 = vmatprep.subr.mxu0 %v5744
        %6614 = vmatpush1.msra.mxu0 %v5743
        %6615 = vmatprep.subr.mxu0 %v5748
        %6616 = vmatpush1.msra.mxu0 %v5747
        %6617 = vmatprep.subr.mxu0 %v5752
        %6618 = vmatpush1.msra.mxu0 %v5751
        %6619 = vmatprep.subr.mxu0 %v5756
        %6620 = vmatpush1.msra.mxu0 %v5755
        %6621 = vmatprep.subr.mxu0 %v5760
        %6622 = vmatpush1.msra.mxu0 %v5759
        %6623 = vmatprep.subr.mxu0 %v5764
        %6624 = vmatpush1.msra.mxu0 %v5763
        %6625 = vmatprep.subr.mxu0 %v5768
        %6626 = vmatpush1.msra.mxu0 %v5767
        %6627 = vmatprep.subr.mxu0 %v5772
        %6628 = vmatpush1.msra.mxu0 %v5771
        %6629 = vmatprep.subr.mxu0 %v5776
        %6630 = vmatpush1.msra.mxu0 %v5775
        %6631 = vmatprep.subr.mxu0 %v5780
        %6632 = vmatpush1.msra.mxu0 %v5779
        %6633 = vmatprep.subr.mxu0 %v5784
        %6634 = vmatpush1.msra.mxu0 %v5783
        %6635 = vmatprep.subr.mxu0 %v5788
        %6636 = vmatpush1.msra.mxu0 %v5787
        %6637 = vmatprep.subr.mxu0 %v5792
        %6638 = vmatpush1.msra.mxu0 %v5791
        %6639 = vmatprep.mubr.f32.mxu0 %v324
        %6640 = vmatmul.mubr.f32.gmra.mrb[0].mxu0 %v323
        %v6641 = vpop.f32.mrb[0].mxu0
        %v6642 = vadd.f32 %v6411, %v6641
        %v6643 = vpop.f32.mrb[0].mxu0
        %v6644 = vadd.f32 %v6413, %v6643
        %6645 = vmatprep.mubr.f32.mxu0 %v328
        %6646 = vmatmul.mubr.f32.gmra.mrb[0].mxu0 %v327
        %v6647 = vpop.f32.mrb[0].mxu0
        %v6648 = vadd.f32 %v6417, %v6647
        %v6649 = vpop.f32.mrb[0].mxu0
        %v6650 = vadd.f32 %v6419, %v6649
        %6651 = vdwg.mxu0
        %6652 = vmatprep.subr.mxu0 %v5796
        %6653 = vmatpush1.msra.mxu0 %v5795
        %6654 = vmatprep.subr.mxu0 %v5800
        %6655 = vmatpush1.msra.mxu0 %v5799
        %6656 = vmatprep.subr.mxu0 %v5804
        %6657 = vmatpush1.msra.mxu0 %v5803
        %6658 = vmatprep.subr.mxu0 %v5808
        %6659 = vmatpush1.msra.mxu0 %v5807
        %6660 = vmatprep.subr.mxu0 %v5812
        %6661 = vmatpush1.msra.mxu0 %v5811
        %6662 = vmatprep.subr.mxu0 %v5816
        %6663 = vmatpush1.msra.mxu0 %v5815
        %6664 = vmatprep.subr.mxu0 %v5820
        %6665 = vmatpush1.msra.mxu0 %v5819
        %6666 = vmatprep.subr.mxu0 %v5824
        %6667 = vmatpush1.msra.mxu0 %v5823
        %6668 = vmatprep.subr.mxu0 %v5828
        %6669 = vmatpush1.msra.mxu0 %v5827
        %6670 = vmatprep.subr.mxu0 %v5832
        %6671 = vmatpush1.msra.mxu0 %v5831
        %6672 = vmatprep.subr.mxu0 %v5836
        %6673 = vmatpush1.msra.mxu0 %v5835
        %6674 = vmatprep.subr.mxu0 %v5840
        %6675 = vmatpush1.msra.mxu0 %v5839
        %6676 = vmatprep.subr.mxu0 %v5844
        %6677 = vmatpush1.msra.mxu0 %v5843
        %6678 = vmatprep.subr.mxu0 %v5848
        %6679 = vmatpush1.msra.mxu0 %v5847
        %6680 = vmatprep.subr.mxu0 %v5852
        %6681 = vmatpush1.msra.mxu0 %v5851
        %6682 = vmatprep.subr.mxu0 %v5856
        %6683 = vmatpush1.msra.mxu0 %v5855
        %6684 = vmatprep.subr.mxu0 %v5860
        %6685 = vmatpush1.msra.mxu0 %v5859
        %6686 = vmatprep.subr.mxu0 %v5864
        %6687 = vmatpush1.msra.mxu0 %v5863
        %6688 = vmatprep.subr.mxu0 %v5868
        %6689 = vmatpush1.msra.mxu0 %v5867
        %6690 = vmatprep.subr.mxu0 %v5872
        %6691 = vmatpush1.msra.mxu0 %v5871
        %6692 = vmatprep.subr.mxu0 %v5876
        %6693 = vmatpush1.msra.mxu0 %v5875
        %6694 = vmatprep.subr.mxu0 %v5880
        %6695 = vmatpush1.msra.mxu0 %v5879
        %6696 = vmatprep.subr.mxu0 %v5884
        %6697 = vmatpush1.msra.mxu0 %v5883
        %6698 = vmatprep.subr.mxu0 %v5888
        %6699 = vmatpush1.msra.mxu0 %v5887
        %6700 = vmatprep.subr.mxu0 %v5892
        %6701 = vmatpush1.msra.mxu0 %v5891
        %6702 = vmatprep.subr.mxu0 %v5896
        %6703 = vmatpush1.msra.mxu0 %v5895
        %6704 = vmatprep.subr.mxu0 %v5900
        %6705 = vmatpush1.msra.mxu0 %v5899
        %6706 = vmatprep.subr.mxu0 %v5904
        %6707 = vmatpush1.msra.mxu0 %v5903
        %6708 = vmatprep.subr.mxu0 %v5908
        %6709 = vmatpush1.msra.mxu0 %v5907
        %6710 = vmatprep.subr.mxu0 %v5912
        %6711 = vmatpush1.msra.mxu0 %v5911
        %6712 = vmatprep.subr.mxu0 %v5916
        %6713 = vmatpush1.msra.mxu0 %v5915
        %6714 = vmatprep.subr.mxu0 %v5920
        %6715 = vmatpush1.msra.mxu0 %v5919
        %6716 = vmatprep.mubr.f32.mxu0 %v326
        %6717 = vmatmul.mubr.f32.gmra.mrb[0].mxu0 %v325
        %v6718 = vpop.f32.mrb[0].mxu0
        %v6719 = vadd.f32 %v6642, %v6718
        %v6720 = vpop.f32.mrb[0].mxu0
        %v6721 = vadd.f32 %v6644, %v6720
        %6722 = vmatprep.mubr.f32.mxu0 %v330
        %6723 = vmatmul.mubr.f32.gmra.mrb[0].mxu0 %v329
        %v6724 = vpop.f32.mrb[0].mxu0
        %v6725 = vadd.f32 %v6648, %v6724
        %v6726 = vpop.f32.mrb[0].mxu0
        %v6727 = vadd.f32 %v6650, %v6726
        %6728 = vdwg.mxu0
        %v6729 = vld [vmem:[%s6] sm:$0xf]
        %v6731 = vlaneseq
        %v6732 = vshrl.u32 %v6731, 7
        %v6733 = vsub.s32 0, %v6732
        %v6734 = vrot.slane %v6729, %v6733
        %v6735 = vlaneseq
        %v6736 = vshrl.u32 %v6735, 7
        %v6737 = vsub.s32 1, %v6736
        %v6738 = vrot.slane %v6729, %v6737
        %v6739 = vlaneseq
        %v6740 = vshrl.u32 %v6739, 7
        %v6741 = vsub.s32 2, %v6740
        %v6742 = vrot.slane %v6729, %v6741
        %v6743 = vlaneseq
        %v6744 = vshrl.u32 %v6743, 7
        %v6745 = vsub.s32 3, %v6744
        %v6746 = vrot.slane %v6729, %v6745
        %v6751 = vadd.f32 %v6565, %v6734
        %v6752 = vadd.f32 %v6567, %v6738
        %v6753 = vadd.f32 %v6719, %v6742
        %v6754 = vadd.f32 %v6721, %v6746
        %v6755 = vadd.f32 %v6571, %v6734
        %v6756 = vadd.f32 %v6573, %v6738
        %v6757 = vadd.f32 %v6725, %v6742
        %v6758 = vadd.f32 %v6727, %v6746
        %v6759 = vmax.f32 %v6751, 0.0
        %v6760 = vmax.f32 %v6752, 0.0
        %v6761 = vmax.f32 %v6753, 0.0
        %v6762 = vmax.f32 %v6754, 0.0
        %v6763 = vmax.f32 %v6755, 0.0
        %v6764 = vmax.f32 %v6756, 0.0
        %v6765 = vmax.f32 %v6757, 0.0
        %v6766 = vmax.f32 %v6758, 0.0
        %6767 = vst [vmem:[%s322] sm:$0xff] %v6759
        %6768 = vst [vmem:[%s322 + $0x8] sm:$0xff] %v6760
        %6769 = vst [vmem:[%s322 + $0x10] sm:$0xff] %v6761
        %6770 = vst [vmem:[%s322 + $0x18] sm:$0xff] %v6762
        %6771 = vst [vmem:[%s322 + $0x20] sm:$0xff] %v6763
        %6772 = vst [vmem:[%s322 + $0x28] sm:$0xff] %v6764
        %6773 = vst [vmem:[%s322 + $0x30] sm:$0xff] %v6765
        %6774 = vst [vmem:[%s322 + $0x38] sm:$0xff] %v6766
        %p6775 = scmp.lt.s32.totalorder %s20, 1
        %s6776 = scalar_select %p6775, %s20, 1
        %s6777 = smul.addr %s6776, 8
        %s6778 = smul.addr %s6777, 8
        %s6779 = scalar_lea.vmem %s7, %s6778
        // Predicated region
        $region61: #{aggregator_forward.1} parent=47 // pred_check
          %p6780 = pneg %p190
        $region62: #{aggregator_forward.1} parent=47 // pred_check_branch
          %6782 = sbr.rel (%p6780) target = $region64
        $region63: #{aggregator_forward.1} parent=47 // pred_region
          _
        $region64: #{aggregator_forward.1} parent=47 // pred_fallthru
          _
      $region48: #{aggregator_forward.1} parent=5 // pred_fallthru
        _
      %p6783 = scmp.le.s32.totalorder 2, %s15
      // Predicated region
      $region65: #{aggregator_forward.1} parent=5 // pred_check
        %p6784 = pneg %p6783
      $region66: #{aggregator_forward.1} parent=5 // pred_check_branch
        %6786 = sbr.rel (%p6784) target = $region68
      $region67: #{aggregator_forward.1} parent=5 // pred_region
        %s6787 = ssub.s32 %s15, 2
        // Predicated region
        $region69: #{aggregator_forward.1} parent=67 // pred_check
          %p6788 = pneg %p196
        $region70: #{aggregator_forward.1} parent=67 // pred_check_branch
          %6790 = sbr.rel (%p6788) target = $region72
        $region71: #{aggregator_forward.1} parent=67 // pred_region
          %p6791 = scmp.lt.s32.totalorder %s21, 1
          %s6792 = scalar_select %p6791, %s21, 1
          %s6793 = smul.addr %s6792, 8
          %s6794 = smul.addr %s6793, 8
          %s6795 = scalar_lea.vmem %s7, %s6794
        $region72: #{aggregator_forward.1} parent=67 // pred_fallthru
          _
      $region68: #{aggregator_forward.1} parent=5 // pred_fallthru
        _
    $region6: #{aggregator_forward.1} parent=1 // loop_footer
      %s19 = sadd.s32 1, %s15
    $region7: #{aggregator_forward.1} parent=1 // loop_footer_branch
      %14 = sbr.rel target = $region3
    $region8: #{aggregator_forward.1} parent=1 // loop_exit
      _
    %6796 = vsyncpa [#allocation4], 1
    %s6797 = scalar_lea.sflag [#allocation4], 1
    %6798 = vsyncpa %s6797, 1
    %6799 = vsyncpa [#allocation6], 1

</llo_original>
